<compile_context>
chip_gen: v5e
topology: v5e:2x2
jax: 0.10.0
libtpu: 0.0.40
codegen_flags: <defaults>
</compile_context>

<pallas_src>
import functools

import jax
import jax.numpy as jnp
from jax.experimental import pallas as pl
from jax.experimental.pallas import tpu as pltpu

dZ = 5 * 5 * 9 + 1       # 226
NODE = 200               # nodeNum
STENCIL = 10             # stencilNum

DP = 256                 # dZ padded to a clean MXU k-dim
NP = 256                 # NODE padded to 256 (lane-dense, unmasked stores)
OUTP = 128               # FC3 output padded to one full lane group

MIN_TILES = 8            # target minimum grid steps (DMA overlap + v7x 2 TCs)


def _round_up(x, m):
    return (x + m - 1) // m * m


def _vmem_capacity_bytes():
    """Best-effort VMEM capacity query; conservative 64 MiB fallback (v7x)."""
    try:
        info = pltpu.get_tpu_info()
        for attr in ("vmem_capacity_bytes", "vmem_size_bytes", "vmem_bytes"):
            v = getattr(info, attr, None)
            if v:
                return int(v)
    except Exception:
        pass
    return 64 * 1024 * 1024


# ---------------------------------------------------------------------------
# Fused kernel: z-branch + 10-step residual recurrence + FC head.
# One invocation per batch tile; all weights VMEM-resident (constant blocks).
# ---------------------------------------------------------------------------
def _ds_kernel(z_ref, v_ref, bz_ref, w1_ref, w2_ref, bw2_ref,
               f1_ref, fb1_ref, f2_ref, fb2_ref, f3_ref, fb3_ref,
               o_ref, *, weight_dtype):
    def mm(x, w):
        # bf16 (or f32) MXU matmul, f32 accumulation.
        return jnp.dot(x.astype(weight_dtype), w,
                       preferred_element_type=jnp.float32)

    # Step 0: out == 0, so out @ W1 and the residual add vanish (saves a matmul).
    zv = mm(z_ref[0], v_ref[0]) + bz_ref[0]
    a1 = jnp.maximum(zv, 0.0)
    out = jnp.maximum(mm(a1, w2_ref[0]) + bw2_ref[0], 0.0)

    # Steps 1..9, statically unrolled.  The z-branch matmul is independent of
    # `out`, so it overlaps the 2 dependent matmuls per step on the MXU.
    for i in range(1, STENCIL):
        zv = mm(z_ref[i], v_ref[i]) + bz_ref[i]
        a1 = jnp.maximum(zv + mm(out, w1_ref[i]), 0.0)
        out = jnp.maximum(mm(a1, w2_ref[i]) + bw2_ref[i] + out, 0.0)

    # FC head (200->200->200->1, padded to 256/256/128).
    h = jnp.maximum(mm(out, f1_ref[...]) + fb1_ref[...], 0.0)
    h = jnp.maximum(mm(h, f2_ref[...]) + fb2_ref[...], 0.0)
    y = jnp.maximum(mm(h, f3_ref[...]) + fb3_ref[...], 0.0)
    o_ref[...] = y.astype(o_ref.dtype)   # lane-dense (TB, 128) store


# ---------------------------------------------------------------------------
# Parameter preparation: zero-pad to (DP, NP), fold bW1 into the z-branch
# bias, cast matmul weights to the MXU dtype (biases stay f32).
# ---------------------------------------------------------------------------
def _prep_params(params, weight_dtype):
    V, bV, W1, bW1, W2, bW2, f1, fb1, f2, fb2, f3, fb3 = params

    def pad2(x, r, c):
        return jnp.pad(x, ((0, r - x.shape[0]), (0, c - x.shape[1])))

    def pad3(x, r, c):
        return jnp.pad(x, ((0, 0), (0, r - x.shape[1]), (0, c - x.shape[2])))

    Vp = pad3(V.astype(weight_dtype), DP, NP)
    bz = pad3((bV + bW1).astype(jnp.float32), 1, NP)     # bW1 folded in
    W1p = pad3(W1.astype(weight_dtype), NP, NP)
    W2p = pad3(W2.astype(weight_dtype), NP, NP)
    bW2p = pad3(bW2.astype(jnp.float32), 1, NP)
    f1p = pad2(f1.astype(weight_dtype), NP, NP)
    fb1p = pad2(fb1.astype(jnp.float32), 1, NP)
    f2p = pad2(f2.astype(weight_dtype), NP, NP)
    fb2p = pad2(fb2.astype(jnp.float32), 1, NP)
    f3p = pad2(f3.astype(weight_dtype), NP, OUTP)        # real data in column 0
    fb3p = pad2(fb3.astype(jnp.float32), 1, OUTP)
    return Vp, bz, W1p, W2p, bW2p, f1p, fb1p, f2p, fb2p, f3p, fb3p


def ds_model_forward(z, params, *, use_bf16=True, tile_b=None):
    """z: (B, dZ, STENCIL) float32  ->  (B, 1) float32."""
    B = z.shape[0]
    weight_dtype = jnp.bfloat16 if use_bf16 else jnp.float32
    wbytes = 2 if use_bf16 else 4
    (Vp, bz, W1p, W2p, bW2p,
     f1p, fb1p, f2p, fb2p, f3p, fb3p) = _prep_params(params, weight_dtype)

    # ---- Generation-conditional tile cap / VMEM budget --------------------
    if _vmem_capacity_bytes() >= 100 * 1024 * 1024:      # v5e / v6e: 128 MiB
        max_tb, vmem_limit = 2048, 96 * 1024 * 1024
    else:                                                # v7x (64 MiB/TC) + fallback
        max_tb, vmem_limit = 512, 48 * 1024 * 1024
    if not use_bf16:                                     # f32 z/weights double blocks
        max_tb //= 2

    # ---- Batch tiling: the only (parallel) grid axis ----------------------
    b8 = _round_up(B, 8)
    if tile_b is None:
        # Aim for >= MIN_TILES grid steps (input-DMA/compute overlap, and both
        # v7x TensorCores get work) while staying under the per-tile VMEM cap.
        tile_b = min(max_tb, max(8, _round_up(pl.cdiv(b8, MIN_TILES), 8)))
    TB = max(8, min(_round_up(tile_b, 8), b8))
    Bp = _round_up(b8, TB)
    nbt = Bp // TB

    # (B, dZ, S) -> (S, Bp, DP): cast to the MXU dtype FIRST so the staged
    # transpose/pad copy moves bf16, then put dZ on the 128-lane axis.
    z_s = jnp.transpose(z.astype(weight_dtype), (2, 0, 1))
    z_s = jnp.pad(z_s, ((0, 0), (0, Bp - B), (0, DP - dZ)))

    kernel = functools.partial(_ds_kernel, weight_dtype=weight_dtype)
    # Constant block indices -> weights stay VMEM-resident, DMA'd once.
    const3 = lambda b: (0, 0, 0)   # noqa: E731
    const2 = lambda b: (0, 0)      # noqa: E731

    flops = Bp * (STENCIL * 2 * DP * NP                 # z @ V
                  + (2 * STENCIL - 1) * 2 * NP * NP     # out@W1 + a1@W2
                  + 2 * 2 * NP * NP + 2 * NP * OUTP)    # FC head
    weight_bytes = ((STENCIL * (DP + 2 * NP) * NP + 2 * NP * NP + NP * OUTP)
                    * wbytes
                    + (2 * STENCIL * NP + 2 * NP + OUTP) * 4)
    bytes_accessed = (STENCIL * Bp * DP * wbytes        # z tiles
                      + weight_bytes                    # weights (once)
                      + Bp * OUTP * 4)                  # output

    y = pl.pallas_call(
        kernel,
        out_shape=jax.ShapeDtypeStruct((Bp, OUTP), jnp.float32),
        grid=(nbt,),
        in_specs=[
            pl.BlockSpec((STENCIL, TB, DP), lambda b: (0, b, 0)),   # z tile
            pl.BlockSpec((STENCIL, DP, NP), const3),                # V (resident)
            pl.BlockSpec((STENCIL, 1, NP), const3),                 # bV + bW1
            pl.BlockSpec((STENCIL, NP, NP), const3),                # W1 (resident)
            pl.BlockSpec((STENCIL, NP, NP), const3),                # W2 (resident)
            pl.BlockSpec((STENCIL, 1, NP), const3),                 # bW2
            pl.BlockSpec((NP, NP), const2),                         # FC1
            pl.BlockSpec((1, NP), const2),                          # b1
            pl.BlockSpec((NP, NP), const2),                         # FC2
            pl.BlockSpec((1, NP), const2),                          # b2
            pl.BlockSpec((NP, OUTP), const2),                       # FC3 (padded)
            pl.BlockSpec((1, OUTP), const2),                        # b3
        ],
        out_specs=pl.BlockSpec((TB, OUTP), lambda b: (b, 0)),
        compiler_params=pltpu.CompilerParams(
            dimension_semantics=("parallel",),
            vmem_limit_bytes=vmem_limit),
        cost_estimate=pl.CostEstimate(
            flops=flops, transcendentals=0, bytes_accessed=bytes_accessed),
    )(z_s, Vp, bz, W1p, W2p, bW2p, f1p, fb1p, f2p, fb2p, f3p, fb3p)

    return y[:B, :1]


# ---------------------------------------------------------------------------
# Synthetic params + pure-JAX reference.
# ---------------------------------------------------------------------------
def init_params(key):
    """Deterministic synthetic parameters (PyTorch-Linear-like uniform init).

    Weights are stored pre-transposed as (in, out) so forward is x @ W.
    """
    ks = jax.random.split(key, 12)

    def lin(k, fan_in, shape):
        bound = 1.0 / jnp.sqrt(jnp.float32(fan_in))
        return jax.random.uniform(k, shape, jnp.float32, -bound, bound)

    V = lin(ks[0], dZ, (STENCIL, dZ, NODE))
    bV = lin(ks[1], dZ, (STENCIL, 1, NODE))
    W1 = lin(ks[2], NODE, (STENCIL, NODE, NODE))
    bW1 = lin(ks[3], NODE, (STENCIL, 1, NODE))
    W2 = lin(ks[4], NODE, (STENCIL, NODE, NODE))
    bW2 = lin(ks[5], NODE, (STENCIL, 1, NODE))
    f1 = lin(ks[6], NODE, (NODE, NODE))
    fb1 = lin(ks[7], NODE, (1, NODE))
    f2 = lin(ks[8], NODE, (NODE, NODE))
    fb2 = lin(ks[9], NODE, (1, NODE))
    f3 = lin(ks[10], NODE, (NODE, 1))
    fb3 = lin(ks[11], NODE, (1, 1))
    return (V, bV, W1, bW1, W2, bW2, f1, fb1, f2, fb2, f3, fb3)


def ref_forward(z, params, weight_dtype=jnp.float32):
    """Pure-JAX reference matching the PyTorch forward.

    `weight_dtype` builds a matched-precision reference for the bf16 kernel
    path (bf16 matmul operands, f32 accumulation / elementwise).
    """
    V, bV, W1, bW1, W2, bW2, f1, fb1, f2, fb2, f3, fb3 = params
    B = z.shape[0]

    def mm(x, w):
        return jnp.dot(x.astype(weight_dtype), w.astype(weight_dtype),
                       preferred_element_type=jnp.float32)

    out = jnp.zeros((B, NODE), jnp.float32)
    for i in range(STENCIL):
        zi = z[:, :, i]
        l1 = mm(zi, V[i]) + bV[i, 0] + mm(out, W1[i]) + bW1[i, 0]
        a1 = jnp.maximum(l1, 0.0)
        l2 = mm(a1, W2[i]) + bW2[i, 0] + out
        out = jnp.maximum(l2, 0.0)
    h = jnp.maximum(mm(out, f1) + fb1[0], 0.0)
    h = jnp.maximum(mm(h, f2) + fb2[0], 0.0)
    return jnp.maximum(mm(h, f3) + fb3[0], 0.0)


if __name__ == "__main__":
    # TODO(synk): the PyTorch Block.forward's NaN/Inf/zero debug print-checks
    # are diagnostics only and are intentionally not reproduced in-kernel.
    key = jax.random.PRNGKey(0)
    k_param, k_z = jax.random.split(key)

    params = init_params(k_param)
    B = 8
    z = jax.random.normal(k_z, (B, dZ, STENCIL), jnp.float32)

    # f32-weight path: semantic sanity check.  Loose tolerance because the
    # Mosaic kernel and the XLA reference may use different internal MXU pass
    # counts for f32 matmuls (DEFAULT precision); structural errors would be
    # orders of magnitude larger.
    y32 = jax.block_until_ready(ds_model_forward(z, params, use_bf16=False))
    assert y32.shape == (B, 1), y32.shape
    y_ref32 = ref_forward(z, params, jnp.float32)
    assert jnp.allclose(y32, y_ref32, rtol=3e-2, atol=3e-2), (y32, y_ref32)

    # bf16 fast path vs matched-precision reference (tight numeric check:
    # both sides multiply identical bf16 operands with f32 accumulation).
    y16 = jax.block_until_ready(ds_model_forward(z, params, use_bf16=True))
    assert y16.shape == (B, 1), y16.shape
    y_ref16 = ref_forward(z, params, jnp.bfloat16)
    assert jnp.allclose(y16, y_ref16, rtol=2e-3, atol=2e-3), (y16, y_ref16)

    # Multi-tile grid (nbt > 1) + batch padding correctness (B not a multiple
    # of the tile): forces the "parallel" batch axis to actually iterate.
    B2 = 52
    z2 = jax.random.normal(jax.random.PRNGKey(1), (B2, dZ, STENCIL), jnp.float32)
    y2 = jax.block_until_ready(
        ds_model_forward(z2, params, use_bf16=True, tile_b=8))
    assert y2.shape == (B2, 1), y2.shape
    y2_ref = ref_forward(z2, params, jnp.bfloat16)
    assert jnp.allclose(y2, y2_ref, rtol=2e-3, atol=2e-3), (y2, y2_ref)

    print("KERNEL_OK")
</pallas_src>

<mosaic_0001>
module attributes {stable_mosaic.version = 11 : i64} {
  func.func @_ds_kernel(%arg0: i32, %arg1: memref<10x8x256xf32, #tpu.memory_space<vmem>>, %arg2: memref<10x256x256xf32, #tpu.memory_space<vmem>>, %arg3: memref<10x1x256xf32, #tpu.memory_space<vmem>>, %arg4: memref<10x256x256xf32, #tpu.memory_space<vmem>>, %arg5: memref<10x256x256xf32, #tpu.memory_space<vmem>>, %arg6: memref<10x1x256xf32, #tpu.memory_space<vmem>>, %arg7: memref<256x256xf32, #tpu.memory_space<vmem>>, %arg8: memref<1x256xf32, #tpu.memory_space<vmem>>, %arg9: memref<256x256xf32, #tpu.memory_space<vmem>>, %arg10: memref<1x256xf32, #tpu.memory_space<vmem>>, %arg11: memref<256x128xf32, #tpu.memory_space<vmem>>, %arg12: memref<1x128xf32, #tpu.memory_space<vmem>>, %arg13: memref<8x128xf32, #tpu.memory_space<vmem>>) attributes {dimension_semantics = [#tpu.dimension_semantics<parallel>], iteration_bounds = array<i64: 1>, scalar_prefetch = 0 : i64, scratch_operands = 0 : i64, tpu.core_type = #tpu.core_type<tc>, window_params = [{transform_indices = @transform_0, window_bounds = array<i64: 10, 8, 256>}, {pipeline_mode = #tpu.pipeline_mode<synchronous>, transform_indices = @transform_1, window_bounds = array<i64: 10, 256, 256>}, {pipeline_mode = #tpu.pipeline_mode<synchronous>, transform_indices = @transform_2, window_bounds = array<i64: 10, 1, 256>}, {pipeline_mode = #tpu.pipeline_mode<synchronous>, transform_indices = @transform_3, window_bounds = array<i64: 10, 256, 256>}, {pipeline_mode = #tpu.pipeline_mode<synchronous>, transform_indices = @transform_4, window_bounds = array<i64: 10, 256, 256>}, {pipeline_mode = #tpu.pipeline_mode<synchronous>, transform_indices = @transform_5, window_bounds = array<i64: 10, 1, 256>}, {pipeline_mode = #tpu.pipeline_mode<synchronous>, transform_indices = @transform_6, window_bounds = array<i64: 256, 256>}, {pipeline_mode = #tpu.pipeline_mode<synchronous>, transform_indices = @transform_7, window_bounds = array<i64: 1, 256>}, {pipeline_mode = #tpu.pipeline_mode<synchronous>, transform_indices = @transform_8, window_bounds = array<i64: 256, 256>}, {pipeline_mode = #tpu.pipeline_mode<synchronous>, transform_indices = @transform_9, window_bounds = array<i64: 1, 256>}, {pipeline_mode = #tpu.pipeline_mode<synchronous>, transform_indices = @transform_10, window_bounds = array<i64: 256, 128>}, {pipeline_mode = #tpu.pipeline_mode<synchronous>, transform_indices = @transform_11, window_bounds = array<i64: 1, 128>}, {transform_indices = @transform_12, window_bounds = array<i64: 8, 128>}]} {
    %c0 = arith.constant 0 : index
    %c0_0 = arith.constant 0 : index
    %c0_1 = arith.constant 0 : index
    %0 = vector.load %arg1[%c0, %c0_0, %c0_1] : memref<10x8x256xf32, #tpu.memory_space<vmem>>, vector<1x8x256xf32>
    %1 = vector.shape_cast %0 : vector<1x8x256xf32> to vector<8x256xf32>
    %c0_2 = arith.constant 0 : index
    %c0_3 = arith.constant 0 : index
    %c0_4 = arith.constant 0 : index
    %2 = vector.load %arg2[%c0_2, %c0_3, %c0_4] : memref<10x256x256xf32, #tpu.memory_space<vmem>>, vector<1x256x256xf32>
    %3 = vector.shape_cast %2 : vector<1x256x256xf32> to vector<256x256xf32>
    %cst = arith.constant dense<0.000000e+00> : vector<8x256xf32>
    %4 = tpu.matmul %1, %3, %cst {dimension_numbers = #tpu.dot_dimension_numbers<[1], [0], [0], [1], [0, 0, 1, 1], [], []>} : vector<8x256xf32>, vector<256x256xf32>, vector<8x256xf32> -> vector<8x256xf32>
    %c0_5 = arith.constant 0 : index
    %c0_6 = arith.constant 0 : index
    %c0_7 = arith.constant 0 : index
    %5 = vector.load %arg3[%c0_5, %c0_6, %c0_7] : memref<10x1x256xf32, #tpu.memory_space<vmem>>, vector<1x1x256xf32>
    %6 = vector.shape_cast %5 : vector<1x1x256xf32> to vector<1x256xf32>
    %7 = vector.broadcast %6 : vector<1x256xf32> to vector<8x256xf32>
    %8 = arith.addf %4, %7 : vector<8x256xf32>
    %cst_8 = arith.constant 0.000000e+00 : f32
    %9 = vector.broadcast %cst_8 : f32 to vector<8x256xf32>
    %10 = arith.maximumf %8, %9 : vector<8x256xf32>
    %c0_9 = arith.constant 0 : index
    %c0_10 = arith.constant 0 : index
    %c0_11 = arith.constant 0 : index
    %11 = vector.load %arg5[%c0_9, %c0_10, %c0_11] : memref<10x256x256xf32, #tpu.memory_space<vmem>>, vector<1x256x256xf32>
    %12 = vector.shape_cast %11 : vector<1x256x256xf32> to vector<256x256xf32>
    %cst_12 = arith.constant dense<0.000000e+00> : vector<8x256xf32>
    %13 = tpu.matmul %10, %12, %cst_12 {dimension_numbers = #tpu.dot_dimension_numbers<[1], [0], [0], [1], [0, 0, 1, 1], [], []>} : vector<8x256xf32>, vector<256x256xf32>, vector<8x256xf32> -> vector<8x256xf32>
    %c0_13 = arith.constant 0 : index
    %c0_14 = arith.constant 0 : index
    %c0_15 = arith.constant 0 : index
    %14 = vector.load %arg6[%c0_13, %c0_14, %c0_15] : memref<10x1x256xf32, #tpu.memory_space<vmem>>, vector<1x1x256xf32>
    %15 = vector.shape_cast %14 : vector<1x1x256xf32> to vector<1x256xf32>
    %16 = vector.broadcast %15 : vector<1x256xf32> to vector<8x256xf32>
    %17 = arith.addf %13, %16 : vector<8x256xf32>
    %cst_16 = arith.constant 0.000000e+00 : f32
    %18 = vector.broadcast %cst_16 : f32 to vector<8x256xf32>
    %19 = arith.maximumf %17, %18 : vector<8x256xf32>
    %c1 = arith.constant 1 : index
    %c0_17 = arith.constant 0 : index
    %c0_18 = arith.constant 0 : index
    %20 = vector.load %arg1[%c1, %c0_17, %c0_18] : memref<10x8x256xf32, #tpu.memory_space<vmem>>, vector<1x8x256xf32>
    %21 = vector.shape_cast %20 : vector<1x8x256xf32> to vector<8x256xf32>
    %c1_19 = arith.constant 1 : index
    %c0_20 = arith.constant 0 : index
    %c0_21 = arith.constant 0 : index
    %22 = vector.load %arg2[%c1_19, %c0_20, %c0_21] : memref<10x256x256xf32, #tpu.memory_space<vmem>>, vector<1x256x256xf32>
    %23 = vector.shape_cast %22 : vector<1x256x256xf32> to vector<256x256xf32>
    %cst_22 = arith.constant dense<0.000000e+00> : vector<8x256xf32>
    %24 = tpu.matmul %21, %23, %cst_22 {dimension_numbers = #tpu.dot_dimension_numbers<[1], [0], [0], [1], [0, 0, 1, 1], [], []>} : vector<8x256xf32>, vector<256x256xf32>, vector<8x256xf32> -> vector<8x256xf32>
    %c1_23 = arith.constant 1 : index
    %c0_24 = arith.constant 0 : index
    %c0_25 = arith.constant 0 : index
    %25 = vector.load %arg3[%c1_23, %c0_24, %c0_25] : memref<10x1x256xf32, #tpu.memory_space<vmem>>, vector<1x1x256xf32>
    %26 = vector.shape_cast %25 : vector<1x1x256xf32> to vector<1x256xf32>
    %27 = vector.broadcast %26 : vector<1x256xf32> to vector<8x256xf32>
    %28 = arith.addf %24, %27 : vector<8x256xf32>
    %c1_26 = arith.constant 1 : index
    %c0_27 = arith.constant 0 : index
    %c0_28 = arith.constant 0 : index
    %29 = vector.load %arg4[%c1_26, %c0_27, %c0_28] : memref<10x256x256xf32, #tpu.memory_space<vmem>>, vector<1x256x256xf32>
    %30 = vector.shape_cast %29 : vector<1x256x256xf32> to vector<256x256xf32>
    %cst_29 = arith.constant dense<0.000000e+00> : vector<8x256xf32>
    %31 = tpu.matmul %19, %30, %cst_29 {dimension_numbers = #tpu.dot_dimension_numbers<[1], [0], [0], [1], [0, 0, 1, 1], [], []>} : vector<8x256xf32>, vector<256x256xf32>, vector<8x256xf32> -> vector<8x256xf32>
    %32 = arith.addf %28, %31 : vector<8x256xf32>
    %cst_30 = arith.constant 0.000000e+00 : f32
    %33 = vector.broadcast %cst_30 : f32 to vector<8x256xf32>
    %34 = arith.maximumf %32, %33 : vector<8x256xf32>
    %c1_31 = arith.constant 1 : index
    %c0_32 = arith.constant 0 : index
    %c0_33 = arith.constant 0 : index
    %35 = vector.load %arg5[%c1_31, %c0_32, %c0_33] : memref<10x256x256xf32, #tpu.memory_space<vmem>>, vector<1x256x256xf32>
    %36 = vector.shape_cast %35 : vector<1x256x256xf32> to vector<256x256xf32>
    %cst_34 = arith.constant dense<0.000000e+00> : vector<8x256xf32>
    %37 = tpu.matmul %34, %36, %cst_34 {dimension_numbers = #tpu.dot_dimension_numbers<[1], [0], [0], [1], [0, 0, 1, 1], [], []>} : vector<8x256xf32>, vector<256x256xf32>, vector<8x256xf32> -> vector<8x256xf32>
    %c1_35 = arith.constant 1 : index
    %c0_36 = arith.constant 0 : index
    %c0_37 = arith.constant 0 : index
    %38 = vector.load %arg6[%c1_35, %c0_36, %c0_37] : memref<10x1x256xf32, #tpu.memory_space<vmem>>, vector<1x1x256xf32>
    %39 = vector.shape_cast %38 : vector<1x1x256xf32> to vector<1x256xf32>
    %40 = vector.broadcast %39 : vector<1x256xf32> to vector<8x256xf32>
    %41 = arith.addf %37, %40 : vector<8x256xf32>
    %42 = arith.addf %41, %19 : vector<8x256xf32>
    %cst_38 = arith.constant 0.000000e+00 : f32
    %43 = vector.broadcast %cst_38 : f32 to vector<8x256xf32>
    %44 = arith.maximumf %42, %43 : vector<8x256xf32>
    %c2 = arith.constant 2 : index
    %c0_39 = arith.constant 0 : index
    %c0_40 = arith.constant 0 : index
    %45 = vector.load %arg1[%c2, %c0_39, %c0_40] : memref<10x8x256xf32, #tpu.memory_space<vmem>>, vector<1x8x256xf32>
    %46 = vector.shape_cast %45 : vector<1x8x256xf32> to vector<8x256xf32>
    %c2_41 = arith.constant 2 : index
    %c0_42 = arith.constant 0 : index
    %c0_43 = arith.constant 0 : index
    %47 = vector.load %arg2[%c2_41, %c0_42, %c0_43] : memref<10x256x256xf32, #tpu.memory_space<vmem>>, vector<1x256x256xf32>
    %48 = vector.shape_cast %47 : vector<1x256x256xf32> to vector<256x256xf32>
    %cst_44 = arith.constant dense<0.000000e+00> : vector<8x256xf32>
    %49 = tpu.matmul %46, %48, %cst_44 {dimension_numbers = #tpu.dot_dimension_numbers<[1], [0], [0], [1], [0, 0, 1, 1], [], []>} : vector<8x256xf32>, vector<256x256xf32>, vector<8x256xf32> -> vector<8x256xf32>
    %c2_45 = arith.constant 2 : index
    %c0_46 = arith.constant 0 : index
    %c0_47 = arith.constant 0 : index
    %50 = vector.load %arg3[%c2_45, %c0_46, %c0_47] : memref<10x1x256xf32, #tpu.memory_space<vmem>>, vector<1x1x256xf32>
    %51 = vector.shape_cast %50 : vector<1x1x256xf32> to vector<1x256xf32>
    %52 = vector.broadcast %51 : vector<1x256xf32> to vector<8x256xf32>
    %53 = arith.addf %49, %52 : vector<8x256xf32>
    %c2_48 = arith.constant 2 : index
    %c0_49 = arith.constant 0 : index
    %c0_50 = arith.constant 0 : index
    %54 = vector.load %arg4[%c2_48, %c0_49, %c0_50] : memref<10x256x256xf32, #tpu.memory_space<vmem>>, vector<1x256x256xf32>
    %55 = vector.shape_cast %54 : vector<1x256x256xf32> to vector<256x256xf32>
    %cst_51 = arith.constant dense<0.000000e+00> : vector<8x256xf32>
    %56 = tpu.matmul %44, %55, %cst_51 {dimension_numbers = #tpu.dot_dimension_numbers<[1], [0], [0], [1], [0, 0, 1, 1], [], []>} : vector<8x256xf32>, vector<256x256xf32>, vector<8x256xf32> -> vector<8x256xf32>
    %57 = arith.addf %53, %56 : vector<8x256xf32>
    %cst_52 = arith.constant 0.000000e+00 : f32
    %58 = vector.broadcast %cst_52 : f32 to vector<8x256xf32>
    %59 = arith.maximumf %57, %58 : vector<8x256xf32>
    %c2_53 = arith.constant 2 : index
    %c0_54 = arith.constant 0 : index
    %c0_55 = arith.constant 0 : index
    %60 = vector.load %arg5[%c2_53, %c0_54, %c0_55] : memref<10x256x256xf32, #tpu.memory_space<vmem>>, vector<1x256x256xf32>
    %61 = vector.shape_cast %60 : vector<1x256x256xf32> to vector<256x256xf32>
    %cst_56 = arith.constant dense<0.000000e+00> : vector<8x256xf32>
    %62 = tpu.matmul %59, %61, %cst_56 {dimension_numbers = #tpu.dot_dimension_numbers<[1], [0], [0], [1], [0, 0, 1, 1], [], []>} : vector<8x256xf32>, vector<256x256xf32>, vector<8x256xf32> -> vector<8x256xf32>
    %c2_57 = arith.constant 2 : index
    %c0_58 = arith.constant 0 : index
    %c0_59 = arith.constant 0 : index
    %63 = vector.load %arg6[%c2_57, %c0_58, %c0_59] : memref<10x1x256xf32, #tpu.memory_space<vmem>>, vector<1x1x256xf32>
    %64 = vector.shape_cast %63 : vector<1x1x256xf32> to vector<1x256xf32>
    %65 = vector.broadcast %64 : vector<1x256xf32> to vector<8x256xf32>
    %66 = arith.addf %62, %65 : vector<8x256xf32>
    %67 = arith.addf %66, %44 : vector<8x256xf32>
    %cst_60 = arith.constant 0.000000e+00 : f32
    %68 = vector.broadcast %cst_60 : f32 to vector<8x256xf32>
    %69 = arith.maximumf %67, %68 : vector<8x256xf32>
    %c3 = arith.constant 3 : index
    %c0_61 = arith.constant 0 : index
    %c0_62 = arith.constant 0 : index
    %70 = vector.load %arg1[%c3, %c0_61, %c0_62] : memref<10x8x256xf32, #tpu.memory_space<vmem>>, vector<1x8x256xf32>
    %71 = vector.shape_cast %70 : vector<1x8x256xf32> to vector<8x256xf32>
    %c3_63 = arith.constant 3 : index
    %c0_64 = arith.constant 0 : index
    %c0_65 = arith.constant 0 : index
    %72 = vector.load %arg2[%c3_63, %c0_64, %c0_65] : memref<10x256x256xf32, #tpu.memory_space<vmem>>, vector<1x256x256xf32>
    %73 = vector.shape_cast %72 : vector<1x256x256xf32> to vector<256x256xf32>
    %cst_66 = arith.constant dense<0.000000e+00> : vector<8x256xf32>
    %74 = tpu.matmul %71, %73, %cst_66 {dimension_numbers = #tpu.dot_dimension_numbers<[1], [0], [0], [1], [0, 0, 1, 1], [], []>} : vector<8x256xf32>, vector<256x256xf32>, vector<8x256xf32> -> vector<8x256xf32>
    %c3_67 = arith.constant 3 : index
    %c0_68 = arith.constant 0 : index
    %c0_69 = arith.constant 0 : index
    %75 = vector.load %arg3[%c3_67, %c0_68, %c0_69] : memref<10x1x256xf32, #tpu.memory_space<vmem>>, vector<1x1x256xf32>
    %76 = vector.shape_cast %75 : vector<1x1x256xf32> to vector<1x256xf32>
    %77 = vector.broadcast %76 : vector<1x256xf32> to vector<8x256xf32>
    %78 = arith.addf %74, %77 : vector<8x256xf32>
    %c3_70 = arith.constant 3 : index
    %c0_71 = arith.constant 0 : index
    %c0_72 = arith.constant 0 : index
    %79 = vector.load %arg4[%c3_70, %c0_71, %c0_72] : memref<10x256x256xf32, #tpu.memory_space<vmem>>, vector<1x256x256xf32>
    %80 = vector.shape_cast %79 : vector<1x256x256xf32> to vector<256x256xf32>
    %cst_73 = arith.constant dense<0.000000e+00> : vector<8x256xf32>
    %81 = tpu.matmul %69, %80, %cst_73 {dimension_numbers = #tpu.dot_dimension_numbers<[1], [0], [0], [1], [0, 0, 1, 1], [], []>} : vector<8x256xf32>, vector<256x256xf32>, vector<8x256xf32> -> vector<8x256xf32>
    %82 = arith.addf %78, %81 : vector<8x256xf32>
    %cst_74 = arith.constant 0.000000e+00 : f32
    %83 = vector.broadcast %cst_74 : f32 to vector<8x256xf32>
    %84 = arith.maximumf %82, %83 : vector<8x256xf32>
    %c3_75 = arith.constant 3 : index
    %c0_76 = arith.constant 0 : index
    %c0_77 = arith.constant 0 : index
    %85 = vector.load %arg5[%c3_75, %c0_76, %c0_77] : memref<10x256x256xf32, #tpu.memory_space<vmem>>, vector<1x256x256xf32>
    %86 = vector.shape_cast %85 : vector<1x256x256xf32> to vector<256x256xf32>
    %cst_78 = arith.constant dense<0.000000e+00> : vector<8x256xf32>
    %87 = tpu.matmul %84, %86, %cst_78 {dimension_numbers = #tpu.dot_dimension_numbers<[1], [0], [0], [1], [0, 0, 1, 1], [], []>} : vector<8x256xf32>, vector<256x256xf32>, vector<8x256xf32> -> vector<8x256xf32>
    %c3_79 = arith.constant 3 : index
    %c0_80 = arith.constant 0 : index
    %c0_81 = arith.constant 0 : index
    %88 = vector.load %arg6[%c3_79, %c0_80, %c0_81] : memref<10x1x256xf32, #tpu.memory_space<vmem>>, vector<1x1x256xf32>
    %89 = vector.shape_cast %88 : vector<1x1x256xf32> to vector<1x256xf32>
    %90 = vector.broadcast %89 : vector<1x256xf32> to vector<8x256xf32>
    %91 = arith.addf %87, %90 : vector<8x256xf32>
    %92 = arith.addf %91, %69 : vector<8x256xf32>
    %cst_82 = arith.constant 0.000000e+00 : f32
    %93 = vector.broadcast %cst_82 : f32 to vector<8x256xf32>
    %94 = arith.maximumf %92, %93 : vector<8x256xf32>
    %c4 = arith.constant 4 : index
    %c0_83 = arith.constant 0 : index
    %c0_84 = arith.constant 0 : index
    %95 = vector.load %arg1[%c4, %c0_83, %c0_84] : memref<10x8x256xf32, #tpu.memory_space<vmem>>, vector<1x8x256xf32>
    %96 = vector.shape_cast %95 : vector<1x8x256xf32> to vector<8x256xf32>
    %c4_85 = arith.constant 4 : index
    %c0_86 = arith.constant 0 : index
    %c0_87 = arith.constant 0 : index
    %97 = vector.load %arg2[%c4_85, %c0_86, %c0_87] : memref<10x256x256xf32, #tpu.memory_space<vmem>>, vector<1x256x256xf32>
    %98 = vector.shape_cast %97 : vector<1x256x256xf32> to vector<256x256xf32>
    %cst_88 = arith.constant dense<0.000000e+00> : vector<8x256xf32>
    %99 = tpu.matmul %96, %98, %cst_88 {dimension_numbers = #tpu.dot_dimension_numbers<[1], [0], [0], [1], [0, 0, 1, 1], [], []>} : vector<8x256xf32>, vector<256x256xf32>, vector<8x256xf32> -> vector<8x256xf32>
    %c4_89 = arith.constant 4 : index
    %c0_90 = arith.constant 0 : index
    %c0_91 = arith.constant 0 : index
    %100 = vector.load %arg3[%c4_89, %c0_90, %c0_91] : memref<10x1x256xf32, #tpu.memory_space<vmem>>, vector<1x1x256xf32>
    %101 = vector.shape_cast %100 : vector<1x1x256xf32> to vector<1x256xf32>
    %102 = vector.broadcast %101 : vector<1x256xf32> to vector<8x256xf32>
    %103 = arith.addf %99, %102 : vector<8x256xf32>
    %c4_92 = arith.constant 4 : index
    %c0_93 = arith.constant 0 : index
    %c0_94 = arith.constant 0 : index
    %104 = vector.load %arg4[%c4_92, %c0_93, %c0_94] : memref<10x256x256xf32, #tpu.memory_space<vmem>>, vector<1x256x256xf32>
    %105 = vector.shape_cast %104 : vector<1x256x256xf32> to vector<256x256xf32>
    %cst_95 = arith.constant dense<0.000000e+00> : vector<8x256xf32>
    %106 = tpu.matmul %94, %105, %cst_95 {dimension_numbers = #tpu.dot_dimension_numbers<[1], [0], [0], [1], [0, 0, 1, 1], [], []>} : vector<8x256xf32>, vector<256x256xf32>, vector<8x256xf32> -> vector<8x256xf32>
    %107 = arith.addf %103, %106 : vector<8x256xf32>
    %cst_96 = arith.constant 0.000000e+00 : f32
    %108 = vector.broadcast %cst_96 : f32 to vector<8x256xf32>
    %109 = arith.maximumf %107, %108 : vector<8x256xf32>
    %c4_97 = arith.constant 4 : index
    %c0_98 = arith.constant 0 : index
    %c0_99 = arith.constant 0 : index
    %110 = vector.load %arg5[%c4_97, %c0_98, %c0_99] : memref<10x256x256xf32, #tpu.memory_space<vmem>>, vector<1x256x256xf32>
    %111 = vector.shape_cast %110 : vector<1x256x256xf32> to vector<256x256xf32>
    %cst_100 = arith.constant dense<0.000000e+00> : vector<8x256xf32>
    %112 = tpu.matmul %109, %111, %cst_100 {dimension_numbers = #tpu.dot_dimension_numbers<[1], [0], [0], [1], [0, 0, 1, 1], [], []>} : vector<8x256xf32>, vector<256x256xf32>, vector<8x256xf32> -> vector<8x256xf32>
    %c4_101 = arith.constant 4 : index
    %c0_102 = arith.constant 0 : index
    %c0_103 = arith.constant 0 : index
    %113 = vector.load %arg6[%c4_101, %c0_102, %c0_103] : memref<10x1x256xf32, #tpu.memory_space<vmem>>, vector<1x1x256xf32>
    %114 = vector.shape_cast %113 : vector<1x1x256xf32> to vector<1x256xf32>
    %115 = vector.broadcast %114 : vector<1x256xf32> to vector<8x256xf32>
    %116 = arith.addf %112, %115 : vector<8x256xf32>
    %117 = arith.addf %116, %94 : vector<8x256xf32>
    %cst_104 = arith.constant 0.000000e+00 : f32
    %118 = vector.broadcast %cst_104 : f32 to vector<8x256xf32>
    %119 = arith.maximumf %117, %118 : vector<8x256xf32>
    %c5 = arith.constant 5 : index
    %c0_105 = arith.constant 0 : index
    %c0_106 = arith.constant 0 : index
    %120 = vector.load %arg1[%c5, %c0_105, %c0_106] : memref<10x8x256xf32, #tpu.memory_space<vmem>>, vector<1x8x256xf32>
    %121 = vector.shape_cast %120 : vector<1x8x256xf32> to vector<8x256xf32>
    %c5_107 = arith.constant 5 : index
    %c0_108 = arith.constant 0 : index
    %c0_109 = arith.constant 0 : index
    %122 = vector.load %arg2[%c5_107, %c0_108, %c0_109] : memref<10x256x256xf32, #tpu.memory_space<vmem>>, vector<1x256x256xf32>
    %123 = vector.shape_cast %122 : vector<1x256x256xf32> to vector<256x256xf32>
    %cst_110 = arith.constant dense<0.000000e+00> : vector<8x256xf32>
    %124 = tpu.matmul %121, %123, %cst_110 {dimension_numbers = #tpu.dot_dimension_numbers<[1], [0], [0], [1], [0, 0, 1, 1], [], []>} : vector<8x256xf32>, vector<256x256xf32>, vector<8x256xf32> -> vector<8x256xf32>
    %c5_111 = arith.constant 5 : index
    %c0_112 = arith.constant 0 : index
    %c0_113 = arith.constant 0 : index
    %125 = vector.load %arg3[%c5_111, %c0_112, %c0_113] : memref<10x1x256xf32, #tpu.memory_space<vmem>>, vector<1x1x256xf32>
    %126 = vector.shape_cast %125 : vector<1x1x256xf32> to vector<1x256xf32>
    %127 = vector.broadcast %126 : vector<1x256xf32> to vector<8x256xf32>
    %128 = arith.addf %124, %127 : vector<8x256xf32>
    %c5_114 = arith.constant 5 : index
    %c0_115 = arith.constant 0 : index
    %c0_116 = arith.constant 0 : index
    %129 = vector.load %arg4[%c5_114, %c0_115, %c0_116] : memref<10x256x256xf32, #tpu.memory_space<vmem>>, vector<1x256x256xf32>
    %130 = vector.shape_cast %129 : vector<1x256x256xf32> to vector<256x256xf32>
    %cst_117 = arith.constant dense<0.000000e+00> : vector<8x256xf32>
    %131 = tpu.matmul %119, %130, %cst_117 {dimension_numbers = #tpu.dot_dimension_numbers<[1], [0], [0], [1], [0, 0, 1, 1], [], []>} : vector<8x256xf32>, vector<256x256xf32>, vector<8x256xf32> -> vector<8x256xf32>
    %132 = arith.addf %128, %131 : vector<8x256xf32>
    %cst_118 = arith.constant 0.000000e+00 : f32
    %133 = vector.broadcast %cst_118 : f32 to vector<8x256xf32>
    %134 = arith.maximumf %132, %133 : vector<8x256xf32>
    %c5_119 = arith.constant 5 : index
    %c0_120 = arith.constant 0 : index
    %c0_121 = arith.constant 0 : index
    %135 = vector.load %arg5[%c5_119, %c0_120, %c0_121] : memref<10x256x256xf32, #tpu.memory_space<vmem>>, vector<1x256x256xf32>
    %136 = vector.shape_cast %135 : vector<1x256x256xf32> to vector<256x256xf32>
    %cst_122 = arith.constant dense<0.000000e+00> : vector<8x256xf32>
    %137 = tpu.matmul %134, %136, %cst_122 {dimension_numbers = #tpu.dot_dimension_numbers<[1], [0], [0], [1], [0, 0, 1, 1], [], []>} : vector<8x256xf32>, vector<256x256xf32>, vector<8x256xf32> -> vector<8x256xf32>
    %c5_123 = arith.constant 5 : index
    %c0_124 = arith.constant 0 : index
    %c0_125 = arith.constant 0 : index
    %138 = vector.load %arg6[%c5_123, %c0_124, %c0_125] : memref<10x1x256xf32, #tpu.memory_space<vmem>>, vector<1x1x256xf32>
    %139 = vector.shape_cast %138 : vector<1x1x256xf32> to vector<1x256xf32>
    %140 = vector.broadcast %139 : vector<1x256xf32> to vector<8x256xf32>
    %141 = arith.addf %137, %140 : vector<8x256xf32>
    %142 = arith.addf %141, %119 : vector<8x256xf32>
    %cst_126 = arith.constant 0.000000e+00 : f32
    %143 = vector.broadcast %cst_126 : f32 to vector<8x256xf32>
    %144 = arith.maximumf %142, %143 : vector<8x256xf32>
    %c6 = arith.constant 6 : index
    %c0_127 = arith.constant 0 : index
    %c0_128 = arith.constant 0 : index
    %145 = vector.load %arg1[%c6, %c0_127, %c0_128] : memref<10x8x256xf32, #tpu.memory_space<vmem>>, vector<1x8x256xf32>
    %146 = vector.shape_cast %145 : vector<1x8x256xf32> to vector<8x256xf32>
    %c6_129 = arith.constant 6 : index
    %c0_130 = arith.constant 0 : index
    %c0_131 = arith.constant 0 : index
    %147 = vector.load %arg2[%c6_129, %c0_130, %c0_131] : memref<10x256x256xf32, #tpu.memory_space<vmem>>, vector<1x256x256xf32>
    %148 = vector.shape_cast %147 : vector<1x256x256xf32> to vector<256x256xf32>
    %cst_132 = arith.constant dense<0.000000e+00> : vector<8x256xf32>
    %149 = tpu.matmul %146, %148, %cst_132 {dimension_numbers = #tpu.dot_dimension_numbers<[1], [0], [0], [1], [0, 0, 1, 1], [], []>} : vector<8x256xf32>, vector<256x256xf32>, vector<8x256xf32> -> vector<8x256xf32>
    %c6_133 = arith.constant 6 : index
    %c0_134 = arith.constant 0 : index
    %c0_135 = arith.constant 0 : index
    %150 = vector.load %arg3[%c6_133, %c0_134, %c0_135] : memref<10x1x256xf32, #tpu.memory_space<vmem>>, vector<1x1x256xf32>
    %151 = vector.shape_cast %150 : vector<1x1x256xf32> to vector<1x256xf32>
    %152 = vector.broadcast %151 : vector<1x256xf32> to vector<8x256xf32>
    %153 = arith.addf %149, %152 : vector<8x256xf32>
    %c6_136 = arith.constant 6 : index
    %c0_137 = arith.constant 0 : index
    %c0_138 = arith.constant 0 : index
    %154 = vector.load %arg4[%c6_136, %c0_137, %c0_138] : memref<10x256x256xf32, #tpu.memory_space<vmem>>, vector<1x256x256xf32>
    %155 = vector.shape_cast %154 : vector<1x256x256xf32> to vector<256x256xf32>
    %cst_139 = arith.constant dense<0.000000e+00> : vector<8x256xf32>
    %156 = tpu.matmul %144, %155, %cst_139 {dimension_numbers = #tpu.dot_dimension_numbers<[1], [0], [0], [1], [0, 0, 1, 1], [], []>} : vector<8x256xf32>, vector<256x256xf32>, vector<8x256xf32> -> vector<8x256xf32>
    %157 = arith.addf %153, %156 : vector<8x256xf32>
    %cst_140 = arith.constant 0.000000e+00 : f32
    %158 = vector.broadcast %cst_140 : f32 to vector<8x256xf32>
    %159 = arith.maximumf %157, %158 : vector<8x256xf32>
    %c6_141 = arith.constant 6 : index
    %c0_142 = arith.constant 0 : index
    %c0_143 = arith.constant 0 : index
    %160 = vector.load %arg5[%c6_141, %c0_142, %c0_143] : memref<10x256x256xf32, #tpu.memory_space<vmem>>, vector<1x256x256xf32>
    %161 = vector.shape_cast %160 : vector<1x256x256xf32> to vector<256x256xf32>
    %cst_144 = arith.constant dense<0.000000e+00> : vector<8x256xf32>
    %162 = tpu.matmul %159, %161, %cst_144 {dimension_numbers = #tpu.dot_dimension_numbers<[1], [0], [0], [1], [0, 0, 1, 1], [], []>} : vector<8x256xf32>, vector<256x256xf32>, vector<8x256xf32> -> vector<8x256xf32>
    %c6_145 = arith.constant 6 : index
    %c0_146 = arith.constant 0 : index
    %c0_147 = arith.constant 0 : index
    %163 = vector.load %arg6[%c6_145, %c0_146, %c0_147] : memref<10x1x256xf32, #tpu.memory_space<vmem>>, vector<1x1x256xf32>
    %164 = vector.shape_cast %163 : vector<1x1x256xf32> to vector<1x256xf32>
    %165 = vector.broadcast %164 : vector<1x256xf32> to vector<8x256xf32>
    %166 = arith.addf %162, %165 : vector<8x256xf32>
    %167 = arith.addf %166, %144 : vector<8x256xf32>
    %cst_148 = arith.constant 0.000000e+00 : f32
    %168 = vector.broadcast %cst_148 : f32 to vector<8x256xf32>
    %169 = arith.maximumf %167, %168 : vector<8x256xf32>
    %c7 = arith.constant 7 : index
    %c0_149 = arith.constant 0 : index
    %c0_150 = arith.constant 0 : index
    %170 = vector.load %arg1[%c7, %c0_149, %c0_150] : memref<10x8x256xf32, #tpu.memory_space<vmem>>, vector<1x8x256xf32>
    %171 = vector.shape_cast %170 : vector<1x8x256xf32> to vector<8x256xf32>
    %c7_151 = arith.constant 7 : index
    %c0_152 = arith.constant 0 : index
    %c0_153 = arith.constant 0 : index
    %172 = vector.load %arg2[%c7_151, %c0_152, %c0_153] : memref<10x256x256xf32, #tpu.memory_space<vmem>>, vector<1x256x256xf32>
    %173 = vector.shape_cast %172 : vector<1x256x256xf32> to vector<256x256xf32>
    %cst_154 = arith.constant dense<0.000000e+00> : vector<8x256xf32>
    %174 = tpu.matmul %171, %173, %cst_154 {dimension_numbers = #tpu.dot_dimension_numbers<[1], [0], [0], [1], [0, 0, 1, 1], [], []>} : vector<8x256xf32>, vector<256x256xf32>, vector<8x256xf32> -> vector<8x256xf32>
    %c7_155 = arith.constant 7 : index
    %c0_156 = arith.constant 0 : index
    %c0_157 = arith.constant 0 : index
    %175 = vector.load %arg3[%c7_155, %c0_156, %c0_157] : memref<10x1x256xf32, #tpu.memory_space<vmem>>, vector<1x1x256xf32>
    %176 = vector.shape_cast %175 : vector<1x1x256xf32> to vector<1x256xf32>
    %177 = vector.broadcast %176 : vector<1x256xf32> to vector<8x256xf32>
    %178 = arith.addf %174, %177 : vector<8x256xf32>
    %c7_158 = arith.constant 7 : index
    %c0_159 = arith.constant 0 : index
    %c0_160 = arith.constant 0 : index
    %179 = vector.load %arg4[%c7_158, %c0_159, %c0_160] : memref<10x256x256xf32, #tpu.memory_space<vmem>>, vector<1x256x256xf32>
    %180 = vector.shape_cast %179 : vector<1x256x256xf32> to vector<256x256xf32>
    %cst_161 = arith.constant dense<0.000000e+00> : vector<8x256xf32>
    %181 = tpu.matmul %169, %180, %cst_161 {dimension_numbers = #tpu.dot_dimension_numbers<[1], [0], [0], [1], [0, 0, 1, 1], [], []>} : vector<8x256xf32>, vector<256x256xf32>, vector<8x256xf32> -> vector<8x256xf32>
    %182 = arith.addf %178, %181 : vector<8x256xf32>
    %cst_162 = arith.constant 0.000000e+00 : f32
    %183 = vector.broadcast %cst_162 : f32 to vector<8x256xf32>
    %184 = arith.maximumf %182, %183 : vector<8x256xf32>
    %c7_163 = arith.constant 7 : index
    %c0_164 = arith.constant 0 : index
    %c0_165 = arith.constant 0 : index
    %185 = vector.load %arg5[%c7_163, %c0_164, %c0_165] : memref<10x256x256xf32, #tpu.memory_space<vmem>>, vector<1x256x256xf32>
    %186 = vector.shape_cast %185 : vector<1x256x256xf32> to vector<256x256xf32>
    %cst_166 = arith.constant dense<0.000000e+00> : vector<8x256xf32>
    %187 = tpu.matmul %184, %186, %cst_166 {dimension_numbers = #tpu.dot_dimension_numbers<[1], [0], [0], [1], [0, 0, 1, 1], [], []>} : vector<8x256xf32>, vector<256x256xf32>, vector<8x256xf32> -> vector<8x256xf32>
    %c7_167 = arith.constant 7 : index
    %c0_168 = arith.constant 0 : index
    %c0_169 = arith.constant 0 : index
    %188 = vector.load %arg6[%c7_167, %c0_168, %c0_169] : memref<10x1x256xf32, #tpu.memory_space<vmem>>, vector<1x1x256xf32>
    %189 = vector.shape_cast %188 : vector<1x1x256xf32> to vector<1x256xf32>
    %190 = vector.broadcast %189 : vector<1x256xf32> to vector<8x256xf32>
    %191 = arith.addf %187, %190 : vector<8x256xf32>
    %192 = arith.addf %191, %169 : vector<8x256xf32>
    %cst_170 = arith.constant 0.000000e+00 : f32
    %193 = vector.broadcast %cst_170 : f32 to vector<8x256xf32>
    %194 = arith.maximumf %192, %193 : vector<8x256xf32>
    %c8 = arith.constant 8 : index
    %c0_171 = arith.constant 0 : index
    %c0_172 = arith.constant 0 : index
    %195 = vector.load %arg1[%c8, %c0_171, %c0_172] : memref<10x8x256xf32, #tpu.memory_space<vmem>>, vector<1x8x256xf32>
    %196 = vector.shape_cast %195 : vector<1x8x256xf32> to vector<8x256xf32>
    %c8_173 = arith.constant 8 : index
    %c0_174 = arith.constant 0 : index
    %c0_175 = arith.constant 0 : index
    %197 = vector.load %arg2[%c8_173, %c0_174, %c0_175] : memref<10x256x256xf32, #tpu.memory_space<vmem>>, vector<1x256x256xf32>
    %198 = vector.shape_cast %197 : vector<1x256x256xf32> to vector<256x256xf32>
    %cst_176 = arith.constant dense<0.000000e+00> : vector<8x256xf32>
    %199 = tpu.matmul %196, %198, %cst_176 {dimension_numbers = #tpu.dot_dimension_numbers<[1], [0], [0], [1], [0, 0, 1, 1], [], []>} : vector<8x256xf32>, vector<256x256xf32>, vector<8x256xf32> -> vector<8x256xf32>
    %c8_177 = arith.constant 8 : index
    %c0_178 = arith.constant 0 : index
    %c0_179 = arith.constant 0 : index
    %200 = vector.load %arg3[%c8_177, %c0_178, %c0_179] : memref<10x1x256xf32, #tpu.memory_space<vmem>>, vector<1x1x256xf32>
    %201 = vector.shape_cast %200 : vector<1x1x256xf32> to vector<1x256xf32>
    %202 = vector.broadcast %201 : vector<1x256xf32> to vector<8x256xf32>
    %203 = arith.addf %199, %202 : vector<8x256xf32>
    %c8_180 = arith.constant 8 : index
    %c0_181 = arith.constant 0 : index
    %c0_182 = arith.constant 0 : index
    %204 = vector.load %arg4[%c8_180, %c0_181, %c0_182] : memref<10x256x256xf32, #tpu.memory_space<vmem>>, vector<1x256x256xf32>
    %205 = vector.shape_cast %204 : vector<1x256x256xf32> to vector<256x256xf32>
    %cst_183 = arith.constant dense<0.000000e+00> : vector<8x256xf32>
    %206 = tpu.matmul %194, %205, %cst_183 {dimension_numbers = #tpu.dot_dimension_numbers<[1], [0], [0], [1], [0, 0, 1, 1], [], []>} : vector<8x256xf32>, vector<256x256xf32>, vector<8x256xf32> -> vector<8x256xf32>
    %207 = arith.addf %203, %206 : vector<8x256xf32>
    %cst_184 = arith.constant 0.000000e+00 : f32
    %208 = vector.broadcast %cst_184 : f32 to vector<8x256xf32>
    %209 = arith.maximumf %207, %208 : vector<8x256xf32>
    %c8_185 = arith.constant 8 : index
    %c0_186 = arith.constant 0 : index
    %c0_187 = arith.constant 0 : index
    %210 = vector.load %arg5[%c8_185, %c0_186, %c0_187] : memref<10x256x256xf32, #tpu.memory_space<vmem>>, vector<1x256x256xf32>
    %211 = vector.shape_cast %210 : vector<1x256x256xf32> to vector<256x256xf32>
    %cst_188 = arith.constant dense<0.000000e+00> : vector<8x256xf32>
    %212 = tpu.matmul %209, %211, %cst_188 {dimension_numbers = #tpu.dot_dimension_numbers<[1], [0], [0], [1], [0, 0, 1, 1], [], []>} : vector<8x256xf32>, vector<256x256xf32>, vector<8x256xf32> -> vector<8x256xf32>
    %c8_189 = arith.constant 8 : index
    %c0_190 = arith.constant 0 : index
    %c0_191 = arith.constant 0 : index
    %213 = vector.load %arg6[%c8_189, %c0_190, %c0_191] : memref<10x1x256xf32, #tpu.memory_space<vmem>>, vector<1x1x256xf32>
    %214 = vector.shape_cast %213 : vector<1x1x256xf32> to vector<1x256xf32>
    %215 = vector.broadcast %214 : vector<1x256xf32> to vector<8x256xf32>
    %216 = arith.addf %212, %215 : vector<8x256xf32>
    %217 = arith.addf %216, %194 : vector<8x256xf32>
    %cst_192 = arith.constant 0.000000e+00 : f32
    %218 = vector.broadcast %cst_192 : f32 to vector<8x256xf32>
    %219 = arith.maximumf %217, %218 : vector<8x256xf32>
    %c9 = arith.constant 9 : index
    %c0_193 = arith.constant 0 : index
    %c0_194 = arith.constant 0 : index
    %220 = vector.load %arg1[%c9, %c0_193, %c0_194] : memref<10x8x256xf32, #tpu.memory_space<vmem>>, vector<1x8x256xf32>
    %221 = vector.shape_cast %220 : vector<1x8x256xf32> to vector<8x256xf32>
    %c9_195 = arith.constant 9 : index
    %c0_196 = arith.constant 0 : index
    %c0_197 = arith.constant 0 : index
    %222 = vector.load %arg2[%c9_195, %c0_196, %c0_197] : memref<10x256x256xf32, #tpu.memory_space<vmem>>, vector<1x256x256xf32>
    %223 = vector.shape_cast %222 : vector<1x256x256xf32> to vector<256x256xf32>
    %cst_198 = arith.constant dense<0.000000e+00> : vector<8x256xf32>
    %224 = tpu.matmul %221, %223, %cst_198 {dimension_numbers = #tpu.dot_dimension_numbers<[1], [0], [0], [1], [0, 0, 1, 1], [], []>} : vector<8x256xf32>, vector<256x256xf32>, vector<8x256xf32> -> vector<8x256xf32>
    %c9_199 = arith.constant 9 : index
    %c0_200 = arith.constant 0 : index
    %c0_201 = arith.constant 0 : index
    %225 = vector.load %arg3[%c9_199, %c0_200, %c0_201] : memref<10x1x256xf32, #tpu.memory_space<vmem>>, vector<1x1x256xf32>
    %226 = vector.shape_cast %225 : vector<1x1x256xf32> to vector<1x256xf32>
    %227 = vector.broadcast %226 : vector<1x256xf32> to vector<8x256xf32>
    %228 = arith.addf %224, %227 : vector<8x256xf32>
    %c9_202 = arith.constant 9 : index
    %c0_203 = arith.constant 0 : index
    %c0_204 = arith.constant 0 : index
    %229 = vector.load %arg4[%c9_202, %c0_203, %c0_204] : memref<10x256x256xf32, #tpu.memory_space<vmem>>, vector<1x256x256xf32>
    %230 = vector.shape_cast %229 : vector<1x256x256xf32> to vector<256x256xf32>
    %cst_205 = arith.constant dense<0.000000e+00> : vector<8x256xf32>
    %231 = tpu.matmul %219, %230, %cst_205 {dimension_numbers = #tpu.dot_dimension_numbers<[1], [0], [0], [1], [0, 0, 1, 1], [], []>} : vector<8x256xf32>, vector<256x256xf32>, vector<8x256xf32> -> vector<8x256xf32>
    %232 = arith.addf %228, %231 : vector<8x256xf32>
    %cst_206 = arith.constant 0.000000e+00 : f32
    %233 = vector.broadcast %cst_206 : f32 to vector<8x256xf32>
    %234 = arith.maximumf %232, %233 : vector<8x256xf32>
    %c9_207 = arith.constant 9 : index
    %c0_208 = arith.constant 0 : index
    %c0_209 = arith.constant 0 : index
    %235 = vector.load %arg5[%c9_207, %c0_208, %c0_209] : memref<10x256x256xf32, #tpu.memory_space<vmem>>, vector<1x256x256xf32>
    %236 = vector.shape_cast %235 : vector<1x256x256xf32> to vector<256x256xf32>
    %cst_210 = arith.constant dense<0.000000e+00> : vector<8x256xf32>
    %237 = tpu.matmul %234, %236, %cst_210 {dimension_numbers = #tpu.dot_dimension_numbers<[1], [0], [0], [1], [0, 0, 1, 1], [], []>} : vector<8x256xf32>, vector<256x256xf32>, vector<8x256xf32> -> vector<8x256xf32>
    %c9_211 = arith.constant 9 : index
    %c0_212 = arith.constant 0 : index
    %c0_213 = arith.constant 0 : index
    %238 = vector.load %arg6[%c9_211, %c0_212, %c0_213] : memref<10x1x256xf32, #tpu.memory_space<vmem>>, vector<1x1x256xf32>
    %239 = vector.shape_cast %238 : vector<1x1x256xf32> to vector<1x256xf32>
    %240 = vector.broadcast %239 : vector<1x256xf32> to vector<8x256xf32>
    %241 = arith.addf %237, %240 : vector<8x256xf32>
    %242 = arith.addf %241, %219 : vector<8x256xf32>
    %cst_214 = arith.constant 0.000000e+00 : f32
    %243 = vector.broadcast %cst_214 : f32 to vector<8x256xf32>
    %244 = arith.maximumf %242, %243 : vector<8x256xf32>
    %c0_215 = arith.constant 0 : index
    %c0_216 = arith.constant 0 : index
    %245 = vector.load %arg7[%c0_215, %c0_216] : memref<256x256xf32, #tpu.memory_space<vmem>>, vector<256x256xf32>
    %cst_217 = arith.constant dense<0.000000e+00> : vector<8x256xf32>
    %246 = tpu.matmul %244, %245, %cst_217 {dimension_numbers = #tpu.dot_dimension_numbers<[1], [0], [0], [1], [0, 0, 1, 1], [], []>} : vector<8x256xf32>, vector<256x256xf32>, vector<8x256xf32> -> vector<8x256xf32>
    %c0_218 = arith.constant 0 : index
    %c0_219 = arith.constant 0 : index
    %247 = vector.load %arg8[%c0_218, %c0_219] : memref<1x256xf32, #tpu.memory_space<vmem>>, vector<1x256xf32>
    %248 = vector.broadcast %247 : vector<1x256xf32> to vector<8x256xf32>
    %249 = arith.addf %246, %248 : vector<8x256xf32>
    %cst_220 = arith.constant 0.000000e+00 : f32
    %250 = vector.broadcast %cst_220 : f32 to vector<8x256xf32>
    %251 = arith.maximumf %249, %250 : vector<8x256xf32>
    %c0_221 = arith.constant 0 : index
    %c0_222 = arith.constant 0 : index
    %252 = vector.load %arg9[%c0_221, %c0_222] : memref<256x256xf32, #tpu.memory_space<vmem>>, vector<256x256xf32>
    %cst_223 = arith.constant dense<0.000000e+00> : vector<8x256xf32>
    %253 = tpu.matmul %251, %252, %cst_223 {dimension_numbers = #tpu.dot_dimension_numbers<[1], [0], [0], [1], [0, 0, 1, 1], [], []>} : vector<8x256xf32>, vector<256x256xf32>, vector<8x256xf32> -> vector<8x256xf32>
    %c0_224 = arith.constant 0 : index
    %c0_225 = arith.constant 0 : index
    %254 = vector.load %arg10[%c0_224, %c0_225] : memref<1x256xf32, #tpu.memory_space<vmem>>, vector<1x256xf32>
    %255 = vector.broadcast %254 : vector<1x256xf32> to vector<8x256xf32>
    %256 = arith.addf %253, %255 : vector<8x256xf32>
    %cst_226 = arith.constant 0.000000e+00 : f32
    %257 = vector.broadcast %cst_226 : f32 to vector<8x256xf32>
    %258 = arith.maximumf %256, %257 : vector<8x256xf32>
    %c0_227 = arith.constant 0 : index
    %c0_228 = arith.constant 0 : index
    %259 = vector.load %arg11[%c0_227, %c0_228] : memref<256x128xf32, #tpu.memory_space<vmem>>, vector<256x128xf32>
    %cst_229 = arith.constant dense<0.000000e+00> : vector<8x128xf32>
    %260 = tpu.matmul %258, %259, %cst_229 {dimension_numbers = #tpu.dot_dimension_numbers<[1], [0], [0], [1], [0, 0, 1, 1], [], []>} : vector<8x256xf32>, vector<256x128xf32>, vector<8x128xf32> -> vector<8x128xf32>
    %c0_230 = arith.constant 0 : index
    %c0_231 = arith.constant 0 : index
    %261 = vector.load %arg12[%c0_230, %c0_231] : memref<1x128xf32, #tpu.memory_space<vmem>>, vector<1x128xf32>
    %262 = vector.broadcast %261 : vector<1x128xf32> to vector<8x128xf32>
    %263 = arith.addf %260, %262 : vector<8x128xf32>
    %cst_232 = arith.constant 0.000000e+00 : f32
    %264 = vector.broadcast %cst_232 : f32 to vector<8x128xf32>
    %265 = arith.maximumf %263, %264 : vector<8x128xf32>
    %c0_233 = arith.constant 0 : index
    %c0_234 = arith.constant 0 : index
    %266 = vector.load %arg13[%c0_233, %c0_234] : memref<8x128xf32, #tpu.memory_space<vmem>>, vector<8x128xf32>
    tpu.vector_store %arg13[%c0_233, %c0_234], %265 {strides = array<i32>} : memref<8x128xf32, #tpu.memory_space<vmem>>, vector<8x128xf32>,
    return
  }
  func.func @transform_0(%arg0: i32) -> (i32, i32, i32) {
    %c0_i32 = arith.constant 0 : i32
    %c0_i32_0 = arith.constant 0 : i32
    %c0_i32_1 = arith.constant 0 : i32
    return %c0_i32, %arg0, %c0_i32_0 : i32, i32, i32
  }
  func.func @transform_1(%arg0: i32) -> (i32, i32, i32) {
    %c0_i32 = arith.constant 0 : i32
    %c0_i32_0 = arith.constant 0 : i32
    %c0_i32_1 = arith.constant 0 : i32
    %c0_i32_2 = arith.constant 0 : i32
    return %c0_i32, %c0_i32_0, %c0_i32_1 : i32, i32, i32
  }
  func.func @transform_2(%arg0: i32) -> (i32, i32, i32) {
    %c0_i32 = arith.constant 0 : i32
    %c0_i32_0 = arith.constant 0 : i32
    %c0_i32_1 = arith.constant 0 : i32
    %c0_i32_2 = arith.constant 0 : i32
    return %c0_i32, %c0_i32_0, %c0_i32_1 : i32, i32, i32
  }
  func.func @transform_3(%arg0: i32) -> (i32, i32, i32) {
    %c0_i32 = arith.constant 0 : i32
    %c0_i32_0 = arith.constant 0 : i32
    %c0_i32_1 = arith.constant 0 : i32
    %c0_i32_2 = arith.constant 0 : i32
    return %c0_i32, %c0_i32_0, %c0_i32_1 : i32, i32, i32
  }
  func.func @transform_4(%arg0: i32) -> (i32, i32, i32) {
    %c0_i32 = arith.constant 0 : i32
    %c0_i32_0 = arith.constant 0 : i32
    %c0_i32_1 = arith.constant 0 : i32
    %c0_i32_2 = arith.constant 0 : i32
    return %c0_i32, %c0_i32_0, %c0_i32_1 : i32, i32, i32
  }
  func.func @transform_5(%arg0: i32) -> (i32, i32, i32) {
    %c0_i32 = arith.constant 0 : i32
    %c0_i32_0 = arith.constant 0 : i32
    %c0_i32_1 = arith.constant 0 : i32
    %c0_i32_2 = arith.constant 0 : i32
    return %c0_i32, %c0_i32_0, %c0_i32_1 : i32, i32, i32
  }
  func.func @transform_6(%arg0: i32) -> (i32, i32) {
    %c0_i32 = arith.constant 0 : i32
    %c0_i32_0 = arith.constant 0 : i32
    %c0_i32_1 = arith.constant 0 : i32
    return %c0_i32, %c0_i32_0 : i32, i32
  }
  func.func @transform_7(%arg0: i32) -> (i32, i32) {
    %c0_i32 = arith.constant 0 : i32
    %c0_i32_0 = arith.constant 0 : i32
    %c0_i32_1 = arith.constant 0 : i32
    return %c0_i32, %c0_i32_0 : i32, i32
  }
  func.func @transform_8(%arg0: i32) -> (i32, i32) {
    %c0_i32 = arith.constant 0 : i32
    %c0_i32_0 = arith.constant 0 : i32
    %c0_i32_1 = arith.constant 0 : i32
    return %c0_i32, %c0_i32_0 : i32, i32
  }
  func.func @transform_9(%arg0: i32) -> (i32, i32) {
    %c0_i32 = arith.constant 0 : i32
    %c0_i32_0 = arith.constant 0 : i32
    %c0_i32_1 = arith.constant 0 : i32
    return %c0_i32, %c0_i32_0 : i32, i32
  }
  func.func @transform_10(%arg0: i32) -> (i32, i32) {
    %c0_i32 = arith.constant 0 : i32
    %c0_i32_0 = arith.constant 0 : i32
    %c0_i32_1 = arith.constant 0 : i32
    return %c0_i32, %c0_i32_0 : i32, i32
  }
  func.func @transform_11(%arg0: i32) -> (i32, i32) {
    %c0_i32 = arith.constant 0 : i32
    %c0_i32_0 = arith.constant 0 : i32
    %c0_i32_1 = arith.constant 0 : i32
    return %c0_i32, %c0_i32_0 : i32, i32
  }
  func.func @transform_12(%arg0: i32) -> (i32, i32) {
    %c0_i32 = arith.constant 0 : i32
    %c0_i32_0 = arith.constant 0 : i32
    return %arg0, %c0_i32 : i32, i32
  }
}

</mosaic_0001>

<llo_original>
// kernel: tpu_custom_call.1
$region0: #{tpu_custom_call.1}
  #allocation0 [shape = 'u32[]', space=smem, size = 0x4, offset = 0x4, fixed_abs, tag = 'smem constant byte address 0x4 - core index']
  #allocation1 [shape = 'u32[72,128]{1,0:T(1,128)}', space=vmem, size = 0x9000, scoped, tag = 'internal scratch']
  %s0 = inlined_call_operand.hbm [shape: f32[10,8,256], index: 0, kind: input, shape index: {}]
  %s1 = inlined_call_operand.hbm [shape: f32[10,256,256], index: 1, kind: input, shape index: {}]
  %s2 = inlined_call_operand.hbm [shape: f32[10,1,256], index: 2, kind: input, shape index: {}]
  %s3 = inlined_call_operand.hbm [shape: f32[10,256,256], index: 3, kind: input, shape index: {}]
  %s4 = inlined_call_operand.hbm [shape: f32[10,256,256], index: 4, kind: input, shape index: {}]
  %s5 = inlined_call_operand.hbm [shape: f32[10,1,256], index: 5, kind: input, shape index: {}]
  %s6 = inlined_call_operand.hbm [shape: f32[256,256], index: 6, kind: input, shape index: {}]
  %s7 = inlined_call_operand.hbm [shape: f32[1,256], index: 7, kind: input, shape index: {}]
  %s8 = inlined_call_operand.hbm [shape: f32[256,256], index: 8, kind: input, shape index: {}]
  %s9 = inlined_call_operand.hbm [shape: f32[1,256], index: 9, kind: input, shape index: {}]
  %s10 = inlined_call_operand.hbm [shape: f32[256,128], index: 10, kind: input, shape index: {}]
  %s11 = inlined_call_operand.hbm [shape: f32[1,128], index: 11, kind: input, shape index: {}]
  %s12 = inlined_call_operand.hbm [shape: f32[8,128], index: 12, kind: output, shape index: {}]
  %s13 = sld [smem:[#allocation0]]
  $region106: #{tpu_custom_call.1} parent=0
    _
  %s15 = ssub.s32 1, %s13
  %s16 = scalar_select 0, %s15, %s13
  $region1: #{tpu_custom_call.1} parent=0
    #allocation2 [shape = 'u8[81920]{0}', space=vmem, size = 0x14000, scoped, tag = 'input window, operand 0, single buffered']
    #allocation3 [shape = 's32[1]{0}', space=sflag, size = 0x4, scoped, tag = 'scoped memory for tpu_custom_call.1']
    #allocation4 [shape = 's32[1]{0}', space=sflag, size = 0x4, scoped, tag = 'scoped memory for tpu_custom_call.1']
    #allocation5 [shape = 'u8[2621440]{0}', space=vmem, size = 0x280000, scoped, tag = 'input window, operand 1, single buffered']
    #allocation6 [shape = 's32[1]{0}', space=sflag, size = 0x4, scoped, tag = 'scoped memory for tpu_custom_call.1']
    #allocation7 [shape = 'u8[10240]{0}', space=vmem, size = 0x2800, scoped, tag = 'input window, operand 2, single buffered']
    #allocation8 [shape = 'u8[2621440]{0}', space=vmem, size = 0x280000, scoped, tag = 'input window, operand 3, single buffered']
    #allocation9 [shape = 's32[1]{0}', space=sflag, size = 0x4, scoped, tag = 'scoped memory for tpu_custom_call.1']
    #allocation10 [shape = 'u8[2621440]{0}', space=vmem, size = 0x280000, scoped, tag = 'input window, operand 4, single buffered']
    #allocation11 [shape = 'u8[10240]{0}', space=vmem, size = 0x2800, scoped, tag = 'input window, operand 5, single buffered']
    #allocation12 [shape = 's32[1]{0}', space=sflag, size = 0x4, scoped, tag = 'scoped memory for tpu_custom_call.1']
    #allocation13 [shape = 'u8[262144]{0}', space=vmem, size = 0x40000, scoped, tag = 'input window, operand 6, single buffered']
    #allocation14 [shape = 'u8[1024]{0}', space=vmem, size = 0x400, scoped, tag = 'input window, operand 7, single buffered']
    #allocation15 [shape = 's32[1]{0}', space=sflag, size = 0x4, scoped, tag = 'scoped memory for tpu_custom_call.1']
    #allocation16 [shape = 'u8[262144]{0}', space=vmem, size = 0x40000, scoped, tag = 'input window, operand 8, single buffered']
    #allocation17 [shape = 'u8[1024]{0}', space=vmem, size = 0x400, scoped, tag = 'input window, operand 9, single buffered']
    #allocation18 [shape = 's32[1]{0}', space=sflag, size = 0x4, scoped, tag = 'scoped memory for tpu_custom_call.1']
    #allocation19 [shape = 'u8[131072]{0}', space=vmem, size = 0x20000, scoped, tag = 'input window, operand 10, single buffered']
    #allocation20 [shape = 'u8[512]{0}', space=vmem, size = 0x400, scoped, tag = 'input window, operand 11, single buffered']
    #allocation21 [shape = 's32[1]{0}', space=sflag, size = 0x4, scoped, tag = 'scoped memory for tpu_custom_call.1']
    #allocation22 [shape = 'u8[4096]{0}', space=vmem, size = 0x1000, scoped, tag = 'output window, operand 0, single buffered']
    %17 = vsyncpa [#allocation3], 0
    %18 = vsyncpa [#allocation6], 0
    %19 = vsyncpa [#allocation9], 0
    %20 = vsyncpa [#allocation12], 0
    %21 = vsyncpa [#allocation15], 0
    %22 = vsyncpa [#allocation18], 0
    %23 = vsyncpa [#allocation21], 0
    %24 = vsyncpa [#allocation4], 0
    // Predicated region
    $region2: #{tpu_custom_call.1} parent=1 // pred_check
      _
    $region3: #{tpu_custom_call.1} parent=1 // pred_check_branch
      %26 = sbr.rel (0) target = $region5
    $region4: #{tpu_custom_call.1} parent=1 // pred_region
      %28 = vsyncadd [#allocation3], 0
      %s29 = sshll.u32 %s0, 4
      %s30 = int_to_ptr.hbm [resolvable:$true] %s29
      %s31 = sshll.u32 [#allocation2], 4
      %s32 = int_to_ptr.vmem [resolvable:$true] %s31
      %37 = dma.hbm_to_vmem [thread:$0]  %s30, 2560, %s32, [#allocation3], 256, 256, 16
    $region5: #{tpu_custom_call.1} parent=1 // pred_fallthru
      _
    // Predicated region
    $region6: #{tpu_custom_call.1} parent=1 // pred_check
      _
    $region7: #{tpu_custom_call.1} parent=1 // pred_check_branch
      %39 = sbr.rel (0) target = $region9
    $region8: #{tpu_custom_call.1} parent=1 // pred_region
      %41 = vsyncadd [#allocation6], 0
      %s42 = sshll.u32 %s1, 4
      %s43 = int_to_ptr.hbm [resolvable:$true] %s42
      %s44 = sshll.u32 [#allocation5], 4
      %s45 = int_to_ptr.vmem [resolvable:$true] %s44
      %50 = dma.hbm_to_vmem [thread:$0]  %s43, 81920, %s45, [#allocation6], 256, 256, 16
    $region9: #{tpu_custom_call.1} parent=1 // pred_fallthru
      _
    // Predicated region
    $region10: #{tpu_custom_call.1} parent=1 // pred_check
      _
    $region11: #{tpu_custom_call.1} parent=1 // pred_check_branch
      %52 = sbr.rel (0) target = $region13
    $region12: #{tpu_custom_call.1} parent=1 // pred_region
      %54 = vsyncadd [#allocation6], 0
      %s55 = sshll.u32 %s2, 4
      %s56 = int_to_ptr.hbm [resolvable:$true] %s55
      %s57 = sshll.u32 [#allocation7], 4
      %s58 = int_to_ptr.vmem [resolvable:$true] %s57
      %63 = dma.hbm_to_vmem [thread:$0]  %s56, 320, %s58, [#allocation6], 32, 32, 2
    $region13: #{tpu_custom_call.1} parent=1 // pred_fallthru
      _
    // Predicated region
    $region14: #{tpu_custom_call.1} parent=1 // pred_check
      _
    $region15: #{tpu_custom_call.1} parent=1 // pred_check_branch
      %65 = sbr.rel (0) target = $region17
    $region16: #{tpu_custom_call.1} parent=1 // pred_region
      %67 = vsyncadd [#allocation9], 0
      %s68 = sshll.u32 %s3, 4
      %s69 = int_to_ptr.hbm [resolvable:$true] %s68
      %s70 = sshll.u32 [#allocation8], 4
      %s71 = int_to_ptr.vmem [resolvable:$true] %s70
      %76 = dma.hbm_to_vmem [thread:$0]  %s69, 81920, %s71, [#allocation9], 256, 256, 16
    $region17: #{tpu_custom_call.1} parent=1 // pred_fallthru
      _
    // Predicated region
    $region18: #{tpu_custom_call.1} parent=1 // pred_check
      _
    $region19: #{tpu_custom_call.1} parent=1 // pred_check_branch
      %78 = sbr.rel (0) target = $region21
    $region20: #{tpu_custom_call.1} parent=1 // pred_region
      %80 = vsyncadd [#allocation9], 0
      %s81 = sshll.u32 %s4, 4
      %s82 = int_to_ptr.hbm [resolvable:$true] %s81
      %s83 = sshll.u32 [#allocation10], 4
      %s84 = int_to_ptr.vmem [resolvable:$true] %s83
      %89 = dma.hbm_to_vmem [thread:$0]  %s82, 81920, %s84, [#allocation9], 256, 256, 16
    $region21: #{tpu_custom_call.1} parent=1 // pred_fallthru
      _
    // Predicated region
    $region22: #{tpu_custom_call.1} parent=1 // pred_check
      _
    $region23: #{tpu_custom_call.1} parent=1 // pred_check_branch
      %91 = sbr.rel (0) target = $region25
    $region24: #{tpu_custom_call.1} parent=1 // pred_region
      %93 = vsyncadd [#allocation12], 0
      %s94 = sshll.u32 %s5, 4
      %s95 = int_to_ptr.hbm [resolvable:$true] %s94
      %s96 = sshll.u32 [#allocation11], 4
      %s97 = int_to_ptr.vmem [resolvable:$true] %s96
      %102 = dma.hbm_to_vmem [thread:$0]  %s95, 320, %s97, [#allocation12], 32, 32, 2
    $region25: #{tpu_custom_call.1} parent=1 // pred_fallthru
      _
    // Predicated region
    $region26: #{tpu_custom_call.1} parent=1 // pred_check
      _
    $region27: #{tpu_custom_call.1} parent=1 // pred_check_branch
      %104 = sbr.rel (0) target = $region29
    $region28: #{tpu_custom_call.1} parent=1 // pred_region
      %106 = vsyncadd [#allocation12], 0
      %s107 = sshll.u32 %s6, 4
      %s108 = int_to_ptr.hbm [resolvable:$true] %s107
      %s109 = sshll.u32 [#allocation13], 4
      %s110 = int_to_ptr.vmem [resolvable:$true] %s109
      %115 = dma.hbm_to_vmem [thread:$0]  %s108, 8192, %s110, [#allocation12], 256, 256, 16
    $region29: #{tpu_custom_call.1} parent=1 // pred_fallthru
      _
    // Predicated region
    $region30: #{tpu_custom_call.1} parent=1 // pred_check
      _
    $region31: #{tpu_custom_call.1} parent=1 // pred_check_branch
      %117 = sbr.rel (0) target = $region33
    $region32: #{tpu_custom_call.1} parent=1 // pred_region
      %119 = vsyncadd [#allocation15], 0
      %s121 = sshll.u32 %s7, 4
      %s122 = int_to_ptr.hbm [resolvable:$true] %s121
      %s123 = sshll.u32 [#allocation14], 4
      %s124 = int_to_ptr.vmem [resolvable:$true] %s123
      %126 = dma.hbm_to_vmem [thread:$0]  %s122, 32, %s124, [#allocation15]
    $region33: #{tpu_custom_call.1} parent=1 // pred_fallthru
      _
    // Predicated region
    $region34: #{tpu_custom_call.1} parent=1 // pred_check
      _
    $region35: #{tpu_custom_call.1} parent=1 // pred_check_branch
      %128 = sbr.rel (0) target = $region37
    $region36: #{tpu_custom_call.1} parent=1 // pred_region
      %130 = vsyncadd [#allocation15], 0
      %s131 = sshll.u32 %s8, 4
      %s132 = int_to_ptr.hbm [resolvable:$true] %s131
      %s133 = sshll.u32 [#allocation16], 4
      %s134 = int_to_ptr.vmem [resolvable:$true] %s133
      %139 = dma.hbm_to_vmem [thread:$0]  %s132, 8192, %s134, [#allocation15], 256, 256, 16
    $region37: #{tpu_custom_call.1} parent=1 // pred_fallthru
      _
    // Predicated region
    $region38: #{tpu_custom_call.1} parent=1 // pred_check
      _
    $region39: #{tpu_custom_call.1} parent=1 // pred_check_branch
      %141 = sbr.rel (0) target = $region41
    $region40: #{tpu_custom_call.1} parent=1 // pred_region
      %143 = vsyncadd [#allocation18], 0
      %s145 = sshll.u32 %s9, 4
      %s146 = int_to_ptr.hbm [resolvable:$true] %s145
      %s147 = sshll.u32 [#allocation17], 4
      %s148 = int_to_ptr.vmem [resolvable:$true] %s147
      %150 = dma.hbm_to_vmem [thread:$0]  %s146, 32, %s148, [#allocation18]
    $region41: #{tpu_custom_call.1} parent=1 // pred_fallthru
      _
    // Predicated region
    $region42: #{tpu_custom_call.1} parent=1 // pred_check
      _
    $region43: #{tpu_custom_call.1} parent=1 // pred_check_branch
      %152 = sbr.rel (0) target = $region45
    $region44: #{tpu_custom_call.1} parent=1 // pred_region
      %154 = vsyncadd [#allocation18], 0
      %s155 = sshll.u32 %s10, 4
      %s156 = int_to_ptr.hbm [resolvable:$true] %s155
      %s157 = sshll.u32 [#allocation19], 4
      %s158 = int_to_ptr.vmem [resolvable:$true] %s157
      %163 = dma.hbm_to_vmem [thread:$0]  %s156, 4096, %s158, [#allocation18], 128, 128, 8
    $region45: #{tpu_custom_call.1} parent=1 // pred_fallthru
      _
    // Predicated region
    $region46: #{tpu_custom_call.1} parent=1 // pred_check
      _
    $region47: #{tpu_custom_call.1} parent=1 // pred_check_branch
      %165 = sbr.rel (0) target = $region49
    $region48: #{tpu_custom_call.1} parent=1 // pred_region
      %167 = vsyncadd [#allocation21], 0
      %s169 = sshll.u32 %s11, 4
      %s170 = int_to_ptr.hbm [resolvable:$true] %s169
      %s171 = sshll.u32 [#allocation20], 4
      %s172 = int_to_ptr.vmem [resolvable:$true] %s171
      %174 = dma.hbm_to_vmem [thread:$0]  %s170, 16, %s172, [#allocation21]
    $region49: #{tpu_custom_call.1} parent=1 // pred_fallthru
      _
    // Predicated region
    $region50: #{tpu_custom_call.1} parent=1 // pred_check
      _
    $region51: #{tpu_custom_call.1} parent=1 // pred_check_branch
      %176 = sbr.rel (0) target = $region53
    $region52: #{tpu_custom_call.1} parent=1 // pred_region
      %178 = dma.done [#allocation3], 2560
    $region53: #{tpu_custom_call.1} parent=1 // pred_fallthru
      _
    // Predicated region
    $region54: #{tpu_custom_call.1} parent=1 // pred_check
      _
    $region55: #{tpu_custom_call.1} parent=1 // pred_check_branch
      %180 = sbr.rel (0) target = $region57
    $region56: #{tpu_custom_call.1} parent=1 // pred_region
      %182 = dma.done [#allocation6], 81920
    $region57: #{tpu_custom_call.1} parent=1 // pred_fallthru
      _
    // Predicated region
    $region58: #{tpu_custom_call.1} parent=1 // pred_check
      _
    $region59: #{tpu_custom_call.1} parent=1 // pred_check_branch
      %184 = sbr.rel (0) target = $region61
    $region60: #{tpu_custom_call.1} parent=1 // pred_region
      %186 = dma.done [#allocation6], 320
    $region61: #{tpu_custom_call.1} parent=1 // pred_fallthru
      _
    // Predicated region
    $region62: #{tpu_custom_call.1} parent=1 // pred_check
      _
    $region63: #{tpu_custom_call.1} parent=1 // pred_check_branch
      %188 = sbr.rel (0) target = $region65
    $region64: #{tpu_custom_call.1} parent=1 // pred_region
      %190 = dma.done [#allocation9], 81920
    $region65: #{tpu_custom_call.1} parent=1 // pred_fallthru
      _
    // Predicated region
    $region66: #{tpu_custom_call.1} parent=1 // pred_check
      _
    $region67: #{tpu_custom_call.1} parent=1 // pred_check_branch
      %192 = sbr.rel (0) target = $region69
    $region68: #{tpu_custom_call.1} parent=1 // pred_region
      %194 = dma.done [#allocation9], 81920
    $region69: #{tpu_custom_call.1} parent=1 // pred_fallthru
      _
    // Predicated region
    $region70: #{tpu_custom_call.1} parent=1 // pred_check
      _
    $region71: #{tpu_custom_call.1} parent=1 // pred_check_branch
      %196 = sbr.rel (0) target = $region73
    $region72: #{tpu_custom_call.1} parent=1 // pred_region
      %198 = dma.done [#allocation12], 320
    $region73: #{tpu_custom_call.1} parent=1 // pred_fallthru
      _
    // Predicated region
    $region74: #{tpu_custom_call.1} parent=1 // pred_check
      _
    $region75: #{tpu_custom_call.1} parent=1 // pred_check_branch
      %200 = sbr.rel (0) target = $region77
    $region76: #{tpu_custom_call.1} parent=1 // pred_region
      %202 = dma.done [#allocation12], 8192
    $region77: #{tpu_custom_call.1} parent=1 // pred_fallthru
      _
    // Predicated region
    $region78: #{tpu_custom_call.1} parent=1 // pred_check
      _
    $region79: #{tpu_custom_call.1} parent=1 // pred_check_branch
      %204 = sbr.rel (0) target = $region81
    $region80: #{tpu_custom_call.1} parent=1 // pred_region
      %206 = dma.done [#allocation15], 32
    $region81: #{tpu_custom_call.1} parent=1 // pred_fallthru
      _
    // Predicated region
    $region82: #{tpu_custom_call.1} parent=1 // pred_check
      _
    $region83: #{tpu_custom_call.1} parent=1 // pred_check_branch
      %208 = sbr.rel (0) target = $region85
    $region84: #{tpu_custom_call.1} parent=1 // pred_region
      %210 = dma.done [#allocation15], 8192
    $region85: #{tpu_custom_call.1} parent=1 // pred_fallthru
      _
    // Predicated region
    $region86: #{tpu_custom_call.1} parent=1 // pred_check
      _
    $region87: #{tpu_custom_call.1} parent=1 // pred_check_branch
      %212 = sbr.rel (0) target = $region89
    $region88: #{tpu_custom_call.1} parent=1 // pred_region
      %214 = dma.done [#allocation18], 32
    $region89: #{tpu_custom_call.1} parent=1 // pred_fallthru
      _
    // Predicated region
    $region90: #{tpu_custom_call.1} parent=1 // pred_check
      _
    $region91: #{tpu_custom_call.1} parent=1 // pred_check_branch
      %216 = sbr.rel (0) target = $region93
    $region92: #{tpu_custom_call.1} parent=1 // pred_region
      %218 = dma.done [#allocation18], 4096
    $region93: #{tpu_custom_call.1} parent=1 // pred_fallthru
      _
    // Predicated region
    $region94: #{tpu_custom_call.1} parent=1 // pred_check
      _
    $region95: #{tpu_custom_call.1} parent=1 // pred_check_branch
      %220 = sbr.rel (0) target = $region97
    $region96: #{tpu_custom_call.1} parent=1 // pred_region
      %222 = dma.done [#allocation21], 16
    $region97: #{tpu_custom_call.1} parent=1 // pred_fallthru
      _
    %v223 = vld [vmem:[#allocation2] sm:$0xff]
    %v224 = vld [vmem:[#allocation2 + $0x8] sm:$0xff]
    %v225 = vld [vmem:[#allocation5] sm:$0xff]
    %v226 = vld [vmem:[#allocation5 + $0x8] sm:$0xff]
    %v227 = vld [vmem:[#allocation5 + $0x10] sm:$0xff]
    %v228 = vld [vmem:[#allocation5 + $0x18] sm:$0xff]
    %v229 = vld [vmem:[#allocation5 + $0x20] sm:$0xff]
    %v230 = vld [vmem:[#allocation5 + $0x28] sm:$0xff]
    %v231 = vld [vmem:[#allocation5 + $0x30] sm:$0xff]
    %v232 = vld [vmem:[#allocation5 + $0x38] sm:$0xff]
    %v233 = vld [vmem:[#allocation5 + $0x40] sm:$0xff]
    %v234 = vld [vmem:[#allocation5 + $0x48] sm:$0xff]
    %v235 = vld [vmem:[#allocation5 + $0x50] sm:$0xff]
    %v236 = vld [vmem:[#allocation5 + $0x58] sm:$0xff]
    %v237 = vld [vmem:[#allocation5 + $0x60] sm:$0xff]
    %v238 = vld [vmem:[#allocation5 + $0x68] sm:$0xff]
    %v239 = vld [vmem:[#allocation5 + $0x70] sm:$0xff]
    %v240 = vld [vmem:[#allocation5 + $0x78] sm:$0xff]
    %v241 = vld [vmem:[#allocation5 + $0x80] sm:$0xff]
    %v242 = vld [vmem:[#allocation5 + $0x88] sm:$0xff]
    %v243 = vld [vmem:[#allocation5 + $0x90] sm:$0xff]
    %v244 = vld [vmem:[#allocation5 + $0x98] sm:$0xff]
    %v245 = vld [vmem:[#allocation5 + $0xa0] sm:$0xff]
    %v246 = vld [vmem:[#allocation5 + $0xa8] sm:$0xff]
    %v247 = vld [vmem:[#allocation5 + $0xb0] sm:$0xff]
    %v248 = vld [vmem:[#allocation5 + $0xb8] sm:$0xff]
    %v249 = vld [vmem:[#allocation5 + $0xc0] sm:$0xff]
    %v250 = vld [vmem:[#allocation5 + $0xc8] sm:$0xff]
    %v251 = vld [vmem:[#allocation5 + $0xd0] sm:$0xff]
    %v252 = vld [vmem:[#allocation5 + $0xd8] sm:$0xff]
    %v253 = vld [vmem:[#allocation5 + $0xe0] sm:$0xff]
    %v254 = vld [vmem:[#allocation5 + $0xe8] sm:$0xff]
    %v255 = vld [vmem:[#allocation5 + $0xf0] sm:$0xff]
    %v256 = vld [vmem:[#allocation5 + $0xf8] sm:$0xff]
    %v257 = vld [vmem:[#allocation5 + $0x100] sm:$0xff]
    %v258 = vld [vmem:[#allocation5 + $0x108] sm:$0xff]
    %v259 = vld [vmem:[#allocation5 + $0x110] sm:$0xff]
    %v260 = vld [vmem:[#allocation5 + $0x118] sm:$0xff]
    %v261 = vld [vmem:[#allocation5 + $0x120] sm:$0xff]
    %v262 = vld [vmem:[#allocation5 + $0x128] sm:$0xff]
    %v263 = vld [vmem:[#allocation5 + $0x130] sm:$0xff]
    %v264 = vld [vmem:[#allocation5 + $0x138] sm:$0xff]
    %v265 = vld [vmem:[#allocation5 + $0x140] sm:$0xff]
    %v266 = vld [vmem:[#allocation5 + $0x148] sm:$0xff]
    %v267 = vld [vmem:[#allocation5 + $0x150] sm:$0xff]
    %v268 = vld [vmem:[#allocation5 + $0x158] sm:$0xff]
    %v269 = vld [vmem:[#allocation5 + $0x160] sm:$0xff]
    %v270 = vld [vmem:[#allocation5 + $0x168] sm:$0xff]
    %v271 = vld [vmem:[#allocation5 + $0x170] sm:$0xff]
    %v272 = vld [vmem:[#allocation5 + $0x178] sm:$0xff]
    %v273 = vld [vmem:[#allocation5 + $0x180] sm:$0xff]
    %v274 = vld [vmem:[#allocation5 + $0x188] sm:$0xff]
    %v275 = vld [vmem:[#allocation5 + $0x190] sm:$0xff]
    %v276 = vld [vmem:[#allocation5 + $0x198] sm:$0xff]
    %v277 = vld [vmem:[#allocation5 + $0x1a0] sm:$0xff]
    %v278 = vld [vmem:[#allocation5 + $0x1a8] sm:$0xff]
    %v279 = vld [vmem:[#allocation5 + $0x1b0] sm:$0xff]
    %v280 = vld [vmem:[#allocation5 + $0x1b8] sm:$0xff]
    %v281 = vld [vmem:[#allocation5 + $0x1c0] sm:$0xff]
    %v282 = vld [vmem:[#allocation5 + $0x1c8] sm:$0xff]
    %v283 = vld [vmem:[#allocation5 + $0x1d0] sm:$0xff]
    %v284 = vld [vmem:[#allocation5 + $0x1d8] sm:$0xff]
    %v285 = vld [vmem:[#allocation5 + $0x1e0] sm:$0xff]
    %v286 = vld [vmem:[#allocation5 + $0x1e8] sm:$0xff]
    %v287 = vld [vmem:[#allocation5 + $0x1f0] sm:$0xff]
    %v288 = vld [vmem:[#allocation5 + $0x1f8] sm:$0xff]
    %v289 = vld [vmem:[#allocation7] sm:$0x3]
    %v291 = vperm.slane %v289, 0
    %v292 = vperm.slane %v289, 1
    %295 = vmatpush.msra.mxu0 %v255
    %296 = vmatpush.msra.mxu0 %v253
    %297 = vmatpush.msra.mxu0 %v251
    %298 = vmatpush.msra.mxu0 %v249
    %299 = vmatpush.msra.mxu0 %v247
    %300 = vmatpush.msra.mxu0 %v245
    %301 = vmatpush.msra.mxu0 %v243
    %302 = vmatpush.msra.mxu0 %v241
    %303 = vmatpush.msra.mxu0 %v239
    %304 = vmatpush.msra.mxu0 %v237
    %305 = vmatpush.msra.mxu0 %v235
    %306 = vmatpush.msra.mxu0 %v233
    %307 = vmatpush.msra.mxu0 %v231
    %308 = vmatpush.msra.mxu0 %v229
    %309 = vmatpush.msra.mxu0 %v227
    %310 = vmatpush.msra.mxu0 %v225
    %311 = vmatmul.f32.gmra.mxu0 %v223
    %v312 = vpop.f32.mrf.mxu0
    %v313 = vadd.f32 %v291, %v312
    %314 = vdwg.mxu0
    %315 = vmatpush.msra.mxu0 %v287
    %316 = vmatpush.msra.mxu0 %v285
    %317 = vmatpush.msra.mxu0 %v283
    %318 = vmatpush.msra.mxu0 %v281
    %319 = vmatpush.msra.mxu0 %v279
    %320 = vmatpush.msra.mxu0 %v277
    %321 = vmatpush.msra.mxu0 %v275
    %322 = vmatpush.msra.mxu0 %v273
    %323 = vmatpush.msra.mxu0 %v271
    %324 = vmatpush.msra.mxu0 %v269
    %325 = vmatpush.msra.mxu0 %v267
    %326 = vmatpush.msra.mxu0 %v265
    %327 = vmatpush.msra.mxu0 %v263
    %328 = vmatpush.msra.mxu0 %v261
    %329 = vmatpush.msra.mxu0 %v259
    %330 = vmatpush.msra.mxu0 %v257
    %331 = vmatmul.f32.gmra.mxu0 %v224
    %v332 = vpop.f32.mrf.mxu0
    %v333 = vadd.f32 %v313, %v332
    %334 = vdwg.mxu0
    %335 = vmatpush.msra.mxu0 %v256
    %336 = vmatpush.msra.mxu0 %v254
    %337 = vmatpush.msra.mxu0 %v252
    %338 = vmatpush.msra.mxu0 %v250
    %339 = vmatpush.msra.mxu0 %v248
    %340 = vmatpush.msra.mxu0 %v246
    %341 = vmatpush.msra.mxu0 %v244
    %342 = vmatpush.msra.mxu0 %v242
    %343 = vmatpush.msra.mxu0 %v240
    %344 = vmatpush.msra.mxu0 %v238
    %345 = vmatpush.msra.mxu0 %v236
    %346 = vmatpush.msra.mxu0 %v234
    %347 = vmatpush.msra.mxu0 %v232
    %348 = vmatpush.msra.mxu0 %v230
    %349 = vmatpush.msra.mxu0 %v228
    %350 = vmatpush.msra.mxu0 %v226
    %351 = vmatmul.f32.gmra.mxu0 %v223
    %v352 = vpop.f32.mrf.mxu0
    %v353 = vadd.f32 %v292, %v352
    %354 = vdwg.mxu0
    %355 = vmatpush.msra.mxu0 %v288
    %356 = vmatpush.msra.mxu0 %v286
    %357 = vmatpush.msra.mxu0 %v284
    %358 = vmatpush.msra.mxu0 %v282
    %359 = vmatpush.msra.mxu0 %v280
    %360 = vmatpush.msra.mxu0 %v278
    %361 = vmatpush.msra.mxu0 %v276
    %362 = vmatpush.msra.mxu0 %v274
    %363 = vmatpush.msra.mxu0 %v272
    %364 = vmatpush.msra.mxu0 %v270
    %365 = vmatpush.msra.mxu0 %v268
    %366 = vmatpush.msra.mxu0 %v266
    %367 = vmatpush.msra.mxu0 %v264
    %368 = vmatpush.msra.mxu0 %v262
    %369 = vmatpush.msra.mxu0 %v260
    %370 = vmatpush.msra.mxu0 %v258
    %371 = vmatmul.f32.gmra.mxu0 %v224
    %v372 = vpop.f32.mrf.mxu0
    %v373 = vadd.f32 %v353, %v372
    %374 = vdwg.mxu0
    %v375 = vmax.f32 %v333, 0.0
    %v376 = vmax.f32 %v373, 0.0
    %v377 = vld [vmem:[#allocation10] sm:$0xff]
    %v378 = vld [vmem:[#allocation10 + $0x8] sm:$0xff]
    %v379 = vld [vmem:[#allocation10 + $0x10] sm:$0xff]
    %v380 = vld [vmem:[#allocation10 + $0x18] sm:$0xff]
    %v381 = vld [vmem:[#allocation10 + $0x20] sm:$0xff]
    %v382 = vld [vmem:[#allocation10 + $0x28] sm:$0xff]
    %v383 = vld [vmem:[#allocation10 + $0x30] sm:$0xff]
    %v384 = vld [vmem:[#allocation10 + $0x38] sm:$0xff]
    %v385 = vld [vmem:[#allocation10 + $0x40] sm:$0xff]
    %v386 = vld [vmem:[#allocation10 + $0x48] sm:$0xff]
    %v387 = vld [vmem:[#allocation10 + $0x50] sm:$0xff]
    %v388 = vld [vmem:[#allocation10 + $0x58] sm:$0xff]
    %v389 = vld [vmem:[#allocation10 + $0x60] sm:$0xff]
    %v390 = vld [vmem:[#allocation10 + $0x68] sm:$0xff]
    %v391 = vld [vmem:[#allocation10 + $0x70] sm:$0xff]
    %v392 = vld [vmem:[#allocation10 + $0x78] sm:$0xff]
    %v393 = vld [vmem:[#allocation10 + $0x80] sm:$0xff]
    %v394 = vld [vmem:[#allocation10 + $0x88] sm:$0xff]
    %v395 = vld [vmem:[#allocation10 + $0x90] sm:$0xff]
    %v396 = vld [vmem:[#allocation10 + $0x98] sm:$0xff]
    %v397 = vld [vmem:[#allocation10 + $0xa0] sm:$0xff]
    %v398 = vld [vmem:[#allocation10 + $0xa8] sm:$0xff]
    %v399 = vld [vmem:[#allocation10 + $0xb0] sm:$0xff]
    %v400 = vld [vmem:[#allocation10 + $0xb8] sm:$0xff]
    %v401 = vld [vmem:[#allocation10 + $0xc0] sm:$0xff]
    %v402 = vld [vmem:[#allocation10 + $0xc8] sm:$0xff]
    %v403 = vld [vmem:[#allocation10 + $0xd0] sm:$0xff]
    %v404 = vld [vmem:[#allocation10 + $0xd8] sm:$0xff]
    %v405 = vld [vmem:[#allocation10 + $0xe0] sm:$0xff]
    %v406 = vld [vmem:[#allocation10 + $0xe8] sm:$0xff]
    %v407 = vld [vmem:[#allocation10 + $0xf0] sm:$0xff]
    %v408 = vld [vmem:[#allocation10 + $0xf8] sm:$0xff]
    %v409 = vld [vmem:[#allocation10 + $0x100] sm:$0xff]
    %v410 = vld [vmem:[#allocation10 + $0x108] sm:$0xff]
    %v411 = vld [vmem:[#allocation10 + $0x110] sm:$0xff]
    %v412 = vld [vmem:[#allocation10 + $0x118] sm:$0xff]
    %v413 = vld [vmem:[#allocation10 + $0x120] sm:$0xff]
    %v414 = vld [vmem:[#allocation10 + $0x128] sm:$0xff]
    %v415 = vld [vmem:[#allocation10 + $0x130] sm:$0xff]
    %v416 = vld [vmem:[#allocation10 + $0x138] sm:$0xff]
    %v417 = vld [vmem:[#allocation10 + $0x140] sm:$0xff]
    %v418 = vld [vmem:[#allocation10 + $0x148] sm:$0xff]
    %v419 = vld [vmem:[#allocation10 + $0x150] sm:$0xff]
    %v420 = vld [vmem:[#allocation10 + $0x158] sm:$0xff]
    %v421 = vld [vmem:[#allocation10 + $0x160] sm:$0xff]
    %v422 = vld [vmem:[#allocation10 + $0x168] sm:$0xff]
    %v423 = vld [vmem:[#allocation10 + $0x170] sm:$0xff]
    %v424 = vld [vmem:[#allocation10 + $0x178] sm:$0xff]
    %v425 = vld [vmem:[#allocation10 + $0x180] sm:$0xff]
    %v426 = vld [vmem:[#allocation10 + $0x188] sm:$0xff]
    %v427 = vld [vmem:[#allocation10 + $0x190] sm:$0xff]
    %v428 = vld [vmem:[#allocation10 + $0x198] sm:$0xff]
    %v429 = vld [vmem:[#allocation10 + $0x1a0] sm:$0xff]
    %v430 = vld [vmem:[#allocation10 + $0x1a8] sm:$0xff]
    %v431 = vld [vmem:[#allocation10 + $0x1b0] sm:$0xff]
    %v432 = vld [vmem:[#allocation10 + $0x1b8] sm:$0xff]
    %v433 = vld [vmem:[#allocation10 + $0x1c0] sm:$0xff]
    %v434 = vld [vmem:[#allocation10 + $0x1c8] sm:$0xff]
    %v435 = vld [vmem:[#allocation10 + $0x1d0] sm:$0xff]
    %v436 = vld [vmem:[#allocation10 + $0x1d8] sm:$0xff]
    %v437 = vld [vmem:[#allocation10 + $0x1e0] sm:$0xff]
    %v438 = vld [vmem:[#allocation10 + $0x1e8] sm:$0xff]
    %v439 = vld [vmem:[#allocation10 + $0x1f0] sm:$0xff]
    %v440 = vld [vmem:[#allocation10 + $0x1f8] sm:$0xff]
    %v441 = vld [vmem:[#allocation11] sm:$0x3]
    %v443 = vperm.slane %v441, 0
    %v444 = vperm.slane %v441, 1
    %447 = vmatpush.msra.mxu0 %v407
    %448 = vmatpush.msra.mxu0 %v405
    %449 = vmatpush.msra.mxu0 %v403
    %450 = vmatpush.msra.mxu0 %v401
    %451 = vmatpush.msra.mxu0 %v399
    %452 = vmatpush.msra.mxu0 %v397
    %453 = vmatpush.msra.mxu0 %v395
    %454 = vmatpush.msra.mxu0 %v393
    %455 = vmatpush.msra.mxu0 %v391
    %456 = vmatpush.msra.mxu0 %v389
    %457 = vmatpush.msra.mxu0 %v387
    %458 = vmatpush.msra.mxu0 %v385
    %459 = vmatpush.msra.mxu0 %v383
    %460 = vmatpush.msra.mxu0 %v381
    %461 = vmatpush.msra.mxu0 %v379
    %462 = vmatpush.msra.mxu0 %v377
    %463 = vmatmul.f32.gmra.mxu0 %v375
    %v464 = vpop.f32.mrf.mxu0
    %v465 = vadd.f32 %v443, %v464
    %466 = vdwg.mxu0
    %467 = vmatpush.msra.mxu0 %v439
    %468 = vmatpush.msra.mxu0 %v437
    %469 = vmatpush.msra.mxu0 %v435
    %470 = vmatpush.msra.mxu0 %v433
    %471 = vmatpush.msra.mxu0 %v431
    %472 = vmatpush.msra.mxu0 %v429
    %473 = vmatpush.msra.mxu0 %v427
    %474 = vmatpush.msra.mxu0 %v425
    %475 = vmatpush.msra.mxu0 %v423
    %476 = vmatpush.msra.mxu0 %v421
    %477 = vmatpush.msra.mxu0 %v419
    %478 = vmatpush.msra.mxu0 %v417
    %479 = vmatpush.msra.mxu0 %v415
    %480 = vmatpush.msra.mxu0 %v413
    %481 = vmatpush.msra.mxu0 %v411
    %482 = vmatpush.msra.mxu0 %v409
    %483 = vmatmul.f32.gmra.mxu0 %v376
    %v484 = vpop.f32.mrf.mxu0
    %v485 = vadd.f32 %v465, %v484
    %486 = vdwg.mxu0
    %487 = vmatpush.msra.mxu0 %v408
    %488 = vmatpush.msra.mxu0 %v406
    %489 = vmatpush.msra.mxu0 %v404
    %490 = vmatpush.msra.mxu0 %v402
    %491 = vmatpush.msra.mxu0 %v400
    %492 = vmatpush.msra.mxu0 %v398
    %493 = vmatpush.msra.mxu0 %v396
    %494 = vmatpush.msra.mxu0 %v394
    %495 = vmatpush.msra.mxu0 %v392
    %496 = vmatpush.msra.mxu0 %v390
    %497 = vmatpush.msra.mxu0 %v388
    %498 = vmatpush.msra.mxu0 %v386
    %499 = vmatpush.msra.mxu0 %v384
    %500 = vmatpush.msra.mxu0 %v382
    %501 = vmatpush.msra.mxu0 %v380
    %502 = vmatpush.msra.mxu0 %v378
    %503 = vmatmul.f32.gmra.mxu0 %v375
    %v504 = vpop.f32.mrf.mxu0
    %v505 = vadd.f32 %v444, %v504
    %506 = vdwg.mxu0
    %507 = vmatpush.msra.mxu0 %v440
    %508 = vmatpush.msra.mxu0 %v438
    %509 = vmatpush.msra.mxu0 %v436
    %510 = vmatpush.msra.mxu0 %v434
    %511 = vmatpush.msra.mxu0 %v432
    %512 = vmatpush.msra.mxu0 %v430
    %513 = vmatpush.msra.mxu0 %v428
    %514 = vmatpush.msra.mxu0 %v426
    %515 = vmatpush.msra.mxu0 %v424
    %516 = vmatpush.msra.mxu0 %v422
    %517 = vmatpush.msra.mxu0 %v420
    %518 = vmatpush.msra.mxu0 %v418
    %519 = vmatpush.msra.mxu0 %v416
    %520 = vmatpush.msra.mxu0 %v414
    %521 = vmatpush.msra.mxu0 %v412
    %522 = vmatpush.msra.mxu0 %v410
    %523 = vmatmul.f32.gmra.mxu0 %v376
    %v524 = vpop.f32.mrf.mxu0
    %v525 = vadd.f32 %v505, %v524
    %526 = vdwg.mxu0
    %v527 = vmax.f32 %v485, 0.0
    %v528 = vmax.f32 %v525, 0.0
    %s529 = scalar_lea.vmem [#allocation2], 16
    %v530 = vld [vmem:[%s529] sm:$0xff]
    %v531 = vld [vmem:[%s529 + $0x8] sm:$0xff]
    %s532 = scalar_lea.vmem [#allocation5], 512
    %v533 = vld [vmem:[%s532] sm:$0xff]
    %v534 = vld [vmem:[%s532 + $0x8] sm:$0xff]
    %v535 = vld [vmem:[%s532 + $0x10] sm:$0xff]
    %v536 = vld [vmem:[%s532 + $0x18] sm:$0xff]
    %v537 = vld [vmem:[%s532 + $0x20] sm:$0xff]
    %v538 = vld [vmem:[%s532 + $0x28] sm:$0xff]
    %v539 = vld [vmem:[%s532 + $0x30] sm:$0xff]
    %v540 = vld [vmem:[%s532 + $0x38] sm:$0xff]
    %v541 = vld [vmem:[%s532 + $0x40] sm:$0xff]
    %v542 = vld [vmem:[%s532 + $0x48] sm:$0xff]
    %v543 = vld [vmem:[%s532 + $0x50] sm:$0xff]
    %v544 = vld [vmem:[%s532 + $0x58] sm:$0xff]
    %v545 = vld [vmem:[%s532 + $0x60] sm:$0xff]
    %v546 = vld [vmem:[%s532 + $0x68] sm:$0xff]
    %v547 = vld [vmem:[%s532 + $0x70] sm:$0xff]
    %v548 = vld [vmem:[%s532 + $0x78] sm:$0xff]
    %v549 = vld [vmem:[%s532 + $0x80] sm:$0xff]
    %v550 = vld [vmem:[%s532 + $0x88] sm:$0xff]
    %v551 = vld [vmem:[%s532 + $0x90] sm:$0xff]
    %v552 = vld [vmem:[%s532 + $0x98] sm:$0xff]
    %v553 = vld [vmem:[%s532 + $0xa0] sm:$0xff]
    %v554 = vld [vmem:[%s532 + $0xa8] sm:$0xff]
    %v555 = vld [vmem:[%s532 + $0xb0] sm:$0xff]
    %v556 = vld [vmem:[%s532 + $0xb8] sm:$0xff]
    %v557 = vld [vmem:[%s532 + $0xc0] sm:$0xff]
    %v558 = vld [vmem:[%s532 + $0xc8] sm:$0xff]
    %v559 = vld [vmem:[%s532 + $0xd0] sm:$0xff]
    %v560 = vld [vmem:[%s532 + $0xd8] sm:$0xff]
    %v561 = vld [vmem:[%s532 + $0xe0] sm:$0xff]
    %v562 = vld [vmem:[%s532 + $0xe8] sm:$0xff]
    %v563 = vld [vmem:[%s532 + $0xf0] sm:$0xff]
    %v564 = vld [vmem:[%s532 + $0xf8] sm:$0xff]
    %v565 = vld [vmem:[%s532 + $0x100] sm:$0xff]
    %v566 = vld [vmem:[%s532 + $0x108] sm:$0xff]
    %v567 = vld [vmem:[%s532 + $0x110] sm:$0xff]
    %v568 = vld [vmem:[%s532 + $0x118] sm:$0xff]
    %v569 = vld [vmem:[%s532 + $0x120] sm:$0xff]
    %v570 = vld [vmem:[%s532 + $0x128] sm:$0xff]
    %v571 = vld [vmem:[%s532 + $0x130] sm:$0xff]
    %v572 = vld [vmem:[%s532 + $0x138] sm:$0xff]
    %v573 = vld [vmem:[%s532 + $0x140] sm:$0xff]
    %v574 = vld [vmem:[%s532 + $0x148] sm:$0xff]
    %v575 = vld [vmem:[%s532 + $0x150] sm:$0xff]
    %v576 = vld [vmem:[%s532 + $0x158] sm:$0xff]
    %v577 = vld [vmem:[%s532 + $0x160] sm:$0xff]
    %v578 = vld [vmem:[%s532 + $0x168] sm:$0xff]
    %v579 = vld [vmem:[%s532 + $0x170] sm:$0xff]
    %v580 = vld [vmem:[%s532 + $0x178] sm:$0xff]
    %v581 = vld [vmem:[%s532 + $0x180] sm:$0xff]
    %v582 = vld [vmem:[%s532 + $0x188] sm:$0xff]
    %v583 = vld [vmem:[%s532 + $0x190] sm:$0xff]
    %v584 = vld [vmem:[%s532 + $0x198] sm:$0xff]
    %v585 = vld [vmem:[%s532 + $0x1a0] sm:$0xff]
    %v586 = vld [vmem:[%s532 + $0x1a8] sm:$0xff]
    %v587 = vld [vmem:[%s532 + $0x1b0] sm:$0xff]
    %v588 = vld [vmem:[%s532 + $0x1b8] sm:$0xff]
    %v589 = vld [vmem:[%s532 + $0x1c0] sm:$0xff]
    %v590 = vld [vmem:[%s532 + $0x1c8] sm:$0xff]
    %v591 = vld [vmem:[%s532 + $0x1d0] sm:$0xff]
    %v592 = vld [vmem:[%s532 + $0x1d8] sm:$0xff]
    %v593 = vld [vmem:[%s532 + $0x1e0] sm:$0xff]
    %v594 = vld [vmem:[%s532 + $0x1e8] sm:$0xff]
    %v595 = vld [vmem:[%s532 + $0x1f0] sm:$0xff]
    %v596 = vld [vmem:[%s532 + $0x1f8] sm:$0xff]
    %s597 = scalar_lea.vmem [#allocation7], 2
    %v598 = vld [vmem:[%s597] sm:$0x3]
    %v600 = vperm.slane %v598, 0
    %v601 = vperm.slane %v598, 1
    %604 = vmatpush.msra.mxu0 %v563
    %605 = vmatpush.msra.mxu0 %v561
    %606 = vmatpush.msra.mxu0 %v559
    %607 = vmatpush.msra.mxu0 %v557
    %608 = vmatpush.msra.mxu0 %v555
    %609 = vmatpush.msra.mxu0 %v553
    %610 = vmatpush.msra.mxu0 %v551
    %611 = vmatpush.msra.mxu0 %v549
    %612 = vmatpush.msra.mxu0 %v547
    %613 = vmatpush.msra.mxu0 %v545
    %614 = vmatpush.msra.mxu0 %v543
    %615 = vmatpush.msra.mxu0 %v541
    %616 = vmatpush.msra.mxu0 %v539
    %617 = vmatpush.msra.mxu0 %v537
    %618 = vmatpush.msra.mxu0 %v535
    %619 = vmatpush.msra.mxu0 %v533
    %620 = vmatmul.f32.gmra.mxu0 %v530
    %v621 = vpop.f32.mrf.mxu0
    %v622 = vadd.f32 %v600, %v621
    %623 = vdwg.mxu0
    %624 = vmatpush.msra.mxu0 %v595
    %625 = vmatpush.msra.mxu0 %v593
    %626 = vmatpush.msra.mxu0 %v591
    %627 = vmatpush.msra.mxu0 %v589
    %628 = vmatpush.msra.mxu0 %v587
    %629 = vmatpush.msra.mxu0 %v585
    %630 = vmatpush.msra.mxu0 %v583
    %631 = vmatpush.msra.mxu0 %v581
    %632 = vmatpush.msra.mxu0 %v579
    %633 = vmatpush.msra.mxu0 %v577
    %634 = vmatpush.msra.mxu0 %v575
    %635 = vmatpush.msra.mxu0 %v573
    %636 = vmatpush.msra.mxu0 %v571
    %637 = vmatpush.msra.mxu0 %v569
    %638 = vmatpush.msra.mxu0 %v567
    %639 = vmatpush.msra.mxu0 %v565
    %640 = vmatmul.f32.gmra.mxu0 %v531
    %v641 = vpop.f32.mrf.mxu0
    %v642 = vadd.f32 %v622, %v641
    %643 = vdwg.mxu0
    %644 = vmatpush.msra.mxu0 %v564
    %645 = vmatpush.msra.mxu0 %v562
    %646 = vmatpush.msra.mxu0 %v560
    %647 = vmatpush.msra.mxu0 %v558
    %648 = vmatpush.msra.mxu0 %v556
    %649 = vmatpush.msra.mxu0 %v554
    %650 = vmatpush.msra.mxu0 %v552
    %651 = vmatpush.msra.mxu0 %v550
    %652 = vmatpush.msra.mxu0 %v548
    %653 = vmatpush.msra.mxu0 %v546
    %654 = vmatpush.msra.mxu0 %v544
    %655 = vmatpush.msra.mxu0 %v542
    %656 = vmatpush.msra.mxu0 %v540
    %657 = vmatpush.msra.mxu0 %v538
    %658 = vmatpush.msra.mxu0 %v536
    %659 = vmatpush.msra.mxu0 %v534
    %660 = vmatmul.f32.gmra.mxu0 %v530
    %v661 = vpop.f32.mrf.mxu0
    %v662 = vadd.f32 %v601, %v661
    %663 = vdwg.mxu0
    %664 = vmatpush.msra.mxu0 %v596
    %665 = vmatpush.msra.mxu0 %v594
    %666 = vmatpush.msra.mxu0 %v592
    %667 = vmatpush.msra.mxu0 %v590
    %668 = vmatpush.msra.mxu0 %v588
    %669 = vmatpush.msra.mxu0 %v586
    %670 = vmatpush.msra.mxu0 %v584
    %671 = vmatpush.msra.mxu0 %v582
    %672 = vmatpush.msra.mxu0 %v580
    %673 = vmatpush.msra.mxu0 %v578
    %674 = vmatpush.msra.mxu0 %v576
    %675 = vmatpush.msra.mxu0 %v574
    %676 = vmatpush.msra.mxu0 %v572
    %677 = vmatpush.msra.mxu0 %v570
    %678 = vmatpush.msra.mxu0 %v568
    %679 = vmatpush.msra.mxu0 %v566
    %680 = vmatmul.f32.gmra.mxu0 %v531
    %v681 = vpop.f32.mrf.mxu0
    %v682 = vadd.f32 %v662, %v681
    %683 = vdwg.mxu0
    %s684 = scalar_lea.vmem [#allocation8], 512
    %v685 = vld [vmem:[%s684] sm:$0xff]
    %v686 = vld [vmem:[%s684 + $0x8] sm:$0xff]
    %v687 = vld [vmem:[%s684 + $0x10] sm:$0xff]
    %v688 = vld [vmem:[%s684 + $0x18] sm:$0xff]
    %v689 = vld [vmem:[%s684 + $0x20] sm:$0xff]
    %v690 = vld [vmem:[%s684 + $0x28] sm:$0xff]
    %v691 = vld [vmem:[%s684 + $0x30] sm:$0xff]
    %v692 = vld [vmem:[%s684 + $0x38] sm:$0xff]
    %v693 = vld [vmem:[%s684 + $0x40] sm:$0xff]
    %v694 = vld [vmem:[%s684 + $0x48] sm:$0xff]
    %v695 = vld [vmem:[%s684 + $0x50] sm:$0xff]
    %v696 = vld [vmem:[%s684 + $0x58] sm:$0xff]
    %v697 = vld [vmem:[%s684 + $0x60] sm:$0xff]
    %v698 = vld [vmem:[%s684 + $0x68] sm:$0xff]
    %v699 = vld [vmem:[%s684 + $0x70] sm:$0xff]
    %v700 = vld [vmem:[%s684 + $0x78] sm:$0xff]
    %v701 = vld [vmem:[%s684 + $0x80] sm:$0xff]
    %v702 = vld [vmem:[%s684 + $0x88] sm:$0xff]
    %v703 = vld [vmem:[%s684 + $0x90] sm:$0xff]
    %v704 = vld [vmem:[%s684 + $0x98] sm:$0xff]
    %v705 = vld [vmem:[%s684 + $0xa0] sm:$0xff]
    %v706 = vld [vmem:[%s684 + $0xa8] sm:$0xff]
    %v707 = vld [vmem:[%s684 + $0xb0] sm:$0xff]
    %v708 = vld [vmem:[%s684 + $0xb8] sm:$0xff]
    %v709 = vld [vmem:[%s684 + $0xc0] sm:$0xff]
    %v710 = vld [vmem:[%s684 + $0xc8] sm:$0xff]
    %v711 = vld [vmem:[%s684 + $0xd0] sm:$0xff]
    %v712 = vld [vmem:[%s684 + $0xd8] sm:$0xff]
    %v713 = vld [vmem:[%s684 + $0xe0] sm:$0xff]
    %v714 = vld [vmem:[%s684 + $0xe8] sm:$0xff]
    %v715 = vld [vmem:[%s684 + $0xf0] sm:$0xff]
    %v716 = vld [vmem:[%s684 + $0xf8] sm:$0xff]
    %v717 = vld [vmem:[%s684 + $0x100] sm:$0xff]
    %v718 = vld [vmem:[%s684 + $0x108] sm:$0xff]
    %v719 = vld [vmem:[%s684 + $0x110] sm:$0xff]
    %v720 = vld [vmem:[%s684 + $0x118] sm:$0xff]
    %v721 = vld [vmem:[%s684 + $0x120] sm:$0xff]
    %v722 = vld [vmem:[%s684 + $0x128] sm:$0xff]
    %v723 = vld [vmem:[%s684 + $0x130] sm:$0xff]
    %v724 = vld [vmem:[%s684 + $0x138] sm:$0xff]
    %v725 = vld [vmem:[%s684 + $0x140] sm:$0xff]
    %v726 = vld [vmem:[%s684 + $0x148] sm:$0xff]
    %v727 = vld [vmem:[%s684 + $0x150] sm:$0xff]
    %v728 = vld [vmem:[%s684 + $0x158] sm:$0xff]
    %v729 = vld [vmem:[%s684 + $0x160] sm:$0xff]
    %v730 = vld [vmem:[%s684 + $0x168] sm:$0xff]
    %v731 = vld [vmem:[%s684 + $0x170] sm:$0xff]
    %v732 = vld [vmem:[%s684 + $0x178] sm:$0xff]
    %v733 = vld [vmem:[%s684 + $0x180] sm:$0xff]
    %v734 = vld [vmem:[%s684 + $0x188] sm:$0xff]
    %v735 = vld [vmem:[%s684 + $0x190] sm:$0xff]
    %v736 = vld [vmem:[%s684 + $0x198] sm:$0xff]
    %v737 = vld [vmem:[%s684 + $0x1a0] sm:$0xff]
    %v738 = vld [vmem:[%s684 + $0x1a8] sm:$0xff]
    %v739 = vld [vmem:[%s684 + $0x1b0] sm:$0xff]
    %v740 = vld [vmem:[%s684 + $0x1b8] sm:$0xff]
    %v741 = vld [vmem:[%s684 + $0x1c0] sm:$0xff]
    %v742 = vld [vmem:[%s684 + $0x1c8] sm:$0xff]
    %v743 = vld [vmem:[%s684 + $0x1d0] sm:$0xff]
    %v744 = vld [vmem:[%s684 + $0x1d8] sm:$0xff]
    %v745 = vld [vmem:[%s684 + $0x1e0] sm:$0xff]
    %v746 = vld [vmem:[%s684 + $0x1e8] sm:$0xff]
    %v747 = vld [vmem:[%s684 + $0x1f0] sm:$0xff]
    %v748 = vld [vmem:[%s684 + $0x1f8] sm:$0xff]
    %749 = vmatpush.msra.mxu0 %v715
    %750 = vmatpush.msra.mxu0 %v713
    %751 = vmatpush.msra.mxu0 %v711
    %752 = vmatpush.msra.mxu0 %v709
    %753 = vmatpush.msra.mxu0 %v707
    %754 = vmatpush.msra.mxu0 %v705
    %755 = vmatpush.msra.mxu0 %v703
    %756 = vmatpush.msra.mxu0 %v701
    %757 = vmatpush.msra.mxu0 %v699
    %758 = vmatpush.msra.mxu0 %v697
    %759 = vmatpush.msra.mxu0 %v695
    %760 = vmatpush.msra.mxu0 %v693
    %761 = vmatpush.msra.mxu0 %v691
    %762 = vmatpush.msra.mxu0 %v689
    %763 = vmatpush.msra.mxu0 %v687
    %764 = vmatpush.msra.mxu0 %v685
    %765 = vmatmul.f32.gmra.mxu0 %v527
    %v766 = vpop.f32.mrf.mxu0
    %v767 = vadd.f32 0.0, %v766
    %768 = vdwg.mxu0
    %769 = vmatpush.msra.mxu0 %v747
    %770 = vmatpush.msra.mxu0 %v745
    %771 = vmatpush.msra.mxu0 %v743
    %772 = vmatpush.msra.mxu0 %v741
    %773 = vmatpush.msra.mxu0 %v739
    %774 = vmatpush.msra.mxu0 %v737
    %775 = vmatpush.msra.mxu0 %v735
    %776 = vmatpush.msra.mxu0 %v733
    %777 = vmatpush.msra.mxu0 %v731
    %778 = vmatpush.msra.mxu0 %v729
    %779 = vmatpush.msra.mxu0 %v727
    %780 = vmatpush.msra.mxu0 %v725
    %781 = vmatpush.msra.mxu0 %v723
    %782 = vmatpush.msra.mxu0 %v721
    %783 = vmatpush.msra.mxu0 %v719
    %784 = vmatpush.msra.mxu0 %v717
    %785 = vmatmul.f32.gmra.mxu0 %v528
    %v786 = vpop.f32.mrf.mxu0
    %v787 = vadd.f32 %v767, %v786
    %788 = vdwg.mxu0
    %789 = vmatpush.msra.mxu0 %v716
    %790 = vmatpush.msra.mxu0 %v714
    %791 = vmatpush.msra.mxu0 %v712
    %792 = vmatpush.msra.mxu0 %v710
    %793 = vmatpush.msra.mxu0 %v708
    %794 = vmatpush.msra.mxu0 %v706
    %795 = vmatpush.msra.mxu0 %v704
    %796 = vmatpush.msra.mxu0 %v702
    %797 = vmatpush.msra.mxu0 %v700
    %798 = vmatpush.msra.mxu0 %v698
    %799 = vmatpush.msra.mxu0 %v696
    %800 = vmatpush.msra.mxu0 %v694
    %801 = vmatpush.msra.mxu0 %v692
    %802 = vmatpush.msra.mxu0 %v690
    %803 = vmatpush.msra.mxu0 %v688
    %804 = vmatpush.msra.mxu0 %v686
    %805 = vmatmul.f32.gmra.mxu0 %v527
    %v806 = vpop.f32.mrf.mxu0
    %v807 = vadd.f32 0.0, %v806
    %808 = vdwg.mxu0
    %809 = vmatpush.msra.mxu0 %v748
    %810 = vmatpush.msra.mxu0 %v746
    %811 = vmatpush.msra.mxu0 %v744
    %812 = vmatpush.msra.mxu0 %v742
    %813 = vmatpush.msra.mxu0 %v740
    %814 = vmatpush.msra.mxu0 %v738
    %815 = vmatpush.msra.mxu0 %v736
    %816 = vmatpush.msra.mxu0 %v734
    %817 = vmatpush.msra.mxu0 %v732
    %818 = vmatpush.msra.mxu0 %v730
    %819 = vmatpush.msra.mxu0 %v728
    %820 = vmatpush.msra.mxu0 %v726
    %821 = vmatpush.msra.mxu0 %v724
    %822 = vmatpush.msra.mxu0 %v722
    %823 = vmatpush.msra.mxu0 %v720
    %824 = vmatpush.msra.mxu0 %v718
    %825 = vmatmul.f32.gmra.mxu0 %v528
    %v826 = vpop.f32.mrf.mxu0
    %v827 = vadd.f32 %v807, %v826
    %828 = vdwg.mxu0
    %v829 = vadd.f32 %v642, %v787
    %v830 = vadd.f32 %v682, %v827
    %v831 = vmax.f32 %v829, 0.0
    %v832 = vmax.f32 %v830, 0.0
    %s833 = scalar_lea.vmem [#allocation10], 512
    %v834 = vld [vmem:[%s833] sm:$0xff]
    %v835 = vld [vmem:[%s833 + $0x8] sm:$0xff]
    %v836 = vld [vmem:[%s833 + $0x10] sm:$0xff]
    %v837 = vld [vmem:[%s833 + $0x18] sm:$0xff]
    %v838 = vld [vmem:[%s833 + $0x20] sm:$0xff]
    %v839 = vld [vmem:[%s833 + $0x28] sm:$0xff]
    %v840 = vld [vmem:[%s833 + $0x30] sm:$0xff]
    %v841 = vld [vmem:[%s833 + $0x38] sm:$0xff]
    %v842 = vld [vmem:[%s833 + $0x40] sm:$0xff]
    %v843 = vld [vmem:[%s833 + $0x48] sm:$0xff]
    %v844 = vld [vmem:[%s833 + $0x50] sm:$0xff]
    %v845 = vld [vmem:[%s833 + $0x58] sm:$0xff]
    %v846 = vld [vmem:[%s833 + $0x60] sm:$0xff]
    %v847 = vld [vmem:[%s833 + $0x68] sm:$0xff]
    %v848 = vld [vmem:[%s833 + $0x70] sm:$0xff]
    %v849 = vld [vmem:[%s833 + $0x78] sm:$0xff]
    %v850 = vld [vmem:[%s833 + $0x80] sm:$0xff]
    %v851 = vld [vmem:[%s833 + $0x88] sm:$0xff]
    %v852 = vld [vmem:[%s833 + $0x90] sm:$0xff]
    %v853 = vld [vmem:[%s833 + $0x98] sm:$0xff]
    %v854 = vld [vmem:[%s833 + $0xa0] sm:$0xff]
    %v855 = vld [vmem:[%s833 + $0xa8] sm:$0xff]
    %v856 = vld [vmem:[%s833 + $0xb0] sm:$0xff]
    %v857 = vld [vmem:[%s833 + $0xb8] sm:$0xff]
    %v858 = vld [vmem:[%s833 + $0xc0] sm:$0xff]
    %v859 = vld [vmem:[%s833 + $0xc8] sm:$0xff]
    %v860 = vld [vmem:[%s833 + $0xd0] sm:$0xff]
    %v861 = vld [vmem:[%s833 + $0xd8] sm:$0xff]
    %v862 = vld [vmem:[%s833 + $0xe0] sm:$0xff]
    %v863 = vld [vmem:[%s833 + $0xe8] sm:$0xff]
    %v864 = vld [vmem:[%s833 + $0xf0] sm:$0xff]
    %v865 = vld [vmem:[%s833 + $0xf8] sm:$0xff]
    %v866 = vld [vmem:[%s833 + $0x100] sm:$0xff]
    %v867 = vld [vmem:[%s833 + $0x108] sm:$0xff]
    %v868 = vld [vmem:[%s833 + $0x110] sm:$0xff]
    %v869 = vld [vmem:[%s833 + $0x118] sm:$0xff]
    %v870 = vld [vmem:[%s833 + $0x120] sm:$0xff]
    %v871 = vld [vmem:[%s833 + $0x128] sm:$0xff]
    %v872 = vld [vmem:[%s833 + $0x130] sm:$0xff]
    %v873 = vld [vmem:[%s833 + $0x138] sm:$0xff]
    %v874 = vld [vmem:[%s833 + $0x140] sm:$0xff]
    %v875 = vld [vmem:[%s833 + $0x148] sm:$0xff]
    %v876 = vld [vmem:[%s833 + $0x150] sm:$0xff]
    %v877 = vld [vmem:[%s833 + $0x158] sm:$0xff]
    %v878 = vld [vmem:[%s833 + $0x160] sm:$0xff]
    %v879 = vld [vmem:[%s833 + $0x168] sm:$0xff]
    %v880 = vld [vmem:[%s833 + $0x170] sm:$0xff]
    %v881 = vld [vmem:[%s833 + $0x178] sm:$0xff]
    %v882 = vld [vmem:[%s833 + $0x180] sm:$0xff]
    %v883 = vld [vmem:[%s833 + $0x188] sm:$0xff]
    %v884 = vld [vmem:[%s833 + $0x190] sm:$0xff]
    %v885 = vld [vmem:[%s833 + $0x198] sm:$0xff]
    %v886 = vld [vmem:[%s833 + $0x1a0] sm:$0xff]
    %v887 = vld [vmem:[%s833 + $0x1a8] sm:$0xff]
    %v888 = vld [vmem:[%s833 + $0x1b0] sm:$0xff]
    %v889 = vld [vmem:[%s833 + $0x1b8] sm:$0xff]
    %v890 = vld [vmem:[%s833 + $0x1c0] sm:$0xff]
    %v891 = vld [vmem:[%s833 + $0x1c8] sm:$0xff]
    %v892 = vld [vmem:[%s833 + $0x1d0] sm:$0xff]
    %v893 = vld [vmem:[%s833 + $0x1d8] sm:$0xff]
    %v894 = vld [vmem:[%s833 + $0x1e0] sm:$0xff]
    %v895 = vld [vmem:[%s833 + $0x1e8] sm:$0xff]
    %v896 = vld [vmem:[%s833 + $0x1f0] sm:$0xff]
    %v897 = vld [vmem:[%s833 + $0x1f8] sm:$0xff]
    %s898 = scalar_lea.vmem [#allocation11], 2
    %v899 = vld [vmem:[%s898] sm:$0x3]
    %v901 = vperm.slane %v899, 0
    %v902 = vperm.slane %v899, 1
    %905 = vmatpush.msra.mxu0 %v864
    %906 = vmatpush.msra.mxu0 %v862
    %907 = vmatpush.msra.mxu0 %v860
    %908 = vmatpush.msra.mxu0 %v858
    %909 = vmatpush.msra.mxu0 %v856
    %910 = vmatpush.msra.mxu0 %v854
    %911 = vmatpush.msra.mxu0 %v852
    %912 = vmatpush.msra.mxu0 %v850
    %913 = vmatpush.msra.mxu0 %v848
    %914 = vmatpush.msra.mxu0 %v846
    %915 = vmatpush.msra.mxu0 %v844
    %916 = vmatpush.msra.mxu0 %v842
    %917 = vmatpush.msra.mxu0 %v840
    %918 = vmatpush.msra.mxu0 %v838
    %919 = vmatpush.msra.mxu0 %v836
    %920 = vmatpush.msra.mxu0 %v834
    %921 = vmatmul.f32.gmra.mxu0 %v831
    %v922 = vpop.f32.mrf.mxu0
    %v923 = vadd.f32 %v901, %v922
    %924 = vdwg.mxu0
    %925 = vmatpush.msra.mxu0 %v896
    %926 = vmatpush.msra.mxu0 %v894
    %927 = vmatpush.msra.mxu0 %v892
    %928 = vmatpush.msra.mxu0 %v890
    %929 = vmatpush.msra.mxu0 %v888
    %930 = vmatpush.msra.mxu0 %v886
    %931 = vmatpush.msra.mxu0 %v884
    %932 = vmatpush.msra.mxu0 %v882
    %933 = vmatpush.msra.mxu0 %v880
    %934 = vmatpush.msra.mxu0 %v878
    %935 = vmatpush.msra.mxu0 %v876
    %936 = vmatpush.msra.mxu0 %v874
    %937 = vmatpush.msra.mxu0 %v872
    %938 = vmatpush.msra.mxu0 %v870
    %939 = vmatpush.msra.mxu0 %v868
    %940 = vmatpush.msra.mxu0 %v866
    %941 = vmatmul.f32.gmra.mxu0 %v832
    %v942 = vpop.f32.mrf.mxu0
    %v943 = vadd.f32 %v923, %v942
    %944 = vdwg.mxu0
    %945 = vmatpush.msra.mxu0 %v865
    %946 = vmatpush.msra.mxu0 %v863
    %947 = vmatpush.msra.mxu0 %v861
    %948 = vmatpush.msra.mxu0 %v859
    %949 = vmatpush.msra.mxu0 %v857
    %950 = vmatpush.msra.mxu0 %v855
    %951 = vmatpush.msra.mxu0 %v853
    %952 = vmatpush.msra.mxu0 %v851
    %953 = vmatpush.msra.mxu0 %v849
    %954 = vmatpush.msra.mxu0 %v847
    %955 = vmatpush.msra.mxu0 %v845
    %956 = vmatpush.msra.mxu0 %v843
    %957 = vmatpush.msra.mxu0 %v841
    %958 = vmatpush.msra.mxu0 %v839
    %959 = vmatpush.msra.mxu0 %v837
    %960 = vmatpush.msra.mxu0 %v835
    %961 = vmatmul.f32.gmra.mxu0 %v831
    %v962 = vpop.f32.mrf.mxu0
    %v963 = vadd.f32 %v902, %v962
    %964 = vdwg.mxu0
    %965 = vmatpush.msra.mxu0 %v897
    %966 = vmatpush.msra.mxu0 %v895
    %967 = vmatpush.msra.mxu0 %v893
    %968 = vmatpush.msra.mxu0 %v891
    %969 = vmatpush.msra.mxu0 %v889
    %970 = vmatpush.msra.mxu0 %v887
    %971 = vmatpush.msra.mxu0 %v885
    %972 = vmatpush.msra.mxu0 %v883
    %973 = vmatpush.msra.mxu0 %v881
    %974 = vmatpush.msra.mxu0 %v879
    %975 = vmatpush.msra.mxu0 %v877
    %976 = vmatpush.msra.mxu0 %v875
    %977 = vmatpush.msra.mxu0 %v873
    %978 = vmatpush.msra.mxu0 %v871
    %979 = vmatpush.msra.mxu0 %v869
    %980 = vmatpush.msra.mxu0 %v867
    %981 = vmatmul.f32.gmra.mxu0 %v832
    %v982 = vpop.f32.mrf.mxu0
    %v983 = vadd.f32 %v963, %v982
    %984 = vdwg.mxu0
    %v985 = vadd.f32 %v943, %v527
    %v986 = vadd.f32 %v983, %v528
    %v987 = vmax.f32 %v985, 0.0
    %v988 = vmax.f32 %v986, 0.0
    %s989 = scalar_lea.vmem [#allocation2], 32
    %v990 = vld [vmem:[%s989] sm:$0xff]
    %v991 = vld [vmem:[%s989 + $0x8] sm:$0xff]
    %s992 = scalar_lea.vmem [#allocation5], 1024
    %v993 = vld [vmem:[%s992] sm:$0xff]
    %v994 = vld [vmem:[%s992 + $0x8] sm:$0xff]
    %v995 = vld [vmem:[%s992 + $0x10] sm:$0xff]
    %v996 = vld [vmem:[%s992 + $0x18] sm:$0xff]
    %v997 = vld [vmem:[%s992 + $0x20] sm:$0xff]
    %v998 = vld [vmem:[%s992 + $0x28] sm:$0xff]
    %v999 = vld [vmem:[%s992 + $0x30] sm:$0xff]
    %v1000 = vld [vmem:[%s992 + $0x38] sm:$0xff]
    %v1001 = vld [vmem:[%s992 + $0x40] sm:$0xff]
    %v1002 = vld [vmem:[%s992 + $0x48] sm:$0xff]
    %v1003 = vld [vmem:[%s992 + $0x50] sm:$0xff]
    %v1004 = vld [vmem:[%s992 + $0x58] sm:$0xff]
    %v1005 = vld [vmem:[%s992 + $0x60] sm:$0xff]
    %v1006 = vld [vmem:[%s992 + $0x68] sm:$0xff]
    %v1007 = vld [vmem:[%s992 + $0x70] sm:$0xff]
    %v1008 = vld [vmem:[%s992 + $0x78] sm:$0xff]
    %v1009 = vld [vmem:[%s992 + $0x80] sm:$0xff]
    %v1010 = vld [vmem:[%s992 + $0x88] sm:$0xff]
    %v1011 = vld [vmem:[%s992 + $0x90] sm:$0xff]
    %v1012 = vld [vmem:[%s992 + $0x98] sm:$0xff]
    %v1013 = vld [vmem:[%s992 + $0xa0] sm:$0xff]
    %v1014 = vld [vmem:[%s992 + $0xa8] sm:$0xff]
    %v1015 = vld [vmem:[%s992 + $0xb0] sm:$0xff]
    %v1016 = vld [vmem:[%s992 + $0xb8] sm:$0xff]
    %v1017 = vld [vmem:[%s992 + $0xc0] sm:$0xff]
    %v1018 = vld [vmem:[%s992 + $0xc8] sm:$0xff]
    %v1019 = vld [vmem:[%s992 + $0xd0] sm:$0xff]
    %v1020 = vld [vmem:[%s992 + $0xd8] sm:$0xff]
    %v1021 = vld [vmem:[%s992 + $0xe0] sm:$0xff]
    %v1022 = vld [vmem:[%s992 + $0xe8] sm:$0xff]
    %v1023 = vld [vmem:[%s992 + $0xf0] sm:$0xff]
    %v1024 = vld [vmem:[%s992 + $0xf8] sm:$0xff]
    %v1025 = vld [vmem:[%s992 + $0x100] sm:$0xff]
    %v1026 = vld [vmem:[%s992 + $0x108] sm:$0xff]
    %v1027 = vld [vmem:[%s992 + $0x110] sm:$0xff]
    %v1028 = vld [vmem:[%s992 + $0x118] sm:$0xff]
    %v1029 = vld [vmem:[%s992 + $0x120] sm:$0xff]
    %v1030 = vld [vmem:[%s992 + $0x128] sm:$0xff]
    %v1031 = vld [vmem:[%s992 + $0x130] sm:$0xff]
    %v1032 = vld [vmem:[%s992 + $0x138] sm:$0xff]
    %v1033 = vld [vmem:[%s992 + $0x140] sm:$0xff]
    %v1034 = vld [vmem:[%s992 + $0x148] sm:$0xff]
    %v1035 = vld [vmem:[%s992 + $0x150] sm:$0xff]
    %v1036 = vld [vmem:[%s992 + $0x158] sm:$0xff]
    %v1037 = vld [vmem:[%s992 + $0x160] sm:$0xff]
    %v1038 = vld [vmem:[%s992 + $0x168] sm:$0xff]
    %v1039 = vld [vmem:[%s992 + $0x170] sm:$0xff]
    %v1040 = vld [vmem:[%s992 + $0x178] sm:$0xff]
    %v1041 = vld [vmem:[%s992 + $0x180] sm:$0xff]
    %v1042 = vld [vmem:[%s992 + $0x188] sm:$0xff]
    %v1043 = vld [vmem:[%s992 + $0x190] sm:$0xff]
    %v1044 = vld [vmem:[%s992 + $0x198] sm:$0xff]
    %v1045 = vld [vmem:[%s992 + $0x1a0] sm:$0xff]
    %v1046 = vld [vmem:[%s992 + $0x1a8] sm:$0xff]
    %v1047 = vld [vmem:[%s992 + $0x1b0] sm:$0xff]
    %v1048 = vld [vmem:[%s992 + $0x1b8] sm:$0xff]
    %v1049 = vld [vmem:[%s992 + $0x1c0] sm:$0xff]
    %v1050 = vld [vmem:[%s992 + $0x1c8] sm:$0xff]
    %v1051 = vld [vmem:[%s992 + $0x1d0] sm:$0xff]
    %v1052 = vld [vmem:[%s992 + $0x1d8] sm:$0xff]
    %v1053 = vld [vmem:[%s992 + $0x1e0] sm:$0xff]
    %v1054 = vld [vmem:[%s992 + $0x1e8] sm:$0xff]
    %v1055 = vld [vmem:[%s992 + $0x1f0] sm:$0xff]
    %v1056 = vld [vmem:[%s992 + $0x1f8] sm:$0xff]
    %s1057 = scalar_lea.vmem [#allocation7], 4
    %v1058 = vld [vmem:[%s1057] sm:$0x3]
    %v1060 = vperm.slane %v1058, 0
    %v1061 = vperm.slane %v1058, 1
    %1064 = vmatpush.msra.mxu0 %v1023
    %1065 = vmatpush.msra.mxu0 %v1021
    %1066 = vmatpush.msra.mxu0 %v1019
    %1067 = vmatpush.msra.mxu0 %v1017
    %1068 = vmatpush.msra.mxu0 %v1015
    %1069 = vmatpush.msra.mxu0 %v1013
    %1070 = vmatpush.msra.mxu0 %v1011
    %1071 = vmatpush.msra.mxu0 %v1009
    %1072 = vmatpush.msra.mxu0 %v1007
    %1073 = vmatpush.msra.mxu0 %v1005
    %1074 = vmatpush.msra.mxu0 %v1003
    %1075 = vmatpush.msra.mxu0 %v1001
    %1076 = vmatpush.msra.mxu0 %v999
    %1077 = vmatpush.msra.mxu0 %v997
    %1078 = vmatpush.msra.mxu0 %v995
    %1079 = vmatpush.msra.mxu0 %v993
    %1080 = vmatmul.f32.gmra.mxu0 %v990
    %v1081 = vpop.f32.mrf.mxu0
    %v1082 = vadd.f32 %v1060, %v1081
    %1083 = vdwg.mxu0
    %1084 = vmatpush.msra.mxu0 %v1055
    %1085 = vmatpush.msra.mxu0 %v1053
    %1086 = vmatpush.msra.mxu0 %v1051
    %1087 = vmatpush.msra.mxu0 %v1049
    %1088 = vmatpush.msra.mxu0 %v1047
    %1089 = vmatpush.msra.mxu0 %v1045
    %1090 = vmatpush.msra.mxu0 %v1043
    %1091 = vmatpush.msra.mxu0 %v1041
    %1092 = vmatpush.msra.mxu0 %v1039
    %1093 = vmatpush.msra.mxu0 %v1037
    %1094 = vmatpush.msra.mxu0 %v1035
    %1095 = vmatpush.msra.mxu0 %v1033
    %1096 = vmatpush.msra.mxu0 %v1031
    %1097 = vmatpush.msra.mxu0 %v1029
    %1098 = vmatpush.msra.mxu0 %v1027
    %1099 = vmatpush.msra.mxu0 %v1025
    %1100 = vmatmul.f32.gmra.mxu0 %v991
    %v1101 = vpop.f32.mrf.mxu0
    %v1102 = vadd.f32 %v1082, %v1101
    %1103 = vdwg.mxu0
    %1104 = vmatpush.msra.mxu0 %v1024
    %1105 = vmatpush.msra.mxu0 %v1022
    %1106 = vmatpush.msra.mxu0 %v1020
    %1107 = vmatpush.msra.mxu0 %v1018
    %1108 = vmatpush.msra.mxu0 %v1016
    %1109 = vmatpush.msra.mxu0 %v1014
    %1110 = vmatpush.msra.mxu0 %v1012
    %1111 = vmatpush.msra.mxu0 %v1010
    %1112 = vmatpush.msra.mxu0 %v1008
    %1113 = vmatpush.msra.mxu0 %v1006
    %1114 = vmatpush.msra.mxu0 %v1004
    %1115 = vmatpush.msra.mxu0 %v1002
    %1116 = vmatpush.msra.mxu0 %v1000
    %1117 = vmatpush.msra.mxu0 %v998
    %1118 = vmatpush.msra.mxu0 %v996
    %1119 = vmatpush.msra.mxu0 %v994
    %1120 = vmatmul.f32.gmra.mxu0 %v990
    %v1121 = vpop.f32.mrf.mxu0
    %v1122 = vadd.f32 %v1061, %v1121
    %1123 = vdwg.mxu0
    %1124 = vmatpush.msra.mxu0 %v1056
    %1125 = vmatpush.msra.mxu0 %v1054
    %1126 = vmatpush.msra.mxu0 %v1052
    %1127 = vmatpush.msra.mxu0 %v1050
    %1128 = vmatpush.msra.mxu0 %v1048
    %1129 = vmatpush.msra.mxu0 %v1046
    %1130 = vmatpush.msra.mxu0 %v1044
    %1131 = vmatpush.msra.mxu0 %v1042
    %1132 = vmatpush.msra.mxu0 %v1040
    %1133 = vmatpush.msra.mxu0 %v1038
    %1134 = vmatpush.msra.mxu0 %v1036
    %1135 = vmatpush.msra.mxu0 %v1034
    %1136 = vmatpush.msra.mxu0 %v1032
    %1137 = vmatpush.msra.mxu0 %v1030
    %1138 = vmatpush.msra.mxu0 %v1028
    %1139 = vmatpush.msra.mxu0 %v1026
    %1140 = vmatmul.f32.gmra.mxu0 %v991
    %v1141 = vpop.f32.mrf.mxu0
    %v1142 = vadd.f32 %v1122, %v1141
    %1143 = vdwg.mxu0
    %s1144 = scalar_lea.vmem [#allocation8], 1024
    %v1145 = vld [vmem:[%s1144] sm:$0xff]
    %v1146 = vld [vmem:[%s1144 + $0x8] sm:$0xff]
    %v1147 = vld [vmem:[%s1144 + $0x10] sm:$0xff]
    %v1148 = vld [vmem:[%s1144 + $0x18] sm:$0xff]
    %v1149 = vld [vmem:[%s1144 + $0x20] sm:$0xff]
    %v1150 = vld [vmem:[%s1144 + $0x28] sm:$0xff]
    %v1151 = vld [vmem:[%s1144 + $0x30] sm:$0xff]
    %v1152 = vld [vmem:[%s1144 + $0x38] sm:$0xff]
    %v1153 = vld [vmem:[%s1144 + $0x40] sm:$0xff]
    %v1154 = vld [vmem:[%s1144 + $0x48] sm:$0xff]
    %v1155 = vld [vmem:[%s1144 + $0x50] sm:$0xff]
    %v1156 = vld [vmem:[%s1144 + $0x58] sm:$0xff]
    %v1157 = vld [vmem:[%s1144 + $0x60] sm:$0xff]
    %v1158 = vld [vmem:[%s1144 + $0x68] sm:$0xff]
    %v1159 = vld [vmem:[%s1144 + $0x70] sm:$0xff]
    %v1160 = vld [vmem:[%s1144 + $0x78] sm:$0xff]
    %v1161 = vld [vmem:[%s1144 + $0x80] sm:$0xff]
    %v1162 = vld [vmem:[%s1144 + $0x88] sm:$0xff]
    %v1163 = vld [vmem:[%s1144 + $0x90] sm:$0xff]
    %v1164 = vld [vmem:[%s1144 + $0x98] sm:$0xff]
    %v1165 = vld [vmem:[%s1144 + $0xa0] sm:$0xff]
    %v1166 = vld [vmem:[%s1144 + $0xa8] sm:$0xff]
    %v1167 = vld [vmem:[%s1144 + $0xb0] sm:$0xff]
    %v1168 = vld [vmem:[%s1144 + $0xb8] sm:$0xff]
    %v1169 = vld [vmem:[%s1144 + $0xc0] sm:$0xff]
    %v1170 = vld [vmem:[%s1144 + $0xc8] sm:$0xff]
    %v1171 = vld [vmem:[%s1144 + $0xd0] sm:$0xff]
    %v1172 = vld [vmem:[%s1144 + $0xd8] sm:$0xff]
    %v1173 = vld [vmem:[%s1144 + $0xe0] sm:$0xff]
    %v1174 = vld [vmem:[%s1144 + $0xe8] sm:$0xff]
    %v1175 = vld [vmem:[%s1144 + $0xf0] sm:$0xff]
    %v1176 = vld [vmem:[%s1144 + $0xf8] sm:$0xff]
    %v1177 = vld [vmem:[%s1144 + $0x100] sm:$0xff]
    %v1178 = vld [vmem:[%s1144 + $0x108] sm:$0xff]
    %v1179 = vld [vmem:[%s1144 + $0x110] sm:$0xff]
    %v1180 = vld [vmem:[%s1144 + $0x118] sm:$0xff]
    %v1181 = vld [vmem:[%s1144 + $0x120] sm:$0xff]
    %v1182 = vld [vmem:[%s1144 + $0x128] sm:$0xff]
    %v1183 = vld [vmem:[%s1144 + $0x130] sm:$0xff]
    %v1184 = vld [vmem:[%s1144 + $0x138] sm:$0xff]
    %v1185 = vld [vmem:[%s1144 + $0x140] sm:$0xff]
    %v1186 = vld [vmem:[%s1144 + $0x148] sm:$0xff]
    %v1187 = vld [vmem:[%s1144 + $0x150] sm:$0xff]
    %v1188 = vld [vmem:[%s1144 + $0x158] sm:$0xff]
    %v1189 = vld [vmem:[%s1144 + $0x160] sm:$0xff]
    %v1190 = vld [vmem:[%s1144 + $0x168] sm:$0xff]
    %v1191 = vld [vmem:[%s1144 + $0x170] sm:$0xff]
    %v1192 = vld [vmem:[%s1144 + $0x178] sm:$0xff]
    %v1193 = vld [vmem:[%s1144 + $0x180] sm:$0xff]
    %v1194 = vld [vmem:[%s1144 + $0x188] sm:$0xff]
    %v1195 = vld [vmem:[%s1144 + $0x190] sm:$0xff]
    %v1196 = vld [vmem:[%s1144 + $0x198] sm:$0xff]
    %v1197 = vld [vmem:[%s1144 + $0x1a0] sm:$0xff]
    %v1198 = vld [vmem:[%s1144 + $0x1a8] sm:$0xff]
    %v1199 = vld [vmem:[%s1144 + $0x1b0] sm:$0xff]
    %v1200 = vld [vmem:[%s1144 + $0x1b8] sm:$0xff]
    %v1201 = vld [vmem:[%s1144 + $0x1c0] sm:$0xff]
    %v1202 = vld [vmem:[%s1144 + $0x1c8] sm:$0xff]
    %v1203 = vld [vmem:[%s1144 + $0x1d0] sm:$0xff]
    %v1204 = vld [vmem:[%s1144 + $0x1d8] sm:$0xff]
    %v1205 = vld [vmem:[%s1144 + $0x1e0] sm:$0xff]
    %v1206 = vld [vmem:[%s1144 + $0x1e8] sm:$0xff]
    %v1207 = vld [vmem:[%s1144 + $0x1f0] sm:$0xff]
    %v1208 = vld [vmem:[%s1144 + $0x1f8] sm:$0xff]
    %1209 = vmatpush.msra.mxu0 %v1175
    %1210 = vmatpush.msra.mxu0 %v1173
    %1211 = vmatpush.msra.mxu0 %v1171
    %1212 = vmatpush.msra.mxu0 %v1169
    %1213 = vmatpush.msra.mxu0 %v1167
    %1214 = vmatpush.msra.mxu0 %v1165
    %1215 = vmatpush.msra.mxu0 %v1163
    %1216 = vmatpush.msra.mxu0 %v1161
    %1217 = vmatpush.msra.mxu0 %v1159
    %1218 = vmatpush.msra.mxu0 %v1157
    %1219 = vmatpush.msra.mxu0 %v1155
    %1220 = vmatpush.msra.mxu0 %v1153
    %1221 = vmatpush.msra.mxu0 %v1151
    %1222 = vmatpush.msra.mxu0 %v1149
    %1223 = vmatpush.msra.mxu0 %v1147
    %1224 = vmatpush.msra.mxu0 %v1145
    %1225 = vmatmul.f32.gmra.mxu0 %v987
    %v1226 = vpop.f32.mrf.mxu0
    %v1227 = vadd.f32 0.0, %v1226
    %1228 = vdwg.mxu0
    %1229 = vmatpush.msra.mxu0 %v1207
    %1230 = vmatpush.msra.mxu0 %v1205
    %1231 = vmatpush.msra.mxu0 %v1203
    %1232 = vmatpush.msra.mxu0 %v1201
    %1233 = vmatpush.msra.mxu0 %v1199
    %1234 = vmatpush.msra.mxu0 %v1197
    %1235 = vmatpush.msra.mxu0 %v1195
    %1236 = vmatpush.msra.mxu0 %v1193
    %1237 = vmatpush.msra.mxu0 %v1191
    %1238 = vmatpush.msra.mxu0 %v1189
    %1239 = vmatpush.msra.mxu0 %v1187
    %1240 = vmatpush.msra.mxu0 %v1185
    %1241 = vmatpush.msra.mxu0 %v1183
    %1242 = vmatpush.msra.mxu0 %v1181
    %1243 = vmatpush.msra.mxu0 %v1179
    %1244 = vmatpush.msra.mxu0 %v1177
    %1245 = vmatmul.f32.gmra.mxu0 %v988
    %v1246 = vpop.f32.mrf.mxu0
    %v1247 = vadd.f32 %v1227, %v1246
    %1248 = vdwg.mxu0
    %1249 = vmatpush.msra.mxu0 %v1176
    %1250 = vmatpush.msra.mxu0 %v1174
    %1251 = vmatpush.msra.mxu0 %v1172
    %1252 = vmatpush.msra.mxu0 %v1170
    %1253 = vmatpush.msra.mxu0 %v1168
    %1254 = vmatpush.msra.mxu0 %v1166
    %1255 = vmatpush.msra.mxu0 %v1164
    %1256 = vmatpush.msra.mxu0 %v1162
    %1257 = vmatpush.msra.mxu0 %v1160
    %1258 = vmatpush.msra.mxu0 %v1158
    %1259 = vmatpush.msra.mxu0 %v1156
    %1260 = vmatpush.msra.mxu0 %v1154
    %1261 = vmatpush.msra.mxu0 %v1152
    %1262 = vmatpush.msra.mxu0 %v1150
    %1263 = vmatpush.msra.mxu0 %v1148
    %1264 = vmatpush.msra.mxu0 %v1146
    %1265 = vmatmul.f32.gmra.mxu0 %v987
    %v1266 = vpop.f32.mrf.mxu0
    %v1267 = vadd.f32 0.0, %v1266
    %1268 = vdwg.mxu0
    %1269 = vmatpush.msra.mxu0 %v1208
    %1270 = vmatpush.msra.mxu0 %v1206
    %1271 = vmatpush.msra.mxu0 %v1204
    %1272 = vmatpush.msra.mxu0 %v1202
    %1273 = vmatpush.msra.mxu0 %v1200
    %1274 = vmatpush.msra.mxu0 %v1198
    %1275 = vmatpush.msra.mxu0 %v1196
    %1276 = vmatpush.msra.mxu0 %v1194
    %1277 = vmatpush.msra.mxu0 %v1192
    %1278 = vmatpush.msra.mxu0 %v1190
    %1279 = vmatpush.msra.mxu0 %v1188
    %1280 = vmatpush.msra.mxu0 %v1186
    %1281 = vmatpush.msra.mxu0 %v1184
    %1282 = vmatpush.msra.mxu0 %v1182
    %1283 = vmatpush.msra.mxu0 %v1180
    %1284 = vmatpush.msra.mxu0 %v1178
    %1285 = vmatmul.f32.gmra.mxu0 %v988
    %v1286 = vpop.f32.mrf.mxu0
    %v1287 = vadd.f32 %v1267, %v1286
    %1288 = vdwg.mxu0
    %v1289 = vadd.f32 %v1102, %v1247
    %v1290 = vadd.f32 %v1142, %v1287
    %v1291 = vmax.f32 %v1289, 0.0
    %v1292 = vmax.f32 %v1290, 0.0
    %s1293 = scalar_lea.vmem [#allocation10], 1024
    %v1294 = vld [vmem:[%s1293] sm:$0xff]
    %v1295 = vld [vmem:[%s1293 + $0x8] sm:$0xff]
    %v1296 = vld [vmem:[%s1293 + $0x10] sm:$0xff]
    %v1297 = vld [vmem:[%s1293 + $0x18] sm:$0xff]
    %v1298 = vld [vmem:[%s1293 + $0x20] sm:$0xff]
    %v1299 = vld [vmem:[%s1293 + $0x28] sm:$0xff]
    %v1300 = vld [vmem:[%s1293 + $0x30] sm:$0xff]
    %v1301 = vld [vmem:[%s1293 + $0x38] sm:$0xff]
    %v1302 = vld [vmem:[%s1293 + $0x40] sm:$0xff]
    %v1303 = vld [vmem:[%s1293 + $0x48] sm:$0xff]
    %v1304 = vld [vmem:[%s1293 + $0x50] sm:$0xff]
    %v1305 = vld [vmem:[%s1293 + $0x58] sm:$0xff]
    %v1306 = vld [vmem:[%s1293 + $0x60] sm:$0xff]
    %v1307 = vld [vmem:[%s1293 + $0x68] sm:$0xff]
    %v1308 = vld [vmem:[%s1293 + $0x70] sm:$0xff]
    %v1309 = vld [vmem:[%s1293 + $0x78] sm:$0xff]
    %v1310 = vld [vmem:[%s1293 + $0x80] sm:$0xff]
    %v1311 = vld [vmem:[%s1293 + $0x88] sm:$0xff]
    %v1312 = vld [vmem:[%s1293 + $0x90] sm:$0xff]
    %v1313 = vld [vmem:[%s1293 + $0x98] sm:$0xff]
    %v1314 = vld [vmem:[%s1293 + $0xa0] sm:$0xff]
    %v1315 = vld [vmem:[%s1293 + $0xa8] sm:$0xff]
    %v1316 = vld [vmem:[%s1293 + $0xb0] sm:$0xff]
    %v1317 = vld [vmem:[%s1293 + $0xb8] sm:$0xff]
    %v1318 = vld [vmem:[%s1293 + $0xc0] sm:$0xff]
    %v1319 = vld [vmem:[%s1293 + $0xc8] sm:$0xff]
    %v1320 = vld [vmem:[%s1293 + $0xd0] sm:$0xff]
    %v1321 = vld [vmem:[%s1293 + $0xd8] sm:$0xff]
    %v1322 = vld [vmem:[%s1293 + $0xe0] sm:$0xff]
    %v1323 = vld [vmem:[%s1293 + $0xe8] sm:$0xff]
    %v1324 = vld [vmem:[%s1293 + $0xf0] sm:$0xff]
    %v1325 = vld [vmem:[%s1293 + $0xf8] sm:$0xff]
    %v1326 = vld [vmem:[%s1293 + $0x100] sm:$0xff]
    %v1327 = vld [vmem:[%s1293 + $0x108] sm:$0xff]
    %v1328 = vld [vmem:[%s1293 + $0x110] sm:$0xff]
    %v1329 = vld [vmem:[%s1293 + $0x118] sm:$0xff]
    %v1330 = vld [vmem:[%s1293 + $0x120] sm:$0xff]
    %v1331 = vld [vmem:[%s1293 + $0x128] sm:$0xff]
    %v1332 = vld [vmem:[%s1293 + $0x130] sm:$0xff]
    %v1333 = vld [vmem:[%s1293 + $0x138] sm:$0xff]
    %v1334 = vld [vmem:[%s1293 + $0x140] sm:$0xff]
    %v1335 = vld [vmem:[%s1293 + $0x148] sm:$0xff]
    %v1336 = vld [vmem:[%s1293 + $0x150] sm:$0xff]
    %v1337 = vld [vmem:[%s1293 + $0x158] sm:$0xff]
    %v1338 = vld [vmem:[%s1293 + $0x160] sm:$0xff]
    %v1339 = vld [vmem:[%s1293 + $0x168] sm:$0xff]
    %v1340 = vld [vmem:[%s1293 + $0x170] sm:$0xff]
    %v1341 = vld [vmem:[%s1293 + $0x178] sm:$0xff]
    %v1342 = vld [vmem:[%s1293 + $0x180] sm:$0xff]
    %v1343 = vld [vmem:[%s1293 + $0x188] sm:$0xff]
    %v1344 = vld [vmem:[%s1293 + $0x190] sm:$0xff]
    %v1345 = vld [vmem:[%s1293 + $0x198] sm:$0xff]
    %v1346 = vld [vmem:[%s1293 + $0x1a0] sm:$0xff]
    %v1347 = vld [vmem:[%s1293 + $0x1a8] sm:$0xff]
    %v1348 = vld [vmem:[%s1293 + $0x1b0] sm:$0xff]
    %v1349 = vld [vmem:[%s1293 + $0x1b8] sm:$0xff]
    %v1350 = vld [vmem:[%s1293 + $0x1c0] sm:$0xff]
    %v1351 = vld [vmem:[%s1293 + $0x1c8] sm:$0xff]
    %v1352 = vld [vmem:[%s1293 + $0x1d0] sm:$0xff]
    %v1353 = vld [vmem:[%s1293 + $0x1d8] sm:$0xff]
    %v1354 = vld [vmem:[%s1293 + $0x1e0] sm:$0xff]
    %v1355 = vld [vmem:[%s1293 + $0x1e8] sm:$0xff]
    %v1356 = vld [vmem:[%s1293 + $0x1f0] sm:$0xff]
    %v1357 = vld [vmem:[%s1293 + $0x1f8] sm:$0xff]
    %s1358 = scalar_lea.vmem [#allocation11], 4
    %v1359 = vld [vmem:[%s1358] sm:$0x3]
    %v1361 = vperm.slane %v1359, 0
    %v1362 = vperm.slane %v1359, 1
    %1365 = vmatpush.msra.mxu0 %v1324
    %1366 = vmatpush.msra.mxu0 %v1322
    %1367 = vmatpush.msra.mxu0 %v1320
    %1368 = vmatpush.msra.mxu0 %v1318
    %1369 = vmatpush.msra.mxu0 %v1316
    %1370 = vmatpush.msra.mxu0 %v1314
    %1371 = vmatpush.msra.mxu0 %v1312
    %1372 = vmatpush.msra.mxu0 %v1310
    %1373 = vmatpush.msra.mxu0 %v1308
    %1374 = vmatpush.msra.mxu0 %v1306
    %1375 = vmatpush.msra.mxu0 %v1304
    %1376 = vmatpush.msra.mxu0 %v1302
    %1377 = vmatpush.msra.mxu0 %v1300
    %1378 = vmatpush.msra.mxu0 %v1298
    %1379 = vmatpush.msra.mxu0 %v1296
    %1380 = vmatpush.msra.mxu0 %v1294
    %1381 = vmatmul.f32.gmra.mxu0 %v1291
    %v1382 = vpop.f32.mrf.mxu0
    %v1383 = vadd.f32 %v1361, %v1382
    %1384 = vdwg.mxu0
    %1385 = vmatpush.msra.mxu0 %v1356
    %1386 = vmatpush.msra.mxu0 %v1354
    %1387 = vmatpush.msra.mxu0 %v1352
    %1388 = vmatpush.msra.mxu0 %v1350
    %1389 = vmatpush.msra.mxu0 %v1348
    %1390 = vmatpush.msra.mxu0 %v1346
    %1391 = vmatpush.msra.mxu0 %v1344
    %1392 = vmatpush.msra.mxu0 %v1342
    %1393 = vmatpush.msra.mxu0 %v1340
    %1394 = vmatpush.msra.mxu0 %v1338
    %1395 = vmatpush.msra.mxu0 %v1336
    %1396 = vmatpush.msra.mxu0 %v1334
    %1397 = vmatpush.msra.mxu0 %v1332
    %1398 = vmatpush.msra.mxu0 %v1330
    %1399 = vmatpush.msra.mxu0 %v1328
    %1400 = vmatpush.msra.mxu0 %v1326
    %1401 = vmatmul.f32.gmra.mxu0 %v1292
    %v1402 = vpop.f32.mrf.mxu0
    %v1403 = vadd.f32 %v1383, %v1402
    %1404 = vdwg.mxu0
    %1405 = vmatpush.msra.mxu0 %v1325
    %1406 = vmatpush.msra.mxu0 %v1323
    %1407 = vmatpush.msra.mxu0 %v1321
    %1408 = vmatpush.msra.mxu0 %v1319
    %1409 = vmatpush.msra.mxu0 %v1317
    %1410 = vmatpush.msra.mxu0 %v1315
    %1411 = vmatpush.msra.mxu0 %v1313
    %1412 = vmatpush.msra.mxu0 %v1311
    %1413 = vmatpush.msra.mxu0 %v1309
    %1414 = vmatpush.msra.mxu0 %v1307
    %1415 = vmatpush.msra.mxu0 %v1305
    %1416 = vmatpush.msra.mxu0 %v1303
    %1417 = vmatpush.msra.mxu0 %v1301
    %1418 = vmatpush.msra.mxu0 %v1299
    %1419 = vmatpush.msra.mxu0 %v1297
    %1420 = vmatpush.msra.mxu0 %v1295
    %1421 = vmatmul.f32.gmra.mxu0 %v1291
    %v1422 = vpop.f32.mrf.mxu0
    %v1423 = vadd.f32 %v1362, %v1422
    %1424 = vdwg.mxu0
    %1425 = vmatpush.msra.mxu0 %v1357
    %1426 = vmatpush.msra.mxu0 %v1355
    %1427 = vmatpush.msra.mxu0 %v1353
    %1428 = vmatpush.msra.mxu0 %v1351
    %1429 = vmatpush.msra.mxu0 %v1349
    %1430 = vmatpush.msra.mxu0 %v1347
    %1431 = vmatpush.msra.mxu0 %v1345
    %1432 = vmatpush.msra.mxu0 %v1343
    %1433 = vmatpush.msra.mxu0 %v1341
    %1434 = vmatpush.msra.mxu0 %v1339
    %1435 = vmatpush.msra.mxu0 %v1337
    %1436 = vmatpush.msra.mxu0 %v1335
    %1437 = vmatpush.msra.mxu0 %v1333
    %1438 = vmatpush.msra.mxu0 %v1331
    %1439 = vmatpush.msra.mxu0 %v1329
    %1440 = vmatpush.msra.mxu0 %v1327
    %1441 = vmatmul.f32.gmra.mxu0 %v1292
    %v1442 = vpop.f32.mrf.mxu0
    %v1443 = vadd.f32 %v1423, %v1442
    %1444 = vdwg.mxu0
    %v1445 = vadd.f32 %v1403, %v987
    %v1446 = vadd.f32 %v1443, %v988
    %v1447 = vmax.f32 %v1445, 0.0
    %v1448 = vmax.f32 %v1446, 0.0
    %s1449 = scalar_lea.vmem [#allocation2], 48
    %v1450 = vld [vmem:[%s1449] sm:$0xff]
    %v1451 = vld [vmem:[%s1449 + $0x8] sm:$0xff]
    %s1452 = scalar_lea.vmem [#allocation5], 1536
    %v1453 = vld [vmem:[%s1452] sm:$0xff]
    %v1454 = vld [vmem:[%s1452 + $0x8] sm:$0xff]
    %v1455 = vld [vmem:[%s1452 + $0x10] sm:$0xff]
    %v1456 = vld [vmem:[%s1452 + $0x18] sm:$0xff]
    %v1457 = vld [vmem:[%s1452 + $0x20] sm:$0xff]
    %v1458 = vld [vmem:[%s1452 + $0x28] sm:$0xff]
    %v1459 = vld [vmem:[%s1452 + $0x30] sm:$0xff]
    %v1460 = vld [vmem:[%s1452 + $0x38] sm:$0xff]
    %v1461 = vld [vmem:[%s1452 + $0x40] sm:$0xff]
    %v1462 = vld [vmem:[%s1452 + $0x48] sm:$0xff]
    %v1463 = vld [vmem:[%s1452 + $0x50] sm:$0xff]
    %v1464 = vld [vmem:[%s1452 + $0x58] sm:$0xff]
    %v1465 = vld [vmem:[%s1452 + $0x60] sm:$0xff]
    %v1466 = vld [vmem:[%s1452 + $0x68] sm:$0xff]
    %v1467 = vld [vmem:[%s1452 + $0x70] sm:$0xff]
    %v1468 = vld [vmem:[%s1452 + $0x78] sm:$0xff]
    %v1469 = vld [vmem:[%s1452 + $0x80] sm:$0xff]
    %v1470 = vld [vmem:[%s1452 + $0x88] sm:$0xff]
    %v1471 = vld [vmem:[%s1452 + $0x90] sm:$0xff]
    %v1472 = vld [vmem:[%s1452 + $0x98] sm:$0xff]
    %v1473 = vld [vmem:[%s1452 + $0xa0] sm:$0xff]
    %v1474 = vld [vmem:[%s1452 + $0xa8] sm:$0xff]
    %v1475 = vld [vmem:[%s1452 + $0xb0] sm:$0xff]
    %v1476 = vld [vmem:[%s1452 + $0xb8] sm:$0xff]
    %v1477 = vld [vmem:[%s1452 + $0xc0] sm:$0xff]
    %v1478 = vld [vmem:[%s1452 + $0xc8] sm:$0xff]
    %v1479 = vld [vmem:[%s1452 + $0xd0] sm:$0xff]
    %v1480 = vld [vmem:[%s1452 + $0xd8] sm:$0xff]
    %v1481 = vld [vmem:[%s1452 + $0xe0] sm:$0xff]
    %v1482 = vld [vmem:[%s1452 + $0xe8] sm:$0xff]
    %v1483 = vld [vmem:[%s1452 + $0xf0] sm:$0xff]
    %v1484 = vld [vmem:[%s1452 + $0xf8] sm:$0xff]
    %v1485 = vld [vmem:[%s1452 + $0x100] sm:$0xff]
    %v1486 = vld [vmem:[%s1452 + $0x108] sm:$0xff]
    %v1487 = vld [vmem:[%s1452 + $0x110] sm:$0xff]
    %v1488 = vld [vmem:[%s1452 + $0x118] sm:$0xff]
    %v1489 = vld [vmem:[%s1452 + $0x120] sm:$0xff]
    %v1490 = vld [vmem:[%s1452 + $0x128] sm:$0xff]
    %v1491 = vld [vmem:[%s1452 + $0x130] sm:$0xff]
    %v1492 = vld [vmem:[%s1452 + $0x138] sm:$0xff]
    %v1493 = vld [vmem:[%s1452 + $0x140] sm:$0xff]
    %v1494 = vld [vmem:[%s1452 + $0x148] sm:$0xff]
    %v1495 = vld [vmem:[%s1452 + $0x150] sm:$0xff]
    %v1496 = vld [vmem:[%s1452 + $0x158] sm:$0xff]
    %v1497 = vld [vmem:[%s1452 + $0x160] sm:$0xff]
    %v1498 = vld [vmem:[%s1452 + $0x168] sm:$0xff]
    %v1499 = vld [vmem:[%s1452 + $0x170] sm:$0xff]
    %v1500 = vld [vmem:[%s1452 + $0x178] sm:$0xff]
    %v1501 = vld [vmem:[%s1452 + $0x180] sm:$0xff]
    %v1502 = vld [vmem:[%s1452 + $0x188] sm:$0xff]
    %v1503 = vld [vmem:[%s1452 + $0x190] sm:$0xff]
    %v1504 = vld [vmem:[%s1452 + $0x198] sm:$0xff]
    %v1505 = vld [vmem:[%s1452 + $0x1a0] sm:$0xff]
    %v1506 = vld [vmem:[%s1452 + $0x1a8] sm:$0xff]
    %v1507 = vld [vmem:[%s1452 + $0x1b0] sm:$0xff]
    %v1508 = vld [vmem:[%s1452 + $0x1b8] sm:$0xff]
    %v1509 = vld [vmem:[%s1452 + $0x1c0] sm:$0xff]
    %v1510 = vld [vmem:[%s1452 + $0x1c8] sm:$0xff]
    %v1511 = vld [vmem:[%s1452 + $0x1d0] sm:$0xff]
    %v1512 = vld [vmem:[%s1452 + $0x1d8] sm:$0xff]
    %v1513 = vld [vmem:[%s1452 + $0x1e0] sm:$0xff]
    %v1514 = vld [vmem:[%s1452 + $0x1e8] sm:$0xff]
    %v1515 = vld [vmem:[%s1452 + $0x1f0] sm:$0xff]
    %v1516 = vld [vmem:[%s1452 + $0x1f8] sm:$0xff]
    %s1517 = scalar_lea.vmem [#allocation7], 6
    %v1518 = vld [vmem:[%s1517] sm:$0x3]
    %v1520 = vperm.slane %v1518, 0
    %v1521 = vperm.slane %v1518, 1
    %1524 = vmatpush.msra.mxu0 %v1483
    %1525 = vmatpush.msra.mxu0 %v1481
    %1526 = vmatpush.msra.mxu0 %v1479
    %1527 = vmatpush.msra.mxu0 %v1477
    %1528 = vmatpush.msra.mxu0 %v1475
    %1529 = vmatpush.msra.mxu0 %v1473
    %1530 = vmatpush.msra.mxu0 %v1471
    %1531 = vmatpush.msra.mxu0 %v1469
    %1532 = vmatpush.msra.mxu0 %v1467
    %1533 = vmatpush.msra.mxu0 %v1465
    %1534 = vmatpush.msra.mxu0 %v1463
    %1535 = vmatpush.msra.mxu0 %v1461
    %1536 = vmatpush.msra.mxu0 %v1459
    %1537 = vmatpush.msra.mxu0 %v1457
    %1538 = vmatpush.msra.mxu0 %v1455
    %1539 = vmatpush.msra.mxu0 %v1453
    %1540 = vmatmul.f32.gmra.mxu0 %v1450
    %v1541 = vpop.f32.mrf.mxu0
    %v1542 = vadd.f32 %v1520, %v1541
    %1543 = vdwg.mxu0
    %1544 = vmatpush.msra.mxu0 %v1515
    %1545 = vmatpush.msra.mxu0 %v1513
    %1546 = vmatpush.msra.mxu0 %v1511
    %1547 = vmatpush.msra.mxu0 %v1509
    %1548 = vmatpush.msra.mxu0 %v1507
    %1549 = vmatpush.msra.mxu0 %v1505
    %1550 = vmatpush.msra.mxu0 %v1503
    %1551 = vmatpush.msra.mxu0 %v1501
    %1552 = vmatpush.msra.mxu0 %v1499
    %1553 = vmatpush.msra.mxu0 %v1497
    %1554 = vmatpush.msra.mxu0 %v1495
    %1555 = vmatpush.msra.mxu0 %v1493
    %1556 = vmatpush.msra.mxu0 %v1491
    %1557 = vmatpush.msra.mxu0 %v1489
    %1558 = vmatpush.msra.mxu0 %v1487
    %1559 = vmatpush.msra.mxu0 %v1485
    %1560 = vmatmul.f32.gmra.mxu0 %v1451
    %v1561 = vpop.f32.mrf.mxu0
    %v1562 = vadd.f32 %v1542, %v1561
    %1563 = vdwg.mxu0
    %1564 = vmatpush.msra.mxu0 %v1484
    %1565 = vmatpush.msra.mxu0 %v1482
    %1566 = vmatpush.msra.mxu0 %v1480
    %1567 = vmatpush.msra.mxu0 %v1478
    %1568 = vmatpush.msra.mxu0 %v1476
    %1569 = vmatpush.msra.mxu0 %v1474
    %1570 = vmatpush.msra.mxu0 %v1472
    %1571 = vmatpush.msra.mxu0 %v1470
    %1572 = vmatpush.msra.mxu0 %v1468
    %1573 = vmatpush.msra.mxu0 %v1466
    %1574 = vmatpush.msra.mxu0 %v1464
    %1575 = vmatpush.msra.mxu0 %v1462
    %1576 = vmatpush.msra.mxu0 %v1460
    %1577 = vmatpush.msra.mxu0 %v1458
    %1578 = vmatpush.msra.mxu0 %v1456
    %1579 = vmatpush.msra.mxu0 %v1454
    %1580 = vmatmul.f32.gmra.mxu0 %v1450
    %v1581 = vpop.f32.mrf.mxu0
    %v1582 = vadd.f32 %v1521, %v1581
    %1583 = vdwg.mxu0
    %1584 = vmatpush.msra.mxu0 %v1516
    %1585 = vmatpush.msra.mxu0 %v1514
    %1586 = vmatpush.msra.mxu0 %v1512
    %1587 = vmatpush.msra.mxu0 %v1510
    %1588 = vmatpush.msra.mxu0 %v1508
    %1589 = vmatpush.msra.mxu0 %v1506
    %1590 = vmatpush.msra.mxu0 %v1504
    %1591 = vmatpush.msra.mxu0 %v1502
    %1592 = vmatpush.msra.mxu0 %v1500
    %1593 = vmatpush.msra.mxu0 %v1498
    %1594 = vmatpush.msra.mxu0 %v1496
    %1595 = vmatpush.msra.mxu0 %v1494
    %1596 = vmatpush.msra.mxu0 %v1492
    %1597 = vmatpush.msra.mxu0 %v1490
    %1598 = vmatpush.msra.mxu0 %v1488
    %1599 = vmatpush.msra.mxu0 %v1486
    %1600 = vmatmul.f32.gmra.mxu0 %v1451
    %v1601 = vpop.f32.mrf.mxu0
    %v1602 = vadd.f32 %v1582, %v1601
    %1603 = vdwg.mxu0
    %s1604 = scalar_lea.vmem [#allocation8], 1536
    %v1605 = vld [vmem:[%s1604] sm:$0xff]
    %v1606 = vld [vmem:[%s1604 + $0x8] sm:$0xff]
    %v1607 = vld [vmem:[%s1604 + $0x10] sm:$0xff]
    %v1608 = vld [vmem:[%s1604 + $0x18] sm:$0xff]
    %v1609 = vld [vmem:[%s1604 + $0x20] sm:$0xff]
    %v1610 = vld [vmem:[%s1604 + $0x28] sm:$0xff]
    %v1611 = vld [vmem:[%s1604 + $0x30] sm:$0xff]
    %v1612 = vld [vmem:[%s1604 + $0x38] sm:$0xff]
    %v1613 = vld [vmem:[%s1604 + $0x40] sm:$0xff]
    %v1614 = vld [vmem:[%s1604 + $0x48] sm:$0xff]
    %v1615 = vld [vmem:[%s1604 + $0x50] sm:$0xff]
    %v1616 = vld [vmem:[%s1604 + $0x58] sm:$0xff]
    %v1617 = vld [vmem:[%s1604 + $0x60] sm:$0xff]
    %v1618 = vld [vmem:[%s1604 + $0x68] sm:$0xff]
    %v1619 = vld [vmem:[%s1604 + $0x70] sm:$0xff]
    %v1620 = vld [vmem:[%s1604 + $0x78] sm:$0xff]
    %v1621 = vld [vmem:[%s1604 + $0x80] sm:$0xff]
    %v1622 = vld [vmem:[%s1604 + $0x88] sm:$0xff]
    %v1623 = vld [vmem:[%s1604 + $0x90] sm:$0xff]
    %v1624 = vld [vmem:[%s1604 + $0x98] sm:$0xff]
    %v1625 = vld [vmem:[%s1604 + $0xa0] sm:$0xff]
    %v1626 = vld [vmem:[%s1604 + $0xa8] sm:$0xff]
    %v1627 = vld [vmem:[%s1604 + $0xb0] sm:$0xff]
    %v1628 = vld [vmem:[%s1604 + $0xb8] sm:$0xff]
    %v1629 = vld [vmem:[%s1604 + $0xc0] sm:$0xff]
    %v1630 = vld [vmem:[%s1604 + $0xc8] sm:$0xff]
    %v1631 = vld [vmem:[%s1604 + $0xd0] sm:$0xff]
    %v1632 = vld [vmem:[%s1604 + $0xd8] sm:$0xff]
    %v1633 = vld [vmem:[%s1604 + $0xe0] sm:$0xff]
    %v1634 = vld [vmem:[%s1604 + $0xe8] sm:$0xff]
    %v1635 = vld [vmem:[%s1604 + $0xf0] sm:$0xff]
    %v1636 = vld [vmem:[%s1604 + $0xf8] sm:$0xff]
    %v1637 = vld [vmem:[%s1604 + $0x100] sm:$0xff]
    %v1638 = vld [vmem:[%s1604 + $0x108] sm:$0xff]
    %v1639 = vld [vmem:[%s1604 + $0x110] sm:$0xff]
    %v1640 = vld [vmem:[%s1604 + $0x118] sm:$0xff]
    %v1641 = vld [vmem:[%s1604 + $0x120] sm:$0xff]
    %v1642 = vld [vmem:[%s1604 + $0x128] sm:$0xff]
    %v1643 = vld [vmem:[%s1604 + $0x130] sm:$0xff]
    %v1644 = vld [vmem:[%s1604 + $0x138] sm:$0xff]
    %v1645 = vld [vmem:[%s1604 + $0x140] sm:$0xff]
    %v1646 = vld [vmem:[%s1604 + $0x148] sm:$0xff]
    %v1647 = vld [vmem:[%s1604 + $0x150] sm:$0xff]
    %v1648 = vld [vmem:[%s1604 + $0x158] sm:$0xff]
    %v1649 = vld [vmem:[%s1604 + $0x160] sm:$0xff]
    %v1650 = vld [vmem:[%s1604 + $0x168] sm:$0xff]
    %v1651 = vld [vmem:[%s1604 + $0x170] sm:$0xff]
    %v1652 = vld [vmem:[%s1604 + $0x178] sm:$0xff]
    %v1653 = vld [vmem:[%s1604 + $0x180] sm:$0xff]
    %v1654 = vld [vmem:[%s1604 + $0x188] sm:$0xff]
    %v1655 = vld [vmem:[%s1604 + $0x190] sm:$0xff]
    %v1656 = vld [vmem:[%s1604 + $0x198] sm:$0xff]
    %v1657 = vld [vmem:[%s1604 + $0x1a0] sm:$0xff]
    %v1658 = vld [vmem:[%s1604 + $0x1a8] sm:$0xff]
    %v1659 = vld [vmem:[%s1604 + $0x1b0] sm:$0xff]
    %v1660 = vld [vmem:[%s1604 + $0x1b8] sm:$0xff]
    %v1661 = vld [vmem:[%s1604 + $0x1c0] sm:$0xff]
    %v1662 = vld [vmem:[%s1604 + $0x1c8] sm:$0xff]
    %v1663 = vld [vmem:[%s1604 + $0x1d0] sm:$0xff]
    %v1664 = vld [vmem:[%s1604 + $0x1d8] sm:$0xff]
    %v1665 = vld [vmem:[%s1604 + $0x1e0] sm:$0xff]
    %v1666 = vld [vmem:[%s1604 + $0x1e8] sm:$0xff]
    %v1667 = vld [vmem:[%s1604 + $0x1f0] sm:$0xff]
    %v1668 = vld [vmem:[%s1604 + $0x1f8] sm:$0xff]
    %1669 = vmatpush.msra.mxu0 %v1635
    %1670 = vmatpush.msra.mxu0 %v1633
    %1671 = vmatpush.msra.mxu0 %v1631
    %1672 = vmatpush.msra.mxu0 %v1629
    %1673 = vmatpush.msra.mxu0 %v1627
    %1674 = vmatpush.msra.mxu0 %v1625
    %1675 = vmatpush.msra.mxu0 %v1623
    %1676 = vmatpush.msra.mxu0 %v1621
    %1677 = vmatpush.msra.mxu0 %v1619
    %1678 = vmatpush.msra.mxu0 %v1617
    %1679 = vmatpush.msra.mxu0 %v1615
    %1680 = vmatpush.msra.mxu0 %v1613
    %1681 = vmatpush.msra.mxu0 %v1611
    %1682 = vmatpush.msra.mxu0 %v1609
    %1683 = vmatpush.msra.mxu0 %v1607
    %1684 = vmatpush.msra.mxu0 %v1605
    %1685 = vmatmul.f32.gmra.mxu0 %v1447
    %v1686 = vpop.f32.mrf.mxu0
    %v1687 = vadd.f32 0.0, %v1686
    %1688 = vdwg.mxu0
    %1689 = vmatpush.msra.mxu0 %v1667
    %1690 = vmatpush.msra.mxu0 %v1665
    %1691 = vmatpush.msra.mxu0 %v1663
    %1692 = vmatpush.msra.mxu0 %v1661
    %1693 = vmatpush.msra.mxu0 %v1659
    %1694 = vmatpush.msra.mxu0 %v1657
    %1695 = vmatpush.msra.mxu0 %v1655
    %1696 = vmatpush.msra.mxu0 %v1653
    %1697 = vmatpush.msra.mxu0 %v1651
    %1698 = vmatpush.msra.mxu0 %v1649
    %1699 = vmatpush.msra.mxu0 %v1647
    %1700 = vmatpush.msra.mxu0 %v1645
    %1701 = vmatpush.msra.mxu0 %v1643
    %1702 = vmatpush.msra.mxu0 %v1641
    %1703 = vmatpush.msra.mxu0 %v1639
    %1704 = vmatpush.msra.mxu0 %v1637
    %1705 = vmatmul.f32.gmra.mxu0 %v1448
    %v1706 = vpop.f32.mrf.mxu0
    %v1707 = vadd.f32 %v1687, %v1706
    %1708 = vdwg.mxu0
    %1709 = vmatpush.msra.mxu0 %v1636
    %1710 = vmatpush.msra.mxu0 %v1634
    %1711 = vmatpush.msra.mxu0 %v1632
    %1712 = vmatpush.msra.mxu0 %v1630
    %1713 = vmatpush.msra.mxu0 %v1628
    %1714 = vmatpush.msra.mxu0 %v1626
    %1715 = vmatpush.msra.mxu0 %v1624
    %1716 = vmatpush.msra.mxu0 %v1622
    %1717 = vmatpush.msra.mxu0 %v1620
    %1718 = vmatpush.msra.mxu0 %v1618
    %1719 = vmatpush.msra.mxu0 %v1616
    %1720 = vmatpush.msra.mxu0 %v1614
    %1721 = vmatpush.msra.mxu0 %v1612
    %1722 = vmatpush.msra.mxu0 %v1610
    %1723 = vmatpush.msra.mxu0 %v1608
    %1724 = vmatpush.msra.mxu0 %v1606
    %1725 = vmatmul.f32.gmra.mxu0 %v1447
    %v1726 = vpop.f32.mrf.mxu0
    %v1727 = vadd.f32 0.0, %v1726
    %1728 = vdwg.mxu0
    %1729 = vmatpush.msra.mxu0 %v1668
    %1730 = vmatpush.msra.mxu0 %v1666
    %1731 = vmatpush.msra.mxu0 %v1664
    %1732 = vmatpush.msra.mxu0 %v1662
    %1733 = vmatpush.msra.mxu0 %v1660
    %1734 = vmatpush.msra.mxu0 %v1658
    %1735 = vmatpush.msra.mxu0 %v1656
    %1736 = vmatpush.msra.mxu0 %v1654
    %1737 = vmatpush.msra.mxu0 %v1652
    %1738 = vmatpush.msra.mxu0 %v1650
    %1739 = vmatpush.msra.mxu0 %v1648
    %1740 = vmatpush.msra.mxu0 %v1646
    %1741 = vmatpush.msra.mxu0 %v1644
    %1742 = vmatpush.msra.mxu0 %v1642
    %1743 = vmatpush.msra.mxu0 %v1640
    %1744 = vmatpush.msra.mxu0 %v1638
    %1745 = vmatmul.f32.gmra.mxu0 %v1448
    %v1746 = vpop.f32.mrf.mxu0
    %v1747 = vadd.f32 %v1727, %v1746
    %1748 = vdwg.mxu0
    %v1749 = vadd.f32 %v1562, %v1707
    %v1750 = vadd.f32 %v1602, %v1747
    %v1751 = vmax.f32 %v1749, 0.0
    %v1752 = vmax.f32 %v1750, 0.0
    %s1753 = scalar_lea.vmem [#allocation10], 1536
    %v1754 = vld [vmem:[%s1753] sm:$0xff]
    %v1755 = vld [vmem:[%s1753 + $0x8] sm:$0xff]
    %v1756 = vld [vmem:[%s1753 + $0x10] sm:$0xff]
    %v1757 = vld [vmem:[%s1753 + $0x18] sm:$0xff]
    %v1758 = vld [vmem:[%s1753 + $0x20] sm:$0xff]
    %v1759 = vld [vmem:[%s1753 + $0x28] sm:$0xff]
    %v1760 = vld [vmem:[%s1753 + $0x30] sm:$0xff]
    %v1761 = vld [vmem:[%s1753 + $0x38] sm:$0xff]
    %v1762 = vld [vmem:[%s1753 + $0x40] sm:$0xff]
    %v1763 = vld [vmem:[%s1753 + $0x48] sm:$0xff]
    %v1764 = vld [vmem:[%s1753 + $0x50] sm:$0xff]
    %v1765 = vld [vmem:[%s1753 + $0x58] sm:$0xff]
    %v1766 = vld [vmem:[%s1753 + $0x60] sm:$0xff]
    %v1767 = vld [vmem:[%s1753 + $0x68] sm:$0xff]
    %v1768 = vld [vmem:[%s1753 + $0x70] sm:$0xff]
    %v1769 = vld [vmem:[%s1753 + $0x78] sm:$0xff]
    %v1770 = vld [vmem:[%s1753 + $0x80] sm:$0xff]
    %v1771 = vld [vmem:[%s1753 + $0x88] sm:$0xff]
    %v1772 = vld [vmem:[%s1753 + $0x90] sm:$0xff]
    %v1773 = vld [vmem:[%s1753 + $0x98] sm:$0xff]
    %v1774 = vld [vmem:[%s1753 + $0xa0] sm:$0xff]
    %v1775 = vld [vmem:[%s1753 + $0xa8] sm:$0xff]
    %v1776 = vld [vmem:[%s1753 + $0xb0] sm:$0xff]
    %v1777 = vld [vmem:[%s1753 + $0xb8] sm:$0xff]
    %v1778 = vld [vmem:[%s1753 + $0xc0] sm:$0xff]
    %v1779 = vld [vmem:[%s1753 + $0xc8] sm:$0xff]
    %v1780 = vld [vmem:[%s1753 + $0xd0] sm:$0xff]
    %v1781 = vld [vmem:[%s1753 + $0xd8] sm:$0xff]
    %v1782 = vld [vmem:[%s1753 + $0xe0] sm:$0xff]
    %v1783 = vld [vmem:[%s1753 + $0xe8] sm:$0xff]
    %v1784 = vld [vmem:[%s1753 + $0xf0] sm:$0xff]
    %v1785 = vld [vmem:[%s1753 + $0xf8] sm:$0xff]
    %v1786 = vld [vmem:[%s1753 + $0x100] sm:$0xff]
    %v1787 = vld [vmem:[%s1753 + $0x108] sm:$0xff]
    %v1788 = vld [vmem:[%s1753 + $0x110] sm:$0xff]
    %v1789 = vld [vmem:[%s1753 + $0x118] sm:$0xff]
    %v1790 = vld [vmem:[%s1753 + $0x120] sm:$0xff]
    %v1791 = vld [vmem:[%s1753 + $0x128] sm:$0xff]
    %v1792 = vld [vmem:[%s1753 + $0x130] sm:$0xff]
    %v1793 = vld [vmem:[%s1753 + $0x138] sm:$0xff]
    %v1794 = vld [vmem:[%s1753 + $0x140] sm:$0xff]
    %v1795 = vld [vmem:[%s1753 + $0x148] sm:$0xff]
    %v1796 = vld [vmem:[%s1753 + $0x150] sm:$0xff]
    %v1797 = vld [vmem:[%s1753 + $0x158] sm:$0xff]
    %v1798 = vld [vmem:[%s1753 + $0x160] sm:$0xff]
    %v1799 = vld [vmem:[%s1753 + $0x168] sm:$0xff]
    %v1800 = vld [vmem:[%s1753 + $0x170] sm:$0xff]
    %v1801 = vld [vmem:[%s1753 + $0x178] sm:$0xff]
    %v1802 = vld [vmem:[%s1753 + $0x180] sm:$0xff]
    %v1803 = vld [vmem:[%s1753 + $0x188] sm:$0xff]
    %v1804 = vld [vmem:[%s1753 + $0x190] sm:$0xff]
    %v1805 = vld [vmem:[%s1753 + $0x198] sm:$0xff]
    %v1806 = vld [vmem:[%s1753 + $0x1a0] sm:$0xff]
    %v1807 = vld [vmem:[%s1753 + $0x1a8] sm:$0xff]
    %v1808 = vld [vmem:[%s1753 + $0x1b0] sm:$0xff]
    %v1809 = vld [vmem:[%s1753 + $0x1b8] sm:$0xff]
    %v1810 = vld [vmem:[%s1753 + $0x1c0] sm:$0xff]
    %v1811 = vld [vmem:[%s1753 + $0x1c8] sm:$0xff]
    %v1812 = vld [vmem:[%s1753 + $0x1d0] sm:$0xff]
    %v1813 = vld [vmem:[%s1753 + $0x1d8] sm:$0xff]
    %v1814 = vld [vmem:[%s1753 + $0x1e0] sm:$0xff]
    %v1815 = vld [vmem:[%s1753 + $0x1e8] sm:$0xff]
    %v1816 = vld [vmem:[%s1753 + $0x1f0] sm:$0xff]
    %v1817 = vld [vmem:[%s1753 + $0x1f8] sm:$0xff]
    %s1818 = scalar_lea.vmem [#allocation11], 6
    %v1819 = vld [vmem:[%s1818] sm:$0x3]
    %v1821 = vperm.slane %v1819, 0
    %v1822 = vperm.slane %v1819, 1
    %1825 = vmatpush.msra.mxu0 %v1784
    %1826 = vmatpush.msra.mxu0 %v1782
    %1827 = vmatpush.msra.mxu0 %v1780
    %1828 = vmatpush.msra.mxu0 %v1778
    %1829 = vmatpush.msra.mxu0 %v1776
    %1830 = vmatpush.msra.mxu0 %v1774
    %1831 = vmatpush.msra.mxu0 %v1772
    %1832 = vmatpush.msra.mxu0 %v1770
    %1833 = vmatpush.msra.mxu0 %v1768
    %1834 = vmatpush.msra.mxu0 %v1766
    %1835 = vmatpush.msra.mxu0 %v1764
    %1836 = vmatpush.msra.mxu0 %v1762
    %1837 = vmatpush.msra.mxu0 %v1760
    %1838 = vmatpush.msra.mxu0 %v1758
    %1839 = vmatpush.msra.mxu0 %v1756
    %1840 = vmatpush.msra.mxu0 %v1754
    %1841 = vmatmul.f32.gmra.mxu0 %v1751
    %v1842 = vpop.f32.mrf.mxu0
    %v1843 = vadd.f32 %v1821, %v1842
    %1844 = vdwg.mxu0
    %1845 = vmatpush.msra.mxu0 %v1816
    %1846 = vmatpush.msra.mxu0 %v1814
    %1847 = vmatpush.msra.mxu0 %v1812
    %1848 = vmatpush.msra.mxu0 %v1810
    %1849 = vmatpush.msra.mxu0 %v1808
    %1850 = vmatpush.msra.mxu0 %v1806
    %1851 = vmatpush.msra.mxu0 %v1804
    %1852 = vmatpush.msra.mxu0 %v1802
    %1853 = vmatpush.msra.mxu0 %v1800
    %1854 = vmatpush.msra.mxu0 %v1798
    %1855 = vmatpush.msra.mxu0 %v1796
    %1856 = vmatpush.msra.mxu0 %v1794
    %1857 = vmatpush.msra.mxu0 %v1792
    %1858 = vmatpush.msra.mxu0 %v1790
    %1859 = vmatpush.msra.mxu0 %v1788
    %1860 = vmatpush.msra.mxu0 %v1786
    %1861 = vmatmul.f32.gmra.mxu0 %v1752
    %v1862 = vpop.f32.mrf.mxu0
    %v1863 = vadd.f32 %v1843, %v1862
    %1864 = vdwg.mxu0
    %1865 = vmatpush.msra.mxu0 %v1785
    %1866 = vmatpush.msra.mxu0 %v1783
    %1867 = vmatpush.msra.mxu0 %v1781
    %1868 = vmatpush.msra.mxu0 %v1779
    %1869 = vmatpush.msra.mxu0 %v1777
    %1870 = vmatpush.msra.mxu0 %v1775
    %1871 = vmatpush.msra.mxu0 %v1773
    %1872 = vmatpush.msra.mxu0 %v1771
    %1873 = vmatpush.msra.mxu0 %v1769
    %1874 = vmatpush.msra.mxu0 %v1767
    %1875 = vmatpush.msra.mxu0 %v1765
    %1876 = vmatpush.msra.mxu0 %v1763
    %1877 = vmatpush.msra.mxu0 %v1761
    %1878 = vmatpush.msra.mxu0 %v1759
    %1879 = vmatpush.msra.mxu0 %v1757
    %1880 = vmatpush.msra.mxu0 %v1755
    %1881 = vmatmul.f32.gmra.mxu0 %v1751
    %v1882 = vpop.f32.mrf.mxu0
    %v1883 = vadd.f32 %v1822, %v1882
    %1884 = vdwg.mxu0
    %1885 = vmatpush.msra.mxu0 %v1817
    %1886 = vmatpush.msra.mxu0 %v1815
    %1887 = vmatpush.msra.mxu0 %v1813
    %1888 = vmatpush.msra.mxu0 %v1811
    %1889 = vmatpush.msra.mxu0 %v1809
    %1890 = vmatpush.msra.mxu0 %v1807
    %1891 = vmatpush.msra.mxu0 %v1805
    %1892 = vmatpush.msra.mxu0 %v1803
    %1893 = vmatpush.msra.mxu0 %v1801
    %1894 = vmatpush.msra.mxu0 %v1799
    %1895 = vmatpush.msra.mxu0 %v1797
    %1896 = vmatpush.msra.mxu0 %v1795
    %1897 = vmatpush.msra.mxu0 %v1793
    %1898 = vmatpush.msra.mxu0 %v1791
    %1899 = vmatpush.msra.mxu0 %v1789
    %1900 = vmatpush.msra.mxu0 %v1787
    %1901 = vmatmul.f32.gmra.mxu0 %v1752
    %v1902 = vpop.f32.mrf.mxu0
    %v1903 = vadd.f32 %v1883, %v1902
    %1904 = vdwg.mxu0
    %v1905 = vadd.f32 %v1863, %v1447
    %v1906 = vadd.f32 %v1903, %v1448
    %v1907 = vmax.f32 %v1905, 0.0
    %v1908 = vmax.f32 %v1906, 0.0
    %s1909 = scalar_lea.vmem [#allocation2], 64
    %v1910 = vld [vmem:[%s1909] sm:$0xff]
    %v1911 = vld [vmem:[%s1909 + $0x8] sm:$0xff]
    %s1912 = scalar_lea.vmem [#allocation5], 2048
    %v1913 = vld [vmem:[%s1912] sm:$0xff]
    %v1914 = vld [vmem:[%s1912 + $0x8] sm:$0xff]
    %v1915 = vld [vmem:[%s1912 + $0x10] sm:$0xff]
    %v1916 = vld [vmem:[%s1912 + $0x18] sm:$0xff]
    %v1917 = vld [vmem:[%s1912 + $0x20] sm:$0xff]
    %v1918 = vld [vmem:[%s1912 + $0x28] sm:$0xff]
    %v1919 = vld [vmem:[%s1912 + $0x30] sm:$0xff]
    %v1920 = vld [vmem:[%s1912 + $0x38] sm:$0xff]
    %v1921 = vld [vmem:[%s1912 + $0x40] sm:$0xff]
    %v1922 = vld [vmem:[%s1912 + $0x48] sm:$0xff]
    %v1923 = vld [vmem:[%s1912 + $0x50] sm:$0xff]
    %v1924 = vld [vmem:[%s1912 + $0x58] sm:$0xff]
    %v1925 = vld [vmem:[%s1912 + $0x60] sm:$0xff]
    %v1926 = vld [vmem:[%s1912 + $0x68] sm:$0xff]
    %v1927 = vld [vmem:[%s1912 + $0x70] sm:$0xff]
    %v1928 = vld [vmem:[%s1912 + $0x78] sm:$0xff]
    %v1929 = vld [vmem:[%s1912 + $0x80] sm:$0xff]
    %v1930 = vld [vmem:[%s1912 + $0x88] sm:$0xff]
    %v1931 = vld [vmem:[%s1912 + $0x90] sm:$0xff]
    %v1932 = vld [vmem:[%s1912 + $0x98] sm:$0xff]
    %v1933 = vld [vmem:[%s1912 + $0xa0] sm:$0xff]
    %v1934 = vld [vmem:[%s1912 + $0xa8] sm:$0xff]
    %v1935 = vld [vmem:[%s1912 + $0xb0] sm:$0xff]
    %v1936 = vld [vmem:[%s1912 + $0xb8] sm:$0xff]
    %v1937 = vld [vmem:[%s1912 + $0xc0] sm:$0xff]
    %v1938 = vld [vmem:[%s1912 + $0xc8] sm:$0xff]
    %v1939 = vld [vmem:[%s1912 + $0xd0] sm:$0xff]
    %v1940 = vld [vmem:[%s1912 + $0xd8] sm:$0xff]
    %v1941 = vld [vmem:[%s1912 + $0xe0] sm:$0xff]
    %v1942 = vld [vmem:[%s1912 + $0xe8] sm:$0xff]
    %v1943 = vld [vmem:[%s1912 + $0xf0] sm:$0xff]
    %v1944 = vld [vmem:[%s1912 + $0xf8] sm:$0xff]
    %v1945 = vld [vmem:[%s1912 + $0x100] sm:$0xff]
    %v1946 = vld [vmem:[%s1912 + $0x108] sm:$0xff]
    %v1947 = vld [vmem:[%s1912 + $0x110] sm:$0xff]
    %v1948 = vld [vmem:[%s1912 + $0x118] sm:$0xff]
    %v1949 = vld [vmem:[%s1912 + $0x120] sm:$0xff]
    %v1950 = vld [vmem:[%s1912 + $0x128] sm:$0xff]
    %v1951 = vld [vmem:[%s1912 + $0x130] sm:$0xff]
    %v1952 = vld [vmem:[%s1912 + $0x138] sm:$0xff]
    %v1953 = vld [vmem:[%s1912 + $0x140] sm:$0xff]
    %v1954 = vld [vmem:[%s1912 + $0x148] sm:$0xff]
    %v1955 = vld [vmem:[%s1912 + $0x150] sm:$0xff]
    %v1956 = vld [vmem:[%s1912 + $0x158] sm:$0xff]
    %v1957 = vld [vmem:[%s1912 + $0x160] sm:$0xff]
    %v1958 = vld [vmem:[%s1912 + $0x168] sm:$0xff]
    %v1959 = vld [vmem:[%s1912 + $0x170] sm:$0xff]
    %v1960 = vld [vmem:[%s1912 + $0x178] sm:$0xff]
    %v1961 = vld [vmem:[%s1912 + $0x180] sm:$0xff]
    %v1962 = vld [vmem:[%s1912 + $0x188] sm:$0xff]
    %v1963 = vld [vmem:[%s1912 + $0x190] sm:$0xff]
    %v1964 = vld [vmem:[%s1912 + $0x198] sm:$0xff]
    %v1965 = vld [vmem:[%s1912 + $0x1a0] sm:$0xff]
    %v1966 = vld [vmem:[%s1912 + $0x1a8] sm:$0xff]
    %v1967 = vld [vmem:[%s1912 + $0x1b0] sm:$0xff]
    %v1968 = vld [vmem:[%s1912 + $0x1b8] sm:$0xff]
    %v1969 = vld [vmem:[%s1912 + $0x1c0] sm:$0xff]
    %v1970 = vld [vmem:[%s1912 + $0x1c8] sm:$0xff]
    %v1971 = vld [vmem:[%s1912 + $0x1d0] sm:$0xff]
    %v1972 = vld [vmem:[%s1912 + $0x1d8] sm:$0xff]
    %v1973 = vld [vmem:[%s1912 + $0x1e0] sm:$0xff]
    %v1974 = vld [vmem:[%s1912 + $0x1e8] sm:$0xff]
    %v1975 = vld [vmem:[%s1912 + $0x1f0] sm:$0xff]
    %v1976 = vld [vmem:[%s1912 + $0x1f8] sm:$0xff]
    %s1977 = scalar_lea.vmem [#allocation7], 8
    %v1978 = vld [vmem:[%s1977] sm:$0x3]
    %v1980 = vperm.slane %v1978, 0
    %v1981 = vperm.slane %v1978, 1
    %1984 = vmatpush.msra.mxu0 %v1943
    %1985 = vmatpush.msra.mxu0 %v1941
    %1986 = vmatpush.msra.mxu0 %v1939
    %1987 = vmatpush.msra.mxu0 %v1937
    %1988 = vmatpush.msra.mxu0 %v1935
    %1989 = vmatpush.msra.mxu0 %v1933
    %1990 = vmatpush.msra.mxu0 %v1931
    %1991 = vmatpush.msra.mxu0 %v1929
    %1992 = vmatpush.msra.mxu0 %v1927
    %1993 = vmatpush.msra.mxu0 %v1925
    %1994 = vmatpush.msra.mxu0 %v1923
    %1995 = vmatpush.msra.mxu0 %v1921
    %1996 = vmatpush.msra.mxu0 %v1919
    %1997 = vmatpush.msra.mxu0 %v1917
    %1998 = vmatpush.msra.mxu0 %v1915
    %1999 = vmatpush.msra.mxu0 %v1913
    %2000 = vmatmul.f32.gmra.mxu0 %v1910
    %v2001 = vpop.f32.mrf.mxu0
    %v2002 = vadd.f32 %v1980, %v2001
    %2003 = vdwg.mxu0
    %2004 = vmatpush.msra.mxu0 %v1975
    %2005 = vmatpush.msra.mxu0 %v1973
    %2006 = vmatpush.msra.mxu0 %v1971
    %2007 = vmatpush.msra.mxu0 %v1969
    %2008 = vmatpush.msra.mxu0 %v1967
    %2009 = vmatpush.msra.mxu0 %v1965
    %2010 = vmatpush.msra.mxu0 %v1963
    %2011 = vmatpush.msra.mxu0 %v1961
    %2012 = vmatpush.msra.mxu0 %v1959
    %2013 = vmatpush.msra.mxu0 %v1957
    %2014 = vmatpush.msra.mxu0 %v1955
    %2015 = vmatpush.msra.mxu0 %v1953
    %2016 = vmatpush.msra.mxu0 %v1951
    %2017 = vmatpush.msra.mxu0 %v1949
    %2018 = vmatpush.msra.mxu0 %v1947
    %2019 = vmatpush.msra.mxu0 %v1945
    %2020 = vmatmul.f32.gmra.mxu0 %v1911
    %v2021 = vpop.f32.mrf.mxu0
    %v2022 = vadd.f32 %v2002, %v2021
    %2023 = vdwg.mxu0
    %2024 = vmatpush.msra.mxu0 %v1944
    %2025 = vmatpush.msra.mxu0 %v1942
    %2026 = vmatpush.msra.mxu0 %v1940
    %2027 = vmatpush.msra.mxu0 %v1938
    %2028 = vmatpush.msra.mxu0 %v1936
    %2029 = vmatpush.msra.mxu0 %v1934
    %2030 = vmatpush.msra.mxu0 %v1932
    %2031 = vmatpush.msra.mxu0 %v1930
    %2032 = vmatpush.msra.mxu0 %v1928
    %2033 = vmatpush.msra.mxu0 %v1926
    %2034 = vmatpush.msra.mxu0 %v1924
    %2035 = vmatpush.msra.mxu0 %v1922
    %2036 = vmatpush.msra.mxu0 %v1920
    %2037 = vmatpush.msra.mxu0 %v1918
    %2038 = vmatpush.msra.mxu0 %v1916
    %2039 = vmatpush.msra.mxu0 %v1914
    %2040 = vmatmul.f32.gmra.mxu0 %v1910
    %v2041 = vpop.f32.mrf.mxu0
    %v2042 = vadd.f32 %v1981, %v2041
    %2043 = vdwg.mxu0
    %2044 = vmatpush.msra.mxu0 %v1976
    %2045 = vmatpush.msra.mxu0 %v1974
    %2046 = vmatpush.msra.mxu0 %v1972
    %2047 = vmatpush.msra.mxu0 %v1970
    %2048 = vmatpush.msra.mxu0 %v1968
    %2049 = vmatpush.msra.mxu0 %v1966
    %2050 = vmatpush.msra.mxu0 %v1964
    %2051 = vmatpush.msra.mxu0 %v1962
    %2052 = vmatpush.msra.mxu0 %v1960
    %2053 = vmatpush.msra.mxu0 %v1958
    %2054 = vmatpush.msra.mxu0 %v1956
    %2055 = vmatpush.msra.mxu0 %v1954
    %2056 = vmatpush.msra.mxu0 %v1952
    %2057 = vmatpush.msra.mxu0 %v1950
    %2058 = vmatpush.msra.mxu0 %v1948
    %2059 = vmatpush.msra.mxu0 %v1946
    %2060 = vmatmul.f32.gmra.mxu0 %v1911
    %v2061 = vpop.f32.mrf.mxu0
    %v2062 = vadd.f32 %v2042, %v2061
    %2063 = vdwg.mxu0
    %s2064 = scalar_lea.vmem [#allocation8], 2048
    %v2065 = vld [vmem:[%s2064] sm:$0xff]
    %v2066 = vld [vmem:[%s2064 + $0x8] sm:$0xff]
    %v2067 = vld [vmem:[%s2064 + $0x10] sm:$0xff]
    %v2068 = vld [vmem:[%s2064 + $0x18] sm:$0xff]
    %v2069 = vld [vmem:[%s2064 + $0x20] sm:$0xff]
    %v2070 = vld [vmem:[%s2064 + $0x28] sm:$0xff]
    %v2071 = vld [vmem:[%s2064 + $0x30] sm:$0xff]
    %v2072 = vld [vmem:[%s2064 + $0x38] sm:$0xff]
    %v2073 = vld [vmem:[%s2064 + $0x40] sm:$0xff]
    %v2074 = vld [vmem:[%s2064 + $0x48] sm:$0xff]
    %v2075 = vld [vmem:[%s2064 + $0x50] sm:$0xff]
    %v2076 = vld [vmem:[%s2064 + $0x58] sm:$0xff]
    %v2077 = vld [vmem:[%s2064 + $0x60] sm:$0xff]
    %v2078 = vld [vmem:[%s2064 + $0x68] sm:$0xff]
    %v2079 = vld [vmem:[%s2064 + $0x70] sm:$0xff]
    %v2080 = vld [vmem:[%s2064 + $0x78] sm:$0xff]
    %v2081 = vld [vmem:[%s2064 + $0x80] sm:$0xff]
    %v2082 = vld [vmem:[%s2064 + $0x88] sm:$0xff]
    %v2083 = vld [vmem:[%s2064 + $0x90] sm:$0xff]
    %v2084 = vld [vmem:[%s2064 + $0x98] sm:$0xff]
    %v2085 = vld [vmem:[%s2064 + $0xa0] sm:$0xff]
    %v2086 = vld [vmem:[%s2064 + $0xa8] sm:$0xff]
    %v2087 = vld [vmem:[%s2064 + $0xb0] sm:$0xff]
    %v2088 = vld [vmem:[%s2064 + $0xb8] sm:$0xff]
    %v2089 = vld [vmem:[%s2064 + $0xc0] sm:$0xff]
    %v2090 = vld [vmem:[%s2064 + $0xc8] sm:$0xff]
    %v2091 = vld [vmem:[%s2064 + $0xd0] sm:$0xff]
    %v2092 = vld [vmem:[%s2064 + $0xd8] sm:$0xff]
    %v2093 = vld [vmem:[%s2064 + $0xe0] sm:$0xff]
    %v2094 = vld [vmem:[%s2064 + $0xe8] sm:$0xff]
    %v2095 = vld [vmem:[%s2064 + $0xf0] sm:$0xff]
    %v2096 = vld [vmem:[%s2064 + $0xf8] sm:$0xff]
    %v2097 = vld [vmem:[%s2064 + $0x100] sm:$0xff]
    %v2098 = vld [vmem:[%s2064 + $0x108] sm:$0xff]
    %v2099 = vld [vmem:[%s2064 + $0x110] sm:$0xff]
    %v2100 = vld [vmem:[%s2064 + $0x118] sm:$0xff]
    %v2101 = vld [vmem:[%s2064 + $0x120] sm:$0xff]
    %v2102 = vld [vmem:[%s2064 + $0x128] sm:$0xff]
    %v2103 = vld [vmem:[%s2064 + $0x130] sm:$0xff]
    %v2104 = vld [vmem:[%s2064 + $0x138] sm:$0xff]
    %v2105 = vld [vmem:[%s2064 + $0x140] sm:$0xff]
    %v2106 = vld [vmem:[%s2064 + $0x148] sm:$0xff]
    %v2107 = vld [vmem:[%s2064 + $0x150] sm:$0xff]
    %v2108 = vld [vmem:[%s2064 + $0x158] sm:$0xff]
    %v2109 = vld [vmem:[%s2064 + $0x160] sm:$0xff]
    %v2110 = vld [vmem:[%s2064 + $0x168] sm:$0xff]
    %v2111 = vld [vmem:[%s2064 + $0x170] sm:$0xff]
    %v2112 = vld [vmem:[%s2064 + $0x178] sm:$0xff]
    %v2113 = vld [vmem:[%s2064 + $0x180] sm:$0xff]
    %v2114 = vld [vmem:[%s2064 + $0x188] sm:$0xff]
    %v2115 = vld [vmem:[%s2064 + $0x190] sm:$0xff]
    %v2116 = vld [vmem:[%s2064 + $0x198] sm:$0xff]
    %v2117 = vld [vmem:[%s2064 + $0x1a0] sm:$0xff]
    %v2118 = vld [vmem:[%s2064 + $0x1a8] sm:$0xff]
    %v2119 = vld [vmem:[%s2064 + $0x1b0] sm:$0xff]
    %v2120 = vld [vmem:[%s2064 + $0x1b8] sm:$0xff]
    %v2121 = vld [vmem:[%s2064 + $0x1c0] sm:$0xff]
    %v2122 = vld [vmem:[%s2064 + $0x1c8] sm:$0xff]
    %v2123 = vld [vmem:[%s2064 + $0x1d0] sm:$0xff]
    %v2124 = vld [vmem:[%s2064 + $0x1d8] sm:$0xff]
    %v2125 = vld [vmem:[%s2064 + $0x1e0] sm:$0xff]
    %v2126 = vld [vmem:[%s2064 + $0x1e8] sm:$0xff]
    %v2127 = vld [vmem:[%s2064 + $0x1f0] sm:$0xff]
    %v2128 = vld [vmem:[%s2064 + $0x1f8] sm:$0xff]
    %2129 = vmatpush.msra.mxu0 %v2095
    %2130 = vmatpush.msra.mxu0 %v2093
    %2131 = vmatpush.msra.mxu0 %v2091
    %2132 = vmatpush.msra.mxu0 %v2089
    %2133 = vmatpush.msra.mxu0 %v2087
    %2134 = vmatpush.msra.mxu0 %v2085
    %2135 = vmatpush.msra.mxu0 %v2083
    %2136 = vmatpush.msra.mxu0 %v2081
    %2137 = vmatpush.msra.mxu0 %v2079
    %2138 = vmatpush.msra.mxu0 %v2077
    %2139 = vmatpush.msra.mxu0 %v2075
    %2140 = vmatpush.msra.mxu0 %v2073
    %2141 = vmatpush.msra.mxu0 %v2071
    %2142 = vmatpush.msra.mxu0 %v2069
    %2143 = vmatpush.msra.mxu0 %v2067
    %2144 = vmatpush.msra.mxu0 %v2065
    %2145 = vmatmul.f32.gmra.mxu0 %v1907
    %v2146 = vpop.f32.mrf.mxu0
    %v2147 = vadd.f32 0.0, %v2146
    %2148 = vdwg.mxu0
    %2149 = vmatpush.msra.mxu0 %v2127
    %2150 = vmatpush.msra.mxu0 %v2125
    %2151 = vmatpush.msra.mxu0 %v2123
    %2152 = vmatpush.msra.mxu0 %v2121
    %2153 = vmatpush.msra.mxu0 %v2119
    %2154 = vmatpush.msra.mxu0 %v2117
    %2155 = vmatpush.msra.mxu0 %v2115
    %2156 = vmatpush.msra.mxu0 %v2113
    %2157 = vmatpush.msra.mxu0 %v2111
    %2158 = vmatpush.msra.mxu0 %v2109
    %2159 = vmatpush.msra.mxu0 %v2107
    %2160 = vmatpush.msra.mxu0 %v2105
    %2161 = vmatpush.msra.mxu0 %v2103
    %2162 = vmatpush.msra.mxu0 %v2101
    %2163 = vmatpush.msra.mxu0 %v2099
    %2164 = vmatpush.msra.mxu0 %v2097
    %2165 = vmatmul.f32.gmra.mxu0 %v1908
    %v2166 = vpop.f32.mrf.mxu0
    %v2167 = vadd.f32 %v2147, %v2166
    %2168 = vdwg.mxu0
    %2169 = vmatpush.msra.mxu0 %v2096
    %2170 = vmatpush.msra.mxu0 %v2094
    %2171 = vmatpush.msra.mxu0 %v2092
    %2172 = vmatpush.msra.mxu0 %v2090
    %2173 = vmatpush.msra.mxu0 %v2088
    %2174 = vmatpush.msra.mxu0 %v2086
    %2175 = vmatpush.msra.mxu0 %v2084
    %2176 = vmatpush.msra.mxu0 %v2082
    %2177 = vmatpush.msra.mxu0 %v2080
    %2178 = vmatpush.msra.mxu0 %v2078
    %2179 = vmatpush.msra.mxu0 %v2076
    %2180 = vmatpush.msra.mxu0 %v2074
    %2181 = vmatpush.msra.mxu0 %v2072
    %2182 = vmatpush.msra.mxu0 %v2070
    %2183 = vmatpush.msra.mxu0 %v2068
    %2184 = vmatpush.msra.mxu0 %v2066
    %2185 = vmatmul.f32.gmra.mxu0 %v1907
    %v2186 = vpop.f32.mrf.mxu0
    %v2187 = vadd.f32 0.0, %v2186
    %2188 = vdwg.mxu0
    %2189 = vmatpush.msra.mxu0 %v2128
    %2190 = vmatpush.msra.mxu0 %v2126
    %2191 = vmatpush.msra.mxu0 %v2124
    %2192 = vmatpush.msra.mxu0 %v2122
    %2193 = vmatpush.msra.mxu0 %v2120
    %2194 = vmatpush.msra.mxu0 %v2118
    %2195 = vmatpush.msra.mxu0 %v2116
    %2196 = vmatpush.msra.mxu0 %v2114
    %2197 = vmatpush.msra.mxu0 %v2112
    %2198 = vmatpush.msra.mxu0 %v2110
    %2199 = vmatpush.msra.mxu0 %v2108
    %2200 = vmatpush.msra.mxu0 %v2106
    %2201 = vmatpush.msra.mxu0 %v2104
    %2202 = vmatpush.msra.mxu0 %v2102
    %2203 = vmatpush.msra.mxu0 %v2100
    %2204 = vmatpush.msra.mxu0 %v2098
    %2205 = vmatmul.f32.gmra.mxu0 %v1908
    %v2206 = vpop.f32.mrf.mxu0
    %v2207 = vadd.f32 %v2187, %v2206
    %2208 = vdwg.mxu0
    %v2209 = vadd.f32 %v2022, %v2167
    %v2210 = vadd.f32 %v2062, %v2207
    %v2211 = vmax.f32 %v2209, 0.0
    %v2212 = vmax.f32 %v2210, 0.0
    %s2213 = scalar_lea.vmem [#allocation10], 2048
    %v2214 = vld [vmem:[%s2213] sm:$0xff]
    %v2215 = vld [vmem:[%s2213 + $0x8] sm:$0xff]
    %v2216 = vld [vmem:[%s2213 + $0x10] sm:$0xff]
    %v2217 = vld [vmem:[%s2213 + $0x18] sm:$0xff]
    %v2218 = vld [vmem:[%s2213 + $0x20] sm:$0xff]
    %v2219 = vld [vmem:[%s2213 + $0x28] sm:$0xff]
    %v2220 = vld [vmem:[%s2213 + $0x30] sm:$0xff]
    %v2221 = vld [vmem:[%s2213 + $0x38] sm:$0xff]
    %v2222 = vld [vmem:[%s2213 + $0x40] sm:$0xff]
    %v2223 = vld [vmem:[%s2213 + $0x48] sm:$0xff]
    %v2224 = vld [vmem:[%s2213 + $0x50] sm:$0xff]
    %v2225 = vld [vmem:[%s2213 + $0x58] sm:$0xff]
    %v2226 = vld [vmem:[%s2213 + $0x60] sm:$0xff]
    %v2227 = vld [vmem:[%s2213 + $0x68] sm:$0xff]
    %v2228 = vld [vmem:[%s2213 + $0x70] sm:$0xff]
    %v2229 = vld [vmem:[%s2213 + $0x78] sm:$0xff]
    %v2230 = vld [vmem:[%s2213 + $0x80] sm:$0xff]
    %v2231 = vld [vmem:[%s2213 + $0x88] sm:$0xff]
    %v2232 = vld [vmem:[%s2213 + $0x90] sm:$0xff]
    %v2233 = vld [vmem:[%s2213 + $0x98] sm:$0xff]
    %v2234 = vld [vmem:[%s2213 + $0xa0] sm:$0xff]
    %v2235 = vld [vmem:[%s2213 + $0xa8] sm:$0xff]
    %v2236 = vld [vmem:[%s2213 + $0xb0] sm:$0xff]
    %v2237 = vld [vmem:[%s2213 + $0xb8] sm:$0xff]
    %v2238 = vld [vmem:[%s2213 + $0xc0] sm:$0xff]
    %v2239 = vld [vmem:[%s2213 + $0xc8] sm:$0xff]
    %v2240 = vld [vmem:[%s2213 + $0xd0] sm:$0xff]
    %v2241 = vld [vmem:[%s2213 + $0xd8] sm:$0xff]
    %v2242 = vld [vmem:[%s2213 + $0xe0] sm:$0xff]
    %v2243 = vld [vmem:[%s2213 + $0xe8] sm:$0xff]
    %v2244 = vld [vmem:[%s2213 + $0xf0] sm:$0xff]
    %v2245 = vld [vmem:[%s2213 + $0xf8] sm:$0xff]
    %v2246 = vld [vmem:[%s2213 + $0x100] sm:$0xff]
    %v2247 = vld [vmem:[%s2213 + $0x108] sm:$0xff]
    %v2248 = vld [vmem:[%s2213 + $0x110] sm:$0xff]
    %v2249 = vld [vmem:[%s2213 + $0x118] sm:$0xff]
    %v2250 = vld [vmem:[%s2213 + $0x120] sm:$0xff]
    %v2251 = vld [vmem:[%s2213 + $0x128] sm:$0xff]
    %v2252 = vld [vmem:[%s2213 + $0x130] sm:$0xff]
    %v2253 = vld [vmem:[%s2213 + $0x138] sm:$0xff]
    %v2254 = vld [vmem:[%s2213 + $0x140] sm:$0xff]
    %v2255 = vld [vmem:[%s2213 + $0x148] sm:$0xff]
    %v2256 = vld [vmem:[%s2213 + $0x150] sm:$0xff]
    %v2257 = vld [vmem:[%s2213 + $0x158] sm:$0xff]
    %v2258 = vld [vmem:[%s2213 + $0x160] sm:$0xff]
    %v2259 = vld [vmem:[%s2213 + $0x168] sm:$0xff]
    %v2260 = vld [vmem:[%s2213 + $0x170] sm:$0xff]
    %v2261 = vld [vmem:[%s2213 + $0x178] sm:$0xff]
    %v2262 = vld [vmem:[%s2213 + $0x180] sm:$0xff]
    %v2263 = vld [vmem:[%s2213 + $0x188] sm:$0xff]
    %v2264 = vld [vmem:[%s2213 + $0x190] sm:$0xff]
    %v2265 = vld [vmem:[%s2213 + $0x198] sm:$0xff]
    %v2266 = vld [vmem:[%s2213 + $0x1a0] sm:$0xff]
    %v2267 = vld [vmem:[%s2213 + $0x1a8] sm:$0xff]
    %v2268 = vld [vmem:[%s2213 + $0x1b0] sm:$0xff]
    %v2269 = vld [vmem:[%s2213 + $0x1b8] sm:$0xff]
    %v2270 = vld [vmem:[%s2213 + $0x1c0] sm:$0xff]
    %v2271 = vld [vmem:[%s2213 + $0x1c8] sm:$0xff]
    %v2272 = vld [vmem:[%s2213 + $0x1d0] sm:$0xff]
    %v2273 = vld [vmem:[%s2213 + $0x1d8] sm:$0xff]
    %v2274 = vld [vmem:[%s2213 + $0x1e0] sm:$0xff]
    %v2275 = vld [vmem:[%s2213 + $0x1e8] sm:$0xff]
    %v2276 = vld [vmem:[%s2213 + $0x1f0] sm:$0xff]
    %v2277 = vld [vmem:[%s2213 + $0x1f8] sm:$0xff]
    %s2278 = scalar_lea.vmem [#allocation11], 8
    %v2279 = vld [vmem:[%s2278] sm:$0x3]
    %v2281 = vperm.slane %v2279, 0
    %v2282 = vperm.slane %v2279, 1
    %2285 = vmatpush.msra.mxu0 %v2244
    %2286 = vmatpush.msra.mxu0 %v2242
    %2287 = vmatpush.msra.mxu0 %v2240
    %2288 = vmatpush.msra.mxu0 %v2238
    %2289 = vmatpush.msra.mxu0 %v2236
    %2290 = vmatpush.msra.mxu0 %v2234
    %2291 = vmatpush.msra.mxu0 %v2232
    %2292 = vmatpush.msra.mxu0 %v2230
    %2293 = vmatpush.msra.mxu0 %v2228
    %2294 = vmatpush.msra.mxu0 %v2226
    %2295 = vmatpush.msra.mxu0 %v2224
    %2296 = vmatpush.msra.mxu0 %v2222
    %2297 = vmatpush.msra.mxu0 %v2220
    %2298 = vmatpush.msra.mxu0 %v2218
    %2299 = vmatpush.msra.mxu0 %v2216
    %2300 = vmatpush.msra.mxu0 %v2214
    %2301 = vmatmul.f32.gmra.mxu0 %v2211
    %v2302 = vpop.f32.mrf.mxu0
    %v2303 = vadd.f32 %v2281, %v2302
    %2304 = vdwg.mxu0
    %2305 = vmatpush.msra.mxu0 %v2276
    %2306 = vmatpush.msra.mxu0 %v2274
    %2307 = vmatpush.msra.mxu0 %v2272
    %2308 = vmatpush.msra.mxu0 %v2270
    %2309 = vmatpush.msra.mxu0 %v2268
    %2310 = vmatpush.msra.mxu0 %v2266
    %2311 = vmatpush.msra.mxu0 %v2264
    %2312 = vmatpush.msra.mxu0 %v2262
    %2313 = vmatpush.msra.mxu0 %v2260
    %2314 = vmatpush.msra.mxu0 %v2258
    %2315 = vmatpush.msra.mxu0 %v2256
    %2316 = vmatpush.msra.mxu0 %v2254
    %2317 = vmatpush.msra.mxu0 %v2252
    %2318 = vmatpush.msra.mxu0 %v2250
    %2319 = vmatpush.msra.mxu0 %v2248
    %2320 = vmatpush.msra.mxu0 %v2246
    %2321 = vmatmul.f32.gmra.mxu0 %v2212
    %v2322 = vpop.f32.mrf.mxu0
    %v2323 = vadd.f32 %v2303, %v2322
    %2324 = vdwg.mxu0
    %2325 = vmatpush.msra.mxu0 %v2245
    %2326 = vmatpush.msra.mxu0 %v2243
    %2327 = vmatpush.msra.mxu0 %v2241
    %2328 = vmatpush.msra.mxu0 %v2239
    %2329 = vmatpush.msra.mxu0 %v2237
    %2330 = vmatpush.msra.mxu0 %v2235
    %2331 = vmatpush.msra.mxu0 %v2233
    %2332 = vmatpush.msra.mxu0 %v2231
    %2333 = vmatpush.msra.mxu0 %v2229
    %2334 = vmatpush.msra.mxu0 %v2227
    %2335 = vmatpush.msra.mxu0 %v2225
    %2336 = vmatpush.msra.mxu0 %v2223
    %2337 = vmatpush.msra.mxu0 %v2221
    %2338 = vmatpush.msra.mxu0 %v2219
    %2339 = vmatpush.msra.mxu0 %v2217
    %2340 = vmatpush.msra.mxu0 %v2215
    %2341 = vmatmul.f32.gmra.mxu0 %v2211
    %v2342 = vpop.f32.mrf.mxu0
    %v2343 = vadd.f32 %v2282, %v2342
    %2344 = vdwg.mxu0
    %2345 = vmatpush.msra.mxu0 %v2277
    %2346 = vmatpush.msra.mxu0 %v2275
    %2347 = vmatpush.msra.mxu0 %v2273
    %2348 = vmatpush.msra.mxu0 %v2271
    %2349 = vmatpush.msra.mxu0 %v2269
    %2350 = vmatpush.msra.mxu0 %v2267
    %2351 = vmatpush.msra.mxu0 %v2265
    %2352 = vmatpush.msra.mxu0 %v2263
    %2353 = vmatpush.msra.mxu0 %v2261
    %2354 = vmatpush.msra.mxu0 %v2259
    %2355 = vmatpush.msra.mxu0 %v2257
    %2356 = vmatpush.msra.mxu0 %v2255
    %2357 = vmatpush.msra.mxu0 %v2253
    %2358 = vmatpush.msra.mxu0 %v2251
    %2359 = vmatpush.msra.mxu0 %v2249
    %2360 = vmatpush.msra.mxu0 %v2247
    %2361 = vmatmul.f32.gmra.mxu0 %v2212
    %v2362 = vpop.f32.mrf.mxu0
    %v2363 = vadd.f32 %v2343, %v2362
    %2364 = vdwg.mxu0
    %v2365 = vadd.f32 %v2323, %v1907
    %v2366 = vadd.f32 %v2363, %v1908
    %v2367 = vmax.f32 %v2365, 0.0
    %v2368 = vmax.f32 %v2366, 0.0
    %s2369 = scalar_lea.vmem [#allocation2], 80
    %v2370 = vld [vmem:[%s2369] sm:$0xff]
    %v2371 = vld [vmem:[%s2369 + $0x8] sm:$0xff]
    %s2372 = scalar_lea.vmem [#allocation5], 2560
    %v2373 = vld [vmem:[%s2372] sm:$0xff]
    %v2374 = vld [vmem:[%s2372 + $0x8] sm:$0xff]
    %v2375 = vld [vmem:[%s2372 + $0x10] sm:$0xff]
    %v2376 = vld [vmem:[%s2372 + $0x18] sm:$0xff]
    %v2377 = vld [vmem:[%s2372 + $0x20] sm:$0xff]
    %v2378 = vld [vmem:[%s2372 + $0x28] sm:$0xff]
    %v2379 = vld [vmem:[%s2372 + $0x30] sm:$0xff]
    %v2380 = vld [vmem:[%s2372 + $0x38] sm:$0xff]
    %v2381 = vld [vmem:[%s2372 + $0x40] sm:$0xff]
    %v2382 = vld [vmem:[%s2372 + $0x48] sm:$0xff]
    %v2383 = vld [vmem:[%s2372 + $0x50] sm:$0xff]
    %v2384 = vld [vmem:[%s2372 + $0x58] sm:$0xff]
    %v2385 = vld [vmem:[%s2372 + $0x60] sm:$0xff]
    %v2386 = vld [vmem:[%s2372 + $0x68] sm:$0xff]
    %v2387 = vld [vmem:[%s2372 + $0x70] sm:$0xff]
    %v2388 = vld [vmem:[%s2372 + $0x78] sm:$0xff]
    %v2389 = vld [vmem:[%s2372 + $0x80] sm:$0xff]
    %v2390 = vld [vmem:[%s2372 + $0x88] sm:$0xff]
    %v2391 = vld [vmem:[%s2372 + $0x90] sm:$0xff]
    %v2392 = vld [vmem:[%s2372 + $0x98] sm:$0xff]
    %v2393 = vld [vmem:[%s2372 + $0xa0] sm:$0xff]
    %v2394 = vld [vmem:[%s2372 + $0xa8] sm:$0xff]
    %v2395 = vld [vmem:[%s2372 + $0xb0] sm:$0xff]
    %v2396 = vld [vmem:[%s2372 + $0xb8] sm:$0xff]
    %v2397 = vld [vmem:[%s2372 + $0xc0] sm:$0xff]
    %v2398 = vld [vmem:[%s2372 + $0xc8] sm:$0xff]
    %v2399 = vld [vmem:[%s2372 + $0xd0] sm:$0xff]
    %v2400 = vld [vmem:[%s2372 + $0xd8] sm:$0xff]
    %v2401 = vld [vmem:[%s2372 + $0xe0] sm:$0xff]
    %v2402 = vld [vmem:[%s2372 + $0xe8] sm:$0xff]
    %v2403 = vld [vmem:[%s2372 + $0xf0] sm:$0xff]
    %v2404 = vld [vmem:[%s2372 + $0xf8] sm:$0xff]
    %v2405 = vld [vmem:[%s2372 + $0x100] sm:$0xff]
    %v2406 = vld [vmem:[%s2372 + $0x108] sm:$0xff]
    %v2407 = vld [vmem:[%s2372 + $0x110] sm:$0xff]
    %v2408 = vld [vmem:[%s2372 + $0x118] sm:$0xff]
    %v2409 = vld [vmem:[%s2372 + $0x120] sm:$0xff]
    %v2410 = vld [vmem:[%s2372 + $0x128] sm:$0xff]
    %v2411 = vld [vmem:[%s2372 + $0x130] sm:$0xff]
    %v2412 = vld [vmem:[%s2372 + $0x138] sm:$0xff]
    %v2413 = vld [vmem:[%s2372 + $0x140] sm:$0xff]
    %v2414 = vld [vmem:[%s2372 + $0x148] sm:$0xff]
    %v2415 = vld [vmem:[%s2372 + $0x150] sm:$0xff]
    %v2416 = vld [vmem:[%s2372 + $0x158] sm:$0xff]
    %v2417 = vld [vmem:[%s2372 + $0x160] sm:$0xff]
    %v2418 = vld [vmem:[%s2372 + $0x168] sm:$0xff]
    %v2419 = vld [vmem:[%s2372 + $0x170] sm:$0xff]
    %v2420 = vld [vmem:[%s2372 + $0x178] sm:$0xff]
    %v2421 = vld [vmem:[%s2372 + $0x180] sm:$0xff]
    %v2422 = vld [vmem:[%s2372 + $0x188] sm:$0xff]
    %v2423 = vld [vmem:[%s2372 + $0x190] sm:$0xff]
    %v2424 = vld [vmem:[%s2372 + $0x198] sm:$0xff]
    %v2425 = vld [vmem:[%s2372 + $0x1a0] sm:$0xff]
    %v2426 = vld [vmem:[%s2372 + $0x1a8] sm:$0xff]
    %v2427 = vld [vmem:[%s2372 + $0x1b0] sm:$0xff]
    %v2428 = vld [vmem:[%s2372 + $0x1b8] sm:$0xff]
    %v2429 = vld [vmem:[%s2372 + $0x1c0] sm:$0xff]
    %v2430 = vld [vmem:[%s2372 + $0x1c8] sm:$0xff]
    %v2431 = vld [vmem:[%s2372 + $0x1d0] sm:$0xff]
    %v2432 = vld [vmem:[%s2372 + $0x1d8] sm:$0xff]
    %v2433 = vld [vmem:[%s2372 + $0x1e0] sm:$0xff]
    %v2434 = vld [vmem:[%s2372 + $0x1e8] sm:$0xff]
    %v2435 = vld [vmem:[%s2372 + $0x1f0] sm:$0xff]
    %v2436 = vld [vmem:[%s2372 + $0x1f8] sm:$0xff]
    %s2437 = scalar_lea.vmem [#allocation7], 10
    %v2438 = vld [vmem:[%s2437] sm:$0x3]
    %v2440 = vperm.slane %v2438, 0
    %v2441 = vperm.slane %v2438, 1
    %2444 = vmatpush.msra.mxu0 %v2403
    %2445 = vmatpush.msra.mxu0 %v2401
    %2446 = vmatpush.msra.mxu0 %v2399
    %2447 = vmatpush.msra.mxu0 %v2397
    %2448 = vmatpush.msra.mxu0 %v2395
    %2449 = vmatpush.msra.mxu0 %v2393
    %2450 = vmatpush.msra.mxu0 %v2391
    %2451 = vmatpush.msra.mxu0 %v2389
    %2452 = vmatpush.msra.mxu0 %v2387
    %2453 = vmatpush.msra.mxu0 %v2385
    %2454 = vmatpush.msra.mxu0 %v2383
    %2455 = vmatpush.msra.mxu0 %v2381
    %2456 = vmatpush.msra.mxu0 %v2379
    %2457 = vmatpush.msra.mxu0 %v2377
    %2458 = vmatpush.msra.mxu0 %v2375
    %2459 = vmatpush.msra.mxu0 %v2373
    %2460 = vmatmul.f32.gmra.mxu0 %v2370
    %v2461 = vpop.f32.mrf.mxu0
    %v2462 = vadd.f32 %v2440, %v2461
    %2463 = vdwg.mxu0
    %2464 = vmatpush.msra.mxu0 %v2435
    %2465 = vmatpush.msra.mxu0 %v2433
    %2466 = vmatpush.msra.mxu0 %v2431
    %2467 = vmatpush.msra.mxu0 %v2429
    %2468 = vmatpush.msra.mxu0 %v2427
    %2469 = vmatpush.msra.mxu0 %v2425
    %2470 = vmatpush.msra.mxu0 %v2423
    %2471 = vmatpush.msra.mxu0 %v2421
    %2472 = vmatpush.msra.mxu0 %v2419
    %2473 = vmatpush.msra.mxu0 %v2417
    %2474 = vmatpush.msra.mxu0 %v2415
    %2475 = vmatpush.msra.mxu0 %v2413
    %2476 = vmatpush.msra.mxu0 %v2411
    %2477 = vmatpush.msra.mxu0 %v2409
    %2478 = vmatpush.msra.mxu0 %v2407
    %2479 = vmatpush.msra.mxu0 %v2405
    %2480 = vmatmul.f32.gmra.mxu0 %v2371
    %v2481 = vpop.f32.mrf.mxu0
    %v2482 = vadd.f32 %v2462, %v2481
    %2483 = vdwg.mxu0
    %2484 = vmatpush.msra.mxu0 %v2404
    %2485 = vmatpush.msra.mxu0 %v2402
    %2486 = vmatpush.msra.mxu0 %v2400
    %2487 = vmatpush.msra.mxu0 %v2398
    %2488 = vmatpush.msra.mxu0 %v2396
    %2489 = vmatpush.msra.mxu0 %v2394
    %2490 = vmatpush.msra.mxu0 %v2392
    %2491 = vmatpush.msra.mxu0 %v2390
    %2492 = vmatpush.msra.mxu0 %v2388
    %2493 = vmatpush.msra.mxu0 %v2386
    %2494 = vmatpush.msra.mxu0 %v2384
    %2495 = vmatpush.msra.mxu0 %v2382
    %2496 = vmatpush.msra.mxu0 %v2380
    %2497 = vmatpush.msra.mxu0 %v2378
    %2498 = vmatpush.msra.mxu0 %v2376
    %2499 = vmatpush.msra.mxu0 %v2374
    %2500 = vmatmul.f32.gmra.mxu0 %v2370
    %v2501 = vpop.f32.mrf.mxu0
    %v2502 = vadd.f32 %v2441, %v2501
    %2503 = vdwg.mxu0
    %2504 = vmatpush.msra.mxu0 %v2436
    %2505 = vmatpush.msra.mxu0 %v2434
    %2506 = vmatpush.msra.mxu0 %v2432
    %2507 = vmatpush.msra.mxu0 %v2430
    %2508 = vmatpush.msra.mxu0 %v2428
    %2509 = vmatpush.msra.mxu0 %v2426
    %2510 = vmatpush.msra.mxu0 %v2424
    %2511 = vmatpush.msra.mxu0 %v2422
    %2512 = vmatpush.msra.mxu0 %v2420
    %2513 = vmatpush.msra.mxu0 %v2418
    %2514 = vmatpush.msra.mxu0 %v2416
    %2515 = vmatpush.msra.mxu0 %v2414
    %2516 = vmatpush.msra.mxu0 %v2412
    %2517 = vmatpush.msra.mxu0 %v2410
    %2518 = vmatpush.msra.mxu0 %v2408
    %2519 = vmatpush.msra.mxu0 %v2406
    %2520 = vmatmul.f32.gmra.mxu0 %v2371
    %v2521 = vpop.f32.mrf.mxu0
    %v2522 = vadd.f32 %v2502, %v2521
    %2523 = vdwg.mxu0
    %s2524 = scalar_lea.vmem [#allocation8], 2560
    %v2525 = vld [vmem:[%s2524] sm:$0xff]
    %v2526 = vld [vmem:[%s2524 + $0x8] sm:$0xff]
    %v2527 = vld [vmem:[%s2524 + $0x10] sm:$0xff]
    %v2528 = vld [vmem:[%s2524 + $0x18] sm:$0xff]
    %v2529 = vld [vmem:[%s2524 + $0x20] sm:$0xff]
    %v2530 = vld [vmem:[%s2524 + $0x28] sm:$0xff]
    %v2531 = vld [vmem:[%s2524 + $0x30] sm:$0xff]
    %v2532 = vld [vmem:[%s2524 + $0x38] sm:$0xff]
    %v2533 = vld [vmem:[%s2524 + $0x40] sm:$0xff]
    %v2534 = vld [vmem:[%s2524 + $0x48] sm:$0xff]
    %v2535 = vld [vmem:[%s2524 + $0x50] sm:$0xff]
    %v2536 = vld [vmem:[%s2524 + $0x58] sm:$0xff]
    %v2537 = vld [vmem:[%s2524 + $0x60] sm:$0xff]
    %v2538 = vld [vmem:[%s2524 + $0x68] sm:$0xff]
    %v2539 = vld [vmem:[%s2524 + $0x70] sm:$0xff]
    %v2540 = vld [vmem:[%s2524 + $0x78] sm:$0xff]
    %v2541 = vld [vmem:[%s2524 + $0x80] sm:$0xff]
    %v2542 = vld [vmem:[%s2524 + $0x88] sm:$0xff]
    %v2543 = vld [vmem:[%s2524 + $0x90] sm:$0xff]
    %v2544 = vld [vmem:[%s2524 + $0x98] sm:$0xff]
    %v2545 = vld [vmem:[%s2524 + $0xa0] sm:$0xff]
    %v2546 = vld [vmem:[%s2524 + $0xa8] sm:$0xff]
    %v2547 = vld [vmem:[%s2524 + $0xb0] sm:$0xff]
    %v2548 = vld [vmem:[%s2524 + $0xb8] sm:$0xff]
    %v2549 = vld [vmem:[%s2524 + $0xc0] sm:$0xff]
    %v2550 = vld [vmem:[%s2524 + $0xc8] sm:$0xff]
    %v2551 = vld [vmem:[%s2524 + $0xd0] sm:$0xff]
    %v2552 = vld [vmem:[%s2524 + $0xd8] sm:$0xff]
    %v2553 = vld [vmem:[%s2524 + $0xe0] sm:$0xff]
    %v2554 = vld [vmem:[%s2524 + $0xe8] sm:$0xff]
    %v2555 = vld [vmem:[%s2524 + $0xf0] sm:$0xff]
    %v2556 = vld [vmem:[%s2524 + $0xf8] sm:$0xff]
    %v2557 = vld [vmem:[%s2524 + $0x100] sm:$0xff]
    %v2558 = vld [vmem:[%s2524 + $0x108] sm:$0xff]
    %v2559 = vld [vmem:[%s2524 + $0x110] sm:$0xff]
    %v2560 = vld [vmem:[%s2524 + $0x118] sm:$0xff]
    %v2561 = vld [vmem:[%s2524 + $0x120] sm:$0xff]
    %v2562 = vld [vmem:[%s2524 + $0x128] sm:$0xff]
    %v2563 = vld [vmem:[%s2524 + $0x130] sm:$0xff]
    %v2564 = vld [vmem:[%s2524 + $0x138] sm:$0xff]
    %v2565 = vld [vmem:[%s2524 + $0x140] sm:$0xff]
    %v2566 = vld [vmem:[%s2524 + $0x148] sm:$0xff]
    %v2567 = vld [vmem:[%s2524 + $0x150] sm:$0xff]
    %v2568 = vld [vmem:[%s2524 + $0x158] sm:$0xff]
    %v2569 = vld [vmem:[%s2524 + $0x160] sm:$0xff]
    %v2570 = vld [vmem:[%s2524 + $0x168] sm:$0xff]
    %v2571 = vld [vmem:[%s2524 + $0x170] sm:$0xff]
    %v2572 = vld [vmem:[%s2524 + $0x178] sm:$0xff]
    %v2573 = vld [vmem:[%s2524 + $0x180] sm:$0xff]
    %v2574 = vld [vmem:[%s2524 + $0x188] sm:$0xff]
    %v2575 = vld [vmem:[%s2524 + $0x190] sm:$0xff]
    %v2576 = vld [vmem:[%s2524 + $0x198] sm:$0xff]
    %v2577 = vld [vmem:[%s2524 + $0x1a0] sm:$0xff]
    %v2578 = vld [vmem:[%s2524 + $0x1a8] sm:$0xff]
    %v2579 = vld [vmem:[%s2524 + $0x1b0] sm:$0xff]
    %v2580 = vld [vmem:[%s2524 + $0x1b8] sm:$0xff]
    %v2581 = vld [vmem:[%s2524 + $0x1c0] sm:$0xff]
    %v2582 = vld [vmem:[%s2524 + $0x1c8] sm:$0xff]
    %v2583 = vld [vmem:[%s2524 + $0x1d0] sm:$0xff]
    %v2584 = vld [vmem:[%s2524 + $0x1d8] sm:$0xff]
    %v2585 = vld [vmem:[%s2524 + $0x1e0] sm:$0xff]
    %v2586 = vld [vmem:[%s2524 + $0x1e8] sm:$0xff]
    %v2587 = vld [vmem:[%s2524 + $0x1f0] sm:$0xff]
    %v2588 = vld [vmem:[%s2524 + $0x1f8] sm:$0xff]
    %2589 = vmatpush.msra.mxu0 %v2555
    %2590 = vmatpush.msra.mxu0 %v2553
    %2591 = vmatpush.msra.mxu0 %v2551
    %2592 = vmatpush.msra.mxu0 %v2549
    %2593 = vmatpush.msra.mxu0 %v2547
    %2594 = vmatpush.msra.mxu0 %v2545
    %2595 = vmatpush.msra.mxu0 %v2543
    %2596 = vmatpush.msra.mxu0 %v2541
    %2597 = vmatpush.msra.mxu0 %v2539
    %2598 = vmatpush.msra.mxu0 %v2537
    %2599 = vmatpush.msra.mxu0 %v2535
    %2600 = vmatpush.msra.mxu0 %v2533
    %2601 = vmatpush.msra.mxu0 %v2531
    %2602 = vmatpush.msra.mxu0 %v2529
    %2603 = vmatpush.msra.mxu0 %v2527
    %2604 = vmatpush.msra.mxu0 %v2525
    %2605 = vmatmul.f32.gmra.mxu0 %v2367
    %v2606 = vpop.f32.mrf.mxu0
    %v2607 = vadd.f32 0.0, %v2606
    %2608 = vdwg.mxu0
    %2609 = vmatpush.msra.mxu0 %v2587
    %2610 = vmatpush.msra.mxu0 %v2585
    %2611 = vmatpush.msra.mxu0 %v2583
    %2612 = vmatpush.msra.mxu0 %v2581
    %2613 = vmatpush.msra.mxu0 %v2579
    %2614 = vmatpush.msra.mxu0 %v2577
    %2615 = vmatpush.msra.mxu0 %v2575
    %2616 = vmatpush.msra.mxu0 %v2573
    %2617 = vmatpush.msra.mxu0 %v2571
    %2618 = vmatpush.msra.mxu0 %v2569
    %2619 = vmatpush.msra.mxu0 %v2567
    %2620 = vmatpush.msra.mxu0 %v2565
    %2621 = vmatpush.msra.mxu0 %v2563
    %2622 = vmatpush.msra.mxu0 %v2561
    %2623 = vmatpush.msra.mxu0 %v2559
    %2624 = vmatpush.msra.mxu0 %v2557
    %2625 = vmatmul.f32.gmra.mxu0 %v2368
    %v2626 = vpop.f32.mrf.mxu0
    %v2627 = vadd.f32 %v2607, %v2626
    %2628 = vdwg.mxu0
    %2629 = vmatpush.msra.mxu0 %v2556
    %2630 = vmatpush.msra.mxu0 %v2554
    %2631 = vmatpush.msra.mxu0 %v2552
    %2632 = vmatpush.msra.mxu0 %v2550
    %2633 = vmatpush.msra.mxu0 %v2548
    %2634 = vmatpush.msra.mxu0 %v2546
    %2635 = vmatpush.msra.mxu0 %v2544
    %2636 = vmatpush.msra.mxu0 %v2542
    %2637 = vmatpush.msra.mxu0 %v2540
    %2638 = vmatpush.msra.mxu0 %v2538
    %2639 = vmatpush.msra.mxu0 %v2536
    %2640 = vmatpush.msra.mxu0 %v2534
    %2641 = vmatpush.msra.mxu0 %v2532
    %2642 = vmatpush.msra.mxu0 %v2530
    %2643 = vmatpush.msra.mxu0 %v2528
    %2644 = vmatpush.msra.mxu0 %v2526
    %2645 = vmatmul.f32.gmra.mxu0 %v2367
    %v2646 = vpop.f32.mrf.mxu0
    %v2647 = vadd.f32 0.0, %v2646
    %2648 = vdwg.mxu0
    %2649 = vmatpush.msra.mxu0 %v2588
    %2650 = vmatpush.msra.mxu0 %v2586
    %2651 = vmatpush.msra.mxu0 %v2584
    %2652 = vmatpush.msra.mxu0 %v2582
    %2653 = vmatpush.msra.mxu0 %v2580
    %2654 = vmatpush.msra.mxu0 %v2578
    %2655 = vmatpush.msra.mxu0 %v2576
    %2656 = vmatpush.msra.mxu0 %v2574
    %2657 = vmatpush.msra.mxu0 %v2572
    %2658 = vmatpush.msra.mxu0 %v2570
    %2659 = vmatpush.msra.mxu0 %v2568
    %2660 = vmatpush.msra.mxu0 %v2566
    %2661 = vmatpush.msra.mxu0 %v2564
    %2662 = vmatpush.msra.mxu0 %v2562
    %2663 = vmatpush.msra.mxu0 %v2560
    %2664 = vmatpush.msra.mxu0 %v2558
    %2665 = vmatmul.f32.gmra.mxu0 %v2368
    %v2666 = vpop.f32.mrf.mxu0
    %v2667 = vadd.f32 %v2647, %v2666
    %2668 = vdwg.mxu0
    %v2669 = vadd.f32 %v2482, %v2627
    %v2670 = vadd.f32 %v2522, %v2667
    %v2671 = vmax.f32 %v2669, 0.0
    %v2672 = vmax.f32 %v2670, 0.0
    %s2673 = scalar_lea.vmem [#allocation10], 2560
    %v2674 = vld [vmem:[%s2673] sm:$0xff]
    %v2675 = vld [vmem:[%s2673 + $0x8] sm:$0xff]
    %v2676 = vld [vmem:[%s2673 + $0x10] sm:$0xff]
    %v2677 = vld [vmem:[%s2673 + $0x18] sm:$0xff]
    %v2678 = vld [vmem:[%s2673 + $0x20] sm:$0xff]
    %v2679 = vld [vmem:[%s2673 + $0x28] sm:$0xff]
    %v2680 = vld [vmem:[%s2673 + $0x30] sm:$0xff]
    %v2681 = vld [vmem:[%s2673 + $0x38] sm:$0xff]
    %v2682 = vld [vmem:[%s2673 + $0x40] sm:$0xff]
    %v2683 = vld [vmem:[%s2673 + $0x48] sm:$0xff]
    %v2684 = vld [vmem:[%s2673 + $0x50] sm:$0xff]
    %v2685 = vld [vmem:[%s2673 + $0x58] sm:$0xff]
    %v2686 = vld [vmem:[%s2673 + $0x60] sm:$0xff]
    %v2687 = vld [vmem:[%s2673 + $0x68] sm:$0xff]
    %v2688 = vld [vmem:[%s2673 + $0x70] sm:$0xff]
    %v2689 = vld [vmem:[%s2673 + $0x78] sm:$0xff]
    %v2690 = vld [vmem:[%s2673 + $0x80] sm:$0xff]
    %v2691 = vld [vmem:[%s2673 + $0x88] sm:$0xff]
    %v2692 = vld [vmem:[%s2673 + $0x90] sm:$0xff]
    %v2693 = vld [vmem:[%s2673 + $0x98] sm:$0xff]
    %v2694 = vld [vmem:[%s2673 + $0xa0] sm:$0xff]
    %v2695 = vld [vmem:[%s2673 + $0xa8] sm:$0xff]
    %v2696 = vld [vmem:[%s2673 + $0xb0] sm:$0xff]
    %v2697 = vld [vmem:[%s2673 + $0xb8] sm:$0xff]
    %v2698 = vld [vmem:[%s2673 + $0xc0] sm:$0xff]
    %v2699 = vld [vmem:[%s2673 + $0xc8] sm:$0xff]
    %v2700 = vld [vmem:[%s2673 + $0xd0] sm:$0xff]
    %v2701 = vld [vmem:[%s2673 + $0xd8] sm:$0xff]
    %v2702 = vld [vmem:[%s2673 + $0xe0] sm:$0xff]
    %v2703 = vld [vmem:[%s2673 + $0xe8] sm:$0xff]
    %v2704 = vld [vmem:[%s2673 + $0xf0] sm:$0xff]
    %v2705 = vld [vmem:[%s2673 + $0xf8] sm:$0xff]
    %v2706 = vld [vmem:[%s2673 + $0x100] sm:$0xff]
    %v2707 = vld [vmem:[%s2673 + $0x108] sm:$0xff]
    %v2708 = vld [vmem:[%s2673 + $0x110] sm:$0xff]
    %v2709 = vld [vmem:[%s2673 + $0x118] sm:$0xff]
    %v2710 = vld [vmem:[%s2673 + $0x120] sm:$0xff]
    %v2711 = vld [vmem:[%s2673 + $0x128] sm:$0xff]
    %v2712 = vld [vmem:[%s2673 + $0x130] sm:$0xff]
    %v2713 = vld [vmem:[%s2673 + $0x138] sm:$0xff]
    %v2714 = vld [vmem:[%s2673 + $0x140] sm:$0xff]
    %v2715 = vld [vmem:[%s2673 + $0x148] sm:$0xff]
    %v2716 = vld [vmem:[%s2673 + $0x150] sm:$0xff]
    %v2717 = vld [vmem:[%s2673 + $0x158] sm:$0xff]
    %v2718 = vld [vmem:[%s2673 + $0x160] sm:$0xff]
    %v2719 = vld [vmem:[%s2673 + $0x168] sm:$0xff]
    %v2720 = vld [vmem:[%s2673 + $0x170] sm:$0xff]
    %v2721 = vld [vmem:[%s2673 + $0x178] sm:$0xff]
    %v2722 = vld [vmem:[%s2673 + $0x180] sm:$0xff]
    %v2723 = vld [vmem:[%s2673 + $0x188] sm:$0xff]
    %v2724 = vld [vmem:[%s2673 + $0x190] sm:$0xff]
    %v2725 = vld [vmem:[%s2673 + $0x198] sm:$0xff]
    %v2726 = vld [vmem:[%s2673 + $0x1a0] sm:$0xff]
    %v2727 = vld [vmem:[%s2673 + $0x1a8] sm:$0xff]
    %v2728 = vld [vmem:[%s2673 + $0x1b0] sm:$0xff]
    %v2729 = vld [vmem:[%s2673 + $0x1b8] sm:$0xff]
    %v2730 = vld [vmem:[%s2673 + $0x1c0] sm:$0xff]
    %v2731 = vld [vmem:[%s2673 + $0x1c8] sm:$0xff]
    %v2732 = vld [vmem:[%s2673 + $0x1d0] sm:$0xff]
    %v2733 = vld [vmem:[%s2673 + $0x1d8] sm:$0xff]
    %v2734 = vld [vmem:[%s2673 + $0x1e0] sm:$0xff]
    %v2735 = vld [vmem:[%s2673 + $0x1e8] sm:$0xff]
    %v2736 = vld [vmem:[%s2673 + $0x1f0] sm:$0xff]
    %v2737 = vld [vmem:[%s2673 + $0x1f8] sm:$0xff]
    %s2738 = scalar_lea.vmem [#allocation11], 10
    %v2739 = vld [vmem:[%s2738] sm:$0x3]
    %v2741 = vperm.slane %v2739, 0
    %v2742 = vperm.slane %v2739, 1
    %2745 = vmatpush.msra.mxu0 %v2704
    %2746 = vmatpush.msra.mxu0 %v2702
    %2747 = vmatpush.msra.mxu0 %v2700
    %2748 = vmatpush.msra.mxu0 %v2698
    %2749 = vmatpush.msra.mxu0 %v2696
    %2750 = vmatpush.msra.mxu0 %v2694
    %2751 = vmatpush.msra.mxu0 %v2692
    %2752 = vmatpush.msra.mxu0 %v2690
    %2753 = vmatpush.msra.mxu0 %v2688
    %2754 = vmatpush.msra.mxu0 %v2686
    %2755 = vmatpush.msra.mxu0 %v2684
    %2756 = vmatpush.msra.mxu0 %v2682
    %2757 = vmatpush.msra.mxu0 %v2680
    %2758 = vmatpush.msra.mxu0 %v2678
    %2759 = vmatpush.msra.mxu0 %v2676
    %2760 = vmatpush.msra.mxu0 %v2674
    %2761 = vmatmul.f32.gmra.mxu0 %v2671
    %v2762 = vpop.f32.mrf.mxu0
    %v2763 = vadd.f32 %v2741, %v2762
    %2764 = vdwg.mxu0
    %2765 = vmatpush.msra.mxu0 %v2736
    %2766 = vmatpush.msra.mxu0 %v2734
    %2767 = vmatpush.msra.mxu0 %v2732
    %2768 = vmatpush.msra.mxu0 %v2730
    %2769 = vmatpush.msra.mxu0 %v2728
    %2770 = vmatpush.msra.mxu0 %v2726
    %2771 = vmatpush.msra.mxu0 %v2724
    %2772 = vmatpush.msra.mxu0 %v2722
    %2773 = vmatpush.msra.mxu0 %v2720
    %2774 = vmatpush.msra.mxu0 %v2718
    %2775 = vmatpush.msra.mxu0 %v2716
    %2776 = vmatpush.msra.mxu0 %v2714
    %2777 = vmatpush.msra.mxu0 %v2712
    %2778 = vmatpush.msra.mxu0 %v2710
    %2779 = vmatpush.msra.mxu0 %v2708
    %2780 = vmatpush.msra.mxu0 %v2706
    %2781 = vmatmul.f32.gmra.mxu0 %v2672
    %v2782 = vpop.f32.mrf.mxu0
    %v2783 = vadd.f32 %v2763, %v2782
    %2784 = vdwg.mxu0
    %2785 = vmatpush.msra.mxu0 %v2705
    %2786 = vmatpush.msra.mxu0 %v2703
    %2787 = vmatpush.msra.mxu0 %v2701
    %2788 = vmatpush.msra.mxu0 %v2699
    %2789 = vmatpush.msra.mxu0 %v2697
    %2790 = vmatpush.msra.mxu0 %v2695
    %2791 = vmatpush.msra.mxu0 %v2693
    %2792 = vmatpush.msra.mxu0 %v2691
    %2793 = vmatpush.msra.mxu0 %v2689
    %2794 = vmatpush.msra.mxu0 %v2687
    %2795 = vmatpush.msra.mxu0 %v2685
    %2796 = vmatpush.msra.mxu0 %v2683
    %2797 = vmatpush.msra.mxu0 %v2681
    %2798 = vmatpush.msra.mxu0 %v2679
    %2799 = vmatpush.msra.mxu0 %v2677
    %2800 = vmatpush.msra.mxu0 %v2675
    %2801 = vmatmul.f32.gmra.mxu0 %v2671
    %v2802 = vpop.f32.mrf.mxu0
    %v2803 = vadd.f32 %v2742, %v2802
    %2804 = vdwg.mxu0
    %2805 = vmatpush.msra.mxu0 %v2737
    %2806 = vmatpush.msra.mxu0 %v2735
    %2807 = vmatpush.msra.mxu0 %v2733
    %2808 = vmatpush.msra.mxu0 %v2731
    %2809 = vmatpush.msra.mxu0 %v2729
    %2810 = vmatpush.msra.mxu0 %v2727
    %2811 = vmatpush.msra.mxu0 %v2725
    %2812 = vmatpush.msra.mxu0 %v2723
    %2813 = vmatpush.msra.mxu0 %v2721
    %2814 = vmatpush.msra.mxu0 %v2719
    %2815 = vmatpush.msra.mxu0 %v2717
    %2816 = vmatpush.msra.mxu0 %v2715
    %2817 = vmatpush.msra.mxu0 %v2713
    %2818 = vmatpush.msra.mxu0 %v2711
    %2819 = vmatpush.msra.mxu0 %v2709
    %2820 = vmatpush.msra.mxu0 %v2707
    %2821 = vmatmul.f32.gmra.mxu0 %v2672
    %v2822 = vpop.f32.mrf.mxu0
    %v2823 = vadd.f32 %v2803, %v2822
    %2824 = vdwg.mxu0
    %v2825 = vadd.f32 %v2783, %v2367
    %v2826 = vadd.f32 %v2823, %v2368
    %v2827 = vmax.f32 %v2825, 0.0
    %v2828 = vmax.f32 %v2826, 0.0
    %s2829 = scalar_lea.vmem [#allocation2], 96
    %v2830 = vld [vmem:[%s2829] sm:$0xff]
    %v2831 = vld [vmem:[%s2829 + $0x8] sm:$0xff]
    %s2832 = scalar_lea.vmem [#allocation5], 3072
    %v2833 = vld [vmem:[%s2832] sm:$0xff]
    %v2834 = vld [vmem:[%s2832 + $0x8] sm:$0xff]
    %v2835 = vld [vmem:[%s2832 + $0x10] sm:$0xff]
    %v2836 = vld [vmem:[%s2832 + $0x18] sm:$0xff]
    %v2837 = vld [vmem:[%s2832 + $0x20] sm:$0xff]
    %v2838 = vld [vmem:[%s2832 + $0x28] sm:$0xff]
    %v2839 = vld [vmem:[%s2832 + $0x30] sm:$0xff]
    %v2840 = vld [vmem:[%s2832 + $0x38] sm:$0xff]
    %v2841 = vld [vmem:[%s2832 + $0x40] sm:$0xff]
    %v2842 = vld [vmem:[%s2832 + $0x48] sm:$0xff]
    %v2843 = vld [vmem:[%s2832 + $0x50] sm:$0xff]
    %v2844 = vld [vmem:[%s2832 + $0x58] sm:$0xff]
    %v2845 = vld [vmem:[%s2832 + $0x60] sm:$0xff]
    %v2846 = vld [vmem:[%s2832 + $0x68] sm:$0xff]
    %v2847 = vld [vmem:[%s2832 + $0x70] sm:$0xff]
    %v2848 = vld [vmem:[%s2832 + $0x78] sm:$0xff]
    %v2849 = vld [vmem:[%s2832 + $0x80] sm:$0xff]
    %v2850 = vld [vmem:[%s2832 + $0x88] sm:$0xff]
    %v2851 = vld [vmem:[%s2832 + $0x90] sm:$0xff]
    %v2852 = vld [vmem:[%s2832 + $0x98] sm:$0xff]
    %v2853 = vld [vmem:[%s2832 + $0xa0] sm:$0xff]
    %v2854 = vld [vmem:[%s2832 + $0xa8] sm:$0xff]
    %v2855 = vld [vmem:[%s2832 + $0xb0] sm:$0xff]
    %v2856 = vld [vmem:[%s2832 + $0xb8] sm:$0xff]
    %v2857 = vld [vmem:[%s2832 + $0xc0] sm:$0xff]
    %v2858 = vld [vmem:[%s2832 + $0xc8] sm:$0xff]
    %v2859 = vld [vmem:[%s2832 + $0xd0] sm:$0xff]
    %v2860 = vld [vmem:[%s2832 + $0xd8] sm:$0xff]
    %v2861 = vld [vmem:[%s2832 + $0xe0] sm:$0xff]
    %v2862 = vld [vmem:[%s2832 + $0xe8] sm:$0xff]
    %v2863 = vld [vmem:[%s2832 + $0xf0] sm:$0xff]
    %v2864 = vld [vmem:[%s2832 + $0xf8] sm:$0xff]
    %v2865 = vld [vmem:[%s2832 + $0x100] sm:$0xff]
    %v2866 = vld [vmem:[%s2832 + $0x108] sm:$0xff]
    %v2867 = vld [vmem:[%s2832 + $0x110] sm:$0xff]
    %v2868 = vld [vmem:[%s2832 + $0x118] sm:$0xff]
    %v2869 = vld [vmem:[%s2832 + $0x120] sm:$0xff]
    %v2870 = vld [vmem:[%s2832 + $0x128] sm:$0xff]
    %v2871 = vld [vmem:[%s2832 + $0x130] sm:$0xff]
    %v2872 = vld [vmem:[%s2832 + $0x138] sm:$0xff]
    %v2873 = vld [vmem:[%s2832 + $0x140] sm:$0xff]
    %v2874 = vld [vmem:[%s2832 + $0x148] sm:$0xff]
    %v2875 = vld [vmem:[%s2832 + $0x150] sm:$0xff]
    %v2876 = vld [vmem:[%s2832 + $0x158] sm:$0xff]
    %v2877 = vld [vmem:[%s2832 + $0x160] sm:$0xff]
    %v2878 = vld [vmem:[%s2832 + $0x168] sm:$0xff]
    %v2879 = vld [vmem:[%s2832 + $0x170] sm:$0xff]
    %v2880 = vld [vmem:[%s2832 + $0x178] sm:$0xff]
    %v2881 = vld [vmem:[%s2832 + $0x180] sm:$0xff]
    %v2882 = vld [vmem:[%s2832 + $0x188] sm:$0xff]
    %v2883 = vld [vmem:[%s2832 + $0x190] sm:$0xff]
    %v2884 = vld [vmem:[%s2832 + $0x198] sm:$0xff]
    %v2885 = vld [vmem:[%s2832 + $0x1a0] sm:$0xff]
    %v2886 = vld [vmem:[%s2832 + $0x1a8] sm:$0xff]
    %v2887 = vld [vmem:[%s2832 + $0x1b0] sm:$0xff]
    %v2888 = vld [vmem:[%s2832 + $0x1b8] sm:$0xff]
    %v2889 = vld [vmem:[%s2832 + $0x1c0] sm:$0xff]
    %v2890 = vld [vmem:[%s2832 + $0x1c8] sm:$0xff]
    %v2891 = vld [vmem:[%s2832 + $0x1d0] sm:$0xff]
    %v2892 = vld [vmem:[%s2832 + $0x1d8] sm:$0xff]
    %v2893 = vld [vmem:[%s2832 + $0x1e0] sm:$0xff]
    %v2894 = vld [vmem:[%s2832 + $0x1e8] sm:$0xff]
    %v2895 = vld [vmem:[%s2832 + $0x1f0] sm:$0xff]
    %v2896 = vld [vmem:[%s2832 + $0x1f8] sm:$0xff]
    %s2897 = scalar_lea.vmem [#allocation7], 12
    %v2898 = vld [vmem:[%s2897] sm:$0x3]
    %v2900 = vperm.slane %v2898, 0
    %v2901 = vperm.slane %v2898, 1
    %2904 = vmatpush.msra.mxu0 %v2863
    %2905 = vmatpush.msra.mxu0 %v2861
    %2906 = vmatpush.msra.mxu0 %v2859
    %2907 = vmatpush.msra.mxu0 %v2857
    %2908 = vmatpush.msra.mxu0 %v2855
    %2909 = vmatpush.msra.mxu0 %v2853
    %2910 = vmatpush.msra.mxu0 %v2851
    %2911 = vmatpush.msra.mxu0 %v2849
    %2912 = vmatpush.msra.mxu0 %v2847
    %2913 = vmatpush.msra.mxu0 %v2845
    %2914 = vmatpush.msra.mxu0 %v2843
    %2915 = vmatpush.msra.mxu0 %v2841
    %2916 = vmatpush.msra.mxu0 %v2839
    %2917 = vmatpush.msra.mxu0 %v2837
    %2918 = vmatpush.msra.mxu0 %v2835
    %2919 = vmatpush.msra.mxu0 %v2833
    %2920 = vmatmul.f32.gmra.mxu0 %v2830
    %v2921 = vpop.f32.mrf.mxu0
    %v2922 = vadd.f32 %v2900, %v2921
    %2923 = vdwg.mxu0
    %2924 = vmatpush.msra.mxu0 %v2895
    %2925 = vmatpush.msra.mxu0 %v2893
    %2926 = vmatpush.msra.mxu0 %v2891
    %2927 = vmatpush.msra.mxu0 %v2889
    %2928 = vmatpush.msra.mxu0 %v2887
    %2929 = vmatpush.msra.mxu0 %v2885
    %2930 = vmatpush.msra.mxu0 %v2883
    %2931 = vmatpush.msra.mxu0 %v2881
    %2932 = vmatpush.msra.mxu0 %v2879
    %2933 = vmatpush.msra.mxu0 %v2877
    %2934 = vmatpush.msra.mxu0 %v2875
    %2935 = vmatpush.msra.mxu0 %v2873
    %2936 = vmatpush.msra.mxu0 %v2871
    %2937 = vmatpush.msra.mxu0 %v2869
    %2938 = vmatpush.msra.mxu0 %v2867
    %2939 = vmatpush.msra.mxu0 %v2865
    %2940 = vmatmul.f32.gmra.mxu0 %v2831
    %v2941 = vpop.f32.mrf.mxu0
    %v2942 = vadd.f32 %v2922, %v2941
    %2943 = vdwg.mxu0
    %2944 = vmatpush.msra.mxu0 %v2864
    %2945 = vmatpush.msra.mxu0 %v2862
    %2946 = vmatpush.msra.mxu0 %v2860
    %2947 = vmatpush.msra.mxu0 %v2858
    %2948 = vmatpush.msra.mxu0 %v2856
    %2949 = vmatpush.msra.mxu0 %v2854
    %2950 = vmatpush.msra.mxu0 %v2852
    %2951 = vmatpush.msra.mxu0 %v2850
    %2952 = vmatpush.msra.mxu0 %v2848
    %2953 = vmatpush.msra.mxu0 %v2846
    %2954 = vmatpush.msra.mxu0 %v2844
    %2955 = vmatpush.msra.mxu0 %v2842
    %2956 = vmatpush.msra.mxu0 %v2840
    %2957 = vmatpush.msra.mxu0 %v2838
    %2958 = vmatpush.msra.mxu0 %v2836
    %2959 = vmatpush.msra.mxu0 %v2834
    %2960 = vmatmul.f32.gmra.mxu0 %v2830
    %v2961 = vpop.f32.mrf.mxu0
    %v2962 = vadd.f32 %v2901, %v2961
    %2963 = vdwg.mxu0
    %2964 = vmatpush.msra.mxu0 %v2896
    %2965 = vmatpush.msra.mxu0 %v2894
    %2966 = vmatpush.msra.mxu0 %v2892
    %2967 = vmatpush.msra.mxu0 %v2890
    %2968 = vmatpush.msra.mxu0 %v2888
    %2969 = vmatpush.msra.mxu0 %v2886
    %2970 = vmatpush.msra.mxu0 %v2884
    %2971 = vmatpush.msra.mxu0 %v2882
    %2972 = vmatpush.msra.mxu0 %v2880
    %2973 = vmatpush.msra.mxu0 %v2878
    %2974 = vmatpush.msra.mxu0 %v2876
    %2975 = vmatpush.msra.mxu0 %v2874
    %2976 = vmatpush.msra.mxu0 %v2872
    %2977 = vmatpush.msra.mxu0 %v2870
    %2978 = vmatpush.msra.mxu0 %v2868
    %2979 = vmatpush.msra.mxu0 %v2866
    %2980 = vmatmul.f32.gmra.mxu0 %v2831
    %v2981 = vpop.f32.mrf.mxu0
    %v2982 = vadd.f32 %v2962, %v2981
    %2983 = vdwg.mxu0
    %s2984 = scalar_lea.vmem [#allocation8], 3072
    %v2985 = vld [vmem:[%s2984] sm:$0xff]
    %v2986 = vld [vmem:[%s2984 + $0x8] sm:$0xff]
    %v2987 = vld [vmem:[%s2984 + $0x10] sm:$0xff]
    %v2988 = vld [vmem:[%s2984 + $0x18] sm:$0xff]
    %v2989 = vld [vmem:[%s2984 + $0x20] sm:$0xff]
    %v2990 = vld [vmem:[%s2984 + $0x28] sm:$0xff]
    %v2991 = vld [vmem:[%s2984 + $0x30] sm:$0xff]
    %v2992 = vld [vmem:[%s2984 + $0x38] sm:$0xff]
    %v2993 = vld [vmem:[%s2984 + $0x40] sm:$0xff]
    %v2994 = vld [vmem:[%s2984 + $0x48] sm:$0xff]
    %v2995 = vld [vmem:[%s2984 + $0x50] sm:$0xff]
    %v2996 = vld [vmem:[%s2984 + $0x58] sm:$0xff]
    %v2997 = vld [vmem:[%s2984 + $0x60] sm:$0xff]
    %v2998 = vld [vmem:[%s2984 + $0x68] sm:$0xff]
    %v2999 = vld [vmem:[%s2984 + $0x70] sm:$0xff]
    %v3000 = vld [vmem:[%s2984 + $0x78] sm:$0xff]
    %v3001 = vld [vmem:[%s2984 + $0x80] sm:$0xff]
    %v3002 = vld [vmem:[%s2984 + $0x88] sm:$0xff]
    %v3003 = vld [vmem:[%s2984 + $0x90] sm:$0xff]
    %v3004 = vld [vmem:[%s2984 + $0x98] sm:$0xff]
    %v3005 = vld [vmem:[%s2984 + $0xa0] sm:$0xff]
    %v3006 = vld [vmem:[%s2984 + $0xa8] sm:$0xff]
    %v3007 = vld [vmem:[%s2984 + $0xb0] sm:$0xff]
    %v3008 = vld [vmem:[%s2984 + $0xb8] sm:$0xff]
    %v3009 = vld [vmem:[%s2984 + $0xc0] sm:$0xff]
    %v3010 = vld [vmem:[%s2984 + $0xc8] sm:$0xff]
    %v3011 = vld [vmem:[%s2984 + $0xd0] sm:$0xff]
    %v3012 = vld [vmem:[%s2984 + $0xd8] sm:$0xff]
    %v3013 = vld [vmem:[%s2984 + $0xe0] sm:$0xff]
    %v3014 = vld [vmem:[%s2984 + $0xe8] sm:$0xff]
    %v3015 = vld [vmem:[%s2984 + $0xf0] sm:$0xff]
    %v3016 = vld [vmem:[%s2984 + $0xf8] sm:$0xff]
    %v3017 = vld [vmem:[%s2984 + $0x100] sm:$0xff]
    %v3018 = vld [vmem:[%s2984 + $0x108] sm:$0xff]
    %v3019 = vld [vmem:[%s2984 + $0x110] sm:$0xff]
    %v3020 = vld [vmem:[%s2984 + $0x118] sm:$0xff]
    %v3021 = vld [vmem:[%s2984 + $0x120] sm:$0xff]
    %v3022 = vld [vmem:[%s2984 + $0x128] sm:$0xff]
    %v3023 = vld [vmem:[%s2984 + $0x130] sm:$0xff]
    %v3024 = vld [vmem:[%s2984 + $0x138] sm:$0xff]
    %v3025 = vld [vmem:[%s2984 + $0x140] sm:$0xff]
    %v3026 = vld [vmem:[%s2984 + $0x148] sm:$0xff]
    %v3027 = vld [vmem:[%s2984 + $0x150] sm:$0xff]
    %v3028 = vld [vmem:[%s2984 + $0x158] sm:$0xff]
    %v3029 = vld [vmem:[%s2984 + $0x160] sm:$0xff]
    %v3030 = vld [vmem:[%s2984 + $0x168] sm:$0xff]
    %v3031 = vld [vmem:[%s2984 + $0x170] sm:$0xff]
    %v3032 = vld [vmem:[%s2984 + $0x178] sm:$0xff]
    %v3033 = vld [vmem:[%s2984 + $0x180] sm:$0xff]
    %v3034 = vld [vmem:[%s2984 + $0x188] sm:$0xff]
    %v3035 = vld [vmem:[%s2984 + $0x190] sm:$0xff]
    %v3036 = vld [vmem:[%s2984 + $0x198] sm:$0xff]
    %v3037 = vld [vmem:[%s2984 + $0x1a0] sm:$0xff]
    %v3038 = vld [vmem:[%s2984 + $0x1a8] sm:$0xff]
    %v3039 = vld [vmem:[%s2984 + $0x1b0] sm:$0xff]
    %v3040 = vld [vmem:[%s2984 + $0x1b8] sm:$0xff]
    %v3041 = vld [vmem:[%s2984 + $0x1c0] sm:$0xff]
    %v3042 = vld [vmem:[%s2984 + $0x1c8] sm:$0xff]
    %v3043 = vld [vmem:[%s2984 + $0x1d0] sm:$0xff]
    %v3044 = vld [vmem:[%s2984 + $0x1d8] sm:$0xff]
    %v3045 = vld [vmem:[%s2984 + $0x1e0] sm:$0xff]
    %v3046 = vld [vmem:[%s2984 + $0x1e8] sm:$0xff]
    %v3047 = vld [vmem:[%s2984 + $0x1f0] sm:$0xff]
    %v3048 = vld [vmem:[%s2984 + $0x1f8] sm:$0xff]
    %3049 = vmatpush.msra.mxu0 %v3015
    %3050 = vmatpush.msra.mxu0 %v3013
    %3051 = vmatpush.msra.mxu0 %v3011
    %3052 = vmatpush.msra.mxu0 %v3009
    %3053 = vmatpush.msra.mxu0 %v3007
    %3054 = vmatpush.msra.mxu0 %v3005
    %3055 = vmatpush.msra.mxu0 %v3003
    %3056 = vmatpush.msra.mxu0 %v3001
    %3057 = vmatpush.msra.mxu0 %v2999
    %3058 = vmatpush.msra.mxu0 %v2997
    %3059 = vmatpush.msra.mxu0 %v2995
    %3060 = vmatpush.msra.mxu0 %v2993
    %3061 = vmatpush.msra.mxu0 %v2991
    %3062 = vmatpush.msra.mxu0 %v2989
    %3063 = vmatpush.msra.mxu0 %v2987
    %3064 = vmatpush.msra.mxu0 %v2985
    %3065 = vmatmul.f32.gmra.mxu0 %v2827
    %v3066 = vpop.f32.mrf.mxu0
    %v3067 = vadd.f32 0.0, %v3066
    %3068 = vdwg.mxu0
    %3069 = vmatpush.msra.mxu0 %v3047
    %3070 = vmatpush.msra.mxu0 %v3045
    %3071 = vmatpush.msra.mxu0 %v3043
    %3072 = vmatpush.msra.mxu0 %v3041
    %3073 = vmatpush.msra.mxu0 %v3039
    %3074 = vmatpush.msra.mxu0 %v3037
    %3075 = vmatpush.msra.mxu0 %v3035
    %3076 = vmatpush.msra.mxu0 %v3033
    %3077 = vmatpush.msra.mxu0 %v3031
    %3078 = vmatpush.msra.mxu0 %v3029
    %3079 = vmatpush.msra.mxu0 %v3027
    %3080 = vmatpush.msra.mxu0 %v3025
    %3081 = vmatpush.msra.mxu0 %v3023
    %3082 = vmatpush.msra.mxu0 %v3021
    %3083 = vmatpush.msra.mxu0 %v3019
    %3084 = vmatpush.msra.mxu0 %v3017
    %3085 = vmatmul.f32.gmra.mxu0 %v2828
    %v3086 = vpop.f32.mrf.mxu0
    %v3087 = vadd.f32 %v3067, %v3086
    %3088 = vdwg.mxu0
    %3089 = vmatpush.msra.mxu0 %v3016
    %3090 = vmatpush.msra.mxu0 %v3014
    %3091 = vmatpush.msra.mxu0 %v3012
    %3092 = vmatpush.msra.mxu0 %v3010
    %3093 = vmatpush.msra.mxu0 %v3008
    %3094 = vmatpush.msra.mxu0 %v3006
    %3095 = vmatpush.msra.mxu0 %v3004
    %3096 = vmatpush.msra.mxu0 %v3002
    %3097 = vmatpush.msra.mxu0 %v3000
    %3098 = vmatpush.msra.mxu0 %v2998
    %3099 = vmatpush.msra.mxu0 %v2996
    %3100 = vmatpush.msra.mxu0 %v2994
    %3101 = vmatpush.msra.mxu0 %v2992
    %3102 = vmatpush.msra.mxu0 %v2990
    %3103 = vmatpush.msra.mxu0 %v2988
    %3104 = vmatpush.msra.mxu0 %v2986
    %3105 = vmatmul.f32.gmra.mxu0 %v2827
    %v3106 = vpop.f32.mrf.mxu0
    %v3107 = vadd.f32 0.0, %v3106
    %3108 = vdwg.mxu0
    %3109 = vmatpush.msra.mxu0 %v3048
    %3110 = vmatpush.msra.mxu0 %v3046
    %3111 = vmatpush.msra.mxu0 %v3044
    %3112 = vmatpush.msra.mxu0 %v3042
    %3113 = vmatpush.msra.mxu0 %v3040
    %3114 = vmatpush.msra.mxu0 %v3038
    %3115 = vmatpush.msra.mxu0 %v3036
    %3116 = vmatpush.msra.mxu0 %v3034
    %3117 = vmatpush.msra.mxu0 %v3032
    %3118 = vmatpush.msra.mxu0 %v3030
    %3119 = vmatpush.msra.mxu0 %v3028
    %3120 = vmatpush.msra.mxu0 %v3026
    %3121 = vmatpush.msra.mxu0 %v3024
    %3122 = vmatpush.msra.mxu0 %v3022
    %3123 = vmatpush.msra.mxu0 %v3020
    %3124 = vmatpush.msra.mxu0 %v3018
    %3125 = vmatmul.f32.gmra.mxu0 %v2828
    %v3126 = vpop.f32.mrf.mxu0
    %v3127 = vadd.f32 %v3107, %v3126
    %3128 = vdwg.mxu0
    %v3129 = vadd.f32 %v2942, %v3087
    %v3130 = vadd.f32 %v2982, %v3127
    %v3131 = vmax.f32 %v3129, 0.0
    %v3132 = vmax.f32 %v3130, 0.0
    %s3133 = scalar_lea.vmem [#allocation10], 3072
    %v3134 = vld [vmem:[%s3133] sm:$0xff]
    %v3135 = vld [vmem:[%s3133 + $0x8] sm:$0xff]
    %v3136 = vld [vmem:[%s3133 + $0x10] sm:$0xff]
    %v3137 = vld [vmem:[%s3133 + $0x18] sm:$0xff]
    %v3138 = vld [vmem:[%s3133 + $0x20] sm:$0xff]
    %v3139 = vld [vmem:[%s3133 + $0x28] sm:$0xff]
    %v3140 = vld [vmem:[%s3133 + $0x30] sm:$0xff]
    %v3141 = vld [vmem:[%s3133 + $0x38] sm:$0xff]
    %v3142 = vld [vmem:[%s3133 + $0x40] sm:$0xff]
    %v3143 = vld [vmem:[%s3133 + $0x48] sm:$0xff]
    %v3144 = vld [vmem:[%s3133 + $0x50] sm:$0xff]
    %v3145 = vld [vmem:[%s3133 + $0x58] sm:$0xff]
    %v3146 = vld [vmem:[%s3133 + $0x60] sm:$0xff]
    %v3147 = vld [vmem:[%s3133 + $0x68] sm:$0xff]
    %v3148 = vld [vmem:[%s3133 + $0x70] sm:$0xff]
    %v3149 = vld [vmem:[%s3133 + $0x78] sm:$0xff]
    %v3150 = vld [vmem:[%s3133 + $0x80] sm:$0xff]
    %v3151 = vld [vmem:[%s3133 + $0x88] sm:$0xff]
    %v3152 = vld [vmem:[%s3133 + $0x90] sm:$0xff]
    %v3153 = vld [vmem:[%s3133 + $0x98] sm:$0xff]
    %v3154 = vld [vmem:[%s3133 + $0xa0] sm:$0xff]
    %v3155 = vld [vmem:[%s3133 + $0xa8] sm:$0xff]
    %v3156 = vld [vmem:[%s3133 + $0xb0] sm:$0xff]
    %v3157 = vld [vmem:[%s3133 + $0xb8] sm:$0xff]
    %v3158 = vld [vmem:[%s3133 + $0xc0] sm:$0xff]
    %v3159 = vld [vmem:[%s3133 + $0xc8] sm:$0xff]
    %v3160 = vld [vmem:[%s3133 + $0xd0] sm:$0xff]
    %v3161 = vld [vmem:[%s3133 + $0xd8] sm:$0xff]
    %v3162 = vld [vmem:[%s3133 + $0xe0] sm:$0xff]
    %v3163 = vld [vmem:[%s3133 + $0xe8] sm:$0xff]
    %v3164 = vld [vmem:[%s3133 + $0xf0] sm:$0xff]
    %v3165 = vld [vmem:[%s3133 + $0xf8] sm:$0xff]
    %v3166 = vld [vmem:[%s3133 + $0x100] sm:$0xff]
    %v3167 = vld [vmem:[%s3133 + $0x108] sm:$0xff]
    %v3168 = vld [vmem:[%s3133 + $0x110] sm:$0xff]
    %v3169 = vld [vmem:[%s3133 + $0x118] sm:$0xff]
    %v3170 = vld [vmem:[%s3133 + $0x120] sm:$0xff]
    %v3171 = vld [vmem:[%s3133 + $0x128] sm:$0xff]
    %v3172 = vld [vmem:[%s3133 + $0x130] sm:$0xff]
    %v3173 = vld [vmem:[%s3133 + $0x138] sm:$0xff]
    %v3174 = vld [vmem:[%s3133 + $0x140] sm:$0xff]
    %v3175 = vld [vmem:[%s3133 + $0x148] sm:$0xff]
    %v3176 = vld [vmem:[%s3133 + $0x150] sm:$0xff]
    %v3177 = vld [vmem:[%s3133 + $0x158] sm:$0xff]
    %v3178 = vld [vmem:[%s3133 + $0x160] sm:$0xff]
    %v3179 = vld [vmem:[%s3133 + $0x168] sm:$0xff]
    %v3180 = vld [vmem:[%s3133 + $0x170] sm:$0xff]
    %v3181 = vld [vmem:[%s3133 + $0x178] sm:$0xff]
    %v3182 = vld [vmem:[%s3133 + $0x180] sm:$0xff]
    %v3183 = vld [vmem:[%s3133 + $0x188] sm:$0xff]
    %v3184 = vld [vmem:[%s3133 + $0x190] sm:$0xff]
    %v3185 = vld [vmem:[%s3133 + $0x198] sm:$0xff]
    %v3186 = vld [vmem:[%s3133 + $0x1a0] sm:$0xff]
    %v3187 = vld [vmem:[%s3133 + $0x1a8] sm:$0xff]
    %v3188 = vld [vmem:[%s3133 + $0x1b0] sm:$0xff]
    %v3189 = vld [vmem:[%s3133 + $0x1b8] sm:$0xff]
    %v3190 = vld [vmem:[%s3133 + $0x1c0] sm:$0xff]
    %v3191 = vld [vmem:[%s3133 + $0x1c8] sm:$0xff]
    %v3192 = vld [vmem:[%s3133 + $0x1d0] sm:$0xff]
    %v3193 = vld [vmem:[%s3133 + $0x1d8] sm:$0xff]
    %v3194 = vld [vmem:[%s3133 + $0x1e0] sm:$0xff]
    %v3195 = vld [vmem:[%s3133 + $0x1e8] sm:$0xff]
    %v3196 = vld [vmem:[%s3133 + $0x1f0] sm:$0xff]
    %v3197 = vld [vmem:[%s3133 + $0x1f8] sm:$0xff]
    %s3198 = scalar_lea.vmem [#allocation11], 12
    %v3199 = vld [vmem:[%s3198] sm:$0x3]
    %v3201 = vperm.slane %v3199, 0
    %v3202 = vperm.slane %v3199, 1
    %3205 = vmatpush.msra.mxu0 %v3164
    %3206 = vmatpush.msra.mxu0 %v3162
    %3207 = vmatpush.msra.mxu0 %v3160
    %3208 = vmatpush.msra.mxu0 %v3158
    %3209 = vmatpush.msra.mxu0 %v3156
    %3210 = vmatpush.msra.mxu0 %v3154
    %3211 = vmatpush.msra.mxu0 %v3152
    %3212 = vmatpush.msra.mxu0 %v3150
    %3213 = vmatpush.msra.mxu0 %v3148
    %3214 = vmatpush.msra.mxu0 %v3146
    %3215 = vmatpush.msra.mxu0 %v3144
    %3216 = vmatpush.msra.mxu0 %v3142
    %3217 = vmatpush.msra.mxu0 %v3140
    %3218 = vmatpush.msra.mxu0 %v3138
    %3219 = vmatpush.msra.mxu0 %v3136
    %3220 = vmatpush.msra.mxu0 %v3134
    %3221 = vmatmul.f32.gmra.mxu0 %v3131
    %v3222 = vpop.f32.mrf.mxu0
    %v3223 = vadd.f32 %v3201, %v3222
    %3224 = vdwg.mxu0
    %3225 = vmatpush.msra.mxu0 %v3196
    %3226 = vmatpush.msra.mxu0 %v3194
    %3227 = vmatpush.msra.mxu0 %v3192
    %3228 = vmatpush.msra.mxu0 %v3190
    %3229 = vmatpush.msra.mxu0 %v3188
    %3230 = vmatpush.msra.mxu0 %v3186
    %3231 = vmatpush.msra.mxu0 %v3184
    %3232 = vmatpush.msra.mxu0 %v3182
    %3233 = vmatpush.msra.mxu0 %v3180
    %3234 = vmatpush.msra.mxu0 %v3178
    %3235 = vmatpush.msra.mxu0 %v3176
    %3236 = vmatpush.msra.mxu0 %v3174
    %3237 = vmatpush.msra.mxu0 %v3172
    %3238 = vmatpush.msra.mxu0 %v3170
    %3239 = vmatpush.msra.mxu0 %v3168
    %3240 = vmatpush.msra.mxu0 %v3166
    %3241 = vmatmul.f32.gmra.mxu0 %v3132
    %v3242 = vpop.f32.mrf.mxu0
    %v3243 = vadd.f32 %v3223, %v3242
    %3244 = vdwg.mxu0
    %3245 = vmatpush.msra.mxu0 %v3165
    %3246 = vmatpush.msra.mxu0 %v3163
    %3247 = vmatpush.msra.mxu0 %v3161
    %3248 = vmatpush.msra.mxu0 %v3159
    %3249 = vmatpush.msra.mxu0 %v3157
    %3250 = vmatpush.msra.mxu0 %v3155
    %3251 = vmatpush.msra.mxu0 %v3153
    %3252 = vmatpush.msra.mxu0 %v3151
    %3253 = vmatpush.msra.mxu0 %v3149
    %3254 = vmatpush.msra.mxu0 %v3147
    %3255 = vmatpush.msra.mxu0 %v3145
    %3256 = vmatpush.msra.mxu0 %v3143
    %3257 = vmatpush.msra.mxu0 %v3141
    %3258 = vmatpush.msra.mxu0 %v3139
    %3259 = vmatpush.msra.mxu0 %v3137
    %3260 = vmatpush.msra.mxu0 %v3135
    %3261 = vmatmul.f32.gmra.mxu0 %v3131
    %v3262 = vpop.f32.mrf.mxu0
    %v3263 = vadd.f32 %v3202, %v3262
    %3264 = vdwg.mxu0
    %3265 = vmatpush.msra.mxu0 %v3197
    %3266 = vmatpush.msra.mxu0 %v3195
    %3267 = vmatpush.msra.mxu0 %v3193
    %3268 = vmatpush.msra.mxu0 %v3191
    %3269 = vmatpush.msra.mxu0 %v3189
    %3270 = vmatpush.msra.mxu0 %v3187
    %3271 = vmatpush.msra.mxu0 %v3185
    %3272 = vmatpush.msra.mxu0 %v3183
    %3273 = vmatpush.msra.mxu0 %v3181
    %3274 = vmatpush.msra.mxu0 %v3179
    %3275 = vmatpush.msra.mxu0 %v3177
    %3276 = vmatpush.msra.mxu0 %v3175
    %3277 = vmatpush.msra.mxu0 %v3173
    %3278 = vmatpush.msra.mxu0 %v3171
    %3279 = vmatpush.msra.mxu0 %v3169
    %3280 = vmatpush.msra.mxu0 %v3167
    %3281 = vmatmul.f32.gmra.mxu0 %v3132
    %v3282 = vpop.f32.mrf.mxu0
    %v3283 = vadd.f32 %v3263, %v3282
    %3284 = vdwg.mxu0
    %v3285 = vadd.f32 %v3243, %v2827
    %v3286 = vadd.f32 %v3283, %v2828
    %v3287 = vmax.f32 %v3285, 0.0
    %v3288 = vmax.f32 %v3286, 0.0
    %s3289 = scalar_lea.vmem [#allocation2], 112
    %v3290 = vld [vmem:[%s3289] sm:$0xff]
    %v3291 = vld [vmem:[%s3289 + $0x8] sm:$0xff]
    %s3292 = scalar_lea.vmem [#allocation5], 3584
    %v3293 = vld [vmem:[%s3292] sm:$0xff]
    %v3294 = vld [vmem:[%s3292 + $0x8] sm:$0xff]
    %v3295 = vld [vmem:[%s3292 + $0x10] sm:$0xff]
    %v3296 = vld [vmem:[%s3292 + $0x18] sm:$0xff]
    %v3297 = vld [vmem:[%s3292 + $0x20] sm:$0xff]
    %v3298 = vld [vmem:[%s3292 + $0x28] sm:$0xff]
    %v3299 = vld [vmem:[%s3292 + $0x30] sm:$0xff]
    %v3300 = vld [vmem:[%s3292 + $0x38] sm:$0xff]
    %v3301 = vld [vmem:[%s3292 + $0x40] sm:$0xff]
    %v3302 = vld [vmem:[%s3292 + $0x48] sm:$0xff]
    %v3303 = vld [vmem:[%s3292 + $0x50] sm:$0xff]
    %v3304 = vld [vmem:[%s3292 + $0x58] sm:$0xff]
    %v3305 = vld [vmem:[%s3292 + $0x60] sm:$0xff]
    %v3306 = vld [vmem:[%s3292 + $0x68] sm:$0xff]
    %v3307 = vld [vmem:[%s3292 + $0x70] sm:$0xff]
    %v3308 = vld [vmem:[%s3292 + $0x78] sm:$0xff]
    %v3309 = vld [vmem:[%s3292 + $0x80] sm:$0xff]
    %v3310 = vld [vmem:[%s3292 + $0x88] sm:$0xff]
    %v3311 = vld [vmem:[%s3292 + $0x90] sm:$0xff]
    %v3312 = vld [vmem:[%s3292 + $0x98] sm:$0xff]
    %v3313 = vld [vmem:[%s3292 + $0xa0] sm:$0xff]
    %v3314 = vld [vmem:[%s3292 + $0xa8] sm:$0xff]
    %v3315 = vld [vmem:[%s3292 + $0xb0] sm:$0xff]
    %v3316 = vld [vmem:[%s3292 + $0xb8] sm:$0xff]
    %v3317 = vld [vmem:[%s3292 + $0xc0] sm:$0xff]
    %v3318 = vld [vmem:[%s3292 + $0xc8] sm:$0xff]
    %v3319 = vld [vmem:[%s3292 + $0xd0] sm:$0xff]
    %v3320 = vld [vmem:[%s3292 + $0xd8] sm:$0xff]
    %v3321 = vld [vmem:[%s3292 + $0xe0] sm:$0xff]
    %v3322 = vld [vmem:[%s3292 + $0xe8] sm:$0xff]
    %v3323 = vld [vmem:[%s3292 + $0xf0] sm:$0xff]
    %v3324 = vld [vmem:[%s3292 + $0xf8] sm:$0xff]
    %v3325 = vld [vmem:[%s3292 + $0x100] sm:$0xff]
    %v3326 = vld [vmem:[%s3292 + $0x108] sm:$0xff]
    %v3327 = vld [vmem:[%s3292 + $0x110] sm:$0xff]
    %v3328 = vld [vmem:[%s3292 + $0x118] sm:$0xff]
    %v3329 = vld [vmem:[%s3292 + $0x120] sm:$0xff]
    %v3330 = vld [vmem:[%s3292 + $0x128] sm:$0xff]
    %v3331 = vld [vmem:[%s3292 + $0x130] sm:$0xff]
    %v3332 = vld [vmem:[%s3292 + $0x138] sm:$0xff]
    %v3333 = vld [vmem:[%s3292 + $0x140] sm:$0xff]
    %v3334 = vld [vmem:[%s3292 + $0x148] sm:$0xff]
    %v3335 = vld [vmem:[%s3292 + $0x150] sm:$0xff]
    %v3336 = vld [vmem:[%s3292 + $0x158] sm:$0xff]
    %v3337 = vld [vmem:[%s3292 + $0x160] sm:$0xff]
    %v3338 = vld [vmem:[%s3292 + $0x168] sm:$0xff]
    %v3339 = vld [vmem:[%s3292 + $0x170] sm:$0xff]
    %v3340 = vld [vmem:[%s3292 + $0x178] sm:$0xff]
    %v3341 = vld [vmem:[%s3292 + $0x180] sm:$0xff]
    %v3342 = vld [vmem:[%s3292 + $0x188] sm:$0xff]
    %v3343 = vld [vmem:[%s3292 + $0x190] sm:$0xff]
    %v3344 = vld [vmem:[%s3292 + $0x198] sm:$0xff]
    %v3345 = vld [vmem:[%s3292 + $0x1a0] sm:$0xff]
    %v3346 = vld [vmem:[%s3292 + $0x1a8] sm:$0xff]
    %v3347 = vld [vmem:[%s3292 + $0x1b0] sm:$0xff]
    %v3348 = vld [vmem:[%s3292 + $0x1b8] sm:$0xff]
    %v3349 = vld [vmem:[%s3292 + $0x1c0] sm:$0xff]
    %v3350 = vld [vmem:[%s3292 + $0x1c8] sm:$0xff]
    %v3351 = vld [vmem:[%s3292 + $0x1d0] sm:$0xff]
    %v3352 = vld [vmem:[%s3292 + $0x1d8] sm:$0xff]
    %v3353 = vld [vmem:[%s3292 + $0x1e0] sm:$0xff]
    %v3354 = vld [vmem:[%s3292 + $0x1e8] sm:$0xff]
    %v3355 = vld [vmem:[%s3292 + $0x1f0] sm:$0xff]
    %v3356 = vld [vmem:[%s3292 + $0x1f8] sm:$0xff]
    %s3357 = scalar_lea.vmem [#allocation7], 14
    %v3358 = vld [vmem:[%s3357] sm:$0x3]
    %v3360 = vperm.slane %v3358, 0
    %v3361 = vperm.slane %v3358, 1
    %3364 = vmatpush.msra.mxu0 %v3323
    %3365 = vmatpush.msra.mxu0 %v3321
    %3366 = vmatpush.msra.mxu0 %v3319
    %3367 = vmatpush.msra.mxu0 %v3317
    %3368 = vmatpush.msra.mxu0 %v3315
    %3369 = vmatpush.msra.mxu0 %v3313
    %3370 = vmatpush.msra.mxu0 %v3311
    %3371 = vmatpush.msra.mxu0 %v3309
    %3372 = vmatpush.msra.mxu0 %v3307
    %3373 = vmatpush.msra.mxu0 %v3305
    %3374 = vmatpush.msra.mxu0 %v3303
    %3375 = vmatpush.msra.mxu0 %v3301
    %3376 = vmatpush.msra.mxu0 %v3299
    %3377 = vmatpush.msra.mxu0 %v3297
    %3378 = vmatpush.msra.mxu0 %v3295
    %3379 = vmatpush.msra.mxu0 %v3293
    %3380 = vmatmul.f32.gmra.mxu0 %v3290
    %v3381 = vpop.f32.mrf.mxu0
    %v3382 = vadd.f32 %v3360, %v3381
    %3383 = vdwg.mxu0
    %3384 = vmatpush.msra.mxu0 %v3355
    %3385 = vmatpush.msra.mxu0 %v3353
    %3386 = vmatpush.msra.mxu0 %v3351
    %3387 = vmatpush.msra.mxu0 %v3349
    %3388 = vmatpush.msra.mxu0 %v3347
    %3389 = vmatpush.msra.mxu0 %v3345
    %3390 = vmatpush.msra.mxu0 %v3343
    %3391 = vmatpush.msra.mxu0 %v3341
    %3392 = vmatpush.msra.mxu0 %v3339
    %3393 = vmatpush.msra.mxu0 %v3337
    %3394 = vmatpush.msra.mxu0 %v3335
    %3395 = vmatpush.msra.mxu0 %v3333
    %3396 = vmatpush.msra.mxu0 %v3331
    %3397 = vmatpush.msra.mxu0 %v3329
    %3398 = vmatpush.msra.mxu0 %v3327
    %3399 = vmatpush.msra.mxu0 %v3325
    %3400 = vmatmul.f32.gmra.mxu0 %v3291
    %v3401 = vpop.f32.mrf.mxu0
    %v3402 = vadd.f32 %v3382, %v3401
    %3403 = vdwg.mxu0
    %3404 = vmatpush.msra.mxu0 %v3324
    %3405 = vmatpush.msra.mxu0 %v3322
    %3406 = vmatpush.msra.mxu0 %v3320
    %3407 = vmatpush.msra.mxu0 %v3318
    %3408 = vmatpush.msra.mxu0 %v3316
    %3409 = vmatpush.msra.mxu0 %v3314
    %3410 = vmatpush.msra.mxu0 %v3312
    %3411 = vmatpush.msra.mxu0 %v3310
    %3412 = vmatpush.msra.mxu0 %v3308
    %3413 = vmatpush.msra.mxu0 %v3306
    %3414 = vmatpush.msra.mxu0 %v3304
    %3415 = vmatpush.msra.mxu0 %v3302
    %3416 = vmatpush.msra.mxu0 %v3300
    %3417 = vmatpush.msra.mxu0 %v3298
    %3418 = vmatpush.msra.mxu0 %v3296
    %3419 = vmatpush.msra.mxu0 %v3294
    %3420 = vmatmul.f32.gmra.mxu0 %v3290
    %v3421 = vpop.f32.mrf.mxu0
    %v3422 = vadd.f32 %v3361, %v3421
    %3423 = vdwg.mxu0
    %3424 = vmatpush.msra.mxu0 %v3356
    %3425 = vmatpush.msra.mxu0 %v3354
    %3426 = vmatpush.msra.mxu0 %v3352
    %3427 = vmatpush.msra.mxu0 %v3350
    %3428 = vmatpush.msra.mxu0 %v3348
    %3429 = vmatpush.msra.mxu0 %v3346
    %3430 = vmatpush.msra.mxu0 %v3344
    %3431 = vmatpush.msra.mxu0 %v3342
    %3432 = vmatpush.msra.mxu0 %v3340
    %3433 = vmatpush.msra.mxu0 %v3338
    %3434 = vmatpush.msra.mxu0 %v3336
    %3435 = vmatpush.msra.mxu0 %v3334
    %3436 = vmatpush.msra.mxu0 %v3332
    %3437 = vmatpush.msra.mxu0 %v3330
    %3438 = vmatpush.msra.mxu0 %v3328
    %3439 = vmatpush.msra.mxu0 %v3326
    %3440 = vmatmul.f32.gmra.mxu0 %v3291
    %v3441 = vpop.f32.mrf.mxu0
    %v3442 = vadd.f32 %v3422, %v3441
    %3443 = vdwg.mxu0
    %s3444 = scalar_lea.vmem [#allocation8], 3584
    %v3445 = vld [vmem:[%s3444] sm:$0xff]
    %v3446 = vld [vmem:[%s3444 + $0x8] sm:$0xff]
    %v3447 = vld [vmem:[%s3444 + $0x10] sm:$0xff]
    %v3448 = vld [vmem:[%s3444 + $0x18] sm:$0xff]
    %v3449 = vld [vmem:[%s3444 + $0x20] sm:$0xff]
    %v3450 = vld [vmem:[%s3444 + $0x28] sm:$0xff]
    %v3451 = vld [vmem:[%s3444 + $0x30] sm:$0xff]
    %v3452 = vld [vmem:[%s3444 + $0x38] sm:$0xff]
    %v3453 = vld [vmem:[%s3444 + $0x40] sm:$0xff]
    %v3454 = vld [vmem:[%s3444 + $0x48] sm:$0xff]
    %v3455 = vld [vmem:[%s3444 + $0x50] sm:$0xff]
    %v3456 = vld [vmem:[%s3444 + $0x58] sm:$0xff]
    %v3457 = vld [vmem:[%s3444 + $0x60] sm:$0xff]
    %v3458 = vld [vmem:[%s3444 + $0x68] sm:$0xff]
    %v3459 = vld [vmem:[%s3444 + $0x70] sm:$0xff]
    %v3460 = vld [vmem:[%s3444 + $0x78] sm:$0xff]
    %v3461 = vld [vmem:[%s3444 + $0x80] sm:$0xff]
    %v3462 = vld [vmem:[%s3444 + $0x88] sm:$0xff]
    %v3463 = vld [vmem:[%s3444 + $0x90] sm:$0xff]
    %v3464 = vld [vmem:[%s3444 + $0x98] sm:$0xff]
    %v3465 = vld [vmem:[%s3444 + $0xa0] sm:$0xff]
    %v3466 = vld [vmem:[%s3444 + $0xa8] sm:$0xff]
    %v3467 = vld [vmem:[%s3444 + $0xb0] sm:$0xff]
    %v3468 = vld [vmem:[%s3444 + $0xb8] sm:$0xff]
    %v3469 = vld [vmem:[%s3444 + $0xc0] sm:$0xff]
    %v3470 = vld [vmem:[%s3444 + $0xc8] sm:$0xff]
    %v3471 = vld [vmem:[%s3444 + $0xd0] sm:$0xff]
    %v3472 = vld [vmem:[%s3444 + $0xd8] sm:$0xff]
    %v3473 = vld [vmem:[%s3444 + $0xe0] sm:$0xff]
    %v3474 = vld [vmem:[%s3444 + $0xe8] sm:$0xff]
    %v3475 = vld [vmem:[%s3444 + $0xf0] sm:$0xff]
    %v3476 = vld [vmem:[%s3444 + $0xf8] sm:$0xff]
    %v3477 = vld [vmem:[%s3444 + $0x100] sm:$0xff]
    %v3478 = vld [vmem:[%s3444 + $0x108] sm:$0xff]
    %v3479 = vld [vmem:[%s3444 + $0x110] sm:$0xff]
    %v3480 = vld [vmem:[%s3444 + $0x118] sm:$0xff]
    %v3481 = vld [vmem:[%s3444 + $0x120] sm:$0xff]
    %v3482 = vld [vmem:[%s3444 + $0x128] sm:$0xff]
    %v3483 = vld [vmem:[%s3444 + $0x130] sm:$0xff]
    %v3484 = vld [vmem:[%s3444 + $0x138] sm:$0xff]
    %v3485 = vld [vmem:[%s3444 + $0x140] sm:$0xff]
    %v3486 = vld [vmem:[%s3444 + $0x148] sm:$0xff]
    %v3487 = vld [vmem:[%s3444 + $0x150] sm:$0xff]
    %v3488 = vld [vmem:[%s3444 + $0x158] sm:$0xff]
    %v3489 = vld [vmem:[%s3444 + $0x160] sm:$0xff]
    %v3490 = vld [vmem:[%s3444 + $0x168] sm:$0xff]
    %v3491 = vld [vmem:[%s3444 + $0x170] sm:$0xff]
    %v3492 = vld [vmem:[%s3444 + $0x178] sm:$0xff]
    %v3493 = vld [vmem:[%s3444 + $0x180] sm:$0xff]
    %v3494 = vld [vmem:[%s3444 + $0x188] sm:$0xff]
    %v3495 = vld [vmem:[%s3444 + $0x190] sm:$0xff]
    %v3496 = vld [vmem:[%s3444 + $0x198] sm:$0xff]
    %v3497 = vld [vmem:[%s3444 + $0x1a0] sm:$0xff]
    %v3498 = vld [vmem:[%s3444 + $0x1a8] sm:$0xff]
    %v3499 = vld [vmem:[%s3444 + $0x1b0] sm:$0xff]
    %v3500 = vld [vmem:[%s3444 + $0x1b8] sm:$0xff]
    %v3501 = vld [vmem:[%s3444 + $0x1c0] sm:$0xff]
    %v3502 = vld [vmem:[%s3444 + $0x1c8] sm:$0xff]
    %v3503 = vld [vmem:[%s3444 + $0x1d0] sm:$0xff]
    %v3504 = vld [vmem:[%s3444 + $0x1d8] sm:$0xff]
    %v3505 = vld [vmem:[%s3444 + $0x1e0] sm:$0xff]
    %v3506 = vld [vmem:[%s3444 + $0x1e8] sm:$0xff]
    %v3507 = vld [vmem:[%s3444 + $0x1f0] sm:$0xff]
    %v3508 = vld [vmem:[%s3444 + $0x1f8] sm:$0xff]
    %3509 = vmatpush.msra.mxu0 %v3475
    %3510 = vmatpush.msra.mxu0 %v3473
    %3511 = vmatpush.msra.mxu0 %v3471
    %3512 = vmatpush.msra.mxu0 %v3469
    %3513 = vmatpush.msra.mxu0 %v3467
    %3514 = vmatpush.msra.mxu0 %v3465
    %3515 = vmatpush.msra.mxu0 %v3463
    %3516 = vmatpush.msra.mxu0 %v3461
    %3517 = vmatpush.msra.mxu0 %v3459
    %3518 = vmatpush.msra.mxu0 %v3457
    %3519 = vmatpush.msra.mxu0 %v3455
    %3520 = vmatpush.msra.mxu0 %v3453
    %3521 = vmatpush.msra.mxu0 %v3451
    %3522 = vmatpush.msra.mxu0 %v3449
    %3523 = vmatpush.msra.mxu0 %v3447
    %3524 = vmatpush.msra.mxu0 %v3445
    %3525 = vmatmul.f32.gmra.mxu0 %v3287
    %v3526 = vpop.f32.mrf.mxu0
    %v3527 = vadd.f32 0.0, %v3526
    %3528 = vdwg.mxu0
    %3529 = vmatpush.msra.mxu0 %v3507
    %3530 = vmatpush.msra.mxu0 %v3505
    %3531 = vmatpush.msra.mxu0 %v3503
    %3532 = vmatpush.msra.mxu0 %v3501
    %3533 = vmatpush.msra.mxu0 %v3499
    %3534 = vmatpush.msra.mxu0 %v3497
    %3535 = vmatpush.msra.mxu0 %v3495
    %3536 = vmatpush.msra.mxu0 %v3493
    %3537 = vmatpush.msra.mxu0 %v3491
    %3538 = vmatpush.msra.mxu0 %v3489
    %3539 = vmatpush.msra.mxu0 %v3487
    %3540 = vmatpush.msra.mxu0 %v3485
    %3541 = vmatpush.msra.mxu0 %v3483
    %3542 = vmatpush.msra.mxu0 %v3481
    %3543 = vmatpush.msra.mxu0 %v3479
    %3544 = vmatpush.msra.mxu0 %v3477
    %3545 = vmatmul.f32.gmra.mxu0 %v3288
    %v3546 = vpop.f32.mrf.mxu0
    %v3547 = vadd.f32 %v3527, %v3546
    %3548 = vdwg.mxu0
    %3549 = vmatpush.msra.mxu0 %v3476
    %3550 = vmatpush.msra.mxu0 %v3474
    %3551 = vmatpush.msra.mxu0 %v3472
    %3552 = vmatpush.msra.mxu0 %v3470
    %3553 = vmatpush.msra.mxu0 %v3468
    %3554 = vmatpush.msra.mxu0 %v3466
    %3555 = vmatpush.msra.mxu0 %v3464
    %3556 = vmatpush.msra.mxu0 %v3462
    %3557 = vmatpush.msra.mxu0 %v3460
    %3558 = vmatpush.msra.mxu0 %v3458
    %3559 = vmatpush.msra.mxu0 %v3456
    %3560 = vmatpush.msra.mxu0 %v3454
    %3561 = vmatpush.msra.mxu0 %v3452
    %3562 = vmatpush.msra.mxu0 %v3450
    %3563 = vmatpush.msra.mxu0 %v3448
    %3564 = vmatpush.msra.mxu0 %v3446
    %3565 = vmatmul.f32.gmra.mxu0 %v3287
    %v3566 = vpop.f32.mrf.mxu0
    %v3567 = vadd.f32 0.0, %v3566
    %3568 = vdwg.mxu0
    %3569 = vmatpush.msra.mxu0 %v3508
    %3570 = vmatpush.msra.mxu0 %v3506
    %3571 = vmatpush.msra.mxu0 %v3504
    %3572 = vmatpush.msra.mxu0 %v3502
    %3573 = vmatpush.msra.mxu0 %v3500
    %3574 = vmatpush.msra.mxu0 %v3498
    %3575 = vmatpush.msra.mxu0 %v3496
    %3576 = vmatpush.msra.mxu0 %v3494
    %3577 = vmatpush.msra.mxu0 %v3492
    %3578 = vmatpush.msra.mxu0 %v3490
    %3579 = vmatpush.msra.mxu0 %v3488
    %3580 = vmatpush.msra.mxu0 %v3486
    %3581 = vmatpush.msra.mxu0 %v3484
    %3582 = vmatpush.msra.mxu0 %v3482
    %3583 = vmatpush.msra.mxu0 %v3480
    %3584 = vmatpush.msra.mxu0 %v3478
    %3585 = vmatmul.f32.gmra.mxu0 %v3288
    %v3586 = vpop.f32.mrf.mxu0
    %v3587 = vadd.f32 %v3567, %v3586
    %3588 = vdwg.mxu0
    %v3589 = vadd.f32 %v3402, %v3547
    %v3590 = vadd.f32 %v3442, %v3587
    %v3591 = vmax.f32 %v3589, 0.0
    %v3592 = vmax.f32 %v3590, 0.0
    %s3593 = scalar_lea.vmem [#allocation10], 3584
    %v3594 = vld [vmem:[%s3593] sm:$0xff]
    %v3595 = vld [vmem:[%s3593 + $0x8] sm:$0xff]
    %v3596 = vld [vmem:[%s3593 + $0x10] sm:$0xff]
    %v3597 = vld [vmem:[%s3593 + $0x18] sm:$0xff]
    %v3598 = vld [vmem:[%s3593 + $0x20] sm:$0xff]
    %v3599 = vld [vmem:[%s3593 + $0x28] sm:$0xff]
    %v3600 = vld [vmem:[%s3593 + $0x30] sm:$0xff]
    %v3601 = vld [vmem:[%s3593 + $0x38] sm:$0xff]
    %v3602 = vld [vmem:[%s3593 + $0x40] sm:$0xff]
    %v3603 = vld [vmem:[%s3593 + $0x48] sm:$0xff]
    %v3604 = vld [vmem:[%s3593 + $0x50] sm:$0xff]
    %v3605 = vld [vmem:[%s3593 + $0x58] sm:$0xff]
    %v3606 = vld [vmem:[%s3593 + $0x60] sm:$0xff]
    %v3607 = vld [vmem:[%s3593 + $0x68] sm:$0xff]
    %v3608 = vld [vmem:[%s3593 + $0x70] sm:$0xff]
    %v3609 = vld [vmem:[%s3593 + $0x78] sm:$0xff]
    %v3610 = vld [vmem:[%s3593 + $0x80] sm:$0xff]
    %v3611 = vld [vmem:[%s3593 + $0x88] sm:$0xff]
    %v3612 = vld [vmem:[%s3593 + $0x90] sm:$0xff]
    %v3613 = vld [vmem:[%s3593 + $0x98] sm:$0xff]
    %v3614 = vld [vmem:[%s3593 + $0xa0] sm:$0xff]
    %v3615 = vld [vmem:[%s3593 + $0xa8] sm:$0xff]
    %v3616 = vld [vmem:[%s3593 + $0xb0] sm:$0xff]
    %v3617 = vld [vmem:[%s3593 + $0xb8] sm:$0xff]
    %v3618 = vld [vmem:[%s3593 + $0xc0] sm:$0xff]
    %v3619 = vld [vmem:[%s3593 + $0xc8] sm:$0xff]
    %v3620 = vld [vmem:[%s3593 + $0xd0] sm:$0xff]
    %v3621 = vld [vmem:[%s3593 + $0xd8] sm:$0xff]
    %v3622 = vld [vmem:[%s3593 + $0xe0] sm:$0xff]
    %v3623 = vld [vmem:[%s3593 + $0xe8] sm:$0xff]
    %v3624 = vld [vmem:[%s3593 + $0xf0] sm:$0xff]
    %v3625 = vld [vmem:[%s3593 + $0xf8] sm:$0xff]
    %v3626 = vld [vmem:[%s3593 + $0x100] sm:$0xff]
    %v3627 = vld [vmem:[%s3593 + $0x108] sm:$0xff]
    %v3628 = vld [vmem:[%s3593 + $0x110] sm:$0xff]
    %v3629 = vld [vmem:[%s3593 + $0x118] sm:$0xff]
    %v3630 = vld [vmem:[%s3593 + $0x120] sm:$0xff]
    %v3631 = vld [vmem:[%s3593 + $0x128] sm:$0xff]
    %v3632 = vld [vmem:[%s3593 + $0x130] sm:$0xff]
    %v3633 = vld [vmem:[%s3593 + $0x138] sm:$0xff]
    %v3634 = vld [vmem:[%s3593 + $0x140] sm:$0xff]
    %v3635 = vld [vmem:[%s3593 + $0x148] sm:$0xff]
    %v3636 = vld [vmem:[%s3593 + $0x150] sm:$0xff]
    %v3637 = vld [vmem:[%s3593 + $0x158] sm:$0xff]
    %v3638 = vld [vmem:[%s3593 + $0x160] sm:$0xff]
    %v3639 = vld [vmem:[%s3593 + $0x168] sm:$0xff]
    %v3640 = vld [vmem:[%s3593 + $0x170] sm:$0xff]
    %v3641 = vld [vmem:[%s3593 + $0x178] sm:$0xff]
    %v3642 = vld [vmem:[%s3593 + $0x180] sm:$0xff]
    %v3643 = vld [vmem:[%s3593 + $0x188] sm:$0xff]
    %v3644 = vld [vmem:[%s3593 + $0x190] sm:$0xff]
    %v3645 = vld [vmem:[%s3593 + $0x198] sm:$0xff]
    %v3646 = vld [vmem:[%s3593 + $0x1a0] sm:$0xff]
    %v3647 = vld [vmem:[%s3593 + $0x1a8] sm:$0xff]
    %v3648 = vld [vmem:[%s3593 + $0x1b0] sm:$0xff]
    %v3649 = vld [vmem:[%s3593 + $0x1b8] sm:$0xff]
    %v3650 = vld [vmem:[%s3593 + $0x1c0] sm:$0xff]
    %v3651 = vld [vmem:[%s3593 + $0x1c8] sm:$0xff]
    %v3652 = vld [vmem:[%s3593 + $0x1d0] sm:$0xff]
    %v3653 = vld [vmem:[%s3593 + $0x1d8] sm:$0xff]
    %v3654 = vld [vmem:[%s3593 + $0x1e0] sm:$0xff]
    %v3655 = vld [vmem:[%s3593 + $0x1e8] sm:$0xff]
    %v3656 = vld [vmem:[%s3593 + $0x1f0] sm:$0xff]
    %v3657 = vld [vmem:[%s3593 + $0x1f8] sm:$0xff]
    %s3658 = scalar_lea.vmem [#allocation11], 14
    %v3659 = vld [vmem:[%s3658] sm:$0x3]
    %v3661 = vperm.slane %v3659, 0
    %v3662 = vperm.slane %v3659, 1
    %3665 = vmatpush.msra.mxu0 %v3624
    %3666 = vmatpush.msra.mxu0 %v3622
    %3667 = vmatpush.msra.mxu0 %v3620
    %3668 = vmatpush.msra.mxu0 %v3618
    %3669 = vmatpush.msra.mxu0 %v3616
    %3670 = vmatpush.msra.mxu0 %v3614
    %3671 = vmatpush.msra.mxu0 %v3612
    %3672 = vmatpush.msra.mxu0 %v3610
    %3673 = vmatpush.msra.mxu0 %v3608
    %3674 = vmatpush.msra.mxu0 %v3606
    %3675 = vmatpush.msra.mxu0 %v3604
    %3676 = vmatpush.msra.mxu0 %v3602
    %3677 = vmatpush.msra.mxu0 %v3600
    %3678 = vmatpush.msra.mxu0 %v3598
    %3679 = vmatpush.msra.mxu0 %v3596
    %3680 = vmatpush.msra.mxu0 %v3594
    %3681 = vmatmul.f32.gmra.mxu0 %v3591
    %v3682 = vpop.f32.mrf.mxu0
    %v3683 = vadd.f32 %v3661, %v3682
    %3684 = vdwg.mxu0
    %3685 = vmatpush.msra.mxu0 %v3656
    %3686 = vmatpush.msra.mxu0 %v3654
    %3687 = vmatpush.msra.mxu0 %v3652
    %3688 = vmatpush.msra.mxu0 %v3650
    %3689 = vmatpush.msra.mxu0 %v3648
    %3690 = vmatpush.msra.mxu0 %v3646
    %3691 = vmatpush.msra.mxu0 %v3644
    %3692 = vmatpush.msra.mxu0 %v3642
    %3693 = vmatpush.msra.mxu0 %v3640
    %3694 = vmatpush.msra.mxu0 %v3638
    %3695 = vmatpush.msra.mxu0 %v3636
    %3696 = vmatpush.msra.mxu0 %v3634
    %3697 = vmatpush.msra.mxu0 %v3632
    %3698 = vmatpush.msra.mxu0 %v3630
    %3699 = vmatpush.msra.mxu0 %v3628
    %3700 = vmatpush.msra.mxu0 %v3626
    %3701 = vmatmul.f32.gmra.mxu0 %v3592
    %v3702 = vpop.f32.mrf.mxu0
    %v3703 = vadd.f32 %v3683, %v3702
    %3704 = vdwg.mxu0
    %3705 = vmatpush.msra.mxu0 %v3625
    %3706 = vmatpush.msra.mxu0 %v3623
    %3707 = vmatpush.msra.mxu0 %v3621
    %3708 = vmatpush.msra.mxu0 %v3619
    %3709 = vmatpush.msra.mxu0 %v3617
    %3710 = vmatpush.msra.mxu0 %v3615
    %3711 = vmatpush.msra.mxu0 %v3613
    %3712 = vmatpush.msra.mxu0 %v3611
    %3713 = vmatpush.msra.mxu0 %v3609
    %3714 = vmatpush.msra.mxu0 %v3607
    %3715 = vmatpush.msra.mxu0 %v3605
    %3716 = vmatpush.msra.mxu0 %v3603
    %3717 = vmatpush.msra.mxu0 %v3601
    %3718 = vmatpush.msra.mxu0 %v3599
    %3719 = vmatpush.msra.mxu0 %v3597
    %3720 = vmatpush.msra.mxu0 %v3595
    %3721 = vmatmul.f32.gmra.mxu0 %v3591
    %v3722 = vpop.f32.mrf.mxu0
    %v3723 = vadd.f32 %v3662, %v3722
    %3724 = vdwg.mxu0
    %3725 = vmatpush.msra.mxu0 %v3657
    %3726 = vmatpush.msra.mxu0 %v3655
    %3727 = vmatpush.msra.mxu0 %v3653
    %3728 = vmatpush.msra.mxu0 %v3651
    %3729 = vmatpush.msra.mxu0 %v3649
    %3730 = vmatpush.msra.mxu0 %v3647
    %3731 = vmatpush.msra.mxu0 %v3645
    %3732 = vmatpush.msra.mxu0 %v3643
    %3733 = vmatpush.msra.mxu0 %v3641
    %3734 = vmatpush.msra.mxu0 %v3639
    %3735 = vmatpush.msra.mxu0 %v3637
    %3736 = vmatpush.msra.mxu0 %v3635
    %3737 = vmatpush.msra.mxu0 %v3633
    %3738 = vmatpush.msra.mxu0 %v3631
    %3739 = vmatpush.msra.mxu0 %v3629
    %3740 = vmatpush.msra.mxu0 %v3627
    %3741 = vmatmul.f32.gmra.mxu0 %v3592
    %v3742 = vpop.f32.mrf.mxu0
    %v3743 = vadd.f32 %v3723, %v3742
    %3744 = vdwg.mxu0
    %v3745 = vadd.f32 %v3703, %v3287
    %v3746 = vadd.f32 %v3743, %v3288
    %v3747 = vmax.f32 %v3745, 0.0
    %v3748 = vmax.f32 %v3746, 0.0
    %s3749 = scalar_lea.vmem [#allocation2], 128
    %v3750 = vld [vmem:[%s3749] sm:$0xff]
    %v3751 = vld [vmem:[%s3749 + $0x8] sm:$0xff]
    %s3752 = scalar_lea.vmem [#allocation5], 4096
    %v3753 = vld [vmem:[%s3752] sm:$0xff]
    %v3754 = vld [vmem:[%s3752 + $0x8] sm:$0xff]
    %v3755 = vld [vmem:[%s3752 + $0x10] sm:$0xff]
    %v3756 = vld [vmem:[%s3752 + $0x18] sm:$0xff]
    %v3757 = vld [vmem:[%s3752 + $0x20] sm:$0xff]
    %v3758 = vld [vmem:[%s3752 + $0x28] sm:$0xff]
    %v3759 = vld [vmem:[%s3752 + $0x30] sm:$0xff]
    %v3760 = vld [vmem:[%s3752 + $0x38] sm:$0xff]
    %v3761 = vld [vmem:[%s3752 + $0x40] sm:$0xff]
    %v3762 = vld [vmem:[%s3752 + $0x48] sm:$0xff]
    %v3763 = vld [vmem:[%s3752 + $0x50] sm:$0xff]
    %v3764 = vld [vmem:[%s3752 + $0x58] sm:$0xff]
    %v3765 = vld [vmem:[%s3752 + $0x60] sm:$0xff]
    %v3766 = vld [vmem:[%s3752 + $0x68] sm:$0xff]
    %v3767 = vld [vmem:[%s3752 + $0x70] sm:$0xff]
    %v3768 = vld [vmem:[%s3752 + $0x78] sm:$0xff]
    %v3769 = vld [vmem:[%s3752 + $0x80] sm:$0xff]
    %v3770 = vld [vmem:[%s3752 + $0x88] sm:$0xff]
    %v3771 = vld [vmem:[%s3752 + $0x90] sm:$0xff]
    %v3772 = vld [vmem:[%s3752 + $0x98] sm:$0xff]
    %v3773 = vld [vmem:[%s3752 + $0xa0] sm:$0xff]
    %v3774 = vld [vmem:[%s3752 + $0xa8] sm:$0xff]
    %v3775 = vld [vmem:[%s3752 + $0xb0] sm:$0xff]
    %v3776 = vld [vmem:[%s3752 + $0xb8] sm:$0xff]
    %v3777 = vld [vmem:[%s3752 + $0xc0] sm:$0xff]
    %v3778 = vld [vmem:[%s3752 + $0xc8] sm:$0xff]
    %v3779 = vld [vmem:[%s3752 + $0xd0] sm:$0xff]
    %v3780 = vld [vmem:[%s3752 + $0xd8] sm:$0xff]
    %v3781 = vld [vmem:[%s3752 + $0xe0] sm:$0xff]
    %v3782 = vld [vmem:[%s3752 + $0xe8] sm:$0xff]
    %v3783 = vld [vmem:[%s3752 + $0xf0] sm:$0xff]
    %v3784 = vld [vmem:[%s3752 + $0xf8] sm:$0xff]
    %v3785 = vld [vmem:[%s3752 + $0x100] sm:$0xff]
    %v3786 = vld [vmem:[%s3752 + $0x108] sm:$0xff]
    %v3787 = vld [vmem:[%s3752 + $0x110] sm:$0xff]
    %v3788 = vld [vmem:[%s3752 + $0x118] sm:$0xff]
    %v3789 = vld [vmem:[%s3752 + $0x120] sm:$0xff]
    %v3790 = vld [vmem:[%s3752 + $0x128] sm:$0xff]
    %v3791 = vld [vmem:[%s3752 + $0x130] sm:$0xff]
    %v3792 = vld [vmem:[%s3752 + $0x138] sm:$0xff]
    %v3793 = vld [vmem:[%s3752 + $0x140] sm:$0xff]
    %v3794 = vld [vmem:[%s3752 + $0x148] sm:$0xff]
    %v3795 = vld [vmem:[%s3752 + $0x150] sm:$0xff]
    %v3796 = vld [vmem:[%s3752 + $0x158] sm:$0xff]
    %v3797 = vld [vmem:[%s3752 + $0x160] sm:$0xff]
    %v3798 = vld [vmem:[%s3752 + $0x168] sm:$0xff]
    %v3799 = vld [vmem:[%s3752 + $0x170] sm:$0xff]
    %v3800 = vld [vmem:[%s3752 + $0x178] sm:$0xff]
    %v3801 = vld [vmem:[%s3752 + $0x180] sm:$0xff]
    %v3802 = vld [vmem:[%s3752 + $0x188] sm:$0xff]
    %v3803 = vld [vmem:[%s3752 + $0x190] sm:$0xff]
    %v3804 = vld [vmem:[%s3752 + $0x198] sm:$0xff]
    %v3805 = vld [vmem:[%s3752 + $0x1a0] sm:$0xff]
    %v3806 = vld [vmem:[%s3752 + $0x1a8] sm:$0xff]
    %v3807 = vld [vmem:[%s3752 + $0x1b0] sm:$0xff]
    %v3808 = vld [vmem:[%s3752 + $0x1b8] sm:$0xff]
    %v3809 = vld [vmem:[%s3752 + $0x1c0] sm:$0xff]
    %v3810 = vld [vmem:[%s3752 + $0x1c8] sm:$0xff]
    %v3811 = vld [vmem:[%s3752 + $0x1d0] sm:$0xff]
    %v3812 = vld [vmem:[%s3752 + $0x1d8] sm:$0xff]
    %v3813 = vld [vmem:[%s3752 + $0x1e0] sm:$0xff]
    %v3814 = vld [vmem:[%s3752 + $0x1e8] sm:$0xff]
    %v3815 = vld [vmem:[%s3752 + $0x1f0] sm:$0xff]
    %v3816 = vld [vmem:[%s3752 + $0x1f8] sm:$0xff]
    %s3817 = scalar_lea.vmem [#allocation7], 16
    %v3818 = vld [vmem:[%s3817] sm:$0x3]
    %v3820 = vperm.slane %v3818, 0
    %v3821 = vperm.slane %v3818, 1
    %3824 = vmatpush.msra.mxu0 %v3783
    %3825 = vmatpush.msra.mxu0 %v3781
    %3826 = vmatpush.msra.mxu0 %v3779
    %3827 = vmatpush.msra.mxu0 %v3777
    %3828 = vmatpush.msra.mxu0 %v3775
    %3829 = vmatpush.msra.mxu0 %v3773
    %3830 = vmatpush.msra.mxu0 %v3771
    %3831 = vmatpush.msra.mxu0 %v3769
    %3832 = vmatpush.msra.mxu0 %v3767
    %3833 = vmatpush.msra.mxu0 %v3765
    %3834 = vmatpush.msra.mxu0 %v3763
    %3835 = vmatpush.msra.mxu0 %v3761
    %3836 = vmatpush.msra.mxu0 %v3759
    %3837 = vmatpush.msra.mxu0 %v3757
    %3838 = vmatpush.msra.mxu0 %v3755
    %3839 = vmatpush.msra.mxu0 %v3753
    %3840 = vmatmul.f32.gmra.mxu0 %v3750
    %v3841 = vpop.f32.mrf.mxu0
    %v3842 = vadd.f32 %v3820, %v3841
    %3843 = vdwg.mxu0
    %3844 = vmatpush.msra.mxu0 %v3815
    %3845 = vmatpush.msra.mxu0 %v3813
    %3846 = vmatpush.msra.mxu0 %v3811
    %3847 = vmatpush.msra.mxu0 %v3809
    %3848 = vmatpush.msra.mxu0 %v3807
    %3849 = vmatpush.msra.mxu0 %v3805
    %3850 = vmatpush.msra.mxu0 %v3803
    %3851 = vmatpush.msra.mxu0 %v3801
    %3852 = vmatpush.msra.mxu0 %v3799
    %3853 = vmatpush.msra.mxu0 %v3797
    %3854 = vmatpush.msra.mxu0 %v3795
    %3855 = vmatpush.msra.mxu0 %v3793
    %3856 = vmatpush.msra.mxu0 %v3791
    %3857 = vmatpush.msra.mxu0 %v3789
    %3858 = vmatpush.msra.mxu0 %v3787
    %3859 = vmatpush.msra.mxu0 %v3785
    %3860 = vmatmul.f32.gmra.mxu0 %v3751
    %v3861 = vpop.f32.mrf.mxu0
    %v3862 = vadd.f32 %v3842, %v3861
    %3863 = vdwg.mxu0
    %3864 = vmatpush.msra.mxu0 %v3784
    %3865 = vmatpush.msra.mxu0 %v3782
    %3866 = vmatpush.msra.mxu0 %v3780
    %3867 = vmatpush.msra.mxu0 %v3778
    %3868 = vmatpush.msra.mxu0 %v3776
    %3869 = vmatpush.msra.mxu0 %v3774
    %3870 = vmatpush.msra.mxu0 %v3772
    %3871 = vmatpush.msra.mxu0 %v3770
    %3872 = vmatpush.msra.mxu0 %v3768
    %3873 = vmatpush.msra.mxu0 %v3766
    %3874 = vmatpush.msra.mxu0 %v3764
    %3875 = vmatpush.msra.mxu0 %v3762
    %3876 = vmatpush.msra.mxu0 %v3760
    %3877 = vmatpush.msra.mxu0 %v3758
    %3878 = vmatpush.msra.mxu0 %v3756
    %3879 = vmatpush.msra.mxu0 %v3754
    %3880 = vmatmul.f32.gmra.mxu0 %v3750
    %v3881 = vpop.f32.mrf.mxu0
    %v3882 = vadd.f32 %v3821, %v3881
    %3883 = vdwg.mxu0
    %3884 = vmatpush.msra.mxu0 %v3816
    %3885 = vmatpush.msra.mxu0 %v3814
    %3886 = vmatpush.msra.mxu0 %v3812
    %3887 = vmatpush.msra.mxu0 %v3810
    %3888 = vmatpush.msra.mxu0 %v3808
    %3889 = vmatpush.msra.mxu0 %v3806
    %3890 = vmatpush.msra.mxu0 %v3804
    %3891 = vmatpush.msra.mxu0 %v3802
    %3892 = vmatpush.msra.mxu0 %v3800
    %3893 = vmatpush.msra.mxu0 %v3798
    %3894 = vmatpush.msra.mxu0 %v3796
    %3895 = vmatpush.msra.mxu0 %v3794
    %3896 = vmatpush.msra.mxu0 %v3792
    %3897 = vmatpush.msra.mxu0 %v3790
    %3898 = vmatpush.msra.mxu0 %v3788
    %3899 = vmatpush.msra.mxu0 %v3786
    %3900 = vmatmul.f32.gmra.mxu0 %v3751
    %v3901 = vpop.f32.mrf.mxu0
    %v3902 = vadd.f32 %v3882, %v3901
    %3903 = vdwg.mxu0
    %s3904 = scalar_lea.vmem [#allocation8], 4096
    %v3905 = vld [vmem:[%s3904] sm:$0xff]
    %v3906 = vld [vmem:[%s3904 + $0x8] sm:$0xff]
    %v3907 = vld [vmem:[%s3904 + $0x10] sm:$0xff]
    %v3908 = vld [vmem:[%s3904 + $0x18] sm:$0xff]
    %v3909 = vld [vmem:[%s3904 + $0x20] sm:$0xff]
    %v3910 = vld [vmem:[%s3904 + $0x28] sm:$0xff]
    %v3911 = vld [vmem:[%s3904 + $0x30] sm:$0xff]
    %v3912 = vld [vmem:[%s3904 + $0x38] sm:$0xff]
    %v3913 = vld [vmem:[%s3904 + $0x40] sm:$0xff]
    %v3914 = vld [vmem:[%s3904 + $0x48] sm:$0xff]
    %v3915 = vld [vmem:[%s3904 + $0x50] sm:$0xff]
    %v3916 = vld [vmem:[%s3904 + $0x58] sm:$0xff]
    %v3917 = vld [vmem:[%s3904 + $0x60] sm:$0xff]
    %v3918 = vld [vmem:[%s3904 + $0x68] sm:$0xff]
    %v3919 = vld [vmem:[%s3904 + $0x70] sm:$0xff]
    %v3920 = vld [vmem:[%s3904 + $0x78] sm:$0xff]
    %v3921 = vld [vmem:[%s3904 + $0x80] sm:$0xff]
    %v3922 = vld [vmem:[%s3904 + $0x88] sm:$0xff]
    %v3923 = vld [vmem:[%s3904 + $0x90] sm:$0xff]
    %v3924 = vld [vmem:[%s3904 + $0x98] sm:$0xff]
    %v3925 = vld [vmem:[%s3904 + $0xa0] sm:$0xff]
    %v3926 = vld [vmem:[%s3904 + $0xa8] sm:$0xff]
    %v3927 = vld [vmem:[%s3904 + $0xb0] sm:$0xff]
    %v3928 = vld [vmem:[%s3904 + $0xb8] sm:$0xff]
    %v3929 = vld [vmem:[%s3904 + $0xc0] sm:$0xff]
    %v3930 = vld [vmem:[%s3904 + $0xc8] sm:$0xff]
    %v3931 = vld [vmem:[%s3904 + $0xd0] sm:$0xff]
    %v3932 = vld [vmem:[%s3904 + $0xd8] sm:$0xff]
    %v3933 = vld [vmem:[%s3904 + $0xe0] sm:$0xff]
    %v3934 = vld [vmem:[%s3904 + $0xe8] sm:$0xff]
    %v3935 = vld [vmem:[%s3904 + $0xf0] sm:$0xff]
    %v3936 = vld [vmem:[%s3904 + $0xf8] sm:$0xff]
    %v3937 = vld [vmem:[%s3904 + $0x100] sm:$0xff]
    %v3938 = vld [vmem:[%s3904 + $0x108] sm:$0xff]
    %v3939 = vld [vmem:[%s3904 + $0x110] sm:$0xff]
    %v3940 = vld [vmem:[%s3904 + $0x118] sm:$0xff]
    %v3941 = vld [vmem:[%s3904 + $0x120] sm:$0xff]
    %v3942 = vld [vmem:[%s3904 + $0x128] sm:$0xff]
    %v3943 = vld [vmem:[%s3904 + $0x130] sm:$0xff]
    %v3944 = vld [vmem:[%s3904 + $0x138] sm:$0xff]
    %v3945 = vld [vmem:[%s3904 + $0x140] sm:$0xff]
    %v3946 = vld [vmem:[%s3904 + $0x148] sm:$0xff]
    %v3947 = vld [vmem:[%s3904 + $0x150] sm:$0xff]
    %v3948 = vld [vmem:[%s3904 + $0x158] sm:$0xff]
    %v3949 = vld [vmem:[%s3904 + $0x160] sm:$0xff]
    %v3950 = vld [vmem:[%s3904 + $0x168] sm:$0xff]
    %v3951 = vld [vmem:[%s3904 + $0x170] sm:$0xff]
    %v3952 = vld [vmem:[%s3904 + $0x178] sm:$0xff]
    %v3953 = vld [vmem:[%s3904 + $0x180] sm:$0xff]
    %v3954 = vld [vmem:[%s3904 + $0x188] sm:$0xff]
    %v3955 = vld [vmem:[%s3904 + $0x190] sm:$0xff]
    %v3956 = vld [vmem:[%s3904 + $0x198] sm:$0xff]
    %v3957 = vld [vmem:[%s3904 + $0x1a0] sm:$0xff]
    %v3958 = vld [vmem:[%s3904 + $0x1a8] sm:$0xff]
    %v3959 = vld [vmem:[%s3904 + $0x1b0] sm:$0xff]
    %v3960 = vld [vmem:[%s3904 + $0x1b8] sm:$0xff]
    %v3961 = vld [vmem:[%s3904 + $0x1c0] sm:$0xff]
    %v3962 = vld [vmem:[%s3904 + $0x1c8] sm:$0xff]
    %v3963 = vld [vmem:[%s3904 + $0x1d0] sm:$0xff]
    %v3964 = vld [vmem:[%s3904 + $0x1d8] sm:$0xff]
    %v3965 = vld [vmem:[%s3904 + $0x1e0] sm:$0xff]
    %v3966 = vld [vmem:[%s3904 + $0x1e8] sm:$0xff]
    %v3967 = vld [vmem:[%s3904 + $0x1f0] sm:$0xff]
    %v3968 = vld [vmem:[%s3904 + $0x1f8] sm:$0xff]
    %3969 = vmatpush.msra.mxu0 %v3935
    %3970 = vmatpush.msra.mxu0 %v3933
    %3971 = vmatpush.msra.mxu0 %v3931
    %3972 = vmatpush.msra.mxu0 %v3929
    %3973 = vmatpush.msra.mxu0 %v3927
    %3974 = vmatpush.msra.mxu0 %v3925
    %3975 = vmatpush.msra.mxu0 %v3923
    %3976 = vmatpush.msra.mxu0 %v3921
    %3977 = vmatpush.msra.mxu0 %v3919
    %3978 = vmatpush.msra.mxu0 %v3917
    %3979 = vmatpush.msra.mxu0 %v3915
    %3980 = vmatpush.msra.mxu0 %v3913
    %3981 = vmatpush.msra.mxu0 %v3911
    %3982 = vmatpush.msra.mxu0 %v3909
    %3983 = vmatpush.msra.mxu0 %v3907
    %3984 = vmatpush.msra.mxu0 %v3905
    %3985 = vmatmul.f32.gmra.mxu0 %v3747
    %v3986 = vpop.f32.mrf.mxu0
    %v3987 = vadd.f32 0.0, %v3986
    %3988 = vdwg.mxu0
    %3989 = vmatpush.msra.mxu0 %v3967
    %3990 = vmatpush.msra.mxu0 %v3965
    %3991 = vmatpush.msra.mxu0 %v3963
    %3992 = vmatpush.msra.mxu0 %v3961
    %3993 = vmatpush.msra.mxu0 %v3959
    %3994 = vmatpush.msra.mxu0 %v3957
    %3995 = vmatpush.msra.mxu0 %v3955
    %3996 = vmatpush.msra.mxu0 %v3953
    %3997 = vmatpush.msra.mxu0 %v3951
    %3998 = vmatpush.msra.mxu0 %v3949
    %3999 = vmatpush.msra.mxu0 %v3947
    %4000 = vmatpush.msra.mxu0 %v3945
    %4001 = vmatpush.msra.mxu0 %v3943
    %4002 = vmatpush.msra.mxu0 %v3941
    %4003 = vmatpush.msra.mxu0 %v3939
    %4004 = vmatpush.msra.mxu0 %v3937
    %4005 = vmatmul.f32.gmra.mxu0 %v3748
    %v4006 = vpop.f32.mrf.mxu0
    %v4007 = vadd.f32 %v3987, %v4006
    %4008 = vdwg.mxu0
    %4009 = vmatpush.msra.mxu0 %v3936
    %4010 = vmatpush.msra.mxu0 %v3934
    %4011 = vmatpush.msra.mxu0 %v3932
    %4012 = vmatpush.msra.mxu0 %v3930
    %4013 = vmatpush.msra.mxu0 %v3928
    %4014 = vmatpush.msra.mxu0 %v3926
    %4015 = vmatpush.msra.mxu0 %v3924
    %4016 = vmatpush.msra.mxu0 %v3922
    %4017 = vmatpush.msra.mxu0 %v3920
    %4018 = vmatpush.msra.mxu0 %v3918
    %4019 = vmatpush.msra.mxu0 %v3916
    %4020 = vmatpush.msra.mxu0 %v3914
    %4021 = vmatpush.msra.mxu0 %v3912
    %4022 = vmatpush.msra.mxu0 %v3910
    %4023 = vmatpush.msra.mxu0 %v3908
    %4024 = vmatpush.msra.mxu0 %v3906
    %4025 = vmatmul.f32.gmra.mxu0 %v3747
    %v4026 = vpop.f32.mrf.mxu0
    %v4027 = vadd.f32 0.0, %v4026
    %4028 = vdwg.mxu0
    %4029 = vmatpush.msra.mxu0 %v3968
    %4030 = vmatpush.msra.mxu0 %v3966
    %4031 = vmatpush.msra.mxu0 %v3964
    %4032 = vmatpush.msra.mxu0 %v3962
    %4033 = vmatpush.msra.mxu0 %v3960
    %4034 = vmatpush.msra.mxu0 %v3958
    %4035 = vmatpush.msra.mxu0 %v3956
    %4036 = vmatpush.msra.mxu0 %v3954
    %4037 = vmatpush.msra.mxu0 %v3952
    %4038 = vmatpush.msra.mxu0 %v3950
    %4039 = vmatpush.msra.mxu0 %v3948
    %4040 = vmatpush.msra.mxu0 %v3946
    %4041 = vmatpush.msra.mxu0 %v3944
    %4042 = vmatpush.msra.mxu0 %v3942
    %4043 = vmatpush.msra.mxu0 %v3940
    %4044 = vmatpush.msra.mxu0 %v3938
    %4045 = vmatmul.f32.gmra.mxu0 %v3748
    %v4046 = vpop.f32.mrf.mxu0
    %v4047 = vadd.f32 %v4027, %v4046
    %4048 = vdwg.mxu0
    %v4049 = vadd.f32 %v3862, %v4007
    %v4050 = vadd.f32 %v3902, %v4047
    %v4051 = vmax.f32 %v4049, 0.0
    %v4052 = vmax.f32 %v4050, 0.0
    %s4053 = scalar_lea.vmem [#allocation10], 4096
    %v4054 = vld [vmem:[%s4053] sm:$0xff]
    %v4055 = vld [vmem:[%s4053 + $0x8] sm:$0xff]
    %v4056 = vld [vmem:[%s4053 + $0x10] sm:$0xff]
    %v4057 = vld [vmem:[%s4053 + $0x18] sm:$0xff]
    %v4058 = vld [vmem:[%s4053 + $0x20] sm:$0xff]
    %v4059 = vld [vmem:[%s4053 + $0x28] sm:$0xff]
    %v4060 = vld [vmem:[%s4053 + $0x30] sm:$0xff]
    %v4061 = vld [vmem:[%s4053 + $0x38] sm:$0xff]
    %v4062 = vld [vmem:[%s4053 + $0x40] sm:$0xff]
    %v4063 = vld [vmem:[%s4053 + $0x48] sm:$0xff]
    %v4064 = vld [vmem:[%s4053 + $0x50] sm:$0xff]
    %v4065 = vld [vmem:[%s4053 + $0x58] sm:$0xff]
    %v4066 = vld [vmem:[%s4053 + $0x60] sm:$0xff]
    %v4067 = vld [vmem:[%s4053 + $0x68] sm:$0xff]
    %v4068 = vld [vmem:[%s4053 + $0x70] sm:$0xff]
    %v4069 = vld [vmem:[%s4053 + $0x78] sm:$0xff]
    %v4070 = vld [vmem:[%s4053 + $0x80] sm:$0xff]
    %v4071 = vld [vmem:[%s4053 + $0x88] sm:$0xff]
    %v4072 = vld [vmem:[%s4053 + $0x90] sm:$0xff]
    %v4073 = vld [vmem:[%s4053 + $0x98] sm:$0xff]
    %v4074 = vld [vmem:[%s4053 + $0xa0] sm:$0xff]
    %v4075 = vld [vmem:[%s4053 + $0xa8] sm:$0xff]
    %v4076 = vld [vmem:[%s4053 + $0xb0] sm:$0xff]
    %v4077 = vld [vmem:[%s4053 + $0xb8] sm:$0xff]
    %v4078 = vld [vmem:[%s4053 + $0xc0] sm:$0xff]
    %v4079 = vld [vmem:[%s4053 + $0xc8] sm:$0xff]
    %v4080 = vld [vmem:[%s4053 + $0xd0] sm:$0xff]
    %v4081 = vld [vmem:[%s4053 + $0xd8] sm:$0xff]
    %v4082 = vld [vmem:[%s4053 + $0xe0] sm:$0xff]
    %v4083 = vld [vmem:[%s4053 + $0xe8] sm:$0xff]
    %v4084 = vld [vmem:[%s4053 + $0xf0] sm:$0xff]
    %v4085 = vld [vmem:[%s4053 + $0xf8] sm:$0xff]
    %v4086 = vld [vmem:[%s4053 + $0x100] sm:$0xff]
    %v4087 = vld [vmem:[%s4053 + $0x108] sm:$0xff]
    %v4088 = vld [vmem:[%s4053 + $0x110] sm:$0xff]
    %v4089 = vld [vmem:[%s4053 + $0x118] sm:$0xff]
    %v4090 = vld [vmem:[%s4053 + $0x120] sm:$0xff]
    %v4091 = vld [vmem:[%s4053 + $0x128] sm:$0xff]
    %v4092 = vld [vmem:[%s4053 + $0x130] sm:$0xff]
    %v4093 = vld [vmem:[%s4053 + $0x138] sm:$0xff]
    %v4094 = vld [vmem:[%s4053 + $0x140] sm:$0xff]
    %v4095 = vld [vmem:[%s4053 + $0x148] sm:$0xff]
    %v4096 = vld [vmem:[%s4053 + $0x150] sm:$0xff]
    %v4097 = vld [vmem:[%s4053 + $0x158] sm:$0xff]
    %v4098 = vld [vmem:[%s4053 + $0x160] sm:$0xff]
    %v4099 = vld [vmem:[%s4053 + $0x168] sm:$0xff]
    %v4100 = vld [vmem:[%s4053 + $0x170] sm:$0xff]
    %v4101 = vld [vmem:[%s4053 + $0x178] sm:$0xff]
    %v4102 = vld [vmem:[%s4053 + $0x180] sm:$0xff]
    %v4103 = vld [vmem:[%s4053 + $0x188] sm:$0xff]
    %v4104 = vld [vmem:[%s4053 + $0x190] sm:$0xff]
    %v4105 = vld [vmem:[%s4053 + $0x198] sm:$0xff]
    %v4106 = vld [vmem:[%s4053 + $0x1a0] sm:$0xff]
    %v4107 = vld [vmem:[%s4053 + $0x1a8] sm:$0xff]
    %v4108 = vld [vmem:[%s4053 + $0x1b0] sm:$0xff]
    %v4109 = vld [vmem:[%s4053 + $0x1b8] sm:$0xff]
    %v4110 = vld [vmem:[%s4053 + $0x1c0] sm:$0xff]
    %v4111 = vld [vmem:[%s4053 + $0x1c8] sm:$0xff]
    %v4112 = vld [vmem:[%s4053 + $0x1d0] sm:$0xff]
    %v4113 = vld [vmem:[%s4053 + $0x1d8] sm:$0xff]
    %v4114 = vld [vmem:[%s4053 + $0x1e0] sm:$0xff]
    %v4115 = vld [vmem:[%s4053 + $0x1e8] sm:$0xff]
    %v4116 = vld [vmem:[%s4053 + $0x1f0] sm:$0xff]
    %v4117 = vld [vmem:[%s4053 + $0x1f8] sm:$0xff]
    %s4118 = scalar_lea.vmem [#allocation11], 16
    %v4119 = vld [vmem:[%s4118] sm:$0x3]
    %v4121 = vperm.slane %v4119, 0
    %v4122 = vperm.slane %v4119, 1
    %4125 = vmatpush.msra.mxu0 %v4084
    %4126 = vmatpush.msra.mxu0 %v4082
    %4127 = vmatpush.msra.mxu0 %v4080
    %4128 = vmatpush.msra.mxu0 %v4078
    %4129 = vmatpush.msra.mxu0 %v4076
    %4130 = vmatpush.msra.mxu0 %v4074
    %4131 = vmatpush.msra.mxu0 %v4072
    %4132 = vmatpush.msra.mxu0 %v4070
    %4133 = vmatpush.msra.mxu0 %v4068
    %4134 = vmatpush.msra.mxu0 %v4066
    %4135 = vmatpush.msra.mxu0 %v4064
    %4136 = vmatpush.msra.mxu0 %v4062
    %4137 = vmatpush.msra.mxu0 %v4060
    %4138 = vmatpush.msra.mxu0 %v4058
    %4139 = vmatpush.msra.mxu0 %v4056
    %4140 = vmatpush.msra.mxu0 %v4054
    %4141 = vmatmul.f32.gmra.mxu0 %v4051
    %v4142 = vpop.f32.mrf.mxu0
    %v4143 = vadd.f32 %v4121, %v4142
    %4144 = vdwg.mxu0
    %4145 = vmatpush.msra.mxu0 %v4116
    %4146 = vmatpush.msra.mxu0 %v4114
    %4147 = vmatpush.msra.mxu0 %v4112
    %4148 = vmatpush.msra.mxu0 %v4110
    %4149 = vmatpush.msra.mxu0 %v4108
    %4150 = vmatpush.msra.mxu0 %v4106
    %4151 = vmatpush.msra.mxu0 %v4104
    %4152 = vmatpush.msra.mxu0 %v4102
    %4153 = vmatpush.msra.mxu0 %v4100
    %4154 = vmatpush.msra.mxu0 %v4098
    %4155 = vmatpush.msra.mxu0 %v4096
    %4156 = vmatpush.msra.mxu0 %v4094
    %4157 = vmatpush.msra.mxu0 %v4092
    %4158 = vmatpush.msra.mxu0 %v4090
    %4159 = vmatpush.msra.mxu0 %v4088
    %4160 = vmatpush.msra.mxu0 %v4086
    %4161 = vmatmul.f32.gmra.mxu0 %v4052
    %v4162 = vpop.f32.mrf.mxu0
    %v4163 = vadd.f32 %v4143, %v4162
    %4164 = vdwg.mxu0
    %4165 = vmatpush.msra.mxu0 %v4085
    %4166 = vmatpush.msra.mxu0 %v4083
    %4167 = vmatpush.msra.mxu0 %v4081
    %4168 = vmatpush.msra.mxu0 %v4079
    %4169 = vmatpush.msra.mxu0 %v4077
    %4170 = vmatpush.msra.mxu0 %v4075
    %4171 = vmatpush.msra.mxu0 %v4073
    %4172 = vmatpush.msra.mxu0 %v4071
    %4173 = vmatpush.msra.mxu0 %v4069
    %4174 = vmatpush.msra.mxu0 %v4067
    %4175 = vmatpush.msra.mxu0 %v4065
    %4176 = vmatpush.msra.mxu0 %v4063
    %4177 = vmatpush.msra.mxu0 %v4061
    %4178 = vmatpush.msra.mxu0 %v4059
    %4179 = vmatpush.msra.mxu0 %v4057
    %4180 = vmatpush.msra.mxu0 %v4055
    %4181 = vmatmul.f32.gmra.mxu0 %v4051
    %v4182 = vpop.f32.mrf.mxu0
    %v4183 = vadd.f32 %v4122, %v4182
    %4184 = vdwg.mxu0
    %4185 = vmatpush.msra.mxu0 %v4117
    %4186 = vmatpush.msra.mxu0 %v4115
    %4187 = vmatpush.msra.mxu0 %v4113
    %4188 = vmatpush.msra.mxu0 %v4111
    %4189 = vmatpush.msra.mxu0 %v4109
    %4190 = vmatpush.msra.mxu0 %v4107
    %4191 = vmatpush.msra.mxu0 %v4105
    %4192 = vmatpush.msra.mxu0 %v4103
    %4193 = vmatpush.msra.mxu0 %v4101
    %4194 = vmatpush.msra.mxu0 %v4099
    %4195 = vmatpush.msra.mxu0 %v4097
    %4196 = vmatpush.msra.mxu0 %v4095
    %4197 = vmatpush.msra.mxu0 %v4093
    %4198 = vmatpush.msra.mxu0 %v4091
    %4199 = vmatpush.msra.mxu0 %v4089
    %4200 = vmatpush.msra.mxu0 %v4087
    %4201 = vmatmul.f32.gmra.mxu0 %v4052
    %v4202 = vpop.f32.mrf.mxu0
    %v4203 = vadd.f32 %v4183, %v4202
    %4204 = vdwg.mxu0
    %v4205 = vadd.f32 %v4163, %v3747
    %v4206 = vadd.f32 %v4203, %v3748
    %v4207 = vmax.f32 %v4205, 0.0
    %v4208 = vmax.f32 %v4206, 0.0
    %s4209 = scalar_lea.vmem [#allocation2], 144
    %v4210 = vld [vmem:[%s4209] sm:$0xff]
    %v4211 = vld [vmem:[%s4209 + $0x8] sm:$0xff]
    %s4212 = scalar_lea.vmem [#allocation5], 4608
    %v4213 = vld [vmem:[%s4212] sm:$0xff]
    %v4214 = vld [vmem:[%s4212 + $0x8] sm:$0xff]
    %v4215 = vld [vmem:[%s4212 + $0x10] sm:$0xff]
    %v4216 = vld [vmem:[%s4212 + $0x18] sm:$0xff]
    %v4217 = vld [vmem:[%s4212 + $0x20] sm:$0xff]
    %v4218 = vld [vmem:[%s4212 + $0x28] sm:$0xff]
    %v4219 = vld [vmem:[%s4212 + $0x30] sm:$0xff]
    %v4220 = vld [vmem:[%s4212 + $0x38] sm:$0xff]
    %v4221 = vld [vmem:[%s4212 + $0x40] sm:$0xff]
    %v4222 = vld [vmem:[%s4212 + $0x48] sm:$0xff]
    %v4223 = vld [vmem:[%s4212 + $0x50] sm:$0xff]
    %v4224 = vld [vmem:[%s4212 + $0x58] sm:$0xff]
    %v4225 = vld [vmem:[%s4212 + $0x60] sm:$0xff]
    %v4226 = vld [vmem:[%s4212 + $0x68] sm:$0xff]
    %v4227 = vld [vmem:[%s4212 + $0x70] sm:$0xff]
    %v4228 = vld [vmem:[%s4212 + $0x78] sm:$0xff]
    %v4229 = vld [vmem:[%s4212 + $0x80] sm:$0xff]
    %v4230 = vld [vmem:[%s4212 + $0x88] sm:$0xff]
    %v4231 = vld [vmem:[%s4212 + $0x90] sm:$0xff]
    %v4232 = vld [vmem:[%s4212 + $0x98] sm:$0xff]
    %v4233 = vld [vmem:[%s4212 + $0xa0] sm:$0xff]
    %v4234 = vld [vmem:[%s4212 + $0xa8] sm:$0xff]
    %v4235 = vld [vmem:[%s4212 + $0xb0] sm:$0xff]
    %v4236 = vld [vmem:[%s4212 + $0xb8] sm:$0xff]
    %v4237 = vld [vmem:[%s4212 + $0xc0] sm:$0xff]
    %v4238 = vld [vmem:[%s4212 + $0xc8] sm:$0xff]
    %v4239 = vld [vmem:[%s4212 + $0xd0] sm:$0xff]
    %v4240 = vld [vmem:[%s4212 + $0xd8] sm:$0xff]
    %v4241 = vld [vmem:[%s4212 + $0xe0] sm:$0xff]
    %v4242 = vld [vmem:[%s4212 + $0xe8] sm:$0xff]
    %v4243 = vld [vmem:[%s4212 + $0xf0] sm:$0xff]
    %v4244 = vld [vmem:[%s4212 + $0xf8] sm:$0xff]
    %v4245 = vld [vmem:[%s4212 + $0x100] sm:$0xff]
    %v4246 = vld [vmem:[%s4212 + $0x108] sm:$0xff]
    %v4247 = vld [vmem:[%s4212 + $0x110] sm:$0xff]
    %v4248 = vld [vmem:[%s4212 + $0x118] sm:$0xff]
    %v4249 = vld [vmem:[%s4212 + $0x120] sm:$0xff]
    %v4250 = vld [vmem:[%s4212 + $0x128] sm:$0xff]
    %v4251 = vld [vmem:[%s4212 + $0x130] sm:$0xff]
    %v4252 = vld [vmem:[%s4212 + $0x138] sm:$0xff]
    %v4253 = vld [vmem:[%s4212 + $0x140] sm:$0xff]
    %v4254 = vld [vmem:[%s4212 + $0x148] sm:$0xff]
    %v4255 = vld [vmem:[%s4212 + $0x150] sm:$0xff]
    %v4256 = vld [vmem:[%s4212 + $0x158] sm:$0xff]
    %v4257 = vld [vmem:[%s4212 + $0x160] sm:$0xff]
    %v4258 = vld [vmem:[%s4212 + $0x168] sm:$0xff]
    %v4259 = vld [vmem:[%s4212 + $0x170] sm:$0xff]
    %v4260 = vld [vmem:[%s4212 + $0x178] sm:$0xff]
    %v4261 = vld [vmem:[%s4212 + $0x180] sm:$0xff]
    %v4262 = vld [vmem:[%s4212 + $0x188] sm:$0xff]
    %v4263 = vld [vmem:[%s4212 + $0x190] sm:$0xff]
    %v4264 = vld [vmem:[%s4212 + $0x198] sm:$0xff]
    %v4265 = vld [vmem:[%s4212 + $0x1a0] sm:$0xff]
    %v4266 = vld [vmem:[%s4212 + $0x1a8] sm:$0xff]
    %v4267 = vld [vmem:[%s4212 + $0x1b0] sm:$0xff]
    %v4268 = vld [vmem:[%s4212 + $0x1b8] sm:$0xff]
    %v4269 = vld [vmem:[%s4212 + $0x1c0] sm:$0xff]
    %v4270 = vld [vmem:[%s4212 + $0x1c8] sm:$0xff]
    %v4271 = vld [vmem:[%s4212 + $0x1d0] sm:$0xff]
    %v4272 = vld [vmem:[%s4212 + $0x1d8] sm:$0xff]
    %v4273 = vld [vmem:[%s4212 + $0x1e0] sm:$0xff]
    %v4274 = vld [vmem:[%s4212 + $0x1e8] sm:$0xff]
    %v4275 = vld [vmem:[%s4212 + $0x1f0] sm:$0xff]
    %v4276 = vld [vmem:[%s4212 + $0x1f8] sm:$0xff]
    %s4277 = scalar_lea.vmem [#allocation7], 18
    %v4278 = vld [vmem:[%s4277] sm:$0x3]
    %v4280 = vperm.slane %v4278, 0
    %v4281 = vperm.slane %v4278, 1
    %4284 = vmatpush.msra.mxu0 %v4243
    %4285 = vmatpush.msra.mxu0 %v4241
    %4286 = vmatpush.msra.mxu0 %v4239
    %4287 = vmatpush.msra.mxu0 %v4237
    %4288 = vmatpush.msra.mxu0 %v4235
    %4289 = vmatpush.msra.mxu0 %v4233
    %4290 = vmatpush.msra.mxu0 %v4231
    %4291 = vmatpush.msra.mxu0 %v4229
    %4292 = vmatpush.msra.mxu0 %v4227
    %4293 = vmatpush.msra.mxu0 %v4225
    %4294 = vmatpush.msra.mxu0 %v4223
    %4295 = vmatpush.msra.mxu0 %v4221
    %4296 = vmatpush.msra.mxu0 %v4219
    %4297 = vmatpush.msra.mxu0 %v4217
    %4298 = vmatpush.msra.mxu0 %v4215
    %4299 = vmatpush.msra.mxu0 %v4213
    %4300 = vmatmul.f32.gmra.mxu0 %v4210
    %v4301 = vpop.f32.mrf.mxu0
    %v4302 = vadd.f32 %v4280, %v4301
    %4303 = vdwg.mxu0
    %4304 = vmatpush.msra.mxu0 %v4275
    %4305 = vmatpush.msra.mxu0 %v4273
    %4306 = vmatpush.msra.mxu0 %v4271
    %4307 = vmatpush.msra.mxu0 %v4269
    %4308 = vmatpush.msra.mxu0 %v4267
    %4309 = vmatpush.msra.mxu0 %v4265
    %4310 = vmatpush.msra.mxu0 %v4263
    %4311 = vmatpush.msra.mxu0 %v4261
    %4312 = vmatpush.msra.mxu0 %v4259
    %4313 = vmatpush.msra.mxu0 %v4257
    %4314 = vmatpush.msra.mxu0 %v4255
    %4315 = vmatpush.msra.mxu0 %v4253
    %4316 = vmatpush.msra.mxu0 %v4251
    %4317 = vmatpush.msra.mxu0 %v4249
    %4318 = vmatpush.msra.mxu0 %v4247
    %4319 = vmatpush.msra.mxu0 %v4245
    %4320 = vmatmul.f32.gmra.mxu0 %v4211
    %v4321 = vpop.f32.mrf.mxu0
    %v4322 = vadd.f32 %v4302, %v4321
    %4323 = vdwg.mxu0
    %4324 = vmatpush.msra.mxu0 %v4244
    %4325 = vmatpush.msra.mxu0 %v4242
    %4326 = vmatpush.msra.mxu0 %v4240
    %4327 = vmatpush.msra.mxu0 %v4238
    %4328 = vmatpush.msra.mxu0 %v4236
    %4329 = vmatpush.msra.mxu0 %v4234
    %4330 = vmatpush.msra.mxu0 %v4232
    %4331 = vmatpush.msra.mxu0 %v4230
    %4332 = vmatpush.msra.mxu0 %v4228
    %4333 = vmatpush.msra.mxu0 %v4226
    %4334 = vmatpush.msra.mxu0 %v4224
    %4335 = vmatpush.msra.mxu0 %v4222
    %4336 = vmatpush.msra.mxu0 %v4220
    %4337 = vmatpush.msra.mxu0 %v4218
    %4338 = vmatpush.msra.mxu0 %v4216
    %4339 = vmatpush.msra.mxu0 %v4214
    %4340 = vmatmul.f32.gmra.mxu0 %v4210
    %v4341 = vpop.f32.mrf.mxu0
    %v4342 = vadd.f32 %v4281, %v4341
    %4343 = vdwg.mxu0
    %4344 = vmatpush.msra.mxu0 %v4276
    %4345 = vmatpush.msra.mxu0 %v4274
    %4346 = vmatpush.msra.mxu0 %v4272
    %4347 = vmatpush.msra.mxu0 %v4270
    %4348 = vmatpush.msra.mxu0 %v4268
    %4349 = vmatpush.msra.mxu0 %v4266
    %4350 = vmatpush.msra.mxu0 %v4264
    %4351 = vmatpush.msra.mxu0 %v4262
    %4352 = vmatpush.msra.mxu0 %v4260
    %4353 = vmatpush.msra.mxu0 %v4258
    %4354 = vmatpush.msra.mxu0 %v4256
    %4355 = vmatpush.msra.mxu0 %v4254
    %4356 = vmatpush.msra.mxu0 %v4252
    %4357 = vmatpush.msra.mxu0 %v4250
    %4358 = vmatpush.msra.mxu0 %v4248
    %4359 = vmatpush.msra.mxu0 %v4246
    %4360 = vmatmul.f32.gmra.mxu0 %v4211
    %v4361 = vpop.f32.mrf.mxu0
    %v4362 = vadd.f32 %v4342, %v4361
    %4363 = vdwg.mxu0
    %s4364 = scalar_lea.vmem [#allocation8], 4608
    %v4365 = vld [vmem:[%s4364] sm:$0xff]
    %v4366 = vld [vmem:[%s4364 + $0x8] sm:$0xff]
    %v4367 = vld [vmem:[%s4364 + $0x10] sm:$0xff]
    %v4368 = vld [vmem:[%s4364 + $0x18] sm:$0xff]
    %v4369 = vld [vmem:[%s4364 + $0x20] sm:$0xff]
    %v4370 = vld [vmem:[%s4364 + $0x28] sm:$0xff]
    %v4371 = vld [vmem:[%s4364 + $0x30] sm:$0xff]
    %v4372 = vld [vmem:[%s4364 + $0x38] sm:$0xff]
    %v4373 = vld [vmem:[%s4364 + $0x40] sm:$0xff]
    %v4374 = vld [vmem:[%s4364 + $0x48] sm:$0xff]
    %v4375 = vld [vmem:[%s4364 + $0x50] sm:$0xff]
    %v4376 = vld [vmem:[%s4364 + $0x58] sm:$0xff]
    %v4377 = vld [vmem:[%s4364 + $0x60] sm:$0xff]
    %v4378 = vld [vmem:[%s4364 + $0x68] sm:$0xff]
    %v4379 = vld [vmem:[%s4364 + $0x70] sm:$0xff]
    %v4380 = vld [vmem:[%s4364 + $0x78] sm:$0xff]
    %v4381 = vld [vmem:[%s4364 + $0x80] sm:$0xff]
    %v4382 = vld [vmem:[%s4364 + $0x88] sm:$0xff]
    %v4383 = vld [vmem:[%s4364 + $0x90] sm:$0xff]
    %v4384 = vld [vmem:[%s4364 + $0x98] sm:$0xff]
    %v4385 = vld [vmem:[%s4364 + $0xa0] sm:$0xff]
    %v4386 = vld [vmem:[%s4364 + $0xa8] sm:$0xff]
    %v4387 = vld [vmem:[%s4364 + $0xb0] sm:$0xff]
    %v4388 = vld [vmem:[%s4364 + $0xb8] sm:$0xff]
    %v4389 = vld [vmem:[%s4364 + $0xc0] sm:$0xff]
    %v4390 = vld [vmem:[%s4364 + $0xc8] sm:$0xff]
    %v4391 = vld [vmem:[%s4364 + $0xd0] sm:$0xff]
    %v4392 = vld [vmem:[%s4364 + $0xd8] sm:$0xff]
    %v4393 = vld [vmem:[%s4364 + $0xe0] sm:$0xff]
    %v4394 = vld [vmem:[%s4364 + $0xe8] sm:$0xff]
    %v4395 = vld [vmem:[%s4364 + $0xf0] sm:$0xff]
    %v4396 = vld [vmem:[%s4364 + $0xf8] sm:$0xff]
    %v4397 = vld [vmem:[%s4364 + $0x100] sm:$0xff]
    %v4398 = vld [vmem:[%s4364 + $0x108] sm:$0xff]
    %v4399 = vld [vmem:[%s4364 + $0x110] sm:$0xff]
    %v4400 = vld [vmem:[%s4364 + $0x118] sm:$0xff]
    %v4401 = vld [vmem:[%s4364 + $0x120] sm:$0xff]
    %v4402 = vld [vmem:[%s4364 + $0x128] sm:$0xff]
    %v4403 = vld [vmem:[%s4364 + $0x130] sm:$0xff]
    %v4404 = vld [vmem:[%s4364 + $0x138] sm:$0xff]
    %v4405 = vld [vmem:[%s4364 + $0x140] sm:$0xff]
    %v4406 = vld [vmem:[%s4364 + $0x148] sm:$0xff]
    %v4407 = vld [vmem:[%s4364 + $0x150] sm:$0xff]
    %v4408 = vld [vmem:[%s4364 + $0x158] sm:$0xff]
    %v4409 = vld [vmem:[%s4364 + $0x160] sm:$0xff]
    %v4410 = vld [vmem:[%s4364 + $0x168] sm:$0xff]
    %v4411 = vld [vmem:[%s4364 + $0x170] sm:$0xff]
    %v4412 = vld [vmem:[%s4364 + $0x178] sm:$0xff]
    %v4413 = vld [vmem:[%s4364 + $0x180] sm:$0xff]
    %v4414 = vld [vmem:[%s4364 + $0x188] sm:$0xff]
    %v4415 = vld [vmem:[%s4364 + $0x190] sm:$0xff]
    %v4416 = vld [vmem:[%s4364 + $0x198] sm:$0xff]
    %v4417 = vld [vmem:[%s4364 + $0x1a0] sm:$0xff]
    %v4418 = vld [vmem:[%s4364 + $0x1a8] sm:$0xff]
    %v4419 = vld [vmem:[%s4364 + $0x1b0] sm:$0xff]
    %v4420 = vld [vmem:[%s4364 + $0x1b8] sm:$0xff]
    %v4421 = vld [vmem:[%s4364 + $0x1c0] sm:$0xff]
    %v4422 = vld [vmem:[%s4364 + $0x1c8] sm:$0xff]
    %v4423 = vld [vmem:[%s4364 + $0x1d0] sm:$0xff]
    %v4424 = vld [vmem:[%s4364 + $0x1d8] sm:$0xff]
    %v4425 = vld [vmem:[%s4364 + $0x1e0] sm:$0xff]
    %v4426 = vld [vmem:[%s4364 + $0x1e8] sm:$0xff]
    %v4427 = vld [vmem:[%s4364 + $0x1f0] sm:$0xff]
    %v4428 = vld [vmem:[%s4364 + $0x1f8] sm:$0xff]
    %4429 = vmatpush.msra.mxu0 %v4395
    %4430 = vmatpush.msra.mxu0 %v4393
    %4431 = vmatpush.msra.mxu0 %v4391
    %4432 = vmatpush.msra.mxu0 %v4389
    %4433 = vmatpush.msra.mxu0 %v4387
    %4434 = vmatpush.msra.mxu0 %v4385
    %4435 = vmatpush.msra.mxu0 %v4383
    %4436 = vmatpush.msra.mxu0 %v4381
    %4437 = vmatpush.msra.mxu0 %v4379
    %4438 = vmatpush.msra.mxu0 %v4377
    %4439 = vmatpush.msra.mxu0 %v4375
    %4440 = vmatpush.msra.mxu0 %v4373
    %4441 = vmatpush.msra.mxu0 %v4371
    %4442 = vmatpush.msra.mxu0 %v4369
    %4443 = vmatpush.msra.mxu0 %v4367
    %4444 = vmatpush.msra.mxu0 %v4365
    %4445 = vmatmul.f32.gmra.mxu0 %v4207
    %v4446 = vpop.f32.mrf.mxu0
    %v4447 = vadd.f32 0.0, %v4446
    %4448 = vdwg.mxu0
    %4449 = vmatpush.msra.mxu0 %v4427
    %4450 = vmatpush.msra.mxu0 %v4425
    %4451 = vmatpush.msra.mxu0 %v4423
    %4452 = vmatpush.msra.mxu0 %v4421
    %4453 = vmatpush.msra.mxu0 %v4419
    %4454 = vmatpush.msra.mxu0 %v4417
    %4455 = vmatpush.msra.mxu0 %v4415
    %4456 = vmatpush.msra.mxu0 %v4413
    %4457 = vmatpush.msra.mxu0 %v4411
    %4458 = vmatpush.msra.mxu0 %v4409
    %4459 = vmatpush.msra.mxu0 %v4407
    %4460 = vmatpush.msra.mxu0 %v4405
    %4461 = vmatpush.msra.mxu0 %v4403
    %4462 = vmatpush.msra.mxu0 %v4401
    %4463 = vmatpush.msra.mxu0 %v4399
    %4464 = vmatpush.msra.mxu0 %v4397
    %4465 = vmatmul.f32.gmra.mxu0 %v4208
    %v4466 = vpop.f32.mrf.mxu0
    %v4467 = vadd.f32 %v4447, %v4466
    %4468 = vdwg.mxu0
    %4469 = vmatpush.msra.mxu0 %v4396
    %4470 = vmatpush.msra.mxu0 %v4394
    %4471 = vmatpush.msra.mxu0 %v4392
    %4472 = vmatpush.msra.mxu0 %v4390
    %4473 = vmatpush.msra.mxu0 %v4388
    %4474 = vmatpush.msra.mxu0 %v4386
    %4475 = vmatpush.msra.mxu0 %v4384
    %4476 = vmatpush.msra.mxu0 %v4382
    %4477 = vmatpush.msra.mxu0 %v4380
    %4478 = vmatpush.msra.mxu0 %v4378
    %4479 = vmatpush.msra.mxu0 %v4376
    %4480 = vmatpush.msra.mxu0 %v4374
    %4481 = vmatpush.msra.mxu0 %v4372
    %4482 = vmatpush.msra.mxu0 %v4370
    %4483 = vmatpush.msra.mxu0 %v4368
    %4484 = vmatpush.msra.mxu0 %v4366
    %4485 = vmatmul.f32.gmra.mxu0 %v4207
    %v4486 = vpop.f32.mrf.mxu0
    %v4487 = vadd.f32 0.0, %v4486
    %4488 = vdwg.mxu0
    %4489 = vmatpush.msra.mxu0 %v4428
    %4490 = vmatpush.msra.mxu0 %v4426
    %4491 = vmatpush.msra.mxu0 %v4424
    %4492 = vmatpush.msra.mxu0 %v4422
    %4493 = vmatpush.msra.mxu0 %v4420
    %4494 = vmatpush.msra.mxu0 %v4418
    %4495 = vmatpush.msra.mxu0 %v4416
    %4496 = vmatpush.msra.mxu0 %v4414
    %4497 = vmatpush.msra.mxu0 %v4412
    %4498 = vmatpush.msra.mxu0 %v4410
    %4499 = vmatpush.msra.mxu0 %v4408
    %4500 = vmatpush.msra.mxu0 %v4406
    %4501 = vmatpush.msra.mxu0 %v4404
    %4502 = vmatpush.msra.mxu0 %v4402
    %4503 = vmatpush.msra.mxu0 %v4400
    %4504 = vmatpush.msra.mxu0 %v4398
    %4505 = vmatmul.f32.gmra.mxu0 %v4208
    %v4506 = vpop.f32.mrf.mxu0
    %v4507 = vadd.f32 %v4487, %v4506
    %4508 = vdwg.mxu0
    %v4509 = vadd.f32 %v4322, %v4467
    %v4510 = vadd.f32 %v4362, %v4507
    %v4511 = vmax.f32 %v4509, 0.0
    %v4512 = vmax.f32 %v4510, 0.0
    %s4513 = scalar_lea.vmem [#allocation10], 4608
    %v4514 = vld [vmem:[%s4513] sm:$0xff]
    %v4515 = vld [vmem:[%s4513 + $0x8] sm:$0xff]
    %v4516 = vld [vmem:[%s4513 + $0x10] sm:$0xff]
    %v4517 = vld [vmem:[%s4513 + $0x18] sm:$0xff]
    %v4518 = vld [vmem:[%s4513 + $0x20] sm:$0xff]
    %v4519 = vld [vmem:[%s4513 + $0x28] sm:$0xff]
    %v4520 = vld [vmem:[%s4513 + $0x30] sm:$0xff]
    %v4521 = vld [vmem:[%s4513 + $0x38] sm:$0xff]
    %v4522 = vld [vmem:[%s4513 + $0x40] sm:$0xff]
    %v4523 = vld [vmem:[%s4513 + $0x48] sm:$0xff]
    %v4524 = vld [vmem:[%s4513 + $0x50] sm:$0xff]
    %v4525 = vld [vmem:[%s4513 + $0x58] sm:$0xff]
    %v4526 = vld [vmem:[%s4513 + $0x60] sm:$0xff]
    %v4527 = vld [vmem:[%s4513 + $0x68] sm:$0xff]
    %v4528 = vld [vmem:[%s4513 + $0x70] sm:$0xff]
    %v4529 = vld [vmem:[%s4513 + $0x78] sm:$0xff]
    %v4530 = vld [vmem:[%s4513 + $0x80] sm:$0xff]
    %v4531 = vld [vmem:[%s4513 + $0x88] sm:$0xff]
    %v4532 = vld [vmem:[%s4513 + $0x90] sm:$0xff]
    %v4533 = vld [vmem:[%s4513 + $0x98] sm:$0xff]
    %v4534 = vld [vmem:[%s4513 + $0xa0] sm:$0xff]
    %v4535 = vld [vmem:[%s4513 + $0xa8] sm:$0xff]
    %v4536 = vld [vmem:[%s4513 + $0xb0] sm:$0xff]
    %v4537 = vld [vmem:[%s4513 + $0xb8] sm:$0xff]
    %v4538 = vld [vmem:[%s4513 + $0xc0] sm:$0xff]
    %v4539 = vld [vmem:[%s4513 + $0xc8] sm:$0xff]
    %v4540 = vld [vmem:[%s4513 + $0xd0] sm:$0xff]
    %v4541 = vld [vmem:[%s4513 + $0xd8] sm:$0xff]
    %v4542 = vld [vmem:[%s4513 + $0xe0] sm:$0xff]
    %v4543 = vld [vmem:[%s4513 + $0xe8] sm:$0xff]
    %v4544 = vld [vmem:[%s4513 + $0xf0] sm:$0xff]
    %v4545 = vld [vmem:[%s4513 + $0xf8] sm:$0xff]
    %v4546 = vld [vmem:[%s4513 + $0x100] sm:$0xff]
    %v4547 = vld [vmem:[%s4513 + $0x108] sm:$0xff]
    %v4548 = vld [vmem:[%s4513 + $0x110] sm:$0xff]
    %v4549 = vld [vmem:[%s4513 + $0x118] sm:$0xff]
    %v4550 = vld [vmem:[%s4513 + $0x120] sm:$0xff]
    %v4551 = vld [vmem:[%s4513 + $0x128] sm:$0xff]
    %v4552 = vld [vmem:[%s4513 + $0x130] sm:$0xff]
    %v4553 = vld [vmem:[%s4513 + $0x138] sm:$0xff]
    %v4554 = vld [vmem:[%s4513 + $0x140] sm:$0xff]
    %v4555 = vld [vmem:[%s4513 + $0x148] sm:$0xff]
    %v4556 = vld [vmem:[%s4513 + $0x150] sm:$0xff]
    %v4557 = vld [vmem:[%s4513 + $0x158] sm:$0xff]
    %v4558 = vld [vmem:[%s4513 + $0x160] sm:$0xff]
    %v4559 = vld [vmem:[%s4513 + $0x168] sm:$0xff]
    %v4560 = vld [vmem:[%s4513 + $0x170] sm:$0xff]
    %v4561 = vld [vmem:[%s4513 + $0x178] sm:$0xff]
    %v4562 = vld [vmem:[%s4513 + $0x180] sm:$0xff]
    %v4563 = vld [vmem:[%s4513 + $0x188] sm:$0xff]
    %v4564 = vld [vmem:[%s4513 + $0x190] sm:$0xff]
    %v4565 = vld [vmem:[%s4513 + $0x198] sm:$0xff]
    %v4566 = vld [vmem:[%s4513 + $0x1a0] sm:$0xff]
    %v4567 = vld [vmem:[%s4513 + $0x1a8] sm:$0xff]
    %v4568 = vld [vmem:[%s4513 + $0x1b0] sm:$0xff]
    %v4569 = vld [vmem:[%s4513 + $0x1b8] sm:$0xff]
    %v4570 = vld [vmem:[%s4513 + $0x1c0] sm:$0xff]
    %v4571 = vld [vmem:[%s4513 + $0x1c8] sm:$0xff]
    %v4572 = vld [vmem:[%s4513 + $0x1d0] sm:$0xff]
    %v4573 = vld [vmem:[%s4513 + $0x1d8] sm:$0xff]
    %v4574 = vld [vmem:[%s4513 + $0x1e0] sm:$0xff]
    %v4575 = vld [vmem:[%s4513 + $0x1e8] sm:$0xff]
    %v4576 = vld [vmem:[%s4513 + $0x1f0] sm:$0xff]
    %v4577 = vld [vmem:[%s4513 + $0x1f8] sm:$0xff]
    %s4578 = scalar_lea.vmem [#allocation11], 18
    %v4579 = vld [vmem:[%s4578] sm:$0x3]
    %v4581 = vperm.slane %v4579, 0
    %v4582 = vperm.slane %v4579, 1
    %4585 = vmatpush.msra.mxu0 %v4544
    %4586 = vmatpush.msra.mxu0 %v4542
    %4587 = vmatpush.msra.mxu0 %v4540
    %4588 = vmatpush.msra.mxu0 %v4538
    %4589 = vmatpush.msra.mxu0 %v4536
    %4590 = vmatpush.msra.mxu0 %v4534
    %4591 = vmatpush.msra.mxu0 %v4532
    %4592 = vmatpush.msra.mxu0 %v4530
    %4593 = vmatpush.msra.mxu0 %v4528
    %4594 = vmatpush.msra.mxu0 %v4526
    %4595 = vmatpush.msra.mxu0 %v4524
    %4596 = vmatpush.msra.mxu0 %v4522
    %4597 = vmatpush.msra.mxu0 %v4520
    %4598 = vmatpush.msra.mxu0 %v4518
    %4599 = vmatpush.msra.mxu0 %v4516
    %4600 = vmatpush.msra.mxu0 %v4514
    %4601 = vmatmul.f32.gmra.mxu0 %v4511
    %v4602 = vpop.f32.mrf.mxu0
    %v4603 = vadd.f32 %v4581, %v4602
    %4604 = vdwg.mxu0
    %4605 = vmatpush.msra.mxu0 %v4576
    %4606 = vmatpush.msra.mxu0 %v4574
    %4607 = vmatpush.msra.mxu0 %v4572
    %4608 = vmatpush.msra.mxu0 %v4570
    %4609 = vmatpush.msra.mxu0 %v4568
    %4610 = vmatpush.msra.mxu0 %v4566
    %4611 = vmatpush.msra.mxu0 %v4564
    %4612 = vmatpush.msra.mxu0 %v4562
    %4613 = vmatpush.msra.mxu0 %v4560
    %4614 = vmatpush.msra.mxu0 %v4558
    %4615 = vmatpush.msra.mxu0 %v4556
    %4616 = vmatpush.msra.mxu0 %v4554
    %4617 = vmatpush.msra.mxu0 %v4552
    %4618 = vmatpush.msra.mxu0 %v4550
    %4619 = vmatpush.msra.mxu0 %v4548
    %4620 = vmatpush.msra.mxu0 %v4546
    %4621 = vmatmul.f32.gmra.mxu0 %v4512
    %v4622 = vpop.f32.mrf.mxu0
    %v4623 = vadd.f32 %v4603, %v4622
    %4624 = vdwg.mxu0
    %4625 = vmatpush.msra.mxu0 %v4545
    %4626 = vmatpush.msra.mxu0 %v4543
    %4627 = vmatpush.msra.mxu0 %v4541
    %4628 = vmatpush.msra.mxu0 %v4539
    %4629 = vmatpush.msra.mxu0 %v4537
    %4630 = vmatpush.msra.mxu0 %v4535
    %4631 = vmatpush.msra.mxu0 %v4533
    %4632 = vmatpush.msra.mxu0 %v4531
    %4633 = vmatpush.msra.mxu0 %v4529
    %4634 = vmatpush.msra.mxu0 %v4527
    %4635 = vmatpush.msra.mxu0 %v4525
    %4636 = vmatpush.msra.mxu0 %v4523
    %4637 = vmatpush.msra.mxu0 %v4521
    %4638 = vmatpush.msra.mxu0 %v4519
    %4639 = vmatpush.msra.mxu0 %v4517
    %4640 = vmatpush.msra.mxu0 %v4515
    %4641 = vmatmul.f32.gmra.mxu0 %v4511
    %v4642 = vpop.f32.mrf.mxu0
    %v4643 = vadd.f32 %v4582, %v4642
    %4644 = vdwg.mxu0
    %4645 = vmatpush.msra.mxu0 %v4577
    %4646 = vmatpush.msra.mxu0 %v4575
    %4647 = vmatpush.msra.mxu0 %v4573
    %4648 = vmatpush.msra.mxu0 %v4571
    %4649 = vmatpush.msra.mxu0 %v4569
    %4650 = vmatpush.msra.mxu0 %v4567
    %4651 = vmatpush.msra.mxu0 %v4565
    %4652 = vmatpush.msra.mxu0 %v4563
    %4653 = vmatpush.msra.mxu0 %v4561
    %4654 = vmatpush.msra.mxu0 %v4559
    %4655 = vmatpush.msra.mxu0 %v4557
    %4656 = vmatpush.msra.mxu0 %v4555
    %4657 = vmatpush.msra.mxu0 %v4553
    %4658 = vmatpush.msra.mxu0 %v4551
    %4659 = vmatpush.msra.mxu0 %v4549
    %4660 = vmatpush.msra.mxu0 %v4547
    %4661 = vmatmul.f32.gmra.mxu0 %v4512
    %v4662 = vpop.f32.mrf.mxu0
    %v4663 = vadd.f32 %v4643, %v4662
    %4664 = vdwg.mxu0
    %v4665 = vadd.f32 %v4623, %v4207
    %v4666 = vadd.f32 %v4663, %v4208
    %v4667 = vmax.f32 %v4665, 0.0
    %v4668 = vmax.f32 %v4666, 0.0
    %v4669 = vld [vmem:[#allocation13] sm:$0xff]
    %v4670 = vld [vmem:[#allocation13 + $0x8] sm:$0xff]
    %v4671 = vld [vmem:[#allocation13 + $0x10] sm:$0xff]
    %v4672 = vld [vmem:[#allocation13 + $0x18] sm:$0xff]
    %v4673 = vld [vmem:[#allocation13 + $0x20] sm:$0xff]
    %v4674 = vld [vmem:[#allocation13 + $0x28] sm:$0xff]
    %v4675 = vld [vmem:[#allocation13 + $0x30] sm:$0xff]
    %v4676 = vld [vmem:[#allocation13 + $0x38] sm:$0xff]
    %v4677 = vld [vmem:[#allocation13 + $0x40] sm:$0xff]
    %v4678 = vld [vmem:[#allocation13 + $0x48] sm:$0xff]
    %v4679 = vld [vmem:[#allocation13 + $0x50] sm:$0xff]
    %v4680 = vld [vmem:[#allocation13 + $0x58] sm:$0xff]
    %v4681 = vld [vmem:[#allocation13 + $0x60] sm:$0xff]
    %v4682 = vld [vmem:[#allocation13 + $0x68] sm:$0xff]
    %v4683 = vld [vmem:[#allocation13 + $0x70] sm:$0xff]
    %v4684 = vld [vmem:[#allocation13 + $0x78] sm:$0xff]
    %v4685 = vld [vmem:[#allocation13 + $0x80] sm:$0xff]
    %v4686 = vld [vmem:[#allocation13 + $0x88] sm:$0xff]
    %v4687 = vld [vmem:[#allocation13 + $0x90] sm:$0xff]
    %v4688 = vld [vmem:[#allocation13 + $0x98] sm:$0xff]
    %v4689 = vld [vmem:[#allocation13 + $0xa0] sm:$0xff]
    %v4690 = vld [vmem:[#allocation13 + $0xa8] sm:$0xff]
    %v4691 = vld [vmem:[#allocation13 + $0xb0] sm:$0xff]
    %v4692 = vld [vmem:[#allocation13 + $0xb8] sm:$0xff]
    %v4693 = vld [vmem:[#allocation13 + $0xc0] sm:$0xff]
    %v4694 = vld [vmem:[#allocation13 + $0xc8] sm:$0xff]
    %v4695 = vld [vmem:[#allocation13 + $0xd0] sm:$0xff]
    %v4696 = vld [vmem:[#allocation13 + $0xd8] sm:$0xff]
    %v4697 = vld [vmem:[#allocation13 + $0xe0] sm:$0xff]
    %v4698 = vld [vmem:[#allocation13 + $0xe8] sm:$0xff]
    %v4699 = vld [vmem:[#allocation13 + $0xf0] sm:$0xff]
    %v4700 = vld [vmem:[#allocation13 + $0xf8] sm:$0xff]
    %v4701 = vld [vmem:[#allocation13 + $0x100] sm:$0xff]
    %v4702 = vld [vmem:[#allocation13 + $0x108] sm:$0xff]
    %v4703 = vld [vmem:[#allocation13 + $0x110] sm:$0xff]
    %v4704 = vld [vmem:[#allocation13 + $0x118] sm:$0xff]
    %v4705 = vld [vmem:[#allocation13 + $0x120] sm:$0xff]
    %v4706 = vld [vmem:[#allocation13 + $0x128] sm:$0xff]
    %v4707 = vld [vmem:[#allocation13 + $0x130] sm:$0xff]
    %v4708 = vld [vmem:[#allocation13 + $0x138] sm:$0xff]
    %v4709 = vld [vmem:[#allocation13 + $0x140] sm:$0xff]
    %v4710 = vld [vmem:[#allocation13 + $0x148] sm:$0xff]
    %v4711 = vld [vmem:[#allocation13 + $0x150] sm:$0xff]
    %v4712 = vld [vmem:[#allocation13 + $0x158] sm:$0xff]
    %v4713 = vld [vmem:[#allocation13 + $0x160] sm:$0xff]
    %v4714 = vld [vmem:[#allocation13 + $0x168] sm:$0xff]
    %v4715 = vld [vmem:[#allocation13 + $0x170] sm:$0xff]
    %v4716 = vld [vmem:[#allocation13 + $0x178] sm:$0xff]
    %v4717 = vld [vmem:[#allocation13 + $0x180] sm:$0xff]
    %v4718 = vld [vmem:[#allocation13 + $0x188] sm:$0xff]
    %v4719 = vld [vmem:[#allocation13 + $0x190] sm:$0xff]
    %v4720 = vld [vmem:[#allocation13 + $0x198] sm:$0xff]
    %v4721 = vld [vmem:[#allocation13 + $0x1a0] sm:$0xff]
    %v4722 = vld [vmem:[#allocation13 + $0x1a8] sm:$0xff]
    %v4723 = vld [vmem:[#allocation13 + $0x1b0] sm:$0xff]
    %v4724 = vld [vmem:[#allocation13 + $0x1b8] sm:$0xff]
    %v4725 = vld [vmem:[#allocation13 + $0x1c0] sm:$0xff]
    %v4726 = vld [vmem:[#allocation13 + $0x1c8] sm:$0xff]
    %v4727 = vld [vmem:[#allocation13 + $0x1d0] sm:$0xff]
    %v4728 = vld [vmem:[#allocation13 + $0x1d8] sm:$0xff]
    %v4729 = vld [vmem:[#allocation13 + $0x1e0] sm:$0xff]
    %v4730 = vld [vmem:[#allocation13 + $0x1e8] sm:$0xff]
    %v4731 = vld [vmem:[#allocation13 + $0x1f0] sm:$0xff]
    %v4732 = vld [vmem:[#allocation13 + $0x1f8] sm:$0xff]
    %v4733 = vld [vmem:[#allocation14] sm:$0x3]
    %v4735 = vperm.slane %v4733, 0
    %v4736 = vperm.slane %v4733, 1
    %4739 = vmatpush.msra.mxu0 %v4699
    %4740 = vmatpush.msra.mxu0 %v4697
    %4741 = vmatpush.msra.mxu0 %v4695
    %4742 = vmatpush.msra.mxu0 %v4693
    %4743 = vmatpush.msra.mxu0 %v4691
    %4744 = vmatpush.msra.mxu0 %v4689
    %4745 = vmatpush.msra.mxu0 %v4687
    %4746 = vmatpush.msra.mxu0 %v4685
    %4747 = vmatpush.msra.mxu0 %v4683
    %4748 = vmatpush.msra.mxu0 %v4681
    %4749 = vmatpush.msra.mxu0 %v4679
    %4750 = vmatpush.msra.mxu0 %v4677
    %4751 = vmatpush.msra.mxu0 %v4675
    %4752 = vmatpush.msra.mxu0 %v4673
    %4753 = vmatpush.msra.mxu0 %v4671
    %4754 = vmatpush.msra.mxu0 %v4669
    %4755 = vmatmul.f32.gmra.mxu0 %v4667
    %v4756 = vpop.f32.mrf.mxu0
    %v4757 = vadd.f32 %v4735, %v4756
    %4758 = vdwg.mxu0
    %4759 = vmatpush.msra.mxu0 %v4731
    %4760 = vmatpush.msra.mxu0 %v4729
    %4761 = vmatpush.msra.mxu0 %v4727
    %4762 = vmatpush.msra.mxu0 %v4725
    %4763 = vmatpush.msra.mxu0 %v4723
    %4764 = vmatpush.msra.mxu0 %v4721
    %4765 = vmatpush.msra.mxu0 %v4719
    %4766 = vmatpush.msra.mxu0 %v4717
    %4767 = vmatpush.msra.mxu0 %v4715
    %4768 = vmatpush.msra.mxu0 %v4713
    %4769 = vmatpush.msra.mxu0 %v4711
    %4770 = vmatpush.msra.mxu0 %v4709
    %4771 = vmatpush.msra.mxu0 %v4707
    %4772 = vmatpush.msra.mxu0 %v4705
    %4773 = vmatpush.msra.mxu0 %v4703
    %4774 = vmatpush.msra.mxu0 %v4701
    %4775 = vmatmul.f32.gmra.mxu0 %v4668
    %v4776 = vpop.f32.mrf.mxu0
    %v4777 = vadd.f32 %v4757, %v4776
    %4778 = vdwg.mxu0
    %4779 = vmatpush.msra.mxu0 %v4700
    %4780 = vmatpush.msra.mxu0 %v4698
    %4781 = vmatpush.msra.mxu0 %v4696
    %4782 = vmatpush.msra.mxu0 %v4694
    %4783 = vmatpush.msra.mxu0 %v4692
    %4784 = vmatpush.msra.mxu0 %v4690
    %4785 = vmatpush.msra.mxu0 %v4688
    %4786 = vmatpush.msra.mxu0 %v4686
    %4787 = vmatpush.msra.mxu0 %v4684
    %4788 = vmatpush.msra.mxu0 %v4682
    %4789 = vmatpush.msra.mxu0 %v4680
    %4790 = vmatpush.msra.mxu0 %v4678
    %4791 = vmatpush.msra.mxu0 %v4676
    %4792 = vmatpush.msra.mxu0 %v4674
    %4793 = vmatpush.msra.mxu0 %v4672
    %4794 = vmatpush.msra.mxu0 %v4670
    %4795 = vmatmul.f32.gmra.mxu0 %v4667
    %v4796 = vpop.f32.mrf.mxu0
    %v4797 = vadd.f32 %v4736, %v4796
    %4798 = vdwg.mxu0
    %4799 = vmatpush.msra.mxu0 %v4732
    %4800 = vmatpush.msra.mxu0 %v4730
    %4801 = vmatpush.msra.mxu0 %v4728
    %4802 = vmatpush.msra.mxu0 %v4726
    %4803 = vmatpush.msra.mxu0 %v4724
    %4804 = vmatpush.msra.mxu0 %v4722
    %4805 = vmatpush.msra.mxu0 %v4720
    %4806 = vmatpush.msra.mxu0 %v4718
    %4807 = vmatpush.msra.mxu0 %v4716
    %4808 = vmatpush.msra.mxu0 %v4714
    %4809 = vmatpush.msra.mxu0 %v4712
    %4810 = vmatpush.msra.mxu0 %v4710
    %4811 = vmatpush.msra.mxu0 %v4708
    %4812 = vmatpush.msra.mxu0 %v4706
    %4813 = vmatpush.msra.mxu0 %v4704
    %4814 = vmatpush.msra.mxu0 %v4702
    %4815 = vmatmul.f32.gmra.mxu0 %v4668
    %v4816 = vpop.f32.mrf.mxu0
    %v4817 = vadd.f32 %v4797, %v4816
    %4818 = vdwg.mxu0
    %v4819 = vmax.f32 %v4777, 0.0
    %v4820 = vmax.f32 %v4817, 0.0
    %v4821 = vld [vmem:[#allocation16] sm:$0xff]
    %v4822 = vld [vmem:[#allocation16 + $0x8] sm:$0xff]
    %v4823 = vld [vmem:[#allocation16 + $0x10] sm:$0xff]
    %v4824 = vld [vmem:[#allocation16 + $0x18] sm:$0xff]
    %v4825 = vld [vmem:[#allocation16 + $0x20] sm:$0xff]
    %v4826 = vld [vmem:[#allocation16 + $0x28] sm:$0xff]
    %v4827 = vld [vmem:[#allocation16 + $0x30] sm:$0xff]
    %v4828 = vld [vmem:[#allocation16 + $0x38] sm:$0xff]
    %v4829 = vld [vmem:[#allocation16 + $0x40] sm:$0xff]
    %v4830 = vld [vmem:[#allocation16 + $0x48] sm:$0xff]
    %v4831 = vld [vmem:[#allocation16 + $0x50] sm:$0xff]
    %v4832 = vld [vmem:[#allocation16 + $0x58] sm:$0xff]
    %v4833 = vld [vmem:[#allocation16 + $0x60] sm:$0xff]
    %v4834 = vld [vmem:[#allocation16 + $0x68] sm:$0xff]
    %v4835 = vld [vmem:[#allocation16 + $0x70] sm:$0xff]
    %v4836 = vld [vmem:[#allocation16 + $0x78] sm:$0xff]
    %v4837 = vld [vmem:[#allocation16 + $0x80] sm:$0xff]
    %v4838 = vld [vmem:[#allocation16 + $0x88] sm:$0xff]
    %v4839 = vld [vmem:[#allocation16 + $0x90] sm:$0xff]
    %v4840 = vld [vmem:[#allocation16 + $0x98] sm:$0xff]
    %v4841 = vld [vmem:[#allocation16 + $0xa0] sm:$0xff]
    %v4842 = vld [vmem:[#allocation16 + $0xa8] sm:$0xff]
    %v4843 = vld [vmem:[#allocation16 + $0xb0] sm:$0xff]
    %v4844 = vld [vmem:[#allocation16 + $0xb8] sm:$0xff]
    %v4845 = vld [vmem:[#allocation16 + $0xc0] sm:$0xff]
    %v4846 = vld [vmem:[#allocation16 + $0xc8] sm:$0xff]
    %v4847 = vld [vmem:[#allocation16 + $0xd0] sm:$0xff]
    %v4848 = vld [vmem:[#allocation16 + $0xd8] sm:$0xff]
    %v4849 = vld [vmem:[#allocation16 + $0xe0] sm:$0xff]
    %v4850 = vld [vmem:[#allocation16 + $0xe8] sm:$0xff]
    %v4851 = vld [vmem:[#allocation16 + $0xf0] sm:$0xff]
    %v4852 = vld [vmem:[#allocation16 + $0xf8] sm:$0xff]
    %v4853 = vld [vmem:[#allocation16 + $0x100] sm:$0xff]
    %v4854 = vld [vmem:[#allocation16 + $0x108] sm:$0xff]
    %v4855 = vld [vmem:[#allocation16 + $0x110] sm:$0xff]
    %v4856 = vld [vmem:[#allocation16 + $0x118] sm:$0xff]
    %v4857 = vld [vmem:[#allocation16 + $0x120] sm:$0xff]
    %v4858 = vld [vmem:[#allocation16 + $0x128] sm:$0xff]
    %v4859 = vld [vmem:[#allocation16 + $0x130] sm:$0xff]
    %v4860 = vld [vmem:[#allocation16 + $0x138] sm:$0xff]
    %v4861 = vld [vmem:[#allocation16 + $0x140] sm:$0xff]
    %v4862 = vld [vmem:[#allocation16 + $0x148] sm:$0xff]
    %v4863 = vld [vmem:[#allocation16 + $0x150] sm:$0xff]
    %v4864 = vld [vmem:[#allocation16 + $0x158] sm:$0xff]
    %v4865 = vld [vmem:[#allocation16 + $0x160] sm:$0xff]
    %v4866 = vld [vmem:[#allocation16 + $0x168] sm:$0xff]
    %v4867 = vld [vmem:[#allocation16 + $0x170] sm:$0xff]
    %v4868 = vld [vmem:[#allocation16 + $0x178] sm:$0xff]
    %v4869 = vld [vmem:[#allocation16 + $0x180] sm:$0xff]
    %v4870 = vld [vmem:[#allocation16 + $0x188] sm:$0xff]
    %v4871 = vld [vmem:[#allocation16 + $0x190] sm:$0xff]
    %v4872 = vld [vmem:[#allocation16 + $0x198] sm:$0xff]
    %v4873 = vld [vmem:[#allocation16 + $0x1a0] sm:$0xff]
    %v4874 = vld [vmem:[#allocation16 + $0x1a8] sm:$0xff]
    %v4875 = vld [vmem:[#allocation16 + $0x1b0] sm:$0xff]
    %v4876 = vld [vmem:[#allocation16 + $0x1b8] sm:$0xff]
    %v4877 = vld [vmem:[#allocation16 + $0x1c0] sm:$0xff]
    %v4878 = vld [vmem:[#allocation16 + $0x1c8] sm:$0xff]
    %v4879 = vld [vmem:[#allocation16 + $0x1d0] sm:$0xff]
    %v4880 = vld [vmem:[#allocation16 + $0x1d8] sm:$0xff]
    %v4881 = vld [vmem:[#allocation16 + $0x1e0] sm:$0xff]
    %v4882 = vld [vmem:[#allocation16 + $0x1e8] sm:$0xff]
    %v4883 = vld [vmem:[#allocation16 + $0x1f0] sm:$0xff]
    %v4884 = vld [vmem:[#allocation16 + $0x1f8] sm:$0xff]
    %v4885 = vld [vmem:[#allocation17] sm:$0x3]
    %v4887 = vperm.slane %v4885, 0
    %v4888 = vperm.slane %v4885, 1
    %4891 = vmatpush.msra.mxu0 %v4851
    %4892 = vmatpush.msra.mxu0 %v4849
    %4893 = vmatpush.msra.mxu0 %v4847
    %4894 = vmatpush.msra.mxu0 %v4845
    %4895 = vmatpush.msra.mxu0 %v4843
    %4896 = vmatpush.msra.mxu0 %v4841
    %4897 = vmatpush.msra.mxu0 %v4839
    %4898 = vmatpush.msra.mxu0 %v4837
    %4899 = vmatpush.msra.mxu0 %v4835
    %4900 = vmatpush.msra.mxu0 %v4833
    %4901 = vmatpush.msra.mxu0 %v4831
    %4902 = vmatpush.msra.mxu0 %v4829
    %4903 = vmatpush.msra.mxu0 %v4827
    %4904 = vmatpush.msra.mxu0 %v4825
    %4905 = vmatpush.msra.mxu0 %v4823
    %4906 = vmatpush.msra.mxu0 %v4821
    %4907 = vmatmul.f32.gmra.mxu0 %v4819
    %v4908 = vpop.f32.mrf.mxu0
    %v4909 = vadd.f32 %v4887, %v4908
    %4910 = vdwg.mxu0
    %4911 = vmatpush.msra.mxu0 %v4883
    %4912 = vmatpush.msra.mxu0 %v4881
    %4913 = vmatpush.msra.mxu0 %v4879
    %4914 = vmatpush.msra.mxu0 %v4877
    %4915 = vmatpush.msra.mxu0 %v4875
    %4916 = vmatpush.msra.mxu0 %v4873
    %4917 = vmatpush.msra.mxu0 %v4871
    %4918 = vmatpush.msra.mxu0 %v4869
    %4919 = vmatpush.msra.mxu0 %v4867
    %4920 = vmatpush.msra.mxu0 %v4865
    %4921 = vmatpush.msra.mxu0 %v4863
    %4922 = vmatpush.msra.mxu0 %v4861
    %4923 = vmatpush.msra.mxu0 %v4859
    %4924 = vmatpush.msra.mxu0 %v4857
    %4925 = vmatpush.msra.mxu0 %v4855
    %4926 = vmatpush.msra.mxu0 %v4853
    %4927 = vmatmul.f32.gmra.mxu0 %v4820
    %v4928 = vpop.f32.mrf.mxu0
    %v4929 = vadd.f32 %v4909, %v4928
    %4930 = vdwg.mxu0
    %4931 = vmatpush.msra.mxu0 %v4852
    %4932 = vmatpush.msra.mxu0 %v4850
    %4933 = vmatpush.msra.mxu0 %v4848
    %4934 = vmatpush.msra.mxu0 %v4846
    %4935 = vmatpush.msra.mxu0 %v4844
    %4936 = vmatpush.msra.mxu0 %v4842
    %4937 = vmatpush.msra.mxu0 %v4840
    %4938 = vmatpush.msra.mxu0 %v4838
    %4939 = vmatpush.msra.mxu0 %v4836
    %4940 = vmatpush.msra.mxu0 %v4834
    %4941 = vmatpush.msra.mxu0 %v4832
    %4942 = vmatpush.msra.mxu0 %v4830
    %4943 = vmatpush.msra.mxu0 %v4828
    %4944 = vmatpush.msra.mxu0 %v4826
    %4945 = vmatpush.msra.mxu0 %v4824
    %4946 = vmatpush.msra.mxu0 %v4822
    %4947 = vmatmul.f32.gmra.mxu0 %v4819
    %v4948 = vpop.f32.mrf.mxu0
    %v4949 = vadd.f32 %v4888, %v4948
    %4950 = vdwg.mxu0
    %4951 = vmatpush.msra.mxu0 %v4884
    %4952 = vmatpush.msra.mxu0 %v4882
    %4953 = vmatpush.msra.mxu0 %v4880
    %4954 = vmatpush.msra.mxu0 %v4878
    %4955 = vmatpush.msra.mxu0 %v4876
    %4956 = vmatpush.msra.mxu0 %v4874
    %4957 = vmatpush.msra.mxu0 %v4872
    %4958 = vmatpush.msra.mxu0 %v4870
    %4959 = vmatpush.msra.mxu0 %v4868
    %4960 = vmatpush.msra.mxu0 %v4866
    %4961 = vmatpush.msra.mxu0 %v4864
    %4962 = vmatpush.msra.mxu0 %v4862
    %4963 = vmatpush.msra.mxu0 %v4860
    %4964 = vmatpush.msra.mxu0 %v4858
    %4965 = vmatpush.msra.mxu0 %v4856
    %4966 = vmatpush.msra.mxu0 %v4854
    %4967 = vmatmul.f32.gmra.mxu0 %v4820
    %v4968 = vpop.f32.mrf.mxu0
    %v4969 = vadd.f32 %v4949, %v4968
    %4970 = vdwg.mxu0
    %v4971 = vmax.f32 %v4929, 0.0
    %v4972 = vmax.f32 %v4969, 0.0
    %v4973 = vld [vmem:[#allocation19] sm:$0xff]
    %v4974 = vld [vmem:[#allocation19 + $0x8] sm:$0xff]
    %v4975 = vld [vmem:[#allocation19 + $0x10] sm:$0xff]
    %v4976 = vld [vmem:[#allocation19 + $0x18] sm:$0xff]
    %v4977 = vld [vmem:[#allocation19 + $0x20] sm:$0xff]
    %v4978 = vld [vmem:[#allocation19 + $0x28] sm:$0xff]
    %v4979 = vld [vmem:[#allocation19 + $0x30] sm:$0xff]
    %v4980 = vld [vmem:[#allocation19 + $0x38] sm:$0xff]
    %v4981 = vld [vmem:[#allocation19 + $0x40] sm:$0xff]
    %v4982 = vld [vmem:[#allocation19 + $0x48] sm:$0xff]
    %v4983 = vld [vmem:[#allocation19 + $0x50] sm:$0xff]
    %v4984 = vld [vmem:[#allocation19 + $0x58] sm:$0xff]
    %v4985 = vld [vmem:[#allocation19 + $0x60] sm:$0xff]
    %v4986 = vld [vmem:[#allocation19 + $0x68] sm:$0xff]
    %v4987 = vld [vmem:[#allocation19 + $0x70] sm:$0xff]
    %v4988 = vld [vmem:[#allocation19 + $0x78] sm:$0xff]
    %v4989 = vld [vmem:[#allocation19 + $0x80] sm:$0xff]
    %v4990 = vld [vmem:[#allocation19 + $0x88] sm:$0xff]
    %v4991 = vld [vmem:[#allocation19 + $0x90] sm:$0xff]
    %v4992 = vld [vmem:[#allocation19 + $0x98] sm:$0xff]
    %v4993 = vld [vmem:[#allocation19 + $0xa0] sm:$0xff]
    %v4994 = vld [vmem:[#allocation19 + $0xa8] sm:$0xff]
    %v4995 = vld [vmem:[#allocation19 + $0xb0] sm:$0xff]
    %v4996 = vld [vmem:[#allocation19 + $0xb8] sm:$0xff]
    %v4997 = vld [vmem:[#allocation19 + $0xc0] sm:$0xff]
    %v4998 = vld [vmem:[#allocation19 + $0xc8] sm:$0xff]
    %v4999 = vld [vmem:[#allocation19 + $0xd0] sm:$0xff]
    %v5000 = vld [vmem:[#allocation19 + $0xd8] sm:$0xff]
    %v5001 = vld [vmem:[#allocation19 + $0xe0] sm:$0xff]
    %v5002 = vld [vmem:[#allocation19 + $0xe8] sm:$0xff]
    %v5003 = vld [vmem:[#allocation19 + $0xf0] sm:$0xff]
    %v5004 = vld [vmem:[#allocation19 + $0xf8] sm:$0xff]
    %v5005 = vld [vmem:[#allocation20] sm:$0x1]
    %v5007 = vperm.slane %v5005, 0
    %5009 = vmatpush.msra.mxu0 %v4988
    %5010 = vmatpush.msra.mxu0 %v4987
    %5011 = vmatpush.msra.mxu0 %v4986
    %5012 = vmatpush.msra.mxu0 %v4985
    %5013 = vmatpush.msra.mxu0 %v4984
    %5014 = vmatpush.msra.mxu0 %v4983
    %5015 = vmatpush.msra.mxu0 %v4982
    %5016 = vmatpush.msra.mxu0 %v4981
    %5017 = vmatpush.msra.mxu0 %v4980
    %5018 = vmatpush.msra.mxu0 %v4979
    %5019 = vmatpush.msra.mxu0 %v4978
    %5020 = vmatpush.msra.mxu0 %v4977
    %5021 = vmatpush.msra.mxu0 %v4976
    %5022 = vmatpush.msra.mxu0 %v4975
    %5023 = vmatpush.msra.mxu0 %v4974
    %5024 = vmatpush.msra.mxu0 %v4973
    %5025 = vmatmul.f32.gmra.mxu0 %v4971
    %v5026 = vpop.f32.mrf.mxu0
    %v5027 = vadd.f32 %v5007, %v5026
    %5028 = vdwg.mxu0
    %5029 = vmatpush.msra.mxu0 %v5004
    %5030 = vmatpush.msra.mxu0 %v5003
    %5031 = vmatpush.msra.mxu0 %v5002
    %5032 = vmatpush.msra.mxu0 %v5001
    %5033 = vmatpush.msra.mxu0 %v5000
    %5034 = vmatpush.msra.mxu0 %v4999
    %5035 = vmatpush.msra.mxu0 %v4998
    %5036 = vmatpush.msra.mxu0 %v4997
    %5037 = vmatpush.msra.mxu0 %v4996
    %5038 = vmatpush.msra.mxu0 %v4995
    %5039 = vmatpush.msra.mxu0 %v4994
    %5040 = vmatpush.msra.mxu0 %v4993
    %5041 = vmatpush.msra.mxu0 %v4992
    %5042 = vmatpush.msra.mxu0 %v4991
    %5043 = vmatpush.msra.mxu0 %v4990
    %5044 = vmatpush.msra.mxu0 %v4989
    %5045 = vmatmul.f32.gmra.mxu0 %v4972
    %v5046 = vpop.f32.mrf.mxu0
    %v5047 = vadd.f32 %v5027, %v5046
    %5048 = vdwg.mxu0
    %v5049 = vmax.f32 %v5047, 0.0
    %5050 = vst [vmem:[#allocation22] sm:$0xff] %v5049
    // Predicated region
    $region98: #{tpu_custom_call.1} parent=1 // pred_check
      _
    $region99: #{tpu_custom_call.1} parent=1 // pred_check_branch
      %5052 = sbr.rel (0) target = $region101
    $region100: #{tpu_custom_call.1} parent=1 // pred_region
      %5054 = vsyncadd [#allocation4], 0
      %s5056 = sshll.u32 [#allocation22], 4
      %s5057 = int_to_ptr.vmem [resolvable:$true] %s5056
      %s5058 = sshll.u32 %s12, 4
      %s5059 = int_to_ptr.hbm [resolvable:$true] %s5058
      %5061 = dma.vmem_to_hbm [thread:$0]  %s5057, 128, %s5059, [#allocation4]
    $region101: #{tpu_custom_call.1} parent=1 // pred_fallthru
      _
    // Predicated region
    $region102: #{tpu_custom_call.1} parent=1 // pred_check
      _
    $region103: #{tpu_custom_call.1} parent=1 // pred_check_branch
      %5063 = sbr.rel (0) target = $region105
    $region104: #{tpu_custom_call.1} parent=1 // pred_region
      %5065 = dma.done [#allocation4], 128
    $region105: #{tpu_custom_call.1} parent=1 // pred_fallthru
      _
    %5066 = vsyncpa [#allocation3], 1
    %5067 = vsyncpa [#allocation6], 1
    %5068 = vsyncpa [#allocation9], 1
    %5069 = vsyncpa [#allocation12], 1
    %5070 = vsyncpa [#allocation15], 1
    %5071 = vsyncpa [#allocation18], 1
    %5072 = vsyncpa [#allocation21], 1
    %5073 = vsyncpa [#allocation4], 1

</llo_original>
